<compile_context>
chip_gen: v7x
topology: tpu7x:2x2x1
jax: 0.10.0
libtpu: 0.0.40
codegen_flags: <defaults>
</compile_context>

<pallas_src>
import jax
import jax.numpy as jnp
from jax.experimental import pallas as pl
from jax.experimental.pallas import tpu as pltpu

EPS = 1e-6


def _is_small_int(p_static):
    return (p_static is not None
            and float(p_static).is_integer()
            and 1 <= int(p_static) <= 4)


def _pow_elem(x, p_runtime, p_static):
    """Per-element x^p on the hot streaming path.

    If p is statically a small integer (GeM default p=3) use repeated VPU
    multiplies so the single EUP (exp/log) never becomes the saturating VLIW
    slot; otherwise fall back to the runtime exp(p*log x).
    """
    if _is_small_int(p_static):
        n = int(p_static)
        y = x
        for _ in range(n - 1):
            y = y * x
        return y
    return jnp.power(x, p_runtime)


def _make_minkloc_kernel(n_total, p_total, bt, static_p_gem, static_p_pnt):
    inv_n = 1.0 / float(n_total)
    inv_p_total = 1.0 / float(p_total)

    def kernel(p_gem_ref, p_pnt_ref, feats_ref, pnt_ref, wbt_ref, wpt_ref,
               o_ref, accx_ref, accy_ref):
        """One (batch-tile, point-chunk) grid step.

        p_gem_ref : SMEM (1,) f32        -- layers_pooling.GeM p parameter
        p_pnt_ref : SMEM (1,) f32        -- PNT_GeM p parameter
        feats_ref : VMEM (Bt, Cin, tN)   -- channel-major backbone-input chunk
        pnt_ref   : VMEM (Bt, 3,   tP)   -- channel-major pointnet-input chunk
        wbt_ref   : VMEM (F, Cin)        -- backbone stub weights (resident)
        wpt_ref   : VMEM (F, 3)          -- pointnet stub weights (resident)
        o_ref     : VMEM (1, F, Bt)      -- per-batch-tile descriptors
        accx/accy : VMEM (F, Bt) f32     -- streamed sum(clamp(x)^p) accumulators
        """
        k = pl.program_id(1)

        @pl.when(k == 0)
        def _init():
            accx_ref[...] = jnp.zeros_like(accx_ref)
            accy_ref[...] = jnp.zeros_like(accy_ref)

        p = p_gem_ref[0]
        pp = p_pnt_ref[0]

        # Streamed projection + clamp + pow + partial sum for this chunk.
        # Bt <= 8, so the Python loop fully unrolls; each iteration issues a
        # tiny-K MXU matmul, VPU/EUP elementwise work and an XLU lane-reduce
        # (all different VLIW slots, so they overlap).
        # TODO(synk): real MinkFPN output has a variable valid point count per
        # sample; a scalar-prefetched count + masked sum should replace the
        # divide-by-densified-N mean on real data.
        for b in range(bt):
            xs = jnp.dot(wbt_ref[...], feats_ref[b],
                         preferred_element_type=jnp.float32)        # (F, tN)
            xs = jnp.maximum(xs, EPS)
            accx_ref[:, b:b + 1] += jnp.sum(
                _pow_elem(xs, p, static_p_gem), axis=-1, keepdims=True)

            ys = jnp.dot(wpt_ref[...], pnt_ref[b],
                         preferred_element_type=jnp.float32)        # (F, tP)
            ys = jnp.maximum(ys, EPS)
            accy_ref[:, b:b + 1] += jnp.sum(
                _pow_elem(ys, pp, static_p_pnt), axis=-1, keepdims=True)

        @pl.when(k == pl.num_programs(1) - 1)
        def _finalize():
            # mean (1/N) and ^(1/p) only touch the (F, Bt) accumulators:
            # O(F*Bt) regardless of the number of streamed points.
            gx = jnp.power(accx_ref[...] * inv_n, 1.0 / p)
            gy = jnp.power(accy_ref[...] * inv_p_total, 1.0 / pp)
            o_ref[0, :, :] = (gx + gy).astype(o_ref.dtype)

    return kernel


def minkloc_forward(feats, pnt_coords, backbone_w, pointnet_w, p_gem, p_pnt,
                    *, batch_tile=8, point_tile=2048,
                    static_p_gem=None, static_p_pnt=None):
    """feats: (B, N, Cin), pnt_coords: (B, P, 3) -> (B, F) global descriptors."""
    B, N, Cin = feats.shape
    _, P, Cp = pnt_coords.shape
    Cin_w, F = backbone_w.shape
    assert Cin_w == Cin and pointnet_w.shape == (Cp, F)

    # ---- batch tiling: multiple-of-8 tiles when possible, with >= 2 steps on
    # the leading "parallel" grid axis so v7x's 2 TensorCores both get work.
    if B % batch_tile == 0 and B // batch_tile >= 2:
        bt = batch_tile
    else:
        bt = B
    # TODO(synk): for tiny B (< 2*batch_tile) shard the point axis across the
    # parallel grid axis instead (per-core partial sums combined afterwards).

    # ---- point streaming: shared chunk count for the backbone (N) and
    # pointnet (P) streams; chunks kept lane-aligned (multiples of 128) so
    # HBM->VMEM DMAs are dense/unmasked.  point_tile is the per-step chunk
    # target: raise it on v5e/v6e (128 MiB VMEM), shrink on v7x (64 MiB).
    kt = max(1, min(N, P) // max(point_tile, 128))
    while kt > 1 and (N % kt or P % kt or (N // kt) % 128 or (P // kt) % 128):
        kt -= 1
    tn, tp = N // kt, P // kt

    # ---- lane-dense layouts: channel-major point tiles put the big point axis
    # on lanes; a (Cin, tN) f32 tile is dense in VMEM instead of ~32x padded
    # like (tN, Cin=4).
    # TODO(synk): have the upstream backbone / dataloader emit channel-major
    # directly so this transpose disappears from the XLA graph.
    feats_cm = jnp.swapaxes(feats, 1, 2)      # (B, Cin, N)
    pnt_cm = jnp.swapaxes(pnt_coords, 1, 2)   # (B, Cp, P)
    wbt = backbone_w.T                        # (F, Cin)
    wpt = pointnet_w.T                        # (F, Cp)

    kernel = _make_minkloc_kernel(N, P, bt, static_p_gem, static_p_pnt)

    # Advisory cost: tiny-K matmuls + streamed clamp/pow + lane reductions.
    flops = 2 * B * (N * Cin + P * Cp) * F + 6 * B * (N + P) * F
    transcendentals = 4 * B * F  # finalize ^(1/p) on the (F, Bt) accumulators
    if not _is_small_int(static_p_gem):
        transcendentals += 2 * B * N * F
    if not _is_small_int(static_p_pnt):
        transcendentals += 2 * B * P * F
    bytes_accessed = 4 * (B * N * Cin + B * P * Cp + (Cin + Cp) * F + B * F) + 8

    out3 = pl.pallas_call(
        kernel,
        out_shape=jax.ShapeDtypeStruct((B // bt, F, bt), feats.dtype),
        grid=(B // bt, kt),
        in_specs=[
            pl.BlockSpec(memory_space=pltpu.MemorySpace.SMEM),      # p (GeM)
            pl.BlockSpec(memory_space=pltpu.MemorySpace.SMEM),      # p (PNT_GeM)
            pl.BlockSpec((bt, Cin, tn), lambda gb, k: (gb, 0, k)),  # feats chunk
            pl.BlockSpec((bt, Cp, tp), lambda gb, k: (gb, 0, k)),   # coords chunk
            pl.BlockSpec((F, Cin), lambda gb, k: (0, 0)),           # resident W_b^T
            pl.BlockSpec((F, Cp), lambda gb, k: (0, 0)),            # resident W_p^T
        ],
        out_specs=pl.BlockSpec((1, F, bt), lambda gb, k: (gb, 0, 0)),
        scratch_shapes=[pltpu.VMEM((F, bt), jnp.float32),   # GeM sum accumulator
                        pltpu.VMEM((F, bt), jnp.float32)],  # PNT_GeM sum accumulator
        compiler_params=pltpu.CompilerParams(
            dimension_semantics=("parallel", "arbitrary"),
            # Streaming working set is a few MB at these chunk sizes; 48 MiB
            # leaves headroom for fat point_tile chunks while staying inside
            # v7x's 64 MiB physical VMEM.
            vmem_limit_bytes=48 * 1024 * 1024),
        cost_estimate=pl.CostEstimate(
            flops=int(flops), transcendentals=int(transcendentals),
            bytes_accessed=int(bytes_accessed)),
    )(p_gem, p_pnt, feats_cm, pnt_cm, wbt, wpt)

    # (B//bt, F, bt) -> (B, F): a tiny (B*F float) XLA transpose, keeps the
    # kernel free of any in-kernel relayouts.
    return jnp.transpose(out3, (0, 2, 1)).reshape(B, F)


class MinkLocPallas:
    """Synthetic MinkLoc (pooling='GeM', with_pntnet=True) with deterministic params."""

    def __init__(self, in_channels, feature_size, output_dim, num_points, key):
        assert feature_size == output_dim, "output_dim must equal feature_size (GeM pooling)"
        self.in_channels = in_channels
        self.feature_size = feature_size
        self.output_dim = output_dim
        self.num_points = num_points

        k1, k2 = jax.random.split(key)
        # TODO(synk): stand-in for MinkFPN sparse-conv backbone (MinkowskiEngine).
        self.backbone_w = 0.1 * jax.random.normal(k1, (in_channels, feature_size), jnp.float32)
        # TODO(synk): stand-in for PointNetfeatv1 (definition not provided).
        self.pointnet_w = 0.1 * jax.random.normal(k2, (3, feature_size), jnp.float32)
        # nn.Parameter(torch.ones(1) * 3) for both GeM modules.
        self.p_gem = jnp.ones((1,), jnp.float32) * 3.0
        self.p_pnt = jnp.ones((1,), jnp.float32) * 3.0
        # p is initialized to 3 and frozen here -> let the kernel specialize
        # x^p to x*x*x (VPU).  Set to None if p is trained away from an integer.
        self.static_p = 3.0

    def __call__(self, batch, **forward_kwargs):
        feats = batch["features"]          # (B, N, in_channels) densified sparse feats
        pnt_coords = batch["pnt_coords"]   # (B, num_points, 3)
        return minkloc_forward(feats, pnt_coords,
                               self.backbone_w, self.pointnet_w,
                               self.p_gem, self.p_pnt,
                               static_p_gem=self.static_p,
                               static_p_pnt=self.static_p,
                               **forward_kwargs)


def _reference(model, batch):
    """Pure-JAX reference of the pooled forward for correctness checking."""
    feats = batch["features"]
    pnt_coords = batch["pnt_coords"]
    x = jnp.einsum("bnc,cf->bnf", feats, model.backbone_w)
    y = jnp.einsum("bpc,cf->bpf", pnt_coords, model.pointnet_w)
    p, pp = model.p_gem[0], model.p_pnt[0]
    gx = jnp.power(jnp.mean(jnp.power(jnp.maximum(x, EPS), p), axis=1), 1.0 / p)
    gy = jnp.power(jnp.mean(jnp.power(jnp.maximum(y, EPS), pp), axis=1), 1.0 / pp)
    return gx + gy


if __name__ == "__main__":
    B = 16            # two batch tiles of 8 -> leading "parallel" grid axis has 2 steps
    N = 256           # densified backbone points per sample (streamed in 2 chunks)
    in_channels = 4
    feature_size = 128
    output_dim = 128
    num_points = 256  # PNT_GeM kernel = (num_points, 1)

    key = jax.random.PRNGKey(0)
    k_model, k_feat, k_pnt = jax.random.split(key, 3)

    model = MinkLocPallas(in_channels, feature_size, output_dim, num_points, k_model)

    batch = {
        "features": jax.random.normal(k_feat, (B, N, in_channels), jnp.float32),
        "pnt_coords": jax.random.normal(k_pnt, (B, num_points, 3), jnp.float32),
    }

    # point_tile=128 exercises the streaming (k) grid axis at these toy sizes.
    out = jax.block_until_ready(model(batch, point_tile=128))

    assert out.shape == (B, output_dim), out.shape
    ref = _reference(model, batch)
    assert jnp.allclose(out, ref, atol=1e-4, rtol=1e-4), \
        float(jnp.max(jnp.abs(out - ref)))

    print("KERNEL_OK")
</pallas_src>

<mosaic_0001>
module attributes {stable_mosaic.version = 11 : i64} {
  func.func @kernel(%arg0: i32, %arg1: i32, %arg2: memref<1xf32, #tpu.memory_space<smem>>, %arg3: memref<1xf32, #tpu.memory_space<smem>>, %arg4: memref<8x4x128xf32, #tpu.memory_space<vmem>>, %arg5: memref<8x3x128xf32, #tpu.memory_space<vmem>>, %arg6: memref<128x4xf32, #tpu.memory_space<vmem>>, %arg7: memref<128x3xf32, #tpu.memory_space<vmem>>, %arg8: memref<1x128x8xf32, #tpu.memory_space<vmem>>, %arg9: memref<128x8xf32, #tpu.memory_space<vmem>>, %arg10: memref<128x8xf32, #tpu.memory_space<vmem>>) attributes {dimension_semantics = [#tpu.dimension_semantics<parallel>, #tpu.dimension_semantics<arbitrary>], iteration_bounds = array<i64: 2, 2>, scalar_prefetch = 0 : i64, scratch_operands = 2 : i64, tpu.core_type = #tpu.core_type<tc>, window_params = [{transform_indices = @transform_0, window_bounds = array<i64: 1>}, {transform_indices = @transform_1, window_bounds = array<i64: 1>}, {transform_indices = @transform_2, window_bounds = array<i64: 8, 4, 128>}, {transform_indices = @transform_3, window_bounds = array<i64: 8, 3, 128>}, {pipeline_mode = #tpu.pipeline_mode<synchronous>, transform_indices = @transform_4, window_bounds = array<i64: 128, 4>}, {pipeline_mode = #tpu.pipeline_mode<synchronous>, transform_indices = @transform_5, window_bounds = array<i64: 128, 3>}, {transform_indices = @transform_6, window_bounds = array<i64: 1, 128, 8>}]} {
    %c0_i32 = arith.constant 0 : i32
    %0 = arith.cmpi eq, %arg1, %c0_i32 : i32
    %1 = arith.extui %0 : i1 to i32
    %c0_i32_0 = arith.constant 0 : i32
    %2 = arith.cmpi ne, %1, %c0_i32_0 : i32
    scf.if %2 {
      %cst_187 = arith.constant 0.000000e+00 : f32
      %216 = vector.broadcast %cst_187 : f32 to vector<128x8xf32>
      %c0_188 = arith.constant 0 : index
      %c0_189 = arith.constant 0 : index
      %217 = vector.load %arg9[%c0_188, %c0_189] : memref<128x8xf32, #tpu.memory_space<vmem>>, vector<128x8xf32>
      tpu.vector_store %arg9[%c0_188, %c0_189], %216 {strides = array<i32>} : memref<128x8xf32, #tpu.memory_space<vmem>>, vector<128x8xf32>,
      %cst_190 = arith.constant 0.000000e+00 : f32
      %218 = vector.broadcast %cst_190 : f32 to vector<128x8xf32>
      %c0_191 = arith.constant 0 : index
      %c0_192 = arith.constant 0 : index
      %219 = vector.load %arg10[%c0_191, %c0_192] : memref<128x8xf32, #tpu.memory_space<vmem>>, vector<128x8xf32>
      tpu.vector_store %arg10[%c0_191, %c0_192], %218 {strides = array<i32>} : memref<128x8xf32, #tpu.memory_space<vmem>>, vector<128x8xf32>,
    } else {
    }
    %c0 = arith.constant 0 : index
    %3 = memref.load %arg2[%c0] : memref<1xf32, #tpu.memory_space<smem>>
    %c0_1 = arith.constant 0 : index
    %4 = memref.load %arg3[%c0_1] : memref<1xf32, #tpu.memory_space<smem>>
    %c0_2 = arith.constant 0 : index
    %c0_3 = arith.constant 0 : index
    %5 = vector.load %arg6[%c0_2, %c0_3] : memref<128x4xf32, #tpu.memory_space<vmem>>, vector<128x4xf32>
    %c0_4 = arith.constant 0 : index
    %c0_5 = arith.constant 0 : index
    %c0_6 = arith.constant 0 : index
    %6 = vector.load %arg4[%c0_4, %c0_5, %c0_6] : memref<8x4x128xf32, #tpu.memory_space<vmem>>, vector<1x4x128xf32>
    %7 = vector.shape_cast %6 : vector<1x4x128xf32> to vector<4x128xf32>
    %cst = arith.constant dense<0.000000e+00> : vector<128x128xf32>
    %8 = tpu.matmul %5, %7, %cst {dimension_numbers = #tpu.dot_dimension_numbers<[1], [0], [0], [1], [0, 0, 1, 1], [], []>} : vector<128x4xf32>, vector<4x128xf32>, vector<128x128xf32> -> vector<128x128xf32>
    %cst_7 = arith.constant 9.99999997E-7 : f32
    %9 = vector.broadcast %cst_7 : f32 to vector<128x128xf32>
    %10 = arith.maximumf %8, %9 : vector<128x128xf32>
    %c0_8 = arith.constant 0 : index
    %c0_9 = arith.constant 0 : index
    %11 = vector.load %arg9[%c0_8, %c0_9] : memref<128x8xf32, #tpu.memory_space<vmem>>, vector<128x1xf32>
    %12 = arith.mulf %10, %10 : vector<128x128xf32>
    %13 = arith.mulf %12, %10 : vector<128x128xf32>
    %cst_10 = arith.constant dense<0.000000e+00> : vector<128xf32>
    %14 = vector.multi_reduction <add>, %13, %cst_10 [1] : vector<128x128xf32> to vector<128xf32>
    %15 = vector.shape_cast %14 : vector<128xf32> to vector<128x1xf32>
    %16 = arith.addf %11, %15 : vector<128x1xf32>
    %c0_11 = arith.constant 0 : index
    %c0_12 = arith.constant 0 : index
    %17 = vector.load %arg9[%c0_11, %c0_12] : memref<128x8xf32, #tpu.memory_space<vmem>>, vector<128x1xf32>
    tpu.vector_store %arg9[%c0_11, %c0_12], %16 {strides = array<i32>} : memref<128x8xf32, #tpu.memory_space<vmem>>, vector<128x1xf32>,
    %c0_13 = arith.constant 0 : index
    %c0_14 = arith.constant 0 : index
    %18 = vector.load %arg7[%c0_13, %c0_14] : memref<128x3xf32, #tpu.memory_space<vmem>>, vector<128x3xf32>
    %c0_15 = arith.constant 0 : index
    %c0_16 = arith.constant 0 : index
    %c0_17 = arith.constant 0 : index
    %19 = vector.load %arg5[%c0_15, %c0_16, %c0_17] : memref<8x3x128xf32, #tpu.memory_space<vmem>>, vector<1x3x128xf32>
    %20 = vector.shape_cast %19 : vector<1x3x128xf32> to vector<3x128xf32>
    %cst_18 = arith.constant dense<0.000000e+00> : vector<128x128xf32>
    %21 = tpu.matmul %18, %20, %cst_18 {dimension_numbers = #tpu.dot_dimension_numbers<[1], [0], [0], [1], [0, 0, 1, 1], [], []>} : vector<128x3xf32>, vector<3x128xf32>, vector<128x128xf32> -> vector<128x128xf32>
    %cst_19 = arith.constant 9.99999997E-7 : f32
    %22 = vector.broadcast %cst_19 : f32 to vector<128x128xf32>
    %23 = arith.maximumf %21, %22 : vector<128x128xf32>
    %c0_20 = arith.constant 0 : index
    %c0_21 = arith.constant 0 : index
    %24 = vector.load %arg10[%c0_20, %c0_21] : memref<128x8xf32, #tpu.memory_space<vmem>>, vector<128x1xf32>
    %25 = arith.mulf %23, %23 : vector<128x128xf32>
    %26 = arith.mulf %25, %23 : vector<128x128xf32>
    %cst_22 = arith.constant dense<0.000000e+00> : vector<128xf32>
    %27 = vector.multi_reduction <add>, %26, %cst_22 [1] : vector<128x128xf32> to vector<128xf32>
    %28 = vector.shape_cast %27 : vector<128xf32> to vector<128x1xf32>
    %29 = arith.addf %24, %28 : vector<128x1xf32>
    %c0_23 = arith.constant 0 : index
    %c0_24 = arith.constant 0 : index
    %30 = vector.load %arg10[%c0_23, %c0_24] : memref<128x8xf32, #tpu.memory_space<vmem>>, vector<128x1xf32>
    tpu.vector_store %arg10[%c0_23, %c0_24], %29 {strides = array<i32>} : memref<128x8xf32, #tpu.memory_space<vmem>>, vector<128x1xf32>,
    %c0_25 = arith.constant 0 : index
    %c0_26 = arith.constant 0 : index
    %31 = vector.load %arg6[%c0_25, %c0_26] : memref<128x4xf32, #tpu.memory_space<vmem>>, vector<128x4xf32>
    %c1 = arith.constant 1 : index
    %c0_27 = arith.constant 0 : index
    %c0_28 = arith.constant 0 : index
    %32 = vector.load %arg4[%c1, %c0_27, %c0_28] : memref<8x4x128xf32, #tpu.memory_space<vmem>>, vector<1x4x128xf32>
    %33 = vector.shape_cast %32 : vector<1x4x128xf32> to vector<4x128xf32>
    %cst_29 = arith.constant dense<0.000000e+00> : vector<128x128xf32>
    %34 = tpu.matmul %31, %33, %cst_29 {dimension_numbers = #tpu.dot_dimension_numbers<[1], [0], [0], [1], [0, 0, 1, 1], [], []>} : vector<128x4xf32>, vector<4x128xf32>, vector<128x128xf32> -> vector<128x128xf32>
    %cst_30 = arith.constant 9.99999997E-7 : f32
    %35 = vector.broadcast %cst_30 : f32 to vector<128x128xf32>
    %36 = arith.maximumf %34, %35 : vector<128x128xf32>
    %c0_31 = arith.constant 0 : index
    %c1_32 = arith.constant 1 : index
    %37 = vector.load %arg9[%c0_31, %c1_32] : memref<128x8xf32, #tpu.memory_space<vmem>>, vector<128x1xf32>
    %38 = arith.mulf %36, %36 : vector<128x128xf32>
    %39 = arith.mulf %38, %36 : vector<128x128xf32>
    %cst_33 = arith.constant dense<0.000000e+00> : vector<128xf32>
    %40 = vector.multi_reduction <add>, %39, %cst_33 [1] : vector<128x128xf32> to vector<128xf32>
    %41 = vector.shape_cast %40 : vector<128xf32> to vector<128x1xf32>
    %42 = arith.addf %37, %41 : vector<128x1xf32>
    %c0_34 = arith.constant 0 : index
    %c1_35 = arith.constant 1 : index
    %43 = vector.load %arg9[%c0_34, %c1_35] : memref<128x8xf32, #tpu.memory_space<vmem>>, vector<128x1xf32>
    tpu.vector_store %arg9[%c0_34, %c1_35], %42 {strides = array<i32>} : memref<128x8xf32, #tpu.memory_space<vmem>>, vector<128x1xf32>,
    %c0_36 = arith.constant 0 : index
    %c0_37 = arith.constant 0 : index
    %44 = vector.load %arg7[%c0_36, %c0_37] : memref<128x3xf32, #tpu.memory_space<vmem>>, vector<128x3xf32>
    %c1_38 = arith.constant 1 : index
    %c0_39 = arith.constant 0 : index
    %c0_40 = arith.constant 0 : index
    %45 = vector.load %arg5[%c1_38, %c0_39, %c0_40] : memref<8x3x128xf32, #tpu.memory_space<vmem>>, vector<1x3x128xf32>
    %46 = vector.shape_cast %45 : vector<1x3x128xf32> to vector<3x128xf32>
    %cst_41 = arith.constant dense<0.000000e+00> : vector<128x128xf32>
    %47 = tpu.matmul %44, %46, %cst_41 {dimension_numbers = #tpu.dot_dimension_numbers<[1], [0], [0], [1], [0, 0, 1, 1], [], []>} : vector<128x3xf32>, vector<3x128xf32>, vector<128x128xf32> -> vector<128x128xf32>
    %cst_42 = arith.constant 9.99999997E-7 : f32
    %48 = vector.broadcast %cst_42 : f32 to vector<128x128xf32>
    %49 = arith.maximumf %47, %48 : vector<128x128xf32>
    %c0_43 = arith.constant 0 : index
    %c1_44 = arith.constant 1 : index
    %50 = vector.load %arg10[%c0_43, %c1_44] : memref<128x8xf32, #tpu.memory_space<vmem>>, vector<128x1xf32>
    %51 = arith.mulf %49, %49 : vector<128x128xf32>
    %52 = arith.mulf %51, %49 : vector<128x128xf32>
    %cst_45 = arith.constant dense<0.000000e+00> : vector<128xf32>
    %53 = vector.multi_reduction <add>, %52, %cst_45 [1] : vector<128x128xf32> to vector<128xf32>
    %54 = vector.shape_cast %53 : vector<128xf32> to vector<128x1xf32>
    %55 = arith.addf %50, %54 : vector<128x1xf32>
    %c0_46 = arith.constant 0 : index
    %c1_47 = arith.constant 1 : index
    %56 = vector.load %arg10[%c0_46, %c1_47] : memref<128x8xf32, #tpu.memory_space<vmem>>, vector<128x1xf32>
    tpu.vector_store %arg10[%c0_46, %c1_47], %55 {strides = array<i32>} : memref<128x8xf32, #tpu.memory_space<vmem>>, vector<128x1xf32>,
    %c0_48 = arith.constant 0 : index
    %c0_49 = arith.constant 0 : index
    %57 = vector.load %arg6[%c0_48, %c0_49] : memref<128x4xf32, #tpu.memory_space<vmem>>, vector<128x4xf32>
    %c2 = arith.constant 2 : index
    %c0_50 = arith.constant 0 : index
    %c0_51 = arith.constant 0 : index
    %58 = vector.load %arg4[%c2, %c0_50, %c0_51] : memref<8x4x128xf32, #tpu.memory_space<vmem>>, vector<1x4x128xf32>
    %59 = vector.shape_cast %58 : vector<1x4x128xf32> to vector<4x128xf32>
    %cst_52 = arith.constant dense<0.000000e+00> : vector<128x128xf32>
    %60 = tpu.matmul %57, %59, %cst_52 {dimension_numbers = #tpu.dot_dimension_numbers<[1], [0], [0], [1], [0, 0, 1, 1], [], []>} : vector<128x4xf32>, vector<4x128xf32>, vector<128x128xf32> -> vector<128x128xf32>
    %cst_53 = arith.constant 9.99999997E-7 : f32
    %61 = vector.broadcast %cst_53 : f32 to vector<128x128xf32>
    %62 = arith.maximumf %60, %61 : vector<128x128xf32>
    %c0_54 = arith.constant 0 : index
    %c2_55 = arith.constant 2 : index
    %63 = vector.load %arg9[%c0_54, %c2_55] : memref<128x8xf32, #tpu.memory_space<vmem>>, vector<128x1xf32>
    %64 = arith.mulf %62, %62 : vector<128x128xf32>
    %65 = arith.mulf %64, %62 : vector<128x128xf32>
    %cst_56 = arith.constant dense<0.000000e+00> : vector<128xf32>
    %66 = vector.multi_reduction <add>, %65, %cst_56 [1] : vector<128x128xf32> to vector<128xf32>
    %67 = vector.shape_cast %66 : vector<128xf32> to vector<128x1xf32>
    %68 = arith.addf %63, %67 : vector<128x1xf32>
    %c0_57 = arith.constant 0 : index
    %c2_58 = arith.constant 2 : index
    %69 = vector.load %arg9[%c0_57, %c2_58] : memref<128x8xf32, #tpu.memory_space<vmem>>, vector<128x1xf32>
    tpu.vector_store %arg9[%c0_57, %c2_58], %68 {strides = array<i32>} : memref<128x8xf32, #tpu.memory_space<vmem>>, vector<128x1xf32>,
    %c0_59 = arith.constant 0 : index
    %c0_60 = arith.constant 0 : index
    %70 = vector.load %arg7[%c0_59, %c0_60] : memref<128x3xf32, #tpu.memory_space<vmem>>, vector<128x3xf32>
    %c2_61 = arith.constant 2 : index
    %c0_62 = arith.constant 0 : index
    %c0_63 = arith.constant 0 : index
    %71 = vector.load %arg5[%c2_61, %c0_62, %c0_63] : memref<8x3x128xf32, #tpu.memory_space<vmem>>, vector<1x3x128xf32>
    %72 = vector.shape_cast %71 : vector<1x3x128xf32> to vector<3x128xf32>
    %cst_64 = arith.constant dense<0.000000e+00> : vector<128x128xf32>
    %73 = tpu.matmul %70, %72, %cst_64 {dimension_numbers = #tpu.dot_dimension_numbers<[1], [0], [0], [1], [0, 0, 1, 1], [], []>} : vector<128x3xf32>, vector<3x128xf32>, vector<128x128xf32> -> vector<128x128xf32>
    %cst_65 = arith.constant 9.99999997E-7 : f32
    %74 = vector.broadcast %cst_65 : f32 to vector<128x128xf32>
    %75 = arith.maximumf %73, %74 : vector<128x128xf32>
    %c0_66 = arith.constant 0 : index
    %c2_67 = arith.constant 2 : index
    %76 = vector.load %arg10[%c0_66, %c2_67] : memref<128x8xf32, #tpu.memory_space<vmem>>, vector<128x1xf32>
    %77 = arith.mulf %75, %75 : vector<128x128xf32>
    %78 = arith.mulf %77, %75 : vector<128x128xf32>
    %cst_68 = arith.constant dense<0.000000e+00> : vector<128xf32>
    %79 = vector.multi_reduction <add>, %78, %cst_68 [1] : vector<128x128xf32> to vector<128xf32>
    %80 = vector.shape_cast %79 : vector<128xf32> to vector<128x1xf32>
    %81 = arith.addf %76, %80 : vector<128x1xf32>
    %c0_69 = arith.constant 0 : index
    %c2_70 = arith.constant 2 : index
    %82 = vector.load %arg10[%c0_69, %c2_70] : memref<128x8xf32, #tpu.memory_space<vmem>>, vector<128x1xf32>
    tpu.vector_store %arg10[%c0_69, %c2_70], %81 {strides = array<i32>} : memref<128x8xf32, #tpu.memory_space<vmem>>, vector<128x1xf32>,
    %c0_71 = arith.constant 0 : index
    %c0_72 = arith.constant 0 : index
    %83 = vector.load %arg6[%c0_71, %c0_72] : memref<128x4xf32, #tpu.memory_space<vmem>>, vector<128x4xf32>
    %c3 = arith.constant 3 : index
    %c0_73 = arith.constant 0 : index
    %c0_74 = arith.constant 0 : index
    %84 = vector.load %arg4[%c3, %c0_73, %c0_74] : memref<8x4x128xf32, #tpu.memory_space<vmem>>, vector<1x4x128xf32>
    %85 = vector.shape_cast %84 : vector<1x4x128xf32> to vector<4x128xf32>
    %cst_75 = arith.constant dense<0.000000e+00> : vector<128x128xf32>
    %86 = tpu.matmul %83, %85, %cst_75 {dimension_numbers = #tpu.dot_dimension_numbers<[1], [0], [0], [1], [0, 0, 1, 1], [], []>} : vector<128x4xf32>, vector<4x128xf32>, vector<128x128xf32> -> vector<128x128xf32>
    %cst_76 = arith.constant 9.99999997E-7 : f32
    %87 = vector.broadcast %cst_76 : f32 to vector<128x128xf32>
    %88 = arith.maximumf %86, %87 : vector<128x128xf32>
    %c0_77 = arith.constant 0 : index
    %c3_78 = arith.constant 3 : index
    %89 = vector.load %arg9[%c0_77, %c3_78] : memref<128x8xf32, #tpu.memory_space<vmem>>, vector<128x1xf32>
    %90 = arith.mulf %88, %88 : vector<128x128xf32>
    %91 = arith.mulf %90, %88 : vector<128x128xf32>
    %cst_79 = arith.constant dense<0.000000e+00> : vector<128xf32>
    %92 = vector.multi_reduction <add>, %91, %cst_79 [1] : vector<128x128xf32> to vector<128xf32>
    %93 = vector.shape_cast %92 : vector<128xf32> to vector<128x1xf32>
    %94 = arith.addf %89, %93 : vector<128x1xf32>
    %c0_80 = arith.constant 0 : index
    %c3_81 = arith.constant 3 : index
    %95 = vector.load %arg9[%c0_80, %c3_81] : memref<128x8xf32, #tpu.memory_space<vmem>>, vector<128x1xf32>
    tpu.vector_store %arg9[%c0_80, %c3_81], %94 {strides = array<i32>} : memref<128x8xf32, #tpu.memory_space<vmem>>, vector<128x1xf32>,
    %c0_82 = arith.constant 0 : index
    %c0_83 = arith.constant 0 : index
    %96 = vector.load %arg7[%c0_82, %c0_83] : memref<128x3xf32, #tpu.memory_space<vmem>>, vector<128x3xf32>
    %c3_84 = arith.constant 3 : index
    %c0_85 = arith.constant 0 : index
    %c0_86 = arith.constant 0 : index
    %97 = vector.load %arg5[%c3_84, %c0_85, %c0_86] : memref<8x3x128xf32, #tpu.memory_space<vmem>>, vector<1x3x128xf32>
    %98 = vector.shape_cast %97 : vector<1x3x128xf32> to vector<3x128xf32>
    %cst_87 = arith.constant dense<0.000000e+00> : vector<128x128xf32>
    %99 = tpu.matmul %96, %98, %cst_87 {dimension_numbers = #tpu.dot_dimension_numbers<[1], [0], [0], [1], [0, 0, 1, 1], [], []>} : vector<128x3xf32>, vector<3x128xf32>, vector<128x128xf32> -> vector<128x128xf32>
    %cst_88 = arith.constant 9.99999997E-7 : f32
    %100 = vector.broadcast %cst_88 : f32 to vector<128x128xf32>
    %101 = arith.maximumf %99, %100 : vector<128x128xf32>
    %c0_89 = arith.constant 0 : index
    %c3_90 = arith.constant 3 : index
    %102 = vector.load %arg10[%c0_89, %c3_90] : memref<128x8xf32, #tpu.memory_space<vmem>>, vector<128x1xf32>
    %103 = arith.mulf %101, %101 : vector<128x128xf32>
    %104 = arith.mulf %103, %101 : vector<128x128xf32>
    %cst_91 = arith.constant dense<0.000000e+00> : vector<128xf32>
    %105 = vector.multi_reduction <add>, %104, %cst_91 [1] : vector<128x128xf32> to vector<128xf32>
    %106 = vector.shape_cast %105 : vector<128xf32> to vector<128x1xf32>
    %107 = arith.addf %102, %106 : vector<128x1xf32>
    %c0_92 = arith.constant 0 : index
    %c3_93 = arith.constant 3 : index
    %108 = vector.load %arg10[%c0_92, %c3_93] : memref<128x8xf32, #tpu.memory_space<vmem>>, vector<128x1xf32>
    tpu.vector_store %arg10[%c0_92, %c3_93], %107 {strides = array<i32>} : memref<128x8xf32, #tpu.memory_space<vmem>>, vector<128x1xf32>,
    %c0_94 = arith.constant 0 : index
    %c0_95 = arith.constant 0 : index
    %109 = vector.load %arg6[%c0_94, %c0_95] : memref<128x4xf32, #tpu.memory_space<vmem>>, vector<128x4xf32>
    %c4 = arith.constant 4 : index
    %c0_96 = arith.constant 0 : index
    %c0_97 = arith.constant 0 : index
    %110 = vector.load %arg4[%c4, %c0_96, %c0_97] : memref<8x4x128xf32, #tpu.memory_space<vmem>>, vector<1x4x128xf32>
    %111 = vector.shape_cast %110 : vector<1x4x128xf32> to vector<4x128xf32>
    %cst_98 = arith.constant dense<0.000000e+00> : vector<128x128xf32>
    %112 = tpu.matmul %109, %111, %cst_98 {dimension_numbers = #tpu.dot_dimension_numbers<[1], [0], [0], [1], [0, 0, 1, 1], [], []>} : vector<128x4xf32>, vector<4x128xf32>, vector<128x128xf32> -> vector<128x128xf32>
    %cst_99 = arith.constant 9.99999997E-7 : f32
    %113 = vector.broadcast %cst_99 : f32 to vector<128x128xf32>
    %114 = arith.maximumf %112, %113 : vector<128x128xf32>
    %c0_100 = arith.constant 0 : index
    %c4_101 = arith.constant 4 : index
    %115 = vector.load %arg9[%c0_100, %c4_101] : memref<128x8xf32, #tpu.memory_space<vmem>>, vector<128x1xf32>
    %116 = arith.mulf %114, %114 : vector<128x128xf32>
    %117 = arith.mulf %116, %114 : vector<128x128xf32>
    %cst_102 = arith.constant dense<0.000000e+00> : vector<128xf32>
    %118 = vector.multi_reduction <add>, %117, %cst_102 [1] : vector<128x128xf32> to vector<128xf32>
    %119 = vector.shape_cast %118 : vector<128xf32> to vector<128x1xf32>
    %120 = arith.addf %115, %119 : vector<128x1xf32>
    %c0_103 = arith.constant 0 : index
    %c4_104 = arith.constant 4 : index
    %121 = vector.load %arg9[%c0_103, %c4_104] : memref<128x8xf32, #tpu.memory_space<vmem>>, vector<128x1xf32>
    tpu.vector_store %arg9[%c0_103, %c4_104], %120 {strides = array<i32>} : memref<128x8xf32, #tpu.memory_space<vmem>>, vector<128x1xf32>,
    %c0_105 = arith.constant 0 : index
    %c0_106 = arith.constant 0 : index
    %122 = vector.load %arg7[%c0_105, %c0_106] : memref<128x3xf32, #tpu.memory_space<vmem>>, vector<128x3xf32>
    %c4_107 = arith.constant 4 : index
    %c0_108 = arith.constant 0 : index
    %c0_109 = arith.constant 0 : index
    %123 = vector.load %arg5[%c4_107, %c0_108, %c0_109] : memref<8x3x128xf32, #tpu.memory_space<vmem>>, vector<1x3x128xf32>
    %124 = vector.shape_cast %123 : vector<1x3x128xf32> to vector<3x128xf32>
    %cst_110 = arith.constant dense<0.000000e+00> : vector<128x128xf32>
    %125 = tpu.matmul %122, %124, %cst_110 {dimension_numbers = #tpu.dot_dimension_numbers<[1], [0], [0], [1], [0, 0, 1, 1], [], []>} : vector<128x3xf32>, vector<3x128xf32>, vector<128x128xf32> -> vector<128x128xf32>
    %cst_111 = arith.constant 9.99999997E-7 : f32
    %126 = vector.broadcast %cst_111 : f32 to vector<128x128xf32>
    %127 = arith.maximumf %125, %126 : vector<128x128xf32>
    %c0_112 = arith.constant 0 : index
    %c4_113 = arith.constant 4 : index
    %128 = vector.load %arg10[%c0_112, %c4_113] : memref<128x8xf32, #tpu.memory_space<vmem>>, vector<128x1xf32>
    %129 = arith.mulf %127, %127 : vector<128x128xf32>
    %130 = arith.mulf %129, %127 : vector<128x128xf32>
    %cst_114 = arith.constant dense<0.000000e+00> : vector<128xf32>
    %131 = vector.multi_reduction <add>, %130, %cst_114 [1] : vector<128x128xf32> to vector<128xf32>
    %132 = vector.shape_cast %131 : vector<128xf32> to vector<128x1xf32>
    %133 = arith.addf %128, %132 : vector<128x1xf32>
    %c0_115 = arith.constant 0 : index
    %c4_116 = arith.constant 4 : index
    %134 = vector.load %arg10[%c0_115, %c4_116] : memref<128x8xf32, #tpu.memory_space<vmem>>, vector<128x1xf32>
    tpu.vector_store %arg10[%c0_115, %c4_116], %133 {strides = array<i32>} : memref<128x8xf32, #tpu.memory_space<vmem>>, vector<128x1xf32>,
    %c0_117 = arith.constant 0 : index
    %c0_118 = arith.constant 0 : index
    %135 = vector.load %arg6[%c0_117, %c0_118] : memref<128x4xf32, #tpu.memory_space<vmem>>, vector<128x4xf32>
    %c5 = arith.constant 5 : index
    %c0_119 = arith.constant 0 : index
    %c0_120 = arith.constant 0 : index
    %136 = vector.load %arg4[%c5, %c0_119, %c0_120] : memref<8x4x128xf32, #tpu.memory_space<vmem>>, vector<1x4x128xf32>
    %137 = vector.shape_cast %136 : vector<1x4x128xf32> to vector<4x128xf32>
    %cst_121 = arith.constant dense<0.000000e+00> : vector<128x128xf32>
    %138 = tpu.matmul %135, %137, %cst_121 {dimension_numbers = #tpu.dot_dimension_numbers<[1], [0], [0], [1], [0, 0, 1, 1], [], []>} : vector<128x4xf32>, vector<4x128xf32>, vector<128x128xf32> -> vector<128x128xf32>
    %cst_122 = arith.constant 9.99999997E-7 : f32
    %139 = vector.broadcast %cst_122 : f32 to vector<128x128xf32>
    %140 = arith.maximumf %138, %139 : vector<128x128xf32>
    %c0_123 = arith.constant 0 : index
    %c5_124 = arith.constant 5 : index
    %141 = vector.load %arg9[%c0_123, %c5_124] : memref<128x8xf32, #tpu.memory_space<vmem>>, vector<128x1xf32>
    %142 = arith.mulf %140, %140 : vector<128x128xf32>
    %143 = arith.mulf %142, %140 : vector<128x128xf32>
    %cst_125 = arith.constant dense<0.000000e+00> : vector<128xf32>
    %144 = vector.multi_reduction <add>, %143, %cst_125 [1] : vector<128x128xf32> to vector<128xf32>
    %145 = vector.shape_cast %144 : vector<128xf32> to vector<128x1xf32>
    %146 = arith.addf %141, %145 : vector<128x1xf32>
    %c0_126 = arith.constant 0 : index
    %c5_127 = arith.constant 5 : index
    %147 = vector.load %arg9[%c0_126, %c5_127] : memref<128x8xf32, #tpu.memory_space<vmem>>, vector<128x1xf32>
    tpu.vector_store %arg9[%c0_126, %c5_127], %146 {strides = array<i32>} : memref<128x8xf32, #tpu.memory_space<vmem>>, vector<128x1xf32>,
    %c0_128 = arith.constant 0 : index
    %c0_129 = arith.constant 0 : index
    %148 = vector.load %arg7[%c0_128, %c0_129] : memref<128x3xf32, #tpu.memory_space<vmem>>, vector<128x3xf32>
    %c5_130 = arith.constant 5 : index
    %c0_131 = arith.constant 0 : index
    %c0_132 = arith.constant 0 : index
    %149 = vector.load %arg5[%c5_130, %c0_131, %c0_132] : memref<8x3x128xf32, #tpu.memory_space<vmem>>, vector<1x3x128xf32>
    %150 = vector.shape_cast %149 : vector<1x3x128xf32> to vector<3x128xf32>
    %cst_133 = arith.constant dense<0.000000e+00> : vector<128x128xf32>
    %151 = tpu.matmul %148, %150, %cst_133 {dimension_numbers = #tpu.dot_dimension_numbers<[1], [0], [0], [1], [0, 0, 1, 1], [], []>} : vector<128x3xf32>, vector<3x128xf32>, vector<128x128xf32> -> vector<128x128xf32>
    %cst_134 = arith.constant 9.99999997E-7 : f32
    %152 = vector.broadcast %cst_134 : f32 to vector<128x128xf32>
    %153 = arith.maximumf %151, %152 : vector<128x128xf32>
    %c0_135 = arith.constant 0 : index
    %c5_136 = arith.constant 5 : index
    %154 = vector.load %arg10[%c0_135, %c5_136] : memref<128x8xf32, #tpu.memory_space<vmem>>, vector<128x1xf32>
    %155 = arith.mulf %153, %153 : vector<128x128xf32>
    %156 = arith.mulf %155, %153 : vector<128x128xf32>
    %cst_137 = arith.constant dense<0.000000e+00> : vector<128xf32>
    %157 = vector.multi_reduction <add>, %156, %cst_137 [1] : vector<128x128xf32> to vector<128xf32>
    %158 = vector.shape_cast %157 : vector<128xf32> to vector<128x1xf32>
    %159 = arith.addf %154, %158 : vector<128x1xf32>
    %c0_138 = arith.constant 0 : index
    %c5_139 = arith.constant 5 : index
    %160 = vector.load %arg10[%c0_138, %c5_139] : memref<128x8xf32, #tpu.memory_space<vmem>>, vector<128x1xf32>
    tpu.vector_store %arg10[%c0_138, %c5_139], %159 {strides = array<i32>} : memref<128x8xf32, #tpu.memory_space<vmem>>, vector<128x1xf32>,
    %c0_140 = arith.constant 0 : index
    %c0_141 = arith.constant 0 : index
    %161 = vector.load %arg6[%c0_140, %c0_141] : memref<128x4xf32, #tpu.memory_space<vmem>>, vector<128x4xf32>
    %c6 = arith.constant 6 : index
    %c0_142 = arith.constant 0 : index
    %c0_143 = arith.constant 0 : index
    %162 = vector.load %arg4[%c6, %c0_142, %c0_143] : memref<8x4x128xf32, #tpu.memory_space<vmem>>, vector<1x4x128xf32>
    %163 = vector.shape_cast %162 : vector<1x4x128xf32> to vector<4x128xf32>
    %cst_144 = arith.constant dense<0.000000e+00> : vector<128x128xf32>
    %164 = tpu.matmul %161, %163, %cst_144 {dimension_numbers = #tpu.dot_dimension_numbers<[1], [0], [0], [1], [0, 0, 1, 1], [], []>} : vector<128x4xf32>, vector<4x128xf32>, vector<128x128xf32> -> vector<128x128xf32>
    %cst_145 = arith.constant 9.99999997E-7 : f32
    %165 = vector.broadcast %cst_145 : f32 to vector<128x128xf32>
    %166 = arith.maximumf %164, %165 : vector<128x128xf32>
    %c0_146 = arith.constant 0 : index
    %c6_147 = arith.constant 6 : index
    %167 = vector.load %arg9[%c0_146, %c6_147] : memref<128x8xf32, #tpu.memory_space<vmem>>, vector<128x1xf32>
    %168 = arith.mulf %166, %166 : vector<128x128xf32>
    %169 = arith.mulf %168, %166 : vector<128x128xf32>
    %cst_148 = arith.constant dense<0.000000e+00> : vector<128xf32>
    %170 = vector.multi_reduction <add>, %169, %cst_148 [1] : vector<128x128xf32> to vector<128xf32>
    %171 = vector.shape_cast %170 : vector<128xf32> to vector<128x1xf32>
    %172 = arith.addf %167, %171 : vector<128x1xf32>
    %c0_149 = arith.constant 0 : index
    %c6_150 = arith.constant 6 : index
    %173 = vector.load %arg9[%c0_149, %c6_150] : memref<128x8xf32, #tpu.memory_space<vmem>>, vector<128x1xf32>
    tpu.vector_store %arg9[%c0_149, %c6_150], %172 {strides = array<i32>} : memref<128x8xf32, #tpu.memory_space<vmem>>, vector<128x1xf32>,
    %c0_151 = arith.constant 0 : index
    %c0_152 = arith.constant 0 : index
    %174 = vector.load %arg7[%c0_151, %c0_152] : memref<128x3xf32, #tpu.memory_space<vmem>>, vector<128x3xf32>
    %c6_153 = arith.constant 6 : index
    %c0_154 = arith.constant 0 : index
    %c0_155 = arith.constant 0 : index
    %175 = vector.load %arg5[%c6_153, %c0_154, %c0_155] : memref<8x3x128xf32, #tpu.memory_space<vmem>>, vector<1x3x128xf32>
    %176 = vector.shape_cast %175 : vector<1x3x128xf32> to vector<3x128xf32>
    %cst_156 = arith.constant dense<0.000000e+00> : vector<128x128xf32>
    %177 = tpu.matmul %174, %176, %cst_156 {dimension_numbers = #tpu.dot_dimension_numbers<[1], [0], [0], [1], [0, 0, 1, 1], [], []>} : vector<128x3xf32>, vector<3x128xf32>, vector<128x128xf32> -> vector<128x128xf32>
    %cst_157 = arith.constant 9.99999997E-7 : f32
    %178 = vector.broadcast %cst_157 : f32 to vector<128x128xf32>
    %179 = arith.maximumf %177, %178 : vector<128x128xf32>
    %c0_158 = arith.constant 0 : index
    %c6_159 = arith.constant 6 : index
    %180 = vector.load %arg10[%c0_158, %c6_159] : memref<128x8xf32, #tpu.memory_space<vmem>>, vector<128x1xf32>
    %181 = arith.mulf %179, %179 : vector<128x128xf32>
    %182 = arith.mulf %181, %179 : vector<128x128xf32>
    %cst_160 = arith.constant dense<0.000000e+00> : vector<128xf32>
    %183 = vector.multi_reduction <add>, %182, %cst_160 [1] : vector<128x128xf32> to vector<128xf32>
    %184 = vector.shape_cast %183 : vector<128xf32> to vector<128x1xf32>
    %185 = arith.addf %180, %184 : vector<128x1xf32>
    %c0_161 = arith.constant 0 : index
    %c6_162 = arith.constant 6 : index
    %186 = vector.load %arg10[%c0_161, %c6_162] : memref<128x8xf32, #tpu.memory_space<vmem>>, vector<128x1xf32>
    tpu.vector_store %arg10[%c0_161, %c6_162], %185 {strides = array<i32>} : memref<128x8xf32, #tpu.memory_space<vmem>>, vector<128x1xf32>,
    %c0_163 = arith.constant 0 : index
    %c0_164 = arith.constant 0 : index
    %187 = vector.load %arg6[%c0_163, %c0_164] : memref<128x4xf32, #tpu.memory_space<vmem>>, vector<128x4xf32>
    %c7 = arith.constant 7 : index
    %c0_165 = arith.constant 0 : index
    %c0_166 = arith.constant 0 : index
    %188 = vector.load %arg4[%c7, %c0_165, %c0_166] : memref<8x4x128xf32, #tpu.memory_space<vmem>>, vector<1x4x128xf32>
    %189 = vector.shape_cast %188 : vector<1x4x128xf32> to vector<4x128xf32>
    %cst_167 = arith.constant dense<0.000000e+00> : vector<128x128xf32>
    %190 = tpu.matmul %187, %189, %cst_167 {dimension_numbers = #tpu.dot_dimension_numbers<[1], [0], [0], [1], [0, 0, 1, 1], [], []>} : vector<128x4xf32>, vector<4x128xf32>, vector<128x128xf32> -> vector<128x128xf32>
    %cst_168 = arith.constant 9.99999997E-7 : f32
    %191 = vector.broadcast %cst_168 : f32 to vector<128x128xf32>
    %192 = arith.maximumf %190, %191 : vector<128x128xf32>
    %c0_169 = arith.constant 0 : index
    %c7_170 = arith.constant 7 : index
    %193 = vector.load %arg9[%c0_169, %c7_170] : memref<128x8xf32, #tpu.memory_space<vmem>>, vector<128x1xf32>
    %194 = arith.mulf %192, %192 : vector<128x128xf32>
    %195 = arith.mulf %194, %192 : vector<128x128xf32>
    %cst_171 = arith.constant dense<0.000000e+00> : vector<128xf32>
    %196 = vector.multi_reduction <add>, %195, %cst_171 [1] : vector<128x128xf32> to vector<128xf32>
    %197 = vector.shape_cast %196 : vector<128xf32> to vector<128x1xf32>
    %198 = arith.addf %193, %197 : vector<128x1xf32>
    %c0_172 = arith.constant 0 : index
    %c7_173 = arith.constant 7 : index
    %199 = vector.load %arg9[%c0_172, %c7_173] : memref<128x8xf32, #tpu.memory_space<vmem>>, vector<128x1xf32>
    tpu.vector_store %arg9[%c0_172, %c7_173], %198 {strides = array<i32>} : memref<128x8xf32, #tpu.memory_space<vmem>>, vector<128x1xf32>,
    %c0_174 = arith.constant 0 : index
    %c0_175 = arith.constant 0 : index
    %200 = vector.load %arg7[%c0_174, %c0_175] : memref<128x3xf32, #tpu.memory_space<vmem>>, vector<128x3xf32>
    %c7_176 = arith.constant 7 : index
    %c0_177 = arith.constant 0 : index
    %c0_178 = arith.constant 0 : index
    %201 = vector.load %arg5[%c7_176, %c0_177, %c0_178] : memref<8x3x128xf32, #tpu.memory_space<vmem>>, vector<1x3x128xf32>
    %202 = vector.shape_cast %201 : vector<1x3x128xf32> to vector<3x128xf32>
    %cst_179 = arith.constant dense<0.000000e+00> : vector<128x128xf32>
    %203 = tpu.matmul %200, %202, %cst_179 {dimension_numbers = #tpu.dot_dimension_numbers<[1], [0], [0], [1], [0, 0, 1, 1], [], []>} : vector<128x3xf32>, vector<3x128xf32>, vector<128x128xf32> -> vector<128x128xf32>
    %cst_180 = arith.constant 9.99999997E-7 : f32
    %204 = vector.broadcast %cst_180 : f32 to vector<128x128xf32>
    %205 = arith.maximumf %203, %204 : vector<128x128xf32>
    %c0_181 = arith.constant 0 : index
    %c7_182 = arith.constant 7 : index
    %206 = vector.load %arg10[%c0_181, %c7_182] : memref<128x8xf32, #tpu.memory_space<vmem>>, vector<128x1xf32>
    %207 = arith.mulf %205, %205 : vector<128x128xf32>
    %208 = arith.mulf %207, %205 : vector<128x128xf32>
    %cst_183 = arith.constant dense<0.000000e+00> : vector<128xf32>
    %209 = vector.multi_reduction <add>, %208, %cst_183 [1] : vector<128x128xf32> to vector<128xf32>
    %210 = vector.shape_cast %209 : vector<128xf32> to vector<128x1xf32>
    %211 = arith.addf %206, %210 : vector<128x1xf32>
    %c0_184 = arith.constant 0 : index
    %c7_185 = arith.constant 7 : index
    %212 = vector.load %arg10[%c0_184, %c7_185] : memref<128x8xf32, #tpu.memory_space<vmem>>, vector<128x1xf32>
    tpu.vector_store %arg10[%c0_184, %c7_185], %211 {strides = array<i32>} : memref<128x8xf32, #tpu.memory_space<vmem>>, vector<128x1xf32>,
    %c1_i32 = arith.constant 1 : i32
    %213 = arith.cmpi eq, %arg1, %c1_i32 : i32
    %214 = arith.extui %213 : i1 to i32
    %c0_i32_186 = arith.constant 0 : i32
    %215 = arith.cmpi ne, %214, %c0_i32_186 : i32
    scf.if %215 {
      %c0_187 = arith.constant 0 : index
      %c0_188 = arith.constant 0 : index
      %216 = vector.load %arg9[%c0_187, %c0_188] : memref<128x8xf32, #tpu.memory_space<vmem>>, vector<128x8xf32>
      %cst_189 = arith.constant 3.906250e-03 : f32
      %217 = vector.broadcast %cst_189 : f32 to vector<128x8xf32>
      %218 = arith.mulf %216, %217 : vector<128x8xf32>
      %cst_190 = arith.constant 1.000000e+00 : f32
      %219 = arith.divf %cst_190, %3 : f32
      %220 = vector.broadcast %219 : f32 to vector<128x8xf32>
      %221 = math.powf %218, %220 : vector<128x8xf32>
      %c0_191 = arith.constant 0 : index
      %c0_192 = arith.constant 0 : index
      %222 = vector.load %arg10[%c0_191, %c0_192] : memref<128x8xf32, #tpu.memory_space<vmem>>, vector<128x8xf32>
      %cst_193 = arith.constant 3.906250e-03 : f32
      %223 = vector.broadcast %cst_193 : f32 to vector<128x8xf32>
      %224 = arith.mulf %222, %223 : vector<128x8xf32>
      %cst_194 = arith.constant 1.000000e+00 : f32
      %225 = arith.divf %cst_194, %4 : f32
      %226 = vector.broadcast %225 : f32 to vector<128x8xf32>
      %227 = math.powf %224, %226 : vector<128x8xf32>
      %228 = arith.addf %221, %227 : vector<128x8xf32>
      %c0_195 = arith.constant 0 : index
      %c0_196 = arith.constant 0 : index
      %c0_197 = arith.constant 0 : index
      %229 = vector.load %arg8[%c0_195, %c0_196, %c0_197] : memref<1x128x8xf32, #tpu.memory_space<vmem>>, vector<1x128x8xf32>
      %230 = vector.shape_cast %229 : vector<1x128x8xf32> to vector<128x8xf32>
      %231 = vector.shape_cast %228 : vector<128x8xf32> to vector<1x128x8xf32>
      tpu.vector_store %arg8[%c0_195, %c0_196, %c0_197], %231 {strides = array<i32>} : memref<1x128x8xf32, #tpu.memory_space<vmem>>, vector<1x128x8xf32>,
    } else {
    }
    return
  }
  func.func @transform_0(%arg0: i32, %arg1: i32) -> i32 {
    %c0_i32 = arith.constant 0 : i32
    %c0_i32_0 = arith.constant 0 : i32
    return %c0_i32 : i32
  }
  func.func @transform_1(%arg0: i32, %arg1: i32) -> i32 {
    %c0_i32 = arith.constant 0 : i32
    %c0_i32_0 = arith.constant 0 : i32
    return %c0_i32 : i32
  }
  func.func @transform_2(%arg0: i32, %arg1: i32) -> (i32, i32, i32) {
    %c0_i32 = arith.constant 0 : i32
    %c0_i32_0 = arith.constant 0 : i32
    return %arg0, %c0_i32, %arg1 : i32, i32, i32
  }
  func.func @transform_3(%arg0: i32, %arg1: i32) -> (i32, i32, i32) {
    %c0_i32 = arith.constant 0 : i32
    %c0_i32_0 = arith.constant 0 : i32
    return %arg0, %c0_i32, %arg1 : i32, i32, i32
  }
  func.func @transform_4(%arg0: i32, %arg1: i32) -> (i32, i32) {
    %c0_i32 = arith.constant 0 : i32
    %c0_i32_0 = arith.constant 0 : i32
    %c0_i32_1 = arith.constant 0 : i32
    return %c0_i32, %c0_i32_0 : i32, i32
  }
  func.func @transform_5(%arg0: i32, %arg1: i32) -> (i32, i32) {
    %c0_i32 = arith.constant 0 : i32
    %c0_i32_0 = arith.constant 0 : i32
    %c0_i32_1 = arith.constant 0 : i32
    return %c0_i32, %c0_i32_0 : i32, i32
  }
  func.func @transform_6(%arg0: i32, %arg1: i32) -> (i32, i32, i32) {
    %c0_i32 = arith.constant 0 : i32
    %c0_i32_0 = arith.constant 0 : i32
    %c0_i32_1 = arith.constant 0 : i32
    return %arg0, %c0_i32, %c0_i32_0 : i32, i32, i32
  }
}

</mosaic_0001>

<llo_original>
// kernel: tpu_custom_call.1
$region0: #{tpu_custom_call.1}
  #allocation0 [shape = 'u32[]', space=smem, size = 0x4, offset = 0x4, fixed_abs, tag = 'smem constant byte address 0x4 - core index']
  #allocation1 [shape = 'u32[144,128]{1,0:T(1,128)}', space=vmem, size = 0x12000, scoped, tag = 'internal scratch']
  #allocation2 [shape = 'f32[128,8]{1,0:T(8,128)}', space=vmem, size = 0x10000, scoped, tag = 'scratch operand']
  #allocation3 [shape = 'f32[128,8]{1,0:T(8,128)}', space=vmem, size = 0x10000, scoped, tag = 'scratch operand']
  #allocation4 [shape = 'f32[1]{0:T(128)S(6)}', space=smem, size = 0x200, scoped, tag = 'scoped memory for tpu_custom_call.1']
  #allocation5 [shape = 'f32[1]{0:T(128)S(6)}', space=smem, size = 0x200, scoped, tag = 'scoped memory for tpu_custom_call.1']
  %s0 = inlined_call_operand.<no memory space> [shape: f32[1], index: 0, kind: input, shape index: {}]
  %s1 = inlined_call_operand.<no memory space> [shape: f32[1], index: 1, kind: input, shape index: {}]
  %s2 = inlined_call_operand.vmem [shape: f32[16,4,256], index: 2, kind: input, shape index: {}]
  %s3 = inlined_call_operand.vmem [shape: f32[16,3,256], index: 3, kind: input, shape index: {}]
  %s4 = inlined_call_operand.vmem [shape: f32[128,4], index: 4, kind: input, shape index: {}]
  %s5 = inlined_call_operand.vmem [shape: f32[128,3], index: 5, kind: input, shape index: {}]
  %s6 = inlined_call_operand.vmem [shape: f32[2,128,8], index: 6, kind: output, shape index: {}]
  %s7 = sld [smem:[#allocation0]]
  $region147: #{tpu_custom_call.1} parent=0
    _
  %s9 = ssub.s32 1, %s7
  %s10 = scalar_select 0, %s9, %s7
  %11 = sst [smem:[#allocation4]] %s0
  %12 = sst [smem:[#allocation5]] %s1
  $region1: #{tpu_custom_call.1} parent=0
    #allocation6 [shape = 'u8[32768]{0}', space=vmem, size = 0x8000, scoped, tag = 'input window, operand 2']
    #allocation7 [shape = 'u8[32768]{0}', space=vmem, size = 0x8000, scoped, tag = 'input window, operand 3']
    loop: start=0, step=1, limit=6
    $region2: #{tpu_custom_call.1} parent=1 // loop_pre_header
      _
    $region3: #{tpu_custom_call.1} parent=1 // loop_header
      %s14 = sphi 0, %s18
      %p15 = scmp.ge.s32.totalorder %s14, 6
      %s21 = sphi 0, %s33
      %s22 = sphi 0, %s29
      %s23 = sphi 0, %s21
      %s24 = sphi 0, %s22
      %s25 = sphi 0, %s23
      %s26 = sphi 0, %s24
      %s34 = sphi 0, %s34
      %s36 = sphi 0, %s34
      %s37 = sphi 0, %s36
      %s51 = sphi 0, %s37
      %s55 = sphi 0, %s55
      %s57 = sphi 0, %s55
      %s58 = sphi 0, %s57
      %s72 = sphi 0, %s58
      %s80 = sphi 0, %s82
      %s83 = sphi 0, %s80
      %s84 = sphi 0, %s83
      %s100 = sphi 0, %s84
      %s108 = sphi 0, %s110
      %s111 = sphi 0, %s108
      %s112 = sphi 0, %s111
      %s128 = sphi 0, %s112
      %s132 = sphi 0, %s132
      %s134 = sphi 0, %s132
      %s135 = sphi 0, %s134
      %s149 = sphi 0, %s135
      %s153 = sphi 0, %s153
      %s155 = sphi 0, %s153
      %s156 = sphi 0, %s155
      %s170 = sphi 0, %s156
      %s176 = sphi 0, %s178
      %s179 = sphi 0, %s176
      %s180 = sphi 0, %s179
      %s196 = sphi 0, %s180
    $region4: #{tpu_custom_call.1} parent=1 // loop_header_branch
      %17 = sbr.rel (%p15) target = $region8
    $region5: #{tpu_custom_call.1} parent=1 // loop_body
      %s19 = ssub.s32 %s14, 1
      %s20 = ssub.s32 %s14, 2
      %s27 = sadd.s32 1, %s22
      %p28 = scmp.ge.s32.totalorder %s27, 2
      %s29 = scalar_select %p28, 0, %s27
      %s30 = sadd.s32 1, %s21
      %s31 = scalar_select %p28, %s30, %s21
      %p32 = scmp.ge.s32.totalorder %s31, 2
      %s33 = scalar_select %p32, 0, %s31
      %s35 = sadd.s32 %s34, 1
      %p38 = scmp.eq.s32.totalorder %s14, 3
      %p39 = scmp.ne.s32.totalorder %s34, %s36
      %p40 = scmp.eq.s32.totalorder %s14, 0
      %p41 = por %p39, %p40
      %p42 = scmp.ne.s32.totalorder %s34, %s36
      %p43 = scmp.eq.s32.totalorder %s19, 3
      %p44 = por %p42, %p43
      %p45 = scmp.ne.s32.totalorder %s36, %s37
      %p46 = scmp.eq.s32.totalorder %s19, 0
      %p47 = por %p45, %p46
      %p48 = scmp.ne.s32.totalorder %s36, %s37
      %p49 = scmp.eq.s32.totalorder %s20, 3
      %p50 = por %p48, %p49
      %p52 = scmp.ne.s32.totalorder %s37, %s51
      %p53 = scmp.eq.s32.totalorder %s20, 0
      %p54 = por %p52, %p53
      %s56 = sadd.s32 %s55, 1
      %p59 = scmp.eq.s32.totalorder %s14, 3
      %p60 = scmp.ne.s32.totalorder %s55, %s57
      %p61 = scmp.eq.s32.totalorder %s14, 0
      %p62 = por %p60, %p61
      %p63 = scmp.ne.s32.totalorder %s55, %s57
      %p64 = scmp.eq.s32.totalorder %s19, 3
      %p65 = por %p63, %p64
      %p66 = scmp.ne.s32.totalorder %s57, %s58
      %p67 = scmp.eq.s32.totalorder %s19, 0
      %p68 = por %p66, %p67
      %p69 = scmp.ne.s32.totalorder %s57, %s58
      %p70 = scmp.eq.s32.totalorder %s20, 3
      %p71 = por %p69, %p70
      %p73 = scmp.ne.s32.totalorder %s58, %s72
      %p74 = scmp.eq.s32.totalorder %s20, 0
      %p75 = por %p73, %p74
      %s76 = ssub.s32 %s21, %s33
      %s77 = ssub.s32 %s22, %s29
      %s78 = sor.u32 %s76, %s77
      %p79 = scmp.eq.s32.totalorder %s78, 0
      %s81 = sadd.s32 %s80, 1
      %s82 = scalar_select %p79, %s80, %s81
      %p85 = pneg %p79
      %p86 = scmp.eq.s32.totalorder %s14, 3
      %p87 = por %p85, %p86
      %p88 = scmp.ne.s32.totalorder %s80, %s83
      %p89 = scmp.eq.s32.totalorder %s14, 0
      %p90 = por %p88, %p89
      %p91 = scmp.ne.s32.totalorder %s80, %s83
      %p92 = scmp.eq.s32.totalorder %s19, 3
      %p93 = por %p91, %p92
      %p94 = scmp.ne.s32.totalorder %s83, %s84
      %p95 = scmp.eq.s32.totalorder %s19, 0
      %p96 = por %p94, %p95
      %p97 = scmp.ne.s32.totalorder %s83, %s84
      %p98 = scmp.eq.s32.totalorder %s20, 3
      %p99 = por %p97, %p98
      %p101 = scmp.ne.s32.totalorder %s84, %s100
      %p102 = scmp.eq.s32.totalorder %s20, 0
      %p103 = por %p101, %p102
      %s104 = ssub.s32 %s21, %s33
      %s105 = ssub.s32 %s22, %s29
      %s106 = sor.u32 %s104, %s105
      %p107 = scmp.eq.s32.totalorder %s106, 0
      %s109 = sadd.s32 %s108, 1
      %s110 = scalar_select %p107, %s108, %s109
      %p113 = pneg %p107
      %p114 = scmp.eq.s32.totalorder %s14, 3
      %p115 = por %p113, %p114
      %p116 = scmp.ne.s32.totalorder %s108, %s111
      %p117 = scmp.eq.s32.totalorder %s14, 0
      %p118 = por %p116, %p117
      %p119 = scmp.ne.s32.totalorder %s108, %s111
      %p120 = scmp.eq.s32.totalorder %s19, 3
      %p121 = por %p119, %p120
      %p122 = scmp.ne.s32.totalorder %s111, %s112
      %p123 = scmp.eq.s32.totalorder %s19, 0
      %p124 = por %p122, %p123
      %p125 = scmp.ne.s32.totalorder %s111, %s112
      %p126 = scmp.eq.s32.totalorder %s20, 3
      %p127 = por %p125, %p126
      %p129 = scmp.ne.s32.totalorder %s112, %s128
      %p130 = scmp.eq.s32.totalorder %s20, 0
      %p131 = por %p129, %p130
      %s133 = sadd.s32 %s132, 1
      %p136 = scmp.eq.s32.totalorder %s14, 3
      %p137 = scmp.ne.s32.totalorder %s132, %s134
      %p138 = scmp.eq.s32.totalorder %s14, 0
      %p139 = por %p137, %p138
      %p140 = scmp.ne.s32.totalorder %s132, %s134
      %p141 = scmp.eq.s32.totalorder %s19, 3
      %p142 = por %p140, %p141
      %p143 = scmp.ne.s32.totalorder %s134, %s135
      %p144 = scmp.eq.s32.totalorder %s19, 0
      %p145 = por %p143, %p144
      %p146 = scmp.ne.s32.totalorder %s134, %s135
      %p147 = scmp.eq.s32.totalorder %s20, 3
      %p148 = por %p146, %p147
      %p150 = scmp.ne.s32.totalorder %s135, %s149
      %p151 = scmp.eq.s32.totalorder %s20, 0
      %p152 = por %p150, %p151
      %s154 = sadd.s32 %s153, 1
      %p157 = scmp.eq.s32.totalorder %s14, 3
      %p158 = scmp.ne.s32.totalorder %s153, %s155
      %p159 = scmp.eq.s32.totalorder %s14, 0
      %p160 = por %p158, %p159
      %p161 = scmp.ne.s32.totalorder %s153, %s155
      %p162 = scmp.eq.s32.totalorder %s19, 3
      %p163 = por %p161, %p162
      %p164 = scmp.ne.s32.totalorder %s155, %s156
      %p165 = scmp.eq.s32.totalorder %s19, 0
      %p166 = por %p164, %p165
      %p167 = scmp.ne.s32.totalorder %s155, %s156
      %p168 = scmp.eq.s32.totalorder %s20, 3
      %p169 = por %p167, %p168
      %p171 = scmp.ne.s32.totalorder %s156, %s170
      %p172 = scmp.eq.s32.totalorder %s20, 0
      %p173 = por %p171, %p172
      %s174 = ssub.s32 %s21, %s33
      %p175 = scmp.eq.s32.totalorder %s174, 0
      %s177 = sadd.s32 %s176, 1
      %s178 = scalar_select %p175, %s176, %s177
      %p181 = pneg %p175
      %p182 = scmp.eq.s32.totalorder %s14, 3
      %p183 = por %p181, %p182
      %p184 = scmp.ne.s32.totalorder %s176, %s179
      %p185 = scmp.eq.s32.totalorder %s14, 0
      %p186 = por %p184, %p185
      %p187 = scmp.ne.s32.totalorder %s176, %s179
      %p188 = scmp.eq.s32.totalorder %s19, 3
      %p189 = por %p187, %p188
      %p190 = scmp.ne.s32.totalorder %s179, %s180
      %p191 = scmp.eq.s32.totalorder %s19, 0
      %p192 = por %p190, %p191
      %p193 = scmp.ne.s32.totalorder %s179, %s180
      %p194 = scmp.eq.s32.totalorder %s20, 3
      %p195 = por %p193, %p194
      %p197 = scmp.ne.s32.totalorder %s180, %s196
      %p198 = scmp.eq.s32.totalorder %s20, 0
      %p199 = por %p197, %p198
      %p200 = scmp.le.s32.totalorder 1, %s14
      %p201 = scmp.lt.s32.totalorder %s14, 5
      %p202 = pnand %p200, %p201
      %p203 = pneg %p202
      // Predicated region
      $region9: #{tpu_custom_call.1} parent=5 // pred_check
        _
      $region10: #{tpu_custom_call.1} parent=5 // pred_check_branch
        %205 = sbr.rel (%p202) target = $region12
      $region11: #{tpu_custom_call.1} parent=5 // pred_region
        %s206 = ssub.s32 %s14, 1
        // Predicated region
        $region13: #{tpu_custom_call.1} parent=11 // pred_check
          %p207 = pneg %p47
        $region14: #{tpu_custom_call.1} parent=11 // pred_check_branch
          %209 = sbr.rel (%p207) target = $region16
        $region15: #{tpu_custom_call.1} parent=11 // pred_region
          _
        $region16: #{tpu_custom_call.1} parent=11 // pred_fallthru
          _
        // Predicated region
        $region17: #{tpu_custom_call.1} parent=11 // pred_check
          %p210 = pneg %p68
        $region18: #{tpu_custom_call.1} parent=11 // pred_check_branch
          %212 = sbr.rel (%p210) target = $region20
        $region19: #{tpu_custom_call.1} parent=11 // pred_region
          _
        $region20: #{tpu_custom_call.1} parent=11 // pred_fallthru
          _
        // Predicated region
        $region21: #{tpu_custom_call.1} parent=11 // pred_check
          %p213 = pneg %p145
        $region22: #{tpu_custom_call.1} parent=11 // pred_check_branch
          %215 = sbr.rel (%p213) target = $region24
        $region23: #{tpu_custom_call.1} parent=11 // pred_region
          _
        $region24: #{tpu_custom_call.1} parent=11 // pred_fallthru
          _
        // Predicated region
        $region25: #{tpu_custom_call.1} parent=11 // pred_check
          %p216 = pneg %p166
        $region26: #{tpu_custom_call.1} parent=11 // pred_check_branch
          %218 = sbr.rel (%p216) target = $region28
        $region27: #{tpu_custom_call.1} parent=11 // pred_region
          _
        $region28: #{tpu_custom_call.1} parent=11 // pred_fallthru
          _
      $region12: #{tpu_custom_call.1} parent=5 // pred_fallthru
        _
      %p219 = scmp.lt.s32.totalorder %s14, 4
      // Predicated region
      $region29: #{tpu_custom_call.1} parent=5 // pred_check
        %p220 = pneg %p219
      $region30: #{tpu_custom_call.1} parent=5 // pred_check_branch
        %222 = sbr.rel (%p220) target = $region32
      $region31: #{tpu_custom_call.1} parent=5 // pred_region
        // Predicated region
        $region33: #{tpu_custom_call.1} parent=31 // pred_check
          %p223 = pneg %p90
        $region34: #{tpu_custom_call.1} parent=31 // pred_check_branch
          %225 = sbr.rel (%p223) target = $region36
        $region35: #{tpu_custom_call.1} parent=31 // pred_region
          %s226 = sand.u32 %s80, 1
          %s227 = sand.u32 %s80, 1
          %s228 = smul.addr %s227, 32
          %s229 = scalar_lea.vmem [#allocation6], %s228
          %s230 = smul.u32 8, %s21
          %s231 = smul.addr %s230, 2
          %s232 = sadd.s32 %s22, %s231
          %s233 = smul.addr %s232, 4
          %s234 = scalar_lea.vmem %s2, %s233
          // Predicated region
          $region37: #{tpu_custom_call.1} parent=35 // pred_check
            _
          $region38: #{tpu_custom_call.1} parent=35 // pred_check_branch
            %236 = sbr.rel (0) target = $region40
          $region39: #{tpu_custom_call.1} parent=35 // pred_region
            // Predicated region
            $region41: #{tpu_custom_call.1} parent=39 // pred_check
              _
            $region42: #{tpu_custom_call.1} parent=39 // pred_check_branch
              %238 = sbr.rel target = $region44
            $region43: #{tpu_custom_call.1} parent=39 // pred_region
              // Predicated region
              $region56: #{tpu_custom_call.1} parent=43 // pred_check
                _
              $region57: #{tpu_custom_call.1} parent=43 // pred_check_branch
                %267 = sbr.rel (0) target = $region59
              $region58: #{tpu_custom_call.1} parent=43 // pred_region
                loop: start=0, step=1, limit=1
                $region60: #{tpu_custom_call.1} parent=58 // loop_pre_header
                  _
                $region61: #{tpu_custom_call.1} parent=58 // loop_header
                  %s269 = sphi 0, %s273
                  %p270 = scmp.ge.s32.totalorder %s269, 1
                  %s274 = sphi %s234, %s234
                  %s275 = sphi %s229, %s229
                $region62: #{tpu_custom_call.1} parent=58 // loop_header_branch
                  %272 = sbr.rel (%p270) target = $region66
                $region63: #{tpu_custom_call.1} parent=58 // loop_body
                  _
                $region64: #{tpu_custom_call.1} parent=58 // loop_footer
                  %s273 = sadd.s32 1, %s269
                $region65: #{tpu_custom_call.1} parent=58 // loop_footer_branch
                  %268 = sbr.rel target = $region61
                $region66: #{tpu_custom_call.1} parent=58 // loop_exit
                  _
                loop: start=0, step=1, limit=1
                $region67: #{tpu_custom_call.1} parent=58 // loop_pre_header
                  _
                $region68: #{tpu_custom_call.1} parent=58 // loop_header
                  %s278 = sphi 0, %s282
                  %p279 = scmp.ge.s32.totalorder %s278, 1
                  %s283 = sphi %s234, %s234
                  %s284 = sphi %s229, %s229
                $region69: #{tpu_custom_call.1} parent=58 // loop_header_branch
                  %281 = sbr.rel (%p279) target = $region73
                $region70: #{tpu_custom_call.1} parent=58 // loop_body
                  %v285 = vld [vmem:[%s283] sm:$0xf]
                  %286 = vst [vmem:[%s284] sm:$0xf] %v285
                  %v287 = vld [vmem:[%s283 + $0x8] sm:$0xf]
                  %288 = vst [vmem:[%s284 + $0x4] sm:$0xf] %v287
                  %v289 = vld [vmem:[%s283 + $0x10] sm:$0xf]
                  %290 = vst [vmem:[%s284 + $0x8] sm:$0xf] %v289
                  %v291 = vld [vmem:[%s283 + $0x18] sm:$0xf]
                  %292 = vst [vmem:[%s284 + $0xc] sm:$0xf] %v291
                  %v293 = vld [vmem:[%s283 + $0x20] sm:$0xf]
                  %294 = vst [vmem:[%s284 + $0x10] sm:$0xf] %v293
                  %v295 = vld [vmem:[%s283 + $0x28] sm:$0xf]
                  %296 = vst [vmem:[%s284 + $0x14] sm:$0xf] %v295
                  %v297 = vld [vmem:[%s283 + $0x30] sm:$0xf]
                  %298 = vst [vmem:[%s284 + $0x18] sm:$0xf] %v297
                  %v299 = vld [vmem:[%s283 + $0x38] sm:$0xf]
                  %300 = vst [vmem:[%s284 + $0x1c] sm:$0xf] %v299
                $region71: #{tpu_custom_call.1} parent=58 // loop_footer
                  %s282 = sadd.s32 1, %s278
                $region72: #{tpu_custom_call.1} parent=58 // loop_footer_branch
                  %277 = sbr.rel target = $region68
                $region73: #{tpu_custom_call.1} parent=58 // loop_exit
                  _
              $region59: #{tpu_custom_call.1} parent=43 // pred_fallthru
                _
            $region44: #{tpu_custom_call.1} parent=39 // pred_fallthru
              _
            // Predicated region
            $region45: #{tpu_custom_call.1} parent=39 // pred_check
              _
            $region46: #{tpu_custom_call.1} parent=39 // pred_check_branch
              %240 = sbr.rel (0) target = $region48
            $region47: #{tpu_custom_call.1} parent=39 // pred_region
              loop: start=0, step=1, limit=1
              $region49: #{tpu_custom_call.1} parent=47 // loop_pre_header
                _
              $region50: #{tpu_custom_call.1} parent=47 // loop_header
                %s243 = sphi 0, %s247
                %p244 = scmp.ge.s32.totalorder %s243, 1
                %s248 = sphi %s234, %s234
                %s249 = sphi %s229, %s229
              $region51: #{tpu_custom_call.1} parent=47 // loop_header_branch
                %246 = sbr.rel (%p244) target = $region55
              $region52: #{tpu_custom_call.1} parent=47 // loop_body
                %v250 = vld [vmem:[%s248] sm:$0xf]
                %251 = vst [vmem:[%s249] sm:$0xf] %v250
                %v252 = vld [vmem:[%s248 + $0x8] sm:$0xf]
                %253 = vst [vmem:[%s249 + $0x4] sm:$0xf] %v252
                %v254 = vld [vmem:[%s248 + $0x10] sm:$0xf]
                %255 = vst [vmem:[%s249 + $0x8] sm:$0xf] %v254
                %v256 = vld [vmem:[%s248 + $0x18] sm:$0xf]
                %257 = vst [vmem:[%s249 + $0xc] sm:$0xf] %v256
                %v258 = vld [vmem:[%s248 + $0x20] sm:$0xf]
                %259 = vst [vmem:[%s249 + $0x10] sm:$0xf] %v258
                %v260 = vld [vmem:[%s248 + $0x28] sm:$0xf]
                %261 = vst [vmem:[%s249 + $0x14] sm:$0xf] %v260
                %v262 = vld [vmem:[%s248 + $0x30] sm:$0xf]
                %263 = vst [vmem:[%s249 + $0x18] sm:$0xf] %v262
                %v264 = vld [vmem:[%s248 + $0x38] sm:$0xf]
                %265 = vst [vmem:[%s249 + $0x1c] sm:$0xf] %v264
              $region53: #{tpu_custom_call.1} parent=47 // loop_footer
                %s247 = sadd.s32 1, %s243
              $region54: #{tpu_custom_call.1} parent=47 // loop_footer_branch
                %242 = sbr.rel target = $region50
              $region55: #{tpu_custom_call.1} parent=47 // loop_exit
                _
            $region48: #{tpu_custom_call.1} parent=39 // pred_fallthru
              _
          $region40: #{tpu_custom_call.1} parent=35 // pred_fallthru
            _
          %301 = vnop
        $region36: #{tpu_custom_call.1} parent=31 // pred_fallthru
          _
        // Predicated region
        $region74: #{tpu_custom_call.1} parent=31 // pred_check
          %p302 = pneg %p118
        $region75: #{tpu_custom_call.1} parent=31 // pred_check_branch
          %304 = sbr.rel (%p302) target = $region77
        $region76: #{tpu_custom_call.1} parent=31 // pred_region
          %s305 = sand.u32 %s108, 1
          %s306 = sand.u32 %s108, 1
          %s307 = smul.addr %s306, 32
          %s308 = scalar_lea.vmem [#allocation7], %s307
          %s309 = smul.u32 8, %s21
          %s310 = smul.addr %s309, 2
          %s311 = sadd.s32 %s22, %s310
          %s312 = smul.addr %s311, 4
          %s313 = scalar_lea.vmem %s3, %s312
          // Predicated region
          $region78: #{tpu_custom_call.1} parent=76 // pred_check
            _
          $region79: #{tpu_custom_call.1} parent=76 // pred_check_branch
            %315 = sbr.rel (0) target = $region81
          $region80: #{tpu_custom_call.1} parent=76 // pred_region
            // Predicated region
            $region82: #{tpu_custom_call.1} parent=80 // pred_check
              _
            $region83: #{tpu_custom_call.1} parent=80 // pred_check_branch
              %317 = sbr.rel target = $region85
            $region84: #{tpu_custom_call.1} parent=80 // pred_region
              // Predicated region
              $region97: #{tpu_custom_call.1} parent=84 // pred_check
                _
              $region98: #{tpu_custom_call.1} parent=84 // pred_check_branch
                %346 = sbr.rel (0) target = $region100
              $region99: #{tpu_custom_call.1} parent=84 // pred_region
                loop: start=0, step=1, limit=1
                $region101: #{tpu_custom_call.1} parent=99 // loop_pre_header
                  _
                $region102: #{tpu_custom_call.1} parent=99 // loop_header
                  %s348 = sphi 0, %s352
                  %p349 = scmp.ge.s32.totalorder %s348, 1
                  %s353 = sphi %s313, %s313
                  %s354 = sphi %s308, %s308
                $region103: #{tpu_custom_call.1} parent=99 // loop_header_branch
                  %351 = sbr.rel (%p349) target = $region107
                $region104: #{tpu_custom_call.1} parent=99 // loop_body
                  _
                $region105: #{tpu_custom_call.1} parent=99 // loop_footer
                  %s352 = sadd.s32 1, %s348
                $region106: #{tpu_custom_call.1} parent=99 // loop_footer_branch
                  %347 = sbr.rel target = $region102
                $region107: #{tpu_custom_call.1} parent=99 // loop_exit
                  _
                loop: start=0, step=1, limit=1
                $region108: #{tpu_custom_call.1} parent=99 // loop_pre_header
                  _
                $region109: #{tpu_custom_call.1} parent=99 // loop_header
                  %s357 = sphi 0, %s361
                  %p358 = scmp.ge.s32.totalorder %s357, 1
                  %s362 = sphi %s313, %s313
                  %s363 = sphi %s308, %s308
                $region110: #{tpu_custom_call.1} parent=99 // loop_header_branch
                  %360 = sbr.rel (%p358) target = $region114
                $region111: #{tpu_custom_call.1} parent=99 // loop_body
                  %v364 = vld [vmem:[%s362] sm:$0xf]
                  %365 = vst [vmem:[%s363] sm:$0xf] %v364
                  %v366 = vld [vmem:[%s362 + $0x8] sm:$0xf]
                  %367 = vst [vmem:[%s363 + $0x4] sm:$0xf] %v366
                  %v368 = vld [vmem:[%s362 + $0x10] sm:$0xf]
                  %369 = vst [vmem:[%s363 + $0x8] sm:$0xf] %v368
                  %v370 = vld [vmem:[%s362 + $0x18] sm:$0xf]
                  %371 = vst [vmem:[%s363 + $0xc] sm:$0xf] %v370
                  %v372 = vld [vmem:[%s362 + $0x20] sm:$0xf]
                  %373 = vst [vmem:[%s363 + $0x10] sm:$0xf] %v372
                  %v374 = vld [vmem:[%s362 + $0x28] sm:$0xf]
                  %375 = vst [vmem:[%s363 + $0x14] sm:$0xf] %v374
                  %v376 = vld [vmem:[%s362 + $0x30] sm:$0xf]
                  %377 = vst [vmem:[%s363 + $0x18] sm:$0xf] %v376
                  %v378 = vld [vmem:[%s362 + $0x38] sm:$0xf]
                  %379 = vst [vmem:[%s363 + $0x1c] sm:$0xf] %v378
                $region112: #{tpu_custom_call.1} parent=99 // loop_footer
                  %s361 = sadd.s32 1, %s357
                $region113: #{tpu_custom_call.1} parent=99 // loop_footer_branch
                  %356 = sbr.rel target = $region109
                $region114: #{tpu_custom_call.1} parent=99 // loop_exit
                  _
              $region100: #{tpu_custom_call.1} parent=84 // pred_fallthru
                _
            $region85: #{tpu_custom_call.1} parent=80 // pred_fallthru
              _
            // Predicated region
            $region86: #{tpu_custom_call.1} parent=80 // pred_check
              _
            $region87: #{tpu_custom_call.1} parent=80 // pred_check_branch
              %319 = sbr.rel (0) target = $region89
            $region88: #{tpu_custom_call.1} parent=80 // pred_region
              loop: start=0, step=1, limit=1
              $region90: #{tpu_custom_call.1} parent=88 // loop_pre_header
                _
              $region91: #{tpu_custom_call.1} parent=88 // loop_header
                %s322 = sphi 0, %s326
                %p323 = scmp.ge.s32.totalorder %s322, 1
                %s327 = sphi %s313, %s313
                %s328 = sphi %s308, %s308
              $region92: #{tpu_custom_call.1} parent=88 // loop_header_branch
                %325 = sbr.rel (%p323) target = $region96
              $region93: #{tpu_custom_call.1} parent=88 // loop_body
                %v329 = vld [vmem:[%s327] sm:$0xf]
                %330 = vst [vmem:[%s328] sm:$0xf] %v329
                %v331 = vld [vmem:[%s327 + $0x8] sm:$0xf]
                %332 = vst [vmem:[%s328 + $0x4] sm:$0xf] %v331
                %v333 = vld [vmem:[%s327 + $0x10] sm:$0xf]
                %334 = vst [vmem:[%s328 + $0x8] sm:$0xf] %v333
                %v335 = vld [vmem:[%s327 + $0x18] sm:$0xf]
                %336 = vst [vmem:[%s328 + $0xc] sm:$0xf] %v335
                %v337 = vld [vmem:[%s327 + $0x20] sm:$0xf]
                %338 = vst [vmem:[%s328 + $0x10] sm:$0xf] %v337
                %v339 = vld [vmem:[%s327 + $0x28] sm:$0xf]
                %340 = vst [vmem:[%s328 + $0x14] sm:$0xf] %v339
                %v341 = vld [vmem:[%s327 + $0x30] sm:$0xf]
                %342 = vst [vmem:[%s328 + $0x18] sm:$0xf] %v341
                %v343 = vld [vmem:[%s327 + $0x38] sm:$0xf]
                %344 = vst [vmem:[%s328 + $0x1c] sm:$0xf] %v343
              $region94: #{tpu_custom_call.1} parent=88 // loop_footer
                %s326 = sadd.s32 1, %s322
              $region95: #{tpu_custom_call.1} parent=88 // loop_footer_branch
                %321 = sbr.rel target = $region91
              $region96: #{tpu_custom_call.1} parent=88 // loop_exit
                _
            $region89: #{tpu_custom_call.1} parent=80 // pred_fallthru
              _
          $region81: #{tpu_custom_call.1} parent=76 // pred_fallthru
            _
          %380 = vnop
        $region77: #{tpu_custom_call.1} parent=31 // pred_fallthru
          _
      $region32: #{tpu_custom_call.1} parent=5 // pred_fallthru
        _
      %p381 = scmp.le.s32.totalorder 1, %s14
      %p382 = scmp.lt.s32.totalorder %s14, 5
      %p383 = pnand %p381, %p382
      %p384 = pneg %p383
      // Predicated region
      $region115: #{tpu_custom_call.1} parent=5 // pred_check
        _
      $region116: #{tpu_custom_call.1} parent=5 // pred_check_branch
        %386 = sbr.rel (%p383) target = $region118
      $region117: #{tpu_custom_call.1} parent=5 // pred_region
        %s387 = ssub.s32 %s14, 1
        %s388 = sand.u32 %s83, 1
        %s389 = sand.u32 %s83, 1
        %s390 = smul.addr %s389, 32
        %s391 = scalar_lea.vmem [#allocation6], %s390
        // Predicated region
        $region119: #{tpu_custom_call.1} parent=117 // pred_check
          %p392 = pneg %p96
        $region120: #{tpu_custom_call.1} parent=117 // pred_check_branch
          %394 = sbr.rel (%p392) target = $region122
        $region121: #{tpu_custom_call.1} parent=117 // pred_region
          _
        $region122: #{tpu_custom_call.1} parent=117 // pred_fallthru
          _
        %s395 = sand.u32 %s111, 1
        %s396 = sand.u32 %s111, 1
        %s397 = smul.addr %s396, 32
        %s398 = scalar_lea.vmem [#allocation7], %s397
        // Predicated region
        $region123: #{tpu_custom_call.1} parent=117 // pred_check
          %p399 = pneg %p124
        $region124: #{tpu_custom_call.1} parent=117 // pred_check_branch
          %401 = sbr.rel (%p399) target = $region126
        $region125: #{tpu_custom_call.1} parent=117 // pred_region
          _
        $region126: #{tpu_custom_call.1} parent=117 // pred_fallthru
          _
        %p402 = pneg %p47
        %p403 = pneg %p44
        %p404 = pneg %p68
        %p405 = pneg %p65
        %s406 = sand.u32 %s83, 1
        %s407 = sand.u32 %s83, 1
        %s408 = smul.addr %s407, 32
        %s409 = scalar_lea.vmem [#allocation6], %s408
        %p410 = pneg %p96
        %p411 = pneg %p93
        %s412 = sand.u32 %s111, 1
        %s413 = sand.u32 %s111, 1
        %s414 = smul.addr %s413, 32
        %s415 = scalar_lea.vmem [#allocation7], %s414
        %p416 = pneg %p124
        %p417 = pneg %p121
        %p418 = pneg %p145
        %p419 = pneg %p142
        %p420 = pneg %p166
        %p421 = pneg %p163
        %p422 = pneg %p192
        %p423 = pneg %p189
        %p424 = scmp.lt.s32.totalorder %s23, 1
        %s425 = scalar_select %p424, %s23, 1
        %s426 = smul.addr %s425, 16
        %s427 = smul.addr %s426, 8
        %s428 = scalar_lea.vmem %s6, %s427
        %s429 = smul.u32 8, %s23
        %s430 = smul.u32 8, %s23
        %p431 = scmp.lt.s32.totalorder %s23, 1
        %s432 = scalar_select %p431, %s23, 1
        %s433 = smul.addr %s432, 16
        %s434 = smul.addr %s433, 8
        %s435 = scalar_lea.vmem %s6, %s434
        %p436 = scmp.eq.s32.totalorder %s24, 0
        // Predicated region
        $region127: #{tpu_custom_call.1} parent=117 // pred_check
          %p437 = pneg %p436
        $region128: #{tpu_custom_call.1} parent=117 // pred_check_branch
          %439 = sbr.rel (%p437) target = $region130
        $region129: #{tpu_custom_call.1} parent=117 // pred_region
          %vm440 = vcmask 64512
          %441 = vst.msk [vmem:[#allocation2] sm:$0xff] %vm440, 0.0
          %442 = vst.msk [vmem:[#allocation2 + $0x8] sm:$0xff] %vm440, 0.0
          %443 = vst.msk [vmem:[#allocation2 + $0x10] sm:$0xff] %vm440, 0.0
          %444 = vst.msk [vmem:[#allocation2 + $0x18] sm:$0xff] %vm440, 0.0
          %445 = vst.msk [vmem:[#allocation2 + $0x20] sm:$0xff] %vm440, 0.0
          %446 = vst.msk [vmem:[#allocation2 + $0x28] sm:$0xff] %vm440, 0.0
          %447 = vst.msk [vmem:[#allocation2 + $0x30] sm:$0xff] %vm440, 0.0
          %448 = vst.msk [vmem:[#allocation2 + $0x38] sm:$0xff] %vm440, 0.0
          %449 = vst.msk [vmem:[#allocation2 + $0x40] sm:$0xff] %vm440, 0.0
          %450 = vst.msk [vmem:[#allocation2 + $0x48] sm:$0xff] %vm440, 0.0
          %451 = vst.msk [vmem:[#allocation2 + $0x50] sm:$0xff] %vm440, 0.0
          %452 = vst.msk [vmem:[#allocation2 + $0x58] sm:$0xff] %vm440, 0.0
          %453 = vst.msk [vmem:[#allocation2 + $0x60] sm:$0xff] %vm440, 0.0
          %454 = vst.msk [vmem:[#allocation2 + $0x68] sm:$0xff] %vm440, 0.0
          %455 = vst.msk [vmem:[#allocation2 + $0x70] sm:$0xff] %vm440, 0.0
          %456 = vst.msk [vmem:[#allocation2 + $0x78] sm:$0xff] %vm440, 0.0
          %457 = vst.msk [vmem:[#allocation3] sm:$0xff] %vm440, 0.0
          %458 = vst.msk [vmem:[#allocation3 + $0x8] sm:$0xff] %vm440, 0.0
          %459 = vst.msk [vmem:[#allocation3 + $0x10] sm:$0xff] %vm440, 0.0
          %460 = vst.msk [vmem:[#allocation3 + $0x18] sm:$0xff] %vm440, 0.0
          %461 = vst.msk [vmem:[#allocation3 + $0x20] sm:$0xff] %vm440, 0.0
          %462 = vst.msk [vmem:[#allocation3 + $0x28] sm:$0xff] %vm440, 0.0
          %463 = vst.msk [vmem:[#allocation3 + $0x30] sm:$0xff] %vm440, 0.0
          %464 = vst.msk [vmem:[#allocation3 + $0x38] sm:$0xff] %vm440, 0.0
          %465 = vst.msk [vmem:[#allocation3 + $0x40] sm:$0xff] %vm440, 0.0
          %466 = vst.msk [vmem:[#allocation3 + $0x48] sm:$0xff] %vm440, 0.0
          %467 = vst.msk [vmem:[#allocation3 + $0x50] sm:$0xff] %vm440, 0.0
          %468 = vst.msk [vmem:[#allocation3 + $0x58] sm:$0xff] %vm440, 0.0
          %469 = vst.msk [vmem:[#allocation3 + $0x60] sm:$0xff] %vm440, 0.0
          %470 = vst.msk [vmem:[#allocation3 + $0x68] sm:$0xff] %vm440, 0.0
          %471 = vst.msk [vmem:[#allocation3 + $0x70] sm:$0xff] %vm440, 0.0
          %472 = vst.msk [vmem:[#allocation3 + $0x78] sm:$0xff] %vm440, 0.0
        $region130: #{tpu_custom_call.1} parent=117 // pred_fallthru
          _
        %s473 = sld [smem:[#allocation4]]
        %s474 = sld [smem:[#allocation5]]
        %v475 = vld [vmem:[%s4] sm:$0xff]
        %v476 = vld [vmem:[%s4 + $0x8] sm:$0xff]
        %v477 = vld [vmem:[%s4 + $0x10] sm:$0xff]
        %v478 = vld [vmem:[%s4 + $0x18] sm:$0xff]
        %v479 = vld [vmem:[%s4 + $0x20] sm:$0xff]
        %v480 = vld [vmem:[%s4 + $0x28] sm:$0xff]
        %v481 = vld [vmem:[%s4 + $0x30] sm:$0xff]
        %v482 = vld [vmem:[%s4 + $0x38] sm:$0xff]
        %v483 = vld [vmem:[%s4 + $0x40] sm:$0xff]
        %v484 = vld [vmem:[%s4 + $0x48] sm:$0xff]
        %v485 = vld [vmem:[%s4 + $0x50] sm:$0xff]
        %v486 = vld [vmem:[%s4 + $0x58] sm:$0xff]
        %v487 = vld [vmem:[%s4 + $0x60] sm:$0xff]
        %v488 = vld [vmem:[%s4 + $0x68] sm:$0xff]
        %v489 = vld [vmem:[%s4 + $0x70] sm:$0xff]
        %v490 = vld [vmem:[%s4 + $0x78] sm:$0xff]
        %v491 = vld [vmem:[%s391] sm:$0xf]
        %vm492 = vcmask 31744
        %v494 = vsel %vm492, %v475, 0
        %v497 = vsel %vm492, %v476, 0
        %v500 = vsel %vm492, %v477, 0
        %v503 = vsel %vm492, %v478, 0
        %v506 = vsel %vm492, %v479, 0
        %v509 = vsel %vm492, %v480, 0
        %v512 = vsel %vm492, %v481, 0
        %v515 = vsel %vm492, %v482, 0
        %v518 = vsel %vm492, %v483, 0
        %v521 = vsel %vm492, %v484, 0
        %v524 = vsel %vm492, %v485, 0
        %v527 = vsel %vm492, %v486, 0
        %v530 = vsel %vm492, %v487, 0
        %v533 = vsel %vm492, %v488, 0
        %v536 = vsel %vm492, %v489, 0
        %v539 = vsel %vm492, %v490, 0
        %vm541 = vcmask 1043456
        %v543 = vsel %vm541, %v491, 0
        %545 = vmatprep.subr.mxu0 0.0
        %546 = vmatpush1.msra.mxu0 %v543
        %547 = vmatprep.subr.mxu0 0.0
        %548 = vmatpush1.msra.mxu0 0.0
        %549 = vmatprep.subr.mxu0 0.0
        %550 = vmatpush1.msra.mxu0 0.0
        %551 = vmatprep.subr.mxu0 0.0
        %552 = vmatpush1.msra.mxu0 0.0
        %553 = vmatprep.subr.mxu0 0.0
        %554 = vmatpush1.msra.mxu0 0.0
        %555 = vmatprep.subr.mxu0 0.0
        %556 = vmatpush1.msra.mxu0 0.0
        %557 = vmatprep.subr.mxu0 0.0
        %558 = vmatpush1.msra.mxu0 0.0
        %559 = vmatprep.subr.mxu0 0.0
        %560 = vmatpush1.msra.mxu0 0.0
        %561 = vmatprep.subr.mxu0 0.0
        %562 = vmatpush1.msra.mxu0 0.0
        %563 = vmatprep.subr.mxu0 0.0
        %564 = vmatpush1.msra.mxu0 0.0
        %565 = vmatprep.subr.mxu0 0.0
        %566 = vmatpush1.msra.mxu0 0.0
        %567 = vmatprep.subr.mxu0 0.0
        %568 = vmatpush1.msra.mxu0 0.0
        %569 = vmatprep.subr.mxu0 0.0
        %570 = vmatpush1.msra.mxu0 0.0
        %571 = vmatprep.subr.mxu0 0.0
        %572 = vmatpush1.msra.mxu0 0.0
        %573 = vmatprep.subr.mxu0 0.0
        %574 = vmatpush1.msra.mxu0 0.0
        %575 = vmatprep.subr.mxu0 0.0
        %576 = vmatpush1.msra.mxu0 0.0
        %577 = vmatprep.subr.mxu0 0.0
        %578 = vmatpush1.msra.mxu0 0.0
        %579 = vmatprep.subr.mxu0 0.0
        %580 = vmatpush1.msra.mxu0 0.0
        %581 = vmatprep.subr.mxu0 0.0
        %582 = vmatpush1.msra.mxu0 0.0
        %583 = vmatprep.subr.mxu0 0.0
        %584 = vmatpush1.msra.mxu0 0.0
        %585 = vmatprep.subr.mxu0 0.0
        %586 = vmatpush1.msra.mxu0 0.0
        %587 = vmatprep.subr.mxu0 0.0
        %588 = vmatpush1.msra.mxu0 0.0
        %589 = vmatprep.subr.mxu0 0.0
        %590 = vmatpush1.msra.mxu0 0.0
        %591 = vmatprep.subr.mxu0 0.0
        %592 = vmatpush1.msra.mxu0 0.0
        %593 = vmatprep.subr.mxu0 0.0
        %594 = vmatpush1.msra.mxu0 0.0
        %595 = vmatprep.subr.mxu0 0.0
        %596 = vmatpush1.msra.mxu0 0.0
        %597 = vmatprep.subr.mxu0 0.0
        %598 = vmatpush1.msra.mxu0 0.0
        %599 = vmatprep.subr.mxu0 0.0
        %600 = vmatpush1.msra.mxu0 0.0
        %601 = vmatprep.subr.mxu0 0.0
        %602 = vmatpush1.msra.mxu0 0.0
        %603 = vmatprep.subr.mxu0 0.0
        %604 = vmatpush1.msra.mxu0 0.0
        %605 = vmatprep.subr.mxu0 0.0
        %606 = vmatpush1.msra.mxu0 0.0
        %607 = vmatprep.subr.mxu0 0.0
        %608 = vmatpush1.msra.mxu0 0.0
        %609 = vmatprep.mubr.f32.mxu0 0.0
        %610 = vmatmul.mubr.f32.gmra.mrb[0].mxu0 %v494
        %v611 = vpop.f32.mrb[0].mxu0
        %v612 = vadd.f32 0.0, %v611
        %v613 = vpop.f32.mrb[0].mxu0
        %614 = vmatprep.mubr.f32.mxu0 0.0
        %615 = vmatmul.mubr.f32.gmra.mrb[0].mxu0 %v497
        %v616 = vpop.f32.mrb[0].mxu0
        %v617 = vadd.f32 0.0, %v616
        %v618 = vpop.f32.mrb[0].mxu0
        %619 = vmatprep.mubr.f32.mxu0 0.0
        %620 = vmatmul.mubr.f32.gmra.mrb[0].mxu0 %v500
        %v621 = vpop.f32.mrb[0].mxu0
        %v622 = vadd.f32 0.0, %v621
        %v623 = vpop.f32.mrb[0].mxu0
        %624 = vmatprep.mubr.f32.mxu0 0.0
        %625 = vmatmul.mubr.f32.gmra.mrb[0].mxu0 %v503
        %v626 = vpop.f32.mrb[0].mxu0
        %v627 = vadd.f32 0.0, %v626
        %v628 = vpop.f32.mrb[0].mxu0
        %629 = vmatprep.mubr.f32.mxu0 0.0
        %630 = vmatmul.mubr.f32.gmra.mrb[0].mxu0 %v506
        %v631 = vpop.f32.mrb[0].mxu0
        %v632 = vadd.f32 0.0, %v631
        %v633 = vpop.f32.mrb[0].mxu0
        %634 = vmatprep.mubr.f32.mxu0 0.0
        %635 = vmatmul.mubr.f32.gmra.mrb[0].mxu0 %v509
        %v636 = vpop.f32.mrb[0].mxu0
        %v637 = vadd.f32 0.0, %v636
        %v638 = vpop.f32.mrb[0].mxu0
        %639 = vmatprep.mubr.f32.mxu0 0.0
        %640 = vmatmul.mubr.f32.gmra.mrb[0].mxu0 %v512
        %v641 = vpop.f32.mrb[0].mxu0
        %v642 = vadd.f32 0.0, %v641
        %v643 = vpop.f32.mrb[0].mxu0
        %644 = vmatprep.mubr.f32.mxu0 0.0
        %645 = vmatmul.mubr.f32.gmra.mrb[0].mxu0 %v515
        %v646 = vpop.f32.mrb[0].mxu0
        %v647 = vadd.f32 0.0, %v646
        %v648 = vpop.f32.mrb[0].mxu0
        %649 = vmatprep.mubr.f32.mxu0 0.0
        %650 = vmatmul.mubr.f32.gmra.mrb[0].mxu0 %v518
        %v651 = vpop.f32.mrb[0].mxu0
        %v652 = vadd.f32 0.0, %v651
        %v653 = vpop.f32.mrb[0].mxu0
        %654 = vmatprep.mubr.f32.mxu0 0.0
        %655 = vmatmul.mubr.f32.gmra.mrb[0].mxu0 %v521
        %v656 = vpop.f32.mrb[0].mxu0
        %v657 = vadd.f32 0.0, %v656
        %v658 = vpop.f32.mrb[0].mxu0
        %659 = vmatprep.mubr.f32.mxu0 0.0
        %660 = vmatmul.mubr.f32.gmra.mrb[0].mxu0 %v524
        %v661 = vpop.f32.mrb[0].mxu0
        %v662 = vadd.f32 0.0, %v661
        %v663 = vpop.f32.mrb[0].mxu0
        %664 = vmatprep.mubr.f32.mxu0 0.0
        %665 = vmatmul.mubr.f32.gmra.mrb[0].mxu0 %v527
        %v666 = vpop.f32.mrb[0].mxu0
        %v667 = vadd.f32 0.0, %v666
        %v668 = vpop.f32.mrb[0].mxu0
        %669 = vmatprep.mubr.f32.mxu0 0.0
        %670 = vmatmul.mubr.f32.gmra.mrb[0].mxu0 %v530
        %v671 = vpop.f32.mrb[0].mxu0
        %v672 = vadd.f32 0.0, %v671
        %v673 = vpop.f32.mrb[0].mxu0
        %674 = vmatprep.mubr.f32.mxu0 0.0
        %675 = vmatmul.mubr.f32.gmra.mrb[0].mxu0 %v533
        %v676 = vpop.f32.mrb[0].mxu0
        %v677 = vadd.f32 0.0, %v676
        %v678 = vpop.f32.mrb[0].mxu0
        %679 = vmatprep.mubr.f32.mxu0 0.0
        %680 = vmatmul.mubr.f32.gmra.mrb[0].mxu0 %v536
        %v681 = vpop.f32.mrb[0].mxu0
        %v682 = vadd.f32 0.0, %v681
        %v683 = vpop.f32.mrb[0].mxu0
        %684 = vmatprep.mubr.f32.mxu0 0.0
        %685 = vmatmul.mubr.f32.gmra.mrb[0].mxu0 %v539
        %v686 = vpop.f32.mrb[0].mxu0
        %v687 = vadd.f32 0.0, %v686
        %v688 = vpop.f32.mrb[0].mxu0
        %689 = vdwg.mxu0
        %v690 = vmax.f32 %v612, 1e-06
        %v691 = vmax.f32 %v617, 1e-06
        %v692 = vmax.f32 %v622, 1e-06
        %v693 = vmax.f32 %v627, 1e-06
        %v694 = vmax.f32 %v632, 1e-06
        %v695 = vmax.f32 %v637, 1e-06
        %v696 = vmax.f32 %v642, 1e-06
        %v697 = vmax.f32 %v647, 1e-06
        %v698 = vmax.f32 %v652, 1e-06
        %v699 = vmax.f32 %v657, 1e-06
        %v700 = vmax.f32 %v662, 1e-06
        %v701 = vmax.f32 %v667, 1e-06
        %v702 = vmax.f32 %v672, 1e-06
        %v703 = vmax.f32 %v677, 1e-06
        %v704 = vmax.f32 %v682, 1e-06
        %v705 = vmax.f32 %v687, 1e-06
        %v706 = vld [vmem:[#allocation2] sm:$0xff]
        %v707 = vld [vmem:[#allocation2 + $0x8] sm:$0xff]
        %v708 = vld [vmem:[#allocation2 + $0x10] sm:$0xff]
        %v709 = vld [vmem:[#allocation2 + $0x18] sm:$0xff]
        %v710 = vld [vmem:[#allocation2 + $0x20] sm:$0xff]
        %v711 = vld [vmem:[#allocation2 + $0x28] sm:$0xff]
        %v712 = vld [vmem:[#allocation2 + $0x30] sm:$0xff]
        %v713 = vld [vmem:[#allocation2 + $0x38] sm:$0xff]
        %v714 = vld [vmem:[#allocation2 + $0x40] sm:$0xff]
        %v715 = vld [vmem:[#allocation2 + $0x48] sm:$0xff]
        %v716 = vld [vmem:[#allocation2 + $0x50] sm:$0xff]
        %v717 = vld [vmem:[#allocation2 + $0x58] sm:$0xff]
        %v718 = vld [vmem:[#allocation2 + $0x60] sm:$0xff]
        %v719 = vld [vmem:[#allocation2 + $0x68] sm:$0xff]
        %v720 = vld [vmem:[#allocation2 + $0x70] sm:$0xff]
        %v721 = vld [vmem:[#allocation2 + $0x78] sm:$0xff]
        %v722 = vmul.f32 %v690, %v690
        %v723 = vmul.f32 %v691, %v691
        %v724 = vmul.f32 %v692, %v692
        %v725 = vmul.f32 %v693, %v693
        %v726 = vmul.f32 %v694, %v694
        %v727 = vmul.f32 %v695, %v695
        %v728 = vmul.f32 %v696, %v696
        %v729 = vmul.f32 %v697, %v697
        %v730 = vmul.f32 %v698, %v698
        %v731 = vmul.f32 %v699, %v699
        %v732 = vmul.f32 %v700, %v700
        %v733 = vmul.f32 %v701, %v701
        %v734 = vmul.f32 %v702, %v702
        %v735 = vmul.f32 %v703, %v703
        %v736 = vmul.f32 %v704, %v704
        %v737 = vmul.f32 %v705, %v705
        %v738 = vmul.f32 %v722, %v690
        %v739 = vmul.f32 %v723, %v691
        %v740 = vmul.f32 %v724, %v692
        %v741 = vmul.f32 %v725, %v693
        %v742 = vmul.f32 %v726, %v694
        %v743 = vmul.f32 %v727, %v695
        %v744 = vmul.f32 %v728, %v696
        %v745 = vmul.f32 %v729, %v697
        %v746 = vmul.f32 %v730, %v698
        %v747 = vmul.f32 %v731, %v699
        %v748 = vmul.f32 %v732, %v700
        %v749 = vmul.f32 %v733, %v701
        %v750 = vmul.f32 %v734, %v702
        %v751 = vmul.f32 %v735, %v703
        %v752 = vmul.f32 %v736, %v704
        %v753 = vmul.f32 %v737, %v705
        %754 = vadd.xlane.f32.xlu0 %v738
        %v755 = vpop.xlane.xlu0 %754
        %756 = vadd.xlane.f32.xlu0 %v739
        %v757 = vpop.xlane.xlu0 %756
        %758 = vadd.xlane.f32.xlu0 %v740
        %v759 = vpop.xlane.xlu0 %758
        %760 = vadd.xlane.f32.xlu0 %v741
        %v761 = vpop.xlane.xlu0 %760
        %762 = vadd.xlane.f32.xlu0 %v742
        %v763 = vpop.xlane.xlu0 %762
        %764 = vadd.xlane.f32.xlu0 %v743
        %v765 = vpop.xlane.xlu0 %764
        %766 = vadd.xlane.f32.xlu0 %v744
        %v767 = vpop.xlane.xlu0 %766
        %768 = vadd.xlane.f32.xlu0 %v745
        %v769 = vpop.xlane.xlu0 %768
        %770 = vadd.xlane.f32.xlu0 %v746
        %v771 = vpop.xlane.xlu0 %770
        %772 = vadd.xlane.f32.xlu0 %v747
        %v773 = vpop.xlane.xlu0 %772
        %774 = vadd.xlane.f32.xlu0 %v748
        %v775 = vpop.xlane.xlu0 %774
        %776 = vadd.xlane.f32.xlu0 %v749
        %v777 = vpop.xlane.xlu0 %776
        %778 = vadd.xlane.f32.xlu0 %v750
        %v779 = vpop.xlane.xlu0 %778
        %780 = vadd.xlane.f32.xlu0 %v751
        %v781 = vpop.xlane.xlu0 %780
        %782 = vadd.xlane.f32.xlu0 %v752
        %v783 = vpop.xlane.xlu0 %782
        %784 = vadd.xlane.f32.xlu0 %v753
        %v785 = vpop.xlane.xlu0 %784
        %v786 = vadd.f32 %v706, %v755
        %v787 = vadd.f32 %v707, %v757
        %v788 = vadd.f32 %v708, %v759
        %v789 = vadd.f32 %v709, %v761
        %v790 = vadd.f32 %v710, %v763
        %v791 = vadd.f32 %v711, %v765
        %v792 = vadd.f32 %v712, %v767
        %v793 = vadd.f32 %v713, %v769
        %v794 = vadd.f32 %v714, %v771
        %v795 = vadd.f32 %v715, %v773
        %v796 = vadd.f32 %v716, %v775
        %v797 = vadd.f32 %v717, %v777
        %v798 = vadd.f32 %v718, %v779
        %v799 = vadd.f32 %v719, %v781
        %v800 = vadd.f32 %v720, %v783
        %v801 = vadd.f32 %v721, %v785
        %vm802 = vcmask 7168
        %803 = vst.msk [vmem:[#allocation2] sm:$0xff] %vm802, %v786
        %804 = vst.msk [vmem:[#allocation2 + $0x8] sm:$0xff] %vm802, %v787
        %805 = vst.msk [vmem:[#allocation2 + $0x10] sm:$0xff] %vm802, %v788
        %806 = vst.msk [vmem:[#allocation2 + $0x18] sm:$0xff] %vm802, %v789
        %807 = vst.msk [vmem:[#allocation2 + $0x20] sm:$0xff] %vm802, %v790
        %808 = vst.msk [vmem:[#allocation2 + $0x28] sm:$0xff] %vm802, %v791
        %809 = vst.msk [vmem:[#allocation2 + $0x30] sm:$0xff] %vm802, %v792
        %810 = vst.msk [vmem:[#allocation2 + $0x38] sm:$0xff] %vm802, %v793
        %811 = vst.msk [vmem:[#allocation2 + $0x40] sm:$0xff] %vm802, %v794
        %812 = vst.msk [vmem:[#allocation2 + $0x48] sm:$0xff] %vm802, %v795
        %813 = vst.msk [vmem:[#allocation2 + $0x50] sm:$0xff] %vm802, %v796
        %814 = vst.msk [vmem:[#allocation2 + $0x58] sm:$0xff] %vm802, %v797
        %815 = vst.msk [vmem:[#allocation2 + $0x60] sm:$0xff] %vm802, %v798
        %816 = vst.msk [vmem:[#allocation2 + $0x68] sm:$0xff] %vm802, %v799
        %817 = vst.msk [vmem:[#allocation2 + $0x70] sm:$0xff] %vm802, %v800
        %818 = vst.msk [vmem:[#allocation2 + $0x78] sm:$0xff] %vm802, %v801
        %v819 = vld [vmem:[%s5] sm:$0xff]
        %v820 = vld [vmem:[%s5 + $0x8] sm:$0xff]
        %v821 = vld [vmem:[%s5 + $0x10] sm:$0xff]
        %v822 = vld [vmem:[%s5 + $0x18] sm:$0xff]
        %v823 = vld [vmem:[%s5 + $0x20] sm:$0xff]
        %v824 = vld [vmem:[%s5 + $0x28] sm:$0xff]
        %v825 = vld [vmem:[%s5 + $0x30] sm:$0xff]
        %v826 = vld [vmem:[%s5 + $0x38] sm:$0xff]
        %v827 = vld [vmem:[%s5 + $0x40] sm:$0xff]
        %v828 = vld [vmem:[%s5 + $0x48] sm:$0xff]
        %v829 = vld [vmem:[%s5 + $0x50] sm:$0xff]
        %v830 = vld [vmem:[%s5 + $0x58] sm:$0xff]
        %v831 = vld [vmem:[%s5 + $0x60] sm:$0xff]
        %v832 = vld [vmem:[%s5 + $0x68] sm:$0xff]
        %v833 = vld [vmem:[%s5 + $0x70] sm:$0xff]
        %v834 = vld [vmem:[%s5 + $0x78] sm:$0xff]
        %v835 = vld [vmem:[%s398] sm:$0x7]
        %vm836 = vcmask 23552
        %v838 = vsel %vm836, %v819, 0
        %v841 = vsel %vm836, %v820, 0
        %v844 = vsel %vm836, %v821, 0
        %v847 = vsel %vm836, %v822, 0
        %v850 = vsel %vm836, %v823, 0
        %v853 = vsel %vm836, %v824, 0
        %v856 = vsel %vm836, %v825, 0
        %v859 = vsel %vm836, %v826, 0
        %v862 = vsel %vm836, %v827, 0
        %v865 = vsel %vm836, %v828, 0
        %v868 = vsel %vm836, %v829, 0
        %v871 = vsel %vm836, %v830, 0
        %v874 = vsel %vm836, %v831, 0
        %v877 = vsel %vm836, %v832, 0
        %v880 = vsel %vm836, %v833, 0
        %v883 = vsel %vm836, %v834, 0
        %vm885 = vcmask 1042432
        %v887 = vsel %vm885, %v835, 0
        %889 = vmatprep.subr.mxu0 0.0
        %890 = vmatpush1.msra.mxu0 %v887
        %891 = vmatprep.subr.mxu0 0.0
        %892 = vmatpush1.msra.mxu0 0.0
        %893 = vmatprep.subr.mxu0 0.0
        %894 = vmatpush1.msra.mxu0 0.0
        %895 = vmatprep.subr.mxu0 0.0
        %896 = vmatpush1.msra.mxu0 0.0
        %897 = vmatprep.subr.mxu0 0.0
        %898 = vmatpush1.msra.mxu0 0.0
        %899 = vmatprep.subr.mxu0 0.0
        %900 = vmatpush1.msra.mxu0 0.0
        %901 = vmatprep.subr.mxu0 0.0
        %902 = vmatpush1.msra.mxu0 0.0
        %903 = vmatprep.subr.mxu0 0.0
        %904 = vmatpush1.msra.mxu0 0.0
        %905 = vmatprep.subr.mxu0 0.0
        %906 = vmatpush1.msra.mxu0 0.0
        %907 = vmatprep.subr.mxu0 0.0
        %908 = vmatpush1.msra.mxu0 0.0
        %909 = vmatprep.subr.mxu0 0.0
        %910 = vmatpush1.msra.mxu0 0.0
        %911 = vmatprep.subr.mxu0 0.0
        %912 = vmatpush1.msra.mxu0 0.0
        %913 = vmatprep.subr.mxu0 0.0
        %914 = vmatpush1.msra.mxu0 0.0
        %915 = vmatprep.subr.mxu0 0.0
        %916 = vmatpush1.msra.mxu0 0.0
        %917 = vmatprep.subr.mxu0 0.0
        %918 = vmatpush1.msra.mxu0 0.0
        %919 = vmatprep.subr.mxu0 0.0
        %920 = vmatpush1.msra.mxu0 0.0
        %921 = vmatprep.subr.mxu0 0.0
        %922 = vmatpush1.msra.mxu0 0.0
        %923 = vmatprep.subr.mxu0 0.0
        %924 = vmatpush1.msra.mxu0 0.0
        %925 = vmatprep.subr.mxu0 0.0
        %926 = vmatpush1.msra.mxu0 0.0
        %927 = vmatprep.subr.mxu0 0.0
        %928 = vmatpush1.msra.mxu0 0.0
        %929 = vmatprep.subr.mxu0 0.0
        %930 = vmatpush1.msra.mxu0 0.0
        %931 = vmatprep.subr.mxu0 0.0
        %932 = vmatpush1.msra.mxu0 0.0
        %933 = vmatprep.subr.mxu0 0.0
        %934 = vmatpush1.msra.mxu0 0.0
        %935 = vmatprep.subr.mxu0 0.0
        %936 = vmatpush1.msra.mxu0 0.0
        %937 = vmatprep.subr.mxu0 0.0
        %938 = vmatpush1.msra.mxu0 0.0
        %939 = vmatprep.subr.mxu0 0.0
        %940 = vmatpush1.msra.mxu0 0.0
        %941 = vmatprep.subr.mxu0 0.0
        %942 = vmatpush1.msra.mxu0 0.0
        %943 = vmatprep.subr.mxu0 0.0
        %944 = vmatpush1.msra.mxu0 0.0
        %945 = vmatprep.subr.mxu0 0.0
        %946 = vmatpush1.msra.mxu0 0.0
        %947 = vmatprep.subr.mxu0 0.0
        %948 = vmatpush1.msra.mxu0 0.0
        %949 = vmatprep.subr.mxu0 0.0
        %950 = vmatpush1.msra.mxu0 0.0
        %951 = vmatprep.subr.mxu0 0.0
        %952 = vmatpush1.msra.mxu0 0.0
        %953 = vmatprep.mubr.f32.mxu0 0.0
        %954 = vmatmul.mubr.f32.gmra.mrb[0].mxu0 %v838
        %v955 = vpop.f32.mrb[0].mxu0
        %v956 = vadd.f32 0.0, %v955
        %v957 = vpop.f32.mrb[0].mxu0
        %958 = vmatprep.mubr.f32.mxu0 0.0
        %959 = vmatmul.mubr.f32.gmra.mrb[0].mxu0 %v841
        %v960 = vpop.f32.mrb[0].mxu0
        %v961 = vadd.f32 0.0, %v960
        %v962 = vpop.f32.mrb[0].mxu0
        %963 = vmatprep.mubr.f32.mxu0 0.0
        %964 = vmatmul.mubr.f32.gmra.mrb[0].mxu0 %v844
        %v965 = vpop.f32.mrb[0].mxu0
        %v966 = vadd.f32 0.0, %v965
        %v967 = vpop.f32.mrb[0].mxu0
        %968 = vmatprep.mubr.f32.mxu0 0.0
        %969 = vmatmul.mubr.f32.gmra.mrb[0].mxu0 %v847
        %v970 = vpop.f32.mrb[0].mxu0
        %v971 = vadd.f32 0.0, %v970
        %v972 = vpop.f32.mrb[0].mxu0
        %973 = vmatprep.mubr.f32.mxu0 0.0
        %974 = vmatmul.mubr.f32.gmra.mrb[0].mxu0 %v850
        %v975 = vpop.f32.mrb[0].mxu0
        %v976 = vadd.f32 0.0, %v975
        %v977 = vpop.f32.mrb[0].mxu0
        %978 = vmatprep.mubr.f32.mxu0 0.0
        %979 = vmatmul.mubr.f32.gmra.mrb[0].mxu0 %v853
        %v980 = vpop.f32.mrb[0].mxu0
        %v981 = vadd.f32 0.0, %v980
        %v982 = vpop.f32.mrb[0].mxu0
        %983 = vmatprep.mubr.f32.mxu0 0.0
        %984 = vmatmul.mubr.f32.gmra.mrb[0].mxu0 %v856
        %v985 = vpop.f32.mrb[0].mxu0
        %v986 = vadd.f32 0.0, %v985
        %v987 = vpop.f32.mrb[0].mxu0
        %988 = vmatprep.mubr.f32.mxu0 0.0
        %989 = vmatmul.mubr.f32.gmra.mrb[0].mxu0 %v859
        %v990 = vpop.f32.mrb[0].mxu0
        %v991 = vadd.f32 0.0, %v990
        %v992 = vpop.f32.mrb[0].mxu0
        %993 = vmatprep.mubr.f32.mxu0 0.0
        %994 = vmatmul.mubr.f32.gmra.mrb[0].mxu0 %v862
        %v995 = vpop.f32.mrb[0].mxu0
        %v996 = vadd.f32 0.0, %v995
        %v997 = vpop.f32.mrb[0].mxu0
        %998 = vmatprep.mubr.f32.mxu0 0.0
        %999 = vmatmul.mubr.f32.gmra.mrb[0].mxu0 %v865
        %v1000 = vpop.f32.mrb[0].mxu0
        %v1001 = vadd.f32 0.0, %v1000
        %v1002 = vpop.f32.mrb[0].mxu0
        %1003 = vmatprep.mubr.f32.mxu0 0.0
        %1004 = vmatmul.mubr.f32.gmra.mrb[0].mxu0 %v868
        %v1005 = vpop.f32.mrb[0].mxu0
        %v1006 = vadd.f32 0.0, %v1005
        %v1007 = vpop.f32.mrb[0].mxu0
        %1008 = vmatprep.mubr.f32.mxu0 0.0
        %1009 = vmatmul.mubr.f32.gmra.mrb[0].mxu0 %v871
        %v1010 = vpop.f32.mrb[0].mxu0
        %v1011 = vadd.f32 0.0, %v1010
        %v1012 = vpop.f32.mrb[0].mxu0
        %1013 = vmatprep.mubr.f32.mxu0 0.0
        %1014 = vmatmul.mubr.f32.gmra.mrb[0].mxu0 %v874
        %v1015 = vpop.f32.mrb[0].mxu0
        %v1016 = vadd.f32 0.0, %v1015
        %v1017 = vpop.f32.mrb[0].mxu0
        %1018 = vmatprep.mubr.f32.mxu0 0.0
        %1019 = vmatmul.mubr.f32.gmra.mrb[0].mxu0 %v877
        %v1020 = vpop.f32.mrb[0].mxu0
        %v1021 = vadd.f32 0.0, %v1020
        %v1022 = vpop.f32.mrb[0].mxu0
        %1023 = vmatprep.mubr.f32.mxu0 0.0
        %1024 = vmatmul.mubr.f32.gmra.mrb[0].mxu0 %v880
        %v1025 = vpop.f32.mrb[0].mxu0
        %v1026 = vadd.f32 0.0, %v1025
        %v1027 = vpop.f32.mrb[0].mxu0
        %1028 = vmatprep.mubr.f32.mxu0 0.0
        %1029 = vmatmul.mubr.f32.gmra.mrb[0].mxu0 %v883
        %v1030 = vpop.f32.mrb[0].mxu0
        %v1031 = vadd.f32 0.0, %v1030
        %v1032 = vpop.f32.mrb[0].mxu0
        %1033 = vdwg.mxu0
        %v1034 = vmax.f32 %v956, 1e-06
        %v1035 = vmax.f32 %v961, 1e-06
        %v1036 = vmax.f32 %v966, 1e-06
        %v1037 = vmax.f32 %v971, 1e-06
        %v1038 = vmax.f32 %v976, 1e-06
        %v1039 = vmax.f32 %v981, 1e-06
        %v1040 = vmax.f32 %v986, 1e-06
        %v1041 = vmax.f32 %v991, 1e-06
        %v1042 = vmax.f32 %v996, 1e-06
        %v1043 = vmax.f32 %v1001, 1e-06
        %v1044 = vmax.f32 %v1006, 1e-06
        %v1045 = vmax.f32 %v1011, 1e-06
        %v1046 = vmax.f32 %v1016, 1e-06
        %v1047 = vmax.f32 %v1021, 1e-06
        %v1048 = vmax.f32 %v1026, 1e-06
        %v1049 = vmax.f32 %v1031, 1e-06
        %v1050 = vld [vmem:[#allocation3] sm:$0xff]
        %v1051 = vld [vmem:[#allocation3 + $0x8] sm:$0xff]
        %v1052 = vld [vmem:[#allocation3 + $0x10] sm:$0xff]
        %v1053 = vld [vmem:[#allocation3 + $0x18] sm:$0xff]
        %v1054 = vld [vmem:[#allocation3 + $0x20] sm:$0xff]
        %v1055 = vld [vmem:[#allocation3 + $0x28] sm:$0xff]
        %v1056 = vld [vmem:[#allocation3 + $0x30] sm:$0xff]
        %v1057 = vld [vmem:[#allocation3 + $0x38] sm:$0xff]
        %v1058 = vld [vmem:[#allocation3 + $0x40] sm:$0xff]
        %v1059 = vld [vmem:[#allocation3 + $0x48] sm:$0xff]
        %v1060 = vld [vmem:[#allocation3 + $0x50] sm:$0xff]
        %v1061 = vld [vmem:[#allocation3 + $0x58] sm:$0xff]
        %v1062 = vld [vmem:[#allocation3 + $0x60] sm:$0xff]
        %v1063 = vld [vmem:[#allocation3 + $0x68] sm:$0xff]
        %v1064 = vld [vmem:[#allocation3 + $0x70] sm:$0xff]
        %v1065 = vld [vmem:[#allocation3 + $0x78] sm:$0xff]
        %v1066 = vmul.f32 %v1034, %v1034
        %v1067 = vmul.f32 %v1035, %v1035
        %v1068 = vmul.f32 %v1036, %v1036
        %v1069 = vmul.f32 %v1037, %v1037
        %v1070 = vmul.f32 %v1038, %v1038
        %v1071 = vmul.f32 %v1039, %v1039
        %v1072 = vmul.f32 %v1040, %v1040
        %v1073 = vmul.f32 %v1041, %v1041
        %v1074 = vmul.f32 %v1042, %v1042
        %v1075 = vmul.f32 %v1043, %v1043
        %v1076 = vmul.f32 %v1044, %v1044
        %v1077 = vmul.f32 %v1045, %v1045
        %v1078 = vmul.f32 %v1046, %v1046
        %v1079 = vmul.f32 %v1047, %v1047
        %v1080 = vmul.f32 %v1048, %v1048
        %v1081 = vmul.f32 %v1049, %v1049
        %v1082 = vmul.f32 %v1066, %v1034
        %v1083 = vmul.f32 %v1067, %v1035
        %v1084 = vmul.f32 %v1068, %v1036
        %v1085 = vmul.f32 %v1069, %v1037
        %v1086 = vmul.f32 %v1070, %v1038
        %v1087 = vmul.f32 %v1071, %v1039
        %v1088 = vmul.f32 %v1072, %v1040
        %v1089 = vmul.f32 %v1073, %v1041
        %v1090 = vmul.f32 %v1074, %v1042
        %v1091 = vmul.f32 %v1075, %v1043
        %v1092 = vmul.f32 %v1076, %v1044
        %v1093 = vmul.f32 %v1077, %v1045
        %v1094 = vmul.f32 %v1078, %v1046
        %v1095 = vmul.f32 %v1079, %v1047
        %v1096 = vmul.f32 %v1080, %v1048
        %v1097 = vmul.f32 %v1081, %v1049
        %1098 = vadd.xlane.f32.xlu0 %v1082
        %v1099 = vpop.xlane.xlu0 %1098
        %1100 = vadd.xlane.f32.xlu0 %v1083
        %v1101 = vpop.xlane.xlu0 %1100
        %1102 = vadd.xlane.f32.xlu0 %v1084
        %v1103 = vpop.xlane.xlu0 %1102
        %1104 = vadd.xlane.f32.xlu0 %v1085
        %v1105 = vpop.xlane.xlu0 %1104
        %1106 = vadd.xlane.f32.xlu0 %v1086
        %v1107 = vpop.xlane.xlu0 %1106
        %1108 = vadd.xlane.f32.xlu0 %v1087
        %v1109 = vpop.xlane.xlu0 %1108
        %1110 = vadd.xlane.f32.xlu0 %v1088
        %v1111 = vpop.xlane.xlu0 %1110
        %1112 = vadd.xlane.f32.xlu0 %v1089
        %v1113 = vpop.xlane.xlu0 %1112
        %1114 = vadd.xlane.f32.xlu0 %v1090
        %v1115 = vpop.xlane.xlu0 %1114
        %1116 = vadd.xlane.f32.xlu0 %v1091
        %v1117 = vpop.xlane.xlu0 %1116
        %1118 = vadd.xlane.f32.xlu0 %v1092
        %v1119 = vpop.xlane.xlu0 %1118
        %1120 = vadd.xlane.f32.xlu0 %v1093
        %v1121 = vpop.xlane.xlu0 %1120
        %1122 = vadd.xlane.f32.xlu0 %v1094
        %v1123 = vpop.xlane.xlu0 %1122
        %1124 = vadd.xlane.f32.xlu0 %v1095
        %v1125 = vpop.xlane.xlu0 %1124
        %1126 = vadd.xlane.f32.xlu0 %v1096
        %v1127 = vpop.xlane.xlu0 %1126
        %1128 = vadd.xlane.f32.xlu0 %v1097
        %v1129 = vpop.xlane.xlu0 %1128
        %v1130 = vadd.f32 %v1050, %v1099
        %v1131 = vadd.f32 %v1051, %v1101
        %v1132 = vadd.f32 %v1052, %v1103
        %v1133 = vadd.f32 %v1053, %v1105
        %v1134 = vadd.f32 %v1054, %v1107
        %v1135 = vadd.f32 %v1055, %v1109
        %v1136 = vadd.f32 %v1056, %v1111
        %v1137 = vadd.f32 %v1057, %v1113
        %v1138 = vadd.f32 %v1058, %v1115
        %v1139 = vadd.f32 %v1059, %v1117
        %v1140 = vadd.f32 %v1060, %v1119
        %v1141 = vadd.f32 %v1061, %v1121
        %v1142 = vadd.f32 %v1062, %v1123
        %v1143 = vadd.f32 %v1063, %v1125
        %v1144 = vadd.f32 %v1064, %v1127
        %v1145 = vadd.f32 %v1065, %v1129
        %1146 = vst.msk [vmem:[#allocation3] sm:$0xff] %vm802, %v1130
        %1147 = vst.msk [vmem:[#allocation3 + $0x8] sm:$0xff] %vm802, %v1131
        %1148 = vst.msk [vmem:[#allocation3 + $0x10] sm:$0xff] %vm802, %v1132
        %1149 = vst.msk [vmem:[#allocation3 + $0x18] sm:$0xff] %vm802, %v1133
        %1150 = vst.msk [vmem:[#allocation3 + $0x20] sm:$0xff] %vm802, %v1134
        %1151 = vst.msk [vmem:[#allocation3 + $0x28] sm:$0xff] %vm802, %v1135
        %1152 = vst.msk [vmem:[#allocation3 + $0x30] sm:$0xff] %vm802, %v1136
        %1153 = vst.msk [vmem:[#allocation3 + $0x38] sm:$0xff] %vm802, %v1137
        %1154 = vst.msk [vmem:[#allocation3 + $0x40] sm:$0xff] %vm802, %v1138
        %1155 = vst.msk [vmem:[#allocation3 + $0x48] sm:$0xff] %vm802, %v1139
        %1156 = vst.msk [vmem:[#allocation3 + $0x50] sm:$0xff] %vm802, %v1140
        %1157 = vst.msk [vmem:[#allocation3 + $0x58] sm:$0xff] %vm802, %v1141
        %1158 = vst.msk [vmem:[#allocation3 + $0x60] sm:$0xff] %vm802, %v1142
        %1159 = vst.msk [vmem:[#allocation3 + $0x68] sm:$0xff] %vm802, %v1143
        %1160 = vst.msk [vmem:[#allocation3 + $0x70] sm:$0xff] %vm802, %v1144
        %1161 = vst.msk [vmem:[#allocation3 + $0x78] sm:$0xff] %vm802, %v1145
        %v1162 = vld [vmem:[%s4] sm:$0xff]
        %v1163 = vld [vmem:[%s4 + $0x8] sm:$0xff]
        %v1164 = vld [vmem:[%s4 + $0x10] sm:$0xff]
        %v1165 = vld [vmem:[%s4 + $0x18] sm:$0xff]
        %v1166 = vld [vmem:[%s4 + $0x20] sm:$0xff]
        %v1167 = vld [vmem:[%s4 + $0x28] sm:$0xff]
        %v1168 = vld [vmem:[%s4 + $0x30] sm:$0xff]
        %v1169 = vld [vmem:[%s4 + $0x38] sm:$0xff]
        %v1170 = vld [vmem:[%s4 + $0x40] sm:$0xff]
        %v1171 = vld [vmem:[%s4 + $0x48] sm:$0xff]
        %v1172 = vld [vmem:[%s4 + $0x50] sm:$0xff]
        %v1173 = vld [vmem:[%s4 + $0x58] sm:$0xff]
        %v1174 = vld [vmem:[%s4 + $0x60] sm:$0xff]
        %v1175 = vld [vmem:[%s4 + $0x68] sm:$0xff]
        %v1176 = vld [vmem:[%s4 + $0x70] sm:$0xff]
        %v1177 = vld [vmem:[%s4 + $0x78] sm:$0xff]
        %s1178 = scalar_lea.vmem %s391, 4 [#allocation6]
        %v1179 = vld [vmem:[%s1178] sm:$0xf]
        %v1181 = vsel %vm492, %v1162, 0
        %v1184 = vsel %vm492, %v1163, 0
        %v1187 = vsel %vm492, %v1164, 0
        %v1190 = vsel %vm492, %v1165, 0
        %v1193 = vsel %vm492, %v1166, 0
        %v1196 = vsel %vm492, %v1167, 0
        %v1199 = vsel %vm492, %v1168, 0
        %v1202 = vsel %vm492, %v1169, 0
        %v1205 = vsel %vm492, %v1170, 0
        %v1208 = vsel %vm492, %v1171, 0
        %v1211 = vsel %vm492, %v1172, 0
        %v1214 = vsel %vm492, %v1173, 0
        %v1217 = vsel %vm492, %v1174, 0
        %v1220 = vsel %vm492, %v1175, 0
        %v1223 = vsel %vm492, %v1176, 0
        %v1226 = vsel %vm492, %v1177, 0
        %v1229 = vsel %vm541, %v1179, 0
        %1231 = vmatprep.subr.mxu0 0.0
        %1232 = vmatpush1.msra.mxu0 %v1229
        %1233 = vmatprep.subr.mxu0 0.0
        %1234 = vmatpush1.msra.mxu0 0.0
        %1235 = vmatprep.subr.mxu0 0.0
        %1236 = vmatpush1.msra.mxu0 0.0
        %1237 = vmatprep.subr.mxu0 0.0
        %1238 = vmatpush1.msra.mxu0 0.0
        %1239 = vmatprep.subr.mxu0 0.0
        %1240 = vmatpush1.msra.mxu0 0.0
        %1241 = vmatprep.subr.mxu0 0.0
        %1242 = vmatpush1.msra.mxu0 0.0
        %1243 = vmatprep.subr.mxu0 0.0
        %1244 = vmatpush1.msra.mxu0 0.0
        %1245 = vmatprep.subr.mxu0 0.0
        %1246 = vmatpush1.msra.mxu0 0.0
        %1247 = vmatprep.subr.mxu0 0.0
        %1248 = vmatpush1.msra.mxu0 0.0
        %1249 = vmatprep.subr.mxu0 0.0
        %1250 = vmatpush1.msra.mxu0 0.0
        %1251 = vmatprep.subr.mxu0 0.0
        %1252 = vmatpush1.msra.mxu0 0.0
        %1253 = vmatprep.subr.mxu0 0.0
        %1254 = vmatpush1.msra.mxu0 0.0
        %1255 = vmatprep.subr.mxu0 0.0
        %1256 = vmatpush1.msra.mxu0 0.0
        %1257 = vmatprep.subr.mxu0 0.0
        %1258 = vmatpush1.msra.mxu0 0.0
        %1259 = vmatprep.subr.mxu0 0.0
        %1260 = vmatpush1.msra.mxu0 0.0
        %1261 = vmatprep.subr.mxu0 0.0
        %1262 = vmatpush1.msra.mxu0 0.0
        %1263 = vmatprep.subr.mxu0 0.0
        %1264 = vmatpush1.msra.mxu0 0.0
        %1265 = vmatprep.subr.mxu0 0.0
        %1266 = vmatpush1.msra.mxu0 0.0
        %1267 = vmatprep.subr.mxu0 0.0
        %1268 = vmatpush1.msra.mxu0 0.0
        %1269 = vmatprep.subr.mxu0 0.0
        %1270 = vmatpush1.msra.mxu0 0.0
        %1271 = vmatprep.subr.mxu0 0.0
        %1272 = vmatpush1.msra.mxu0 0.0
        %1273 = vmatprep.subr.mxu0 0.0
        %1274 = vmatpush1.msra.mxu0 0.0
        %1275 = vmatprep.subr.mxu0 0.0
        %1276 = vmatpush1.msra.mxu0 0.0
        %1277 = vmatprep.subr.mxu0 0.0
        %1278 = vmatpush1.msra.mxu0 0.0
        %1279 = vmatprep.subr.mxu0 0.0
        %1280 = vmatpush1.msra.mxu0 0.0
        %1281 = vmatprep.subr.mxu0 0.0
        %1282 = vmatpush1.msra.mxu0 0.0
        %1283 = vmatprep.subr.mxu0 0.0
        %1284 = vmatpush1.msra.mxu0 0.0
        %1285 = vmatprep.subr.mxu0 0.0
        %1286 = vmatpush1.msra.mxu0 0.0
        %1287 = vmatprep.subr.mxu0 0.0
        %1288 = vmatpush1.msra.mxu0 0.0
        %1289 = vmatprep.subr.mxu0 0.0
        %1290 = vmatpush1.msra.mxu0 0.0
        %1291 = vmatprep.subr.mxu0 0.0
        %1292 = vmatpush1.msra.mxu0 0.0
        %1293 = vmatprep.subr.mxu0 0.0
        %1294 = vmatpush1.msra.mxu0 0.0
        %1295 = vmatprep.mubr.f32.mxu0 0.0
        %1296 = vmatmul.mubr.f32.gmra.mrb[0].mxu0 %v1181
        %v1297 = vpop.f32.mrb[0].mxu0
        %v1298 = vadd.f32 0.0, %v1297
        %v1299 = vpop.f32.mrb[0].mxu0
        %1300 = vmatprep.mubr.f32.mxu0 0.0
        %1301 = vmatmul.mubr.f32.gmra.mrb[0].mxu0 %v1184
        %v1302 = vpop.f32.mrb[0].mxu0
        %v1303 = vadd.f32 0.0, %v1302
        %v1304 = vpop.f32.mrb[0].mxu0
        %1305 = vmatprep.mubr.f32.mxu0 0.0
        %1306 = vmatmul.mubr.f32.gmra.mrb[0].mxu0 %v1187
        %v1307 = vpop.f32.mrb[0].mxu0
        %v1308 = vadd.f32 0.0, %v1307
        %v1309 = vpop.f32.mrb[0].mxu0
        %1310 = vmatprep.mubr.f32.mxu0 0.0
        %1311 = vmatmul.mubr.f32.gmra.mrb[0].mxu0 %v1190
        %v1312 = vpop.f32.mrb[0].mxu0
        %v1313 = vadd.f32 0.0, %v1312
        %v1314 = vpop.f32.mrb[0].mxu0
        %1315 = vmatprep.mubr.f32.mxu0 0.0
        %1316 = vmatmul.mubr.f32.gmra.mrb[0].mxu0 %v1193
        %v1317 = vpop.f32.mrb[0].mxu0
        %v1318 = vadd.f32 0.0, %v1317
        %v1319 = vpop.f32.mrb[0].mxu0
        %1320 = vmatprep.mubr.f32.mxu0 0.0
        %1321 = vmatmul.mubr.f32.gmra.mrb[0].mxu0 %v1196
        %v1322 = vpop.f32.mrb[0].mxu0
        %v1323 = vadd.f32 0.0, %v1322
        %v1324 = vpop.f32.mrb[0].mxu0
        %1325 = vmatprep.mubr.f32.mxu0 0.0
        %1326 = vmatmul.mubr.f32.gmra.mrb[0].mxu0 %v1199
        %v1327 = vpop.f32.mrb[0].mxu0
        %v1328 = vadd.f32 0.0, %v1327
        %v1329 = vpop.f32.mrb[0].mxu0
        %1330 = vmatprep.mubr.f32.mxu0 0.0
        %1331 = vmatmul.mubr.f32.gmra.mrb[0].mxu0 %v1202
        %v1332 = vpop.f32.mrb[0].mxu0
        %v1333 = vadd.f32 0.0, %v1332
        %v1334 = vpop.f32.mrb[0].mxu0
        %1335 = vmatprep.mubr.f32.mxu0 0.0
        %1336 = vmatmul.mubr.f32.gmra.mrb[0].mxu0 %v1205
        %v1337 = vpop.f32.mrb[0].mxu0
        %v1338 = vadd.f32 0.0, %v1337
        %v1339 = vpop.f32.mrb[0].mxu0
        %1340 = vmatprep.mubr.f32.mxu0 0.0
        %1341 = vmatmul.mubr.f32.gmra.mrb[0].mxu0 %v1208
        %v1342 = vpop.f32.mrb[0].mxu0
        %v1343 = vadd.f32 0.0, %v1342
        %v1344 = vpop.f32.mrb[0].mxu0
        %1345 = vmatprep.mubr.f32.mxu0 0.0
        %1346 = vmatmul.mubr.f32.gmra.mrb[0].mxu0 %v1211
        %v1347 = vpop.f32.mrb[0].mxu0
        %v1348 = vadd.f32 0.0, %v1347
        %v1349 = vpop.f32.mrb[0].mxu0
        %1350 = vmatprep.mubr.f32.mxu0 0.0
        %1351 = vmatmul.mubr.f32.gmra.mrb[0].mxu0 %v1214
        %v1352 = vpop.f32.mrb[0].mxu0
        %v1353 = vadd.f32 0.0, %v1352
        %v1354 = vpop.f32.mrb[0].mxu0
        %1355 = vmatprep.mubr.f32.mxu0 0.0
        %1356 = vmatmul.mubr.f32.gmra.mrb[0].mxu0 %v1217
        %v1357 = vpop.f32.mrb[0].mxu0
        %v1358 = vadd.f32 0.0, %v1357
        %v1359 = vpop.f32.mrb[0].mxu0
        %1360 = vmatprep.mubr.f32.mxu0 0.0
        %1361 = vmatmul.mubr.f32.gmra.mrb[0].mxu0 %v1220
        %v1362 = vpop.f32.mrb[0].mxu0
        %v1363 = vadd.f32 0.0, %v1362
        %v1364 = vpop.f32.mrb[0].mxu0
        %1365 = vmatprep.mubr.f32.mxu0 0.0
        %1366 = vmatmul.mubr.f32.gmra.mrb[0].mxu0 %v1223
        %v1367 = vpop.f32.mrb[0].mxu0
        %v1368 = vadd.f32 0.0, %v1367
        %v1369 = vpop.f32.mrb[0].mxu0
        %1370 = vmatprep.mubr.f32.mxu0 0.0
        %1371 = vmatmul.mubr.f32.gmra.mrb[0].mxu0 %v1226
        %v1372 = vpop.f32.mrb[0].mxu0
        %v1373 = vadd.f32 0.0, %v1372
        %v1374 = vpop.f32.mrb[0].mxu0
        %1375 = vdwg.mxu0
        %v1376 = vmax.f32 %v1298, 1e-06
        %v1377 = vmax.f32 %v1303, 1e-06
        %v1378 = vmax.f32 %v1308, 1e-06
        %v1379 = vmax.f32 %v1313, 1e-06
        %v1380 = vmax.f32 %v1318, 1e-06
        %v1381 = vmax.f32 %v1323, 1e-06
        %v1382 = vmax.f32 %v1328, 1e-06
        %v1383 = vmax.f32 %v1333, 1e-06
        %v1384 = vmax.f32 %v1338, 1e-06
        %v1385 = vmax.f32 %v1343, 1e-06
        %v1386 = vmax.f32 %v1348, 1e-06
        %v1387 = vmax.f32 %v1353, 1e-06
        %v1388 = vmax.f32 %v1358, 1e-06
        %v1389 = vmax.f32 %v1363, 1e-06
        %v1390 = vmax.f32 %v1368, 1e-06
        %v1391 = vmax.f32 %v1373, 1e-06
        %v1392 = vld [vmem:[#allocation2] sm:$0xff]
        %v1393 = vld [vmem:[#allocation2 + $0x8] sm:$0xff]
        %v1394 = vld [vmem:[#allocation2 + $0x10] sm:$0xff]
        %v1395 = vld [vmem:[#allocation2 + $0x18] sm:$0xff]
        %v1396 = vld [vmem:[#allocation2 + $0x20] sm:$0xff]
        %v1397 = vld [vmem:[#allocation2 + $0x28] sm:$0xff]
        %v1398 = vld [vmem:[#allocation2 + $0x30] sm:$0xff]
        %v1399 = vld [vmem:[#allocation2 + $0x38] sm:$0xff]
        %v1400 = vld [vmem:[#allocation2 + $0x40] sm:$0xff]
        %v1401 = vld [vmem:[#allocation2 + $0x48] sm:$0xff]
        %v1402 = vld [vmem:[#allocation2 + $0x50] sm:$0xff]
        %v1403 = vld [vmem:[#allocation2 + $0x58] sm:$0xff]
        %v1404 = vld [vmem:[#allocation2 + $0x60] sm:$0xff]
        %v1405 = vld [vmem:[#allocation2 + $0x68] sm:$0xff]
        %v1406 = vld [vmem:[#allocation2 + $0x70] sm:$0xff]
        %v1407 = vld [vmem:[#allocation2 + $0x78] sm:$0xff]
        %v1408 = vmul.f32 %v1376, %v1376
        %v1409 = vmul.f32 %v1377, %v1377
        %v1410 = vmul.f32 %v1378, %v1378
        %v1411 = vmul.f32 %v1379, %v1379
        %v1412 = vmul.f32 %v1380, %v1380
        %v1413 = vmul.f32 %v1381, %v1381
        %v1414 = vmul.f32 %v1382, %v1382
        %v1415 = vmul.f32 %v1383, %v1383
        %v1416 = vmul.f32 %v1384, %v1384
        %v1417 = vmul.f32 %v1385, %v1385
        %v1418 = vmul.f32 %v1386, %v1386
        %v1419 = vmul.f32 %v1387, %v1387
        %v1420 = vmul.f32 %v1388, %v1388
        %v1421 = vmul.f32 %v1389, %v1389
        %v1422 = vmul.f32 %v1390, %v1390
        %v1423 = vmul.f32 %v1391, %v1391
        %v1424 = vmul.f32 %v1408, %v1376
        %v1425 = vmul.f32 %v1409, %v1377
        %v1426 = vmul.f32 %v1410, %v1378
        %v1427 = vmul.f32 %v1411, %v1379
        %v1428 = vmul.f32 %v1412, %v1380
        %v1429 = vmul.f32 %v1413, %v1381
        %v1430 = vmul.f32 %v1414, %v1382
        %v1431 = vmul.f32 %v1415, %v1383
        %v1432 = vmul.f32 %v1416, %v1384
        %v1433 = vmul.f32 %v1417, %v1385
        %v1434 = vmul.f32 %v1418, %v1386
        %v1435 = vmul.f32 %v1419, %v1387
        %v1436 = vmul.f32 %v1420, %v1388
        %v1437 = vmul.f32 %v1421, %v1389
        %v1438 = vmul.f32 %v1422, %v1390
        %v1439 = vmul.f32 %v1423, %v1391
        %1440 = vadd.xlane.f32.xlu0 %v1424
        %v1441 = vpop.xlane.xlu0 %1440
        %1442 = vadd.xlane.f32.xlu0 %v1425
        %v1443 = vpop.xlane.xlu0 %1442
        %1444 = vadd.xlane.f32.xlu0 %v1426
        %v1445 = vpop.xlane.xlu0 %1444
        %1446 = vadd.xlane.f32.xlu0 %v1427
        %v1447 = vpop.xlane.xlu0 %1446
        %1448 = vadd.xlane.f32.xlu0 %v1428
        %v1449 = vpop.xlane.xlu0 %1448
        %1450 = vadd.xlane.f32.xlu0 %v1429
        %v1451 = vpop.xlane.xlu0 %1450
        %1452 = vadd.xlane.f32.xlu0 %v1430
        %v1453 = vpop.xlane.xlu0 %1452
        %1454 = vadd.xlane.f32.xlu0 %v1431
        %v1455 = vpop.xlane.xlu0 %1454
        %1456 = vadd.xlane.f32.xlu0 %v1432
        %v1457 = vpop.xlane.xlu0 %1456
        %1458 = vadd.xlane.f32.xlu0 %v1433
        %v1459 = vpop.xlane.xlu0 %1458
        %1460 = vadd.xlane.f32.xlu0 %v1434
        %v1461 = vpop.xlane.xlu0 %1460
        %1462 = vadd.xlane.f32.xlu0 %v1435
        %v1463 = vpop.xlane.xlu0 %1462
        %1464 = vadd.xlane.f32.xlu0 %v1436
        %v1465 = vpop.xlane.xlu0 %1464
        %1466 = vadd.xlane.f32.xlu0 %v1437
        %v1467 = vpop.xlane.xlu0 %1466
        %1468 = vadd.xlane.f32.xlu0 %v1438
        %v1469 = vpop.xlane.xlu0 %1468
        %1470 = vadd.xlane.f32.xlu0 %v1439
        %v1471 = vpop.xlane.xlu0 %1470
        %v1472 = vadd.f32 %v1392, %v1441
        %v1473 = vadd.f32 %v1393, %v1443
        %v1474 = vadd.f32 %v1394, %v1445
        %v1475 = vadd.f32 %v1395, %v1447
        %v1476 = vadd.f32 %v1396, %v1449
        %v1477 = vadd.f32 %v1397, %v1451
        %v1478 = vadd.f32 %v1398, %v1453
        %v1479 = vadd.f32 %v1399, %v1455
        %v1480 = vadd.f32 %v1400, %v1457
        %v1481 = vadd.f32 %v1401, %v1459
        %v1482 = vadd.f32 %v1402, %v1461
        %v1483 = vadd.f32 %v1403, %v1463
        %v1484 = vadd.f32 %v1404, %v1465
        %v1485 = vadd.f32 %v1405, %v1467
        %v1486 = vadd.f32 %v1406, %v1469
        %v1487 = vadd.f32 %v1407, %v1471
        %vm1488 = vcmask 15368
        %1489 = vst.msk [vmem:[#allocation2] sm:$0xff] %vm1488, %v1472
        %1490 = vst.msk [vmem:[#allocation2 + $0x8] sm:$0xff] %vm1488, %v1473
        %1491 = vst.msk [vmem:[#allocation2 + $0x10] sm:$0xff] %vm1488, %v1474
        %1492 = vst.msk [vmem:[#allocation2 + $0x18] sm:$0xff] %vm1488, %v1475
        %1493 = vst.msk [vmem:[#allocation2 + $0x20] sm:$0xff] %vm1488, %v1476
        %1494 = vst.msk [vmem:[#allocation2 + $0x28] sm:$0xff] %vm1488, %v1477
        %1495 = vst.msk [vmem:[#allocation2 + $0x30] sm:$0xff] %vm1488, %v1478
        %1496 = vst.msk [vmem:[#allocation2 + $0x38] sm:$0xff] %vm1488, %v1479
        %1497 = vst.msk [vmem:[#allocation2 + $0x40] sm:$0xff] %vm1488, %v1480
        %1498 = vst.msk [vmem:[#allocation2 + $0x48] sm:$0xff] %vm1488, %v1481
        %1499 = vst.msk [vmem:[#allocation2 + $0x50] sm:$0xff] %vm1488, %v1482
        %1500 = vst.msk [vmem:[#allocation2 + $0x58] sm:$0xff] %vm1488, %v1483
        %1501 = vst.msk [vmem:[#allocation2 + $0x60] sm:$0xff] %vm1488, %v1484
        %1502 = vst.msk [vmem:[#allocation2 + $0x68] sm:$0xff] %vm1488, %v1485
        %1503 = vst.msk [vmem:[#allocation2 + $0x70] sm:$0xff] %vm1488, %v1486
        %1504 = vst.msk [vmem:[#allocation2 + $0x78] sm:$0xff] %vm1488, %v1487
        %v1505 = vld [vmem:[%s5] sm:$0xff]
        %v1506 = vld [vmem:[%s5 + $0x8] sm:$0xff]
        %v1507 = vld [vmem:[%s5 + $0x10] sm:$0xff]
        %v1508 = vld [vmem:[%s5 + $0x18] sm:$0xff]
        %v1509 = vld [vmem:[%s5 + $0x20] sm:$0xff]
        %v1510 = vld [vmem:[%s5 + $0x28] sm:$0xff]
        %v1511 = vld [vmem:[%s5 + $0x30] sm:$0xff]
        %v1512 = vld [vmem:[%s5 + $0x38] sm:$0xff]
        %v1513 = vld [vmem:[%s5 + $0x40] sm:$0xff]
        %v1514 = vld [vmem:[%s5 + $0x48] sm:$0xff]
        %v1515 = vld [vmem:[%s5 + $0x50] sm:$0xff]
        %v1516 = vld [vmem:[%s5 + $0x58] sm:$0xff]
        %v1517 = vld [vmem:[%s5 + $0x60] sm:$0xff]
        %v1518 = vld [vmem:[%s5 + $0x68] sm:$0xff]
        %v1519 = vld [vmem:[%s5 + $0x70] sm:$0xff]
        %v1520 = vld [vmem:[%s5 + $0x78] sm:$0xff]
        %s1521 = scalar_lea.vmem %s398, 4 [#allocation7]
        %v1522 = vld [vmem:[%s1521] sm:$0x7]
        %v1524 = vsel %vm836, %v1505, 0
        %v1527 = vsel %vm836, %v1506, 0
        %v1530 = vsel %vm836, %v1507, 0
        %v1533 = vsel %vm836, %v1508, 0
        %v1536 = vsel %vm836, %v1509, 0
        %v1539 = vsel %vm836, %v1510, 0
        %v1542 = vsel %vm836, %v1511, 0
        %v1545 = vsel %vm836, %v1512, 0
        %v1548 = vsel %vm836, %v1513, 0
        %v1551 = vsel %vm836, %v1514, 0
        %v1554 = vsel %vm836, %v1515, 0
        %v1557 = vsel %vm836, %v1516, 0
        %v1560 = vsel %vm836, %v1517, 0
        %v1563 = vsel %vm836, %v1518, 0
        %v1566 = vsel %vm836, %v1519, 0
        %v1569 = vsel %vm836, %v1520, 0
        %v1572 = vsel %vm885, %v1522, 0
        %1574 = vmatprep.subr.mxu0 0.0
        %1575 = vmatpush1.msra.mxu0 %v1572
        %1576 = vmatprep.subr.mxu0 0.0
        %1577 = vmatpush1.msra.mxu0 0.0
        %1578 = vmatprep.subr.mxu0 0.0
        %1579 = vmatpush1.msra.mxu0 0.0
        %1580 = vmatprep.subr.mxu0 0.0
        %1581 = vmatpush1.msra.mxu0 0.0
        %1582 = vmatprep.subr.mxu0 0.0
        %1583 = vmatpush1.msra.mxu0 0.0
        %1584 = vmatprep.subr.mxu0 0.0
        %1585 = vmatpush1.msra.mxu0 0.0
        %1586 = vmatprep.subr.mxu0 0.0
        %1587 = vmatpush1.msra.mxu0 0.0
        %1588 = vmatprep.subr.mxu0 0.0
        %1589 = vmatpush1.msra.mxu0 0.0
        %1590 = vmatprep.subr.mxu0 0.0
        %1591 = vmatpush1.msra.mxu0 0.0
        %1592 = vmatprep.subr.mxu0 0.0
        %1593 = vmatpush1.msra.mxu0 0.0
        %1594 = vmatprep.subr.mxu0 0.0
        %1595 = vmatpush1.msra.mxu0 0.0
        %1596 = vmatprep.subr.mxu0 0.0
        %1597 = vmatpush1.msra.mxu0 0.0
        %1598 = vmatprep.subr.mxu0 0.0
        %1599 = vmatpush1.msra.mxu0 0.0
        %1600 = vmatprep.subr.mxu0 0.0
        %1601 = vmatpush1.msra.mxu0 0.0
        %1602 = vmatprep.subr.mxu0 0.0
        %1603 = vmatpush1.msra.mxu0 0.0
        %1604 = vmatprep.subr.mxu0 0.0
        %1605 = vmatpush1.msra.mxu0 0.0
        %1606 = vmatprep.subr.mxu0 0.0
        %1607 = vmatpush1.msra.mxu0 0.0
        %1608 = vmatprep.subr.mxu0 0.0
        %1609 = vmatpush1.msra.mxu0 0.0
        %1610 = vmatprep.subr.mxu0 0.0
        %1611 = vmatpush1.msra.mxu0 0.0
        %1612 = vmatprep.subr.mxu0 0.0
        %1613 = vmatpush1.msra.mxu0 0.0
        %1614 = vmatprep.subr.mxu0 0.0
        %1615 = vmatpush1.msra.mxu0 0.0
        %1616 = vmatprep.subr.mxu0 0.0
        %1617 = vmatpush1.msra.mxu0 0.0
        %1618 = vmatprep.subr.mxu0 0.0
        %1619 = vmatpush1.msra.mxu0 0.0
        %1620 = vmatprep.subr.mxu0 0.0
        %1621 = vmatpush1.msra.mxu0 0.0
        %1622 = vmatprep.subr.mxu0 0.0
        %1623 = vmatpush1.msra.mxu0 0.0
        %1624 = vmatprep.subr.mxu0 0.0
        %1625 = vmatpush1.msra.mxu0 0.0
        %1626 = vmatprep.subr.mxu0 0.0
        %1627 = vmatpush1.msra.mxu0 0.0
        %1628 = vmatprep.subr.mxu0 0.0
        %1629 = vmatpush1.msra.mxu0 0.0
        %1630 = vmatprep.subr.mxu0 0.0
        %1631 = vmatpush1.msra.mxu0 0.0
        %1632 = vmatprep.subr.mxu0 0.0
        %1633 = vmatpush1.msra.mxu0 0.0
        %1634 = vmatprep.subr.mxu0 0.0
        %1635 = vmatpush1.msra.mxu0 0.0
        %1636 = vmatprep.subr.mxu0 0.0
        %1637 = vmatpush1.msra.mxu0 0.0
        %1638 = vmatprep.mubr.f32.mxu0 0.0
        %1639 = vmatmul.mubr.f32.gmra.mrb[0].mxu0 %v1524
        %v1640 = vpop.f32.mrb[0].mxu0
        %v1641 = vadd.f32 0.0, %v1640
        %v1642 = vpop.f32.mrb[0].mxu0
        %1643 = vmatprep.mubr.f32.mxu0 0.0
        %1644 = vmatmul.mubr.f32.gmra.mrb[0].mxu0 %v1527
        %v1645 = vpop.f32.mrb[0].mxu0
        %v1646 = vadd.f32 0.0, %v1645
        %v1647 = vpop.f32.mrb[0].mxu0
        %1648 = vmatprep.mubr.f32.mxu0 0.0
        %1649 = vmatmul.mubr.f32.gmra.mrb[0].mxu0 %v1530
        %v1650 = vpop.f32.mrb[0].mxu0
        %v1651 = vadd.f32 0.0, %v1650
        %v1652 = vpop.f32.mrb[0].mxu0
        %1653 = vmatprep.mubr.f32.mxu0 0.0
        %1654 = vmatmul.mubr.f32.gmra.mrb[0].mxu0 %v1533
        %v1655 = vpop.f32.mrb[0].mxu0
        %v1656 = vadd.f32 0.0, %v1655
        %v1657 = vpop.f32.mrb[0].mxu0
        %1658 = vmatprep.mubr.f32.mxu0 0.0
        %1659 = vmatmul.mubr.f32.gmra.mrb[0].mxu0 %v1536
        %v1660 = vpop.f32.mrb[0].mxu0
        %v1661 = vadd.f32 0.0, %v1660
        %v1662 = vpop.f32.mrb[0].mxu0
        %1663 = vmatprep.mubr.f32.mxu0 0.0
        %1664 = vmatmul.mubr.f32.gmra.mrb[0].mxu0 %v1539
        %v1665 = vpop.f32.mrb[0].mxu0
        %v1666 = vadd.f32 0.0, %v1665
        %v1667 = vpop.f32.mrb[0].mxu0
        %1668 = vmatprep.mubr.f32.mxu0 0.0
        %1669 = vmatmul.mubr.f32.gmra.mrb[0].mxu0 %v1542
        %v1670 = vpop.f32.mrb[0].mxu0
        %v1671 = vadd.f32 0.0, %v1670
        %v1672 = vpop.f32.mrb[0].mxu0
        %1673 = vmatprep.mubr.f32.mxu0 0.0
        %1674 = vmatmul.mubr.f32.gmra.mrb[0].mxu0 %v1545
        %v1675 = vpop.f32.mrb[0].mxu0
        %v1676 = vadd.f32 0.0, %v1675
        %v1677 = vpop.f32.mrb[0].mxu0
        %1678 = vmatprep.mubr.f32.mxu0 0.0
        %1679 = vmatmul.mubr.f32.gmra.mrb[0].mxu0 %v1548
        %v1680 = vpop.f32.mrb[0].mxu0
        %v1681 = vadd.f32 0.0, %v1680
        %v1682 = vpop.f32.mrb[0].mxu0
        %1683 = vmatprep.mubr.f32.mxu0 0.0
        %1684 = vmatmul.mubr.f32.gmra.mrb[0].mxu0 %v1551
        %v1685 = vpop.f32.mrb[0].mxu0
        %v1686 = vadd.f32 0.0, %v1685
        %v1687 = vpop.f32.mrb[0].mxu0
        %1688 = vmatprep.mubr.f32.mxu0 0.0
        %1689 = vmatmul.mubr.f32.gmra.mrb[0].mxu0 %v1554
        %v1690 = vpop.f32.mrb[0].mxu0
        %v1691 = vadd.f32 0.0, %v1690
        %v1692 = vpop.f32.mrb[0].mxu0
        %1693 = vmatprep.mubr.f32.mxu0 0.0
        %1694 = vmatmul.mubr.f32.gmra.mrb[0].mxu0 %v1557
        %v1695 = vpop.f32.mrb[0].mxu0
        %v1696 = vadd.f32 0.0, %v1695
        %v1697 = vpop.f32.mrb[0].mxu0
        %1698 = vmatprep.mubr.f32.mxu0 0.0
        %1699 = vmatmul.mubr.f32.gmra.mrb[0].mxu0 %v1560
        %v1700 = vpop.f32.mrb[0].mxu0
        %v1701 = vadd.f32 0.0, %v1700
        %v1702 = vpop.f32.mrb[0].mxu0
        %1703 = vmatprep.mubr.f32.mxu0 0.0
        %1704 = vmatmul.mubr.f32.gmra.mrb[0].mxu0 %v1563
        %v1705 = vpop.f32.mrb[0].mxu0
        %v1706 = vadd.f32 0.0, %v1705
        %v1707 = vpop.f32.mrb[0].mxu0
        %1708 = vmatprep.mubr.f32.mxu0 0.0
        %1709 = vmatmul.mubr.f32.gmra.mrb[0].mxu0 %v1566
        %v1710 = vpop.f32.mrb[0].mxu0
        %v1711 = vadd.f32 0.0, %v1710
        %v1712 = vpop.f32.mrb[0].mxu0
        %1713 = vmatprep.mubr.f32.mxu0 0.0
        %1714 = vmatmul.mubr.f32.gmra.mrb[0].mxu0 %v1569
        %v1715 = vpop.f32.mrb[0].mxu0
        %v1716 = vadd.f32 0.0, %v1715
        %v1717 = vpop.f32.mrb[0].mxu0
        %1718 = vdwg.mxu0
        %v1719 = vmax.f32 %v1641, 1e-06
        %v1720 = vmax.f32 %v1646, 1e-06
        %v1721 = vmax.f32 %v1651, 1e-06
        %v1722 = vmax.f32 %v1656, 1e-06
        %v1723 = vmax.f32 %v1661, 1e-06
        %v1724 = vmax.f32 %v1666, 1e-06
        %v1725 = vmax.f32 %v1671, 1e-06
        %v1726 = vmax.f32 %v1676, 1e-06
        %v1727 = vmax.f32 %v1681, 1e-06
        %v1728 = vmax.f32 %v1686, 1e-06
        %v1729 = vmax.f32 %v1691, 1e-06
        %v1730 = vmax.f32 %v1696, 1e-06
        %v1731 = vmax.f32 %v1701, 1e-06
        %v1732 = vmax.f32 %v1706, 1e-06
        %v1733 = vmax.f32 %v1711, 1e-06
        %v1734 = vmax.f32 %v1716, 1e-06
        %v1735 = vld [vmem:[#allocation3] sm:$0xff]
        %v1736 = vld [vmem:[#allocation3 + $0x8] sm:$0xff]
        %v1737 = vld [vmem:[#allocation3 + $0x10] sm:$0xff]
        %v1738 = vld [vmem:[#allocation3 + $0x18] sm:$0xff]
        %v1739 = vld [vmem:[#allocation3 + $0x20] sm:$0xff]
        %v1740 = vld [vmem:[#allocation3 + $0x28] sm:$0xff]
        %v1741 = vld [vmem:[#allocation3 + $0x30] sm:$0xff]
        %v1742 = vld [vmem:[#allocation3 + $0x38] sm:$0xff]
        %v1743 = vld [vmem:[#allocation3 + $0x40] sm:$0xff]
        %v1744 = vld [vmem:[#allocation3 + $0x48] sm:$0xff]
        %v1745 = vld [vmem:[#allocation3 + $0x50] sm:$0xff]
        %v1746 = vld [vmem:[#allocation3 + $0x58] sm:$0xff]
        %v1747 = vld [vmem:[#allocation3 + $0x60] sm:$0xff]
        %v1748 = vld [vmem:[#allocation3 + $0x68] sm:$0xff]
        %v1749 = vld [vmem:[#allocation3 + $0x70] sm:$0xff]
        %v1750 = vld [vmem:[#allocation3 + $0x78] sm:$0xff]
        %v1751 = vmul.f32 %v1719, %v1719
        %v1752 = vmul.f32 %v1720, %v1720
        %v1753 = vmul.f32 %v1721, %v1721
        %v1754 = vmul.f32 %v1722, %v1722
        %v1755 = vmul.f32 %v1723, %v1723
        %v1756 = vmul.f32 %v1724, %v1724
        %v1757 = vmul.f32 %v1725, %v1725
        %v1758 = vmul.f32 %v1726, %v1726
        %v1759 = vmul.f32 %v1727, %v1727
        %v1760 = vmul.f32 %v1728, %v1728
        %v1761 = vmul.f32 %v1729, %v1729
        %v1762 = vmul.f32 %v1730, %v1730
        %v1763 = vmul.f32 %v1731, %v1731
        %v1764 = vmul.f32 %v1732, %v1732
        %v1765 = vmul.f32 %v1733, %v1733
        %v1766 = vmul.f32 %v1734, %v1734
        %v1767 = vmul.f32 %v1751, %v1719
        %v1768 = vmul.f32 %v1752, %v1720
        %v1769 = vmul.f32 %v1753, %v1721
        %v1770 = vmul.f32 %v1754, %v1722
        %v1771 = vmul.f32 %v1755, %v1723
        %v1772 = vmul.f32 %v1756, %v1724
        %v1773 = vmul.f32 %v1757, %v1725
        %v1774 = vmul.f32 %v1758, %v1726
        %v1775 = vmul.f32 %v1759, %v1727
        %v1776 = vmul.f32 %v1760, %v1728
        %v1777 = vmul.f32 %v1761, %v1729
        %v1778 = vmul.f32 %v1762, %v1730
        %v1779 = vmul.f32 %v1763, %v1731
        %v1780 = vmul.f32 %v1764, %v1732
        %v1781 = vmul.f32 %v1765, %v1733
        %v1782 = vmul.f32 %v1766, %v1734
        %1783 = vadd.xlane.f32.xlu0 %v1767
        %v1784 = vpop.xlane.xlu0 %1783
        %1785 = vadd.xlane.f32.xlu0 %v1768
        %v1786 = vpop.xlane.xlu0 %1785
        %1787 = vadd.xlane.f32.xlu0 %v1769
        %v1788 = vpop.xlane.xlu0 %1787
        %1789 = vadd.xlane.f32.xlu0 %v1770
        %v1790 = vpop.xlane.xlu0 %1789
        %1791 = vadd.xlane.f32.xlu0 %v1771
        %v1792 = vpop.xlane.xlu0 %1791
        %1793 = vadd.xlane.f32.xlu0 %v1772
        %v1794 = vpop.xlane.xlu0 %1793
        %1795 = vadd.xlane.f32.xlu0 %v1773
        %v1796 = vpop.xlane.xlu0 %1795
        %1797 = vadd.xlane.f32.xlu0 %v1774
        %v1798 = vpop.xlane.xlu0 %1797
        %1799 = vadd.xlane.f32.xlu0 %v1775
        %v1800 = vpop.xlane.xlu0 %1799
        %1801 = vadd.xlane.f32.xlu0 %v1776
        %v1802 = vpop.xlane.xlu0 %1801
        %1803 = vadd.xlane.f32.xlu0 %v1777
        %v1804 = vpop.xlane.xlu0 %1803
        %1805 = vadd.xlane.f32.xlu0 %v1778
        %v1806 = vpop.xlane.xlu0 %1805
        %1807 = vadd.xlane.f32.xlu0 %v1779
        %v1808 = vpop.xlane.xlu0 %1807
        %1809 = vadd.xlane.f32.xlu0 %v1780
        %v1810 = vpop.xlane.xlu0 %1809
        %1811 = vadd.xlane.f32.xlu0 %v1781
        %v1812 = vpop.xlane.xlu0 %1811
        %1813 = vadd.xlane.f32.xlu0 %v1782
        %v1814 = vpop.xlane.xlu0 %1813
        %v1815 = vadd.f32 %v1735, %v1784
        %v1816 = vadd.f32 %v1736, %v1786
        %v1817 = vadd.f32 %v1737, %v1788
        %v1818 = vadd.f32 %v1738, %v1790
        %v1819 = vadd.f32 %v1739, %v1792
        %v1820 = vadd.f32 %v1740, %v1794
        %v1821 = vadd.f32 %v1741, %v1796
        %v1822 = vadd.f32 %v1742, %v1798
        %v1823 = vadd.f32 %v1743, %v1800
        %v1824 = vadd.f32 %v1744, %v1802
        %v1825 = vadd.f32 %v1745, %v1804
        %v1826 = vadd.f32 %v1746, %v1806
        %v1827 = vadd.f32 %v1747, %v1808
        %v1828 = vadd.f32 %v1748, %v1810
        %v1829 = vadd.f32 %v1749, %v1812
        %v1830 = vadd.f32 %v1750, %v1814
        %1831 = vst.msk [vmem:[#allocation3] sm:$0xff] %vm1488, %v1815
        %1832 = vst.msk [vmem:[#allocation3 + $0x8] sm:$0xff] %vm1488, %v1816
        %1833 = vst.msk [vmem:[#allocation3 + $0x10] sm:$0xff] %vm1488, %v1817
        %1834 = vst.msk [vmem:[#allocation3 + $0x18] sm:$0xff] %vm1488, %v1818
        %1835 = vst.msk [vmem:[#allocation3 + $0x20] sm:$0xff] %vm1488, %v1819
        %1836 = vst.msk [vmem:[#allocation3 + $0x28] sm:$0xff] %vm1488, %v1820
        %1837 = vst.msk [vmem:[#allocation3 + $0x30] sm:$0xff] %vm1488, %v1821
        %1838 = vst.msk [vmem:[#allocation3 + $0x38] sm:$0xff] %vm1488, %v1822
        %1839 = vst.msk [vmem:[#allocation3 + $0x40] sm:$0xff] %vm1488, %v1823
        %1840 = vst.msk [vmem:[#allocation3 + $0x48] sm:$0xff] %vm1488, %v1824
        %1841 = vst.msk [vmem:[#allocation3 + $0x50] sm:$0xff] %vm1488, %v1825
        %1842 = vst.msk [vmem:[#allocation3 + $0x58] sm:$0xff] %vm1488, %v1826
        %1843 = vst.msk [vmem:[#allocation3 + $0x60] sm:$0xff] %vm1488, %v1827
        %1844 = vst.msk [vmem:[#allocation3 + $0x68] sm:$0xff] %vm1488, %v1828
        %1845 = vst.msk [vmem:[#allocation3 + $0x70] sm:$0xff] %vm1488, %v1829
        %1846 = vst.msk [vmem:[#allocation3 + $0x78] sm:$0xff] %vm1488, %v1830
        %v1847 = vld [vmem:[%s4] sm:$0xff]
        %v1848 = vld [vmem:[%s4 + $0x8] sm:$0xff]
        %v1849 = vld [vmem:[%s4 + $0x10] sm:$0xff]
        %v1850 = vld [vmem:[%s4 + $0x18] sm:$0xff]
        %v1851 = vld [vmem:[%s4 + $0x20] sm:$0xff]
        %v1852 = vld [vmem:[%s4 + $0x28] sm:$0xff]
        %v1853 = vld [vmem:[%s4 + $0x30] sm:$0xff]
        %v1854 = vld [vmem:[%s4 + $0x38] sm:$0xff]
        %v1855 = vld [vmem:[%s4 + $0x40] sm:$0xff]
        %v1856 = vld [vmem:[%s4 + $0x48] sm:$0xff]
        %v1857 = vld [vmem:[%s4 + $0x50] sm:$0xff]
        %v1858 = vld [vmem:[%s4 + $0x58] sm:$0xff]
        %v1859 = vld [vmem:[%s4 + $0x60] sm:$0xff]
        %v1860 = vld [vmem:[%s4 + $0x68] sm:$0xff]
        %v1861 = vld [vmem:[%s4 + $0x70] sm:$0xff]
        %v1862 = vld [vmem:[%s4 + $0x78] sm:$0xff]
        %s1863 = scalar_lea.vmem %s391, 8 [#allocation6]
        %v1864 = vld [vmem:[%s1863] sm:$0xf]
        %v1866 = vsel %vm492, %v1847, 0
        %v1869 = vsel %vm492, %v1848, 0
        %v1872 = vsel %vm492, %v1849, 0
        %v1875 = vsel %vm492, %v1850, 0
        %v1878 = vsel %vm492, %v1851, 0
        %v1881 = vsel %vm492, %v1852, 0
        %v1884 = vsel %vm492, %v1853, 0
        %v1887 = vsel %vm492, %v1854, 0
        %v1890 = vsel %vm492, %v1855, 0
        %v1893 = vsel %vm492, %v1856, 0
        %v1896 = vsel %vm492, %v1857, 0
        %v1899 = vsel %vm492, %v1858, 0
        %v1902 = vsel %vm492, %v1859, 0
        %v1905 = vsel %vm492, %v1860, 0
        %v1908 = vsel %vm492, %v1861, 0
        %v1911 = vsel %vm492, %v1862, 0
        %v1914 = vsel %vm541, %v1864, 0
        %1916 = vmatprep.subr.mxu0 0.0
        %1917 = vmatpush1.msra.mxu0 %v1914
        %1918 = vmatprep.subr.mxu0 0.0
        %1919 = vmatpush1.msra.mxu0 0.0
        %1920 = vmatprep.subr.mxu0 0.0
        %1921 = vmatpush1.msra.mxu0 0.0
        %1922 = vmatprep.subr.mxu0 0.0
        %1923 = vmatpush1.msra.mxu0 0.0
        %1924 = vmatprep.subr.mxu0 0.0
        %1925 = vmatpush1.msra.mxu0 0.0
        %1926 = vmatprep.subr.mxu0 0.0
        %1927 = vmatpush1.msra.mxu0 0.0
        %1928 = vmatprep.subr.mxu0 0.0
        %1929 = vmatpush1.msra.mxu0 0.0
        %1930 = vmatprep.subr.mxu0 0.0
        %1931 = vmatpush1.msra.mxu0 0.0
        %1932 = vmatprep.subr.mxu0 0.0
        %1933 = vmatpush1.msra.mxu0 0.0
        %1934 = vmatprep.subr.mxu0 0.0
        %1935 = vmatpush1.msra.mxu0 0.0
        %1936 = vmatprep.subr.mxu0 0.0
        %1937 = vmatpush1.msra.mxu0 0.0
        %1938 = vmatprep.subr.mxu0 0.0
        %1939 = vmatpush1.msra.mxu0 0.0
        %1940 = vmatprep.subr.mxu0 0.0
        %1941 = vmatpush1.msra.mxu0 0.0
        %1942 = vmatprep.subr.mxu0 0.0
        %1943 = vmatpush1.msra.mxu0 0.0
        %1944 = vmatprep.subr.mxu0 0.0
        %1945 = vmatpush1.msra.mxu0 0.0
        %1946 = vmatprep.subr.mxu0 0.0
        %1947 = vmatpush1.msra.mxu0 0.0
        %1948 = vmatprep.subr.mxu0 0.0
        %1949 = vmatpush1.msra.mxu0 0.0
        %1950 = vmatprep.subr.mxu0 0.0
        %1951 = vmatpush1.msra.mxu0 0.0
        %1952 = vmatprep.subr.mxu0 0.0
        %1953 = vmatpush1.msra.mxu0 0.0
        %1954 = vmatprep.subr.mxu0 0.0
        %1955 = vmatpush1.msra.mxu0 0.0
        %1956 = vmatprep.subr.mxu0 0.0
        %1957 = vmatpush1.msra.mxu0 0.0
        %1958 = vmatprep.subr.mxu0 0.0
        %1959 = vmatpush1.msra.mxu0 0.0
        %1960 = vmatprep.subr.mxu0 0.0
        %1961 = vmatpush1.msra.mxu0 0.0
        %1962 = vmatprep.subr.mxu0 0.0
        %1963 = vmatpush1.msra.mxu0 0.0
        %1964 = vmatprep.subr.mxu0 0.0
        %1965 = vmatpush1.msra.mxu0 0.0
        %1966 = vmatprep.subr.mxu0 0.0
        %1967 = vmatpush1.msra.mxu0 0.0
        %1968 = vmatprep.subr.mxu0 0.0
        %1969 = vmatpush1.msra.mxu0 0.0
        %1970 = vmatprep.subr.mxu0 0.0
        %1971 = vmatpush1.msra.mxu0 0.0
        %1972 = vmatprep.subr.mxu0 0.0
        %1973 = vmatpush1.msra.mxu0 0.0
        %1974 = vmatprep.subr.mxu0 0.0
        %1975 = vmatpush1.msra.mxu0 0.0
        %1976 = vmatprep.subr.mxu0 0.0
        %1977 = vmatpush1.msra.mxu0 0.0
        %1978 = vmatprep.subr.mxu0 0.0
        %1979 = vmatpush1.msra.mxu0 0.0
        %1980 = vmatprep.mubr.f32.mxu0 0.0
        %1981 = vmatmul.mubr.f32.gmra.mrb[0].mxu0 %v1866
        %v1982 = vpop.f32.mrb[0].mxu0
        %v1983 = vadd.f32 0.0, %v1982
        %v1984 = vpop.f32.mrb[0].mxu0
        %1985 = vmatprep.mubr.f32.mxu0 0.0
        %1986 = vmatmul.mubr.f32.gmra.mrb[0].mxu0 %v1869
        %v1987 = vpop.f32.mrb[0].mxu0
        %v1988 = vadd.f32 0.0, %v1987
        %v1989 = vpop.f32.mrb[0].mxu0
        %1990 = vmatprep.mubr.f32.mxu0 0.0
        %1991 = vmatmul.mubr.f32.gmra.mrb[0].mxu0 %v1872
        %v1992 = vpop.f32.mrb[0].mxu0
        %v1993 = vadd.f32 0.0, %v1992
        %v1994 = vpop.f32.mrb[0].mxu0
        %1995 = vmatprep.mubr.f32.mxu0 0.0
        %1996 = vmatmul.mubr.f32.gmra.mrb[0].mxu0 %v1875
        %v1997 = vpop.f32.mrb[0].mxu0
        %v1998 = vadd.f32 0.0, %v1997
        %v1999 = vpop.f32.mrb[0].mxu0
        %2000 = vmatprep.mubr.f32.mxu0 0.0
        %2001 = vmatmul.mubr.f32.gmra.mrb[0].mxu0 %v1878
        %v2002 = vpop.f32.mrb[0].mxu0
        %v2003 = vadd.f32 0.0, %v2002
        %v2004 = vpop.f32.mrb[0].mxu0
        %2005 = vmatprep.mubr.f32.mxu0 0.0
        %2006 = vmatmul.mubr.f32.gmra.mrb[0].mxu0 %v1881
        %v2007 = vpop.f32.mrb[0].mxu0
        %v2008 = vadd.f32 0.0, %v2007
        %v2009 = vpop.f32.mrb[0].mxu0
        %2010 = vmatprep.mubr.f32.mxu0 0.0
        %2011 = vmatmul.mubr.f32.gmra.mrb[0].mxu0 %v1884
        %v2012 = vpop.f32.mrb[0].mxu0
        %v2013 = vadd.f32 0.0, %v2012
        %v2014 = vpop.f32.mrb[0].mxu0
        %2015 = vmatprep.mubr.f32.mxu0 0.0
        %2016 = vmatmul.mubr.f32.gmra.mrb[0].mxu0 %v1887
        %v2017 = vpop.f32.mrb[0].mxu0
        %v2018 = vadd.f32 0.0, %v2017
        %v2019 = vpop.f32.mrb[0].mxu0
        %2020 = vmatprep.mubr.f32.mxu0 0.0
        %2021 = vmatmul.mubr.f32.gmra.mrb[0].mxu0 %v1890
        %v2022 = vpop.f32.mrb[0].mxu0
        %v2023 = vadd.f32 0.0, %v2022
        %v2024 = vpop.f32.mrb[0].mxu0
        %2025 = vmatprep.mubr.f32.mxu0 0.0
        %2026 = vmatmul.mubr.f32.gmra.mrb[0].mxu0 %v1893
        %v2027 = vpop.f32.mrb[0].mxu0
        %v2028 = vadd.f32 0.0, %v2027
        %v2029 = vpop.f32.mrb[0].mxu0
        %2030 = vmatprep.mubr.f32.mxu0 0.0
        %2031 = vmatmul.mubr.f32.gmra.mrb[0].mxu0 %v1896
        %v2032 = vpop.f32.mrb[0].mxu0
        %v2033 = vadd.f32 0.0, %v2032
        %v2034 = vpop.f32.mrb[0].mxu0
        %2035 = vmatprep.mubr.f32.mxu0 0.0
        %2036 = vmatmul.mubr.f32.gmra.mrb[0].mxu0 %v1899
        %v2037 = vpop.f32.mrb[0].mxu0
        %v2038 = vadd.f32 0.0, %v2037
        %v2039 = vpop.f32.mrb[0].mxu0
        %2040 = vmatprep.mubr.f32.mxu0 0.0
        %2041 = vmatmul.mubr.f32.gmra.mrb[0].mxu0 %v1902
        %v2042 = vpop.f32.mrb[0].mxu0
        %v2043 = vadd.f32 0.0, %v2042
        %v2044 = vpop.f32.mrb[0].mxu0
        %2045 = vmatprep.mubr.f32.mxu0 0.0
        %2046 = vmatmul.mubr.f32.gmra.mrb[0].mxu0 %v1905
        %v2047 = vpop.f32.mrb[0].mxu0
        %v2048 = vadd.f32 0.0, %v2047
        %v2049 = vpop.f32.mrb[0].mxu0
        %2050 = vmatprep.mubr.f32.mxu0 0.0
        %2051 = vmatmul.mubr.f32.gmra.mrb[0].mxu0 %v1908
        %v2052 = vpop.f32.mrb[0].mxu0
        %v2053 = vadd.f32 0.0, %v2052
        %v2054 = vpop.f32.mrb[0].mxu0
        %2055 = vmatprep.mubr.f32.mxu0 0.0
        %2056 = vmatmul.mubr.f32.gmra.mrb[0].mxu0 %v1911
        %v2057 = vpop.f32.mrb[0].mxu0
        %v2058 = vadd.f32 0.0, %v2057
        %v2059 = vpop.f32.mrb[0].mxu0
        %2060 = vdwg.mxu0
        %v2061 = vmax.f32 %v1983, 1e-06
        %v2062 = vmax.f32 %v1988, 1e-06
        %v2063 = vmax.f32 %v1993, 1e-06
        %v2064 = vmax.f32 %v1998, 1e-06
        %v2065 = vmax.f32 %v2003, 1e-06
        %v2066 = vmax.f32 %v2008, 1e-06
        %v2067 = vmax.f32 %v2013, 1e-06
        %v2068 = vmax.f32 %v2018, 1e-06
        %v2069 = vmax.f32 %v2023, 1e-06
        %v2070 = vmax.f32 %v2028, 1e-06
        %v2071 = vmax.f32 %v2033, 1e-06
        %v2072 = vmax.f32 %v2038, 1e-06
        %v2073 = vmax.f32 %v2043, 1e-06
        %v2074 = vmax.f32 %v2048, 1e-06
        %v2075 = vmax.f32 %v2053, 1e-06
        %v2076 = vmax.f32 %v2058, 1e-06
        %v2077 = vld [vmem:[#allocation2] sm:$0xff]
        %v2078 = vld [vmem:[#allocation2 + $0x8] sm:$0xff]
        %v2079 = vld [vmem:[#allocation2 + $0x10] sm:$0xff]
        %v2080 = vld [vmem:[#allocation2 + $0x18] sm:$0xff]
        %v2081 = vld [vmem:[#allocation2 + $0x20] sm:$0xff]
        %v2082 = vld [vmem:[#allocation2 + $0x28] sm:$0xff]
        %v2083 = vld [vmem:[#allocation2 + $0x30] sm:$0xff]
        %v2084 = vld [vmem:[#allocation2 + $0x38] sm:$0xff]
        %v2085 = vld [vmem:[#allocation2 + $0x40] sm:$0xff]
        %v2086 = vld [vmem:[#allocation2 + $0x48] sm:$0xff]
        %v2087 = vld [vmem:[#allocation2 + $0x50] sm:$0xff]
        %v2088 = vld [vmem:[#allocation2 + $0x58] sm:$0xff]
        %v2089 = vld [vmem:[#allocation2 + $0x60] sm:$0xff]
        %v2090 = vld [vmem:[#allocation2 + $0x68] sm:$0xff]
        %v2091 = vld [vmem:[#allocation2 + $0x70] sm:$0xff]
        %v2092 = vld [vmem:[#allocation2 + $0x78] sm:$0xff]
        %v2093 = vmul.f32 %v2061, %v2061
        %v2094 = vmul.f32 %v2062, %v2062
        %v2095 = vmul.f32 %v2063, %v2063
        %v2096 = vmul.f32 %v2064, %v2064
        %v2097 = vmul.f32 %v2065, %v2065
        %v2098 = vmul.f32 %v2066, %v2066
        %v2099 = vmul.f32 %v2067, %v2067
        %v2100 = vmul.f32 %v2068, %v2068
        %v2101 = vmul.f32 %v2069, %v2069
        %v2102 = vmul.f32 %v2070, %v2070
        %v2103 = vmul.f32 %v2071, %v2071
        %v2104 = vmul.f32 %v2072, %v2072
        %v2105 = vmul.f32 %v2073, %v2073
        %v2106 = vmul.f32 %v2074, %v2074
        %v2107 = vmul.f32 %v2075, %v2075
        %v2108 = vmul.f32 %v2076, %v2076
        %v2109 = vmul.f32 %v2093, %v2061
        %v2110 = vmul.f32 %v2094, %v2062
        %v2111 = vmul.f32 %v2095, %v2063
        %v2112 = vmul.f32 %v2096, %v2064
        %v2113 = vmul.f32 %v2097, %v2065
        %v2114 = vmul.f32 %v2098, %v2066
        %v2115 = vmul.f32 %v2099, %v2067
        %v2116 = vmul.f32 %v2100, %v2068
        %v2117 = vmul.f32 %v2101, %v2069
        %v2118 = vmul.f32 %v2102, %v2070
        %v2119 = vmul.f32 %v2103, %v2071
        %v2120 = vmul.f32 %v2104, %v2072
        %v2121 = vmul.f32 %v2105, %v2073
        %v2122 = vmul.f32 %v2106, %v2074
        %v2123 = vmul.f32 %v2107, %v2075
        %v2124 = vmul.f32 %v2108, %v2076
        %2125 = vadd.xlane.f32.xlu0 %v2109
        %v2126 = vpop.xlane.xlu0 %2125
        %2127 = vadd.xlane.f32.xlu0 %v2110
        %v2128 = vpop.xlane.xlu0 %2127
        %2129 = vadd.xlane.f32.xlu0 %v2111
        %v2130 = vpop.xlane.xlu0 %2129
        %2131 = vadd.xlane.f32.xlu0 %v2112
        %v2132 = vpop.xlane.xlu0 %2131
        %2133 = vadd.xlane.f32.xlu0 %v2113
        %v2134 = vpop.xlane.xlu0 %2133
        %2135 = vadd.xlane.f32.xlu0 %v2114
        %v2136 = vpop.xlane.xlu0 %2135
        %2137 = vadd.xlane.f32.xlu0 %v2115
        %v2138 = vpop.xlane.xlu0 %2137
        %2139 = vadd.xlane.f32.xlu0 %v2116
        %v2140 = vpop.xlane.xlu0 %2139
        %2141 = vadd.xlane.f32.xlu0 %v2117
        %v2142 = vpop.xlane.xlu0 %2141
        %2143 = vadd.xlane.f32.xlu0 %v2118
        %v2144 = vpop.xlane.xlu0 %2143
        %2145 = vadd.xlane.f32.xlu0 %v2119
        %v2146 = vpop.xlane.xlu0 %2145
        %2147 = vadd.xlane.f32.xlu0 %v2120
        %v2148 = vpop.xlane.xlu0 %2147
        %2149 = vadd.xlane.f32.xlu0 %v2121
        %v2150 = vpop.xlane.xlu0 %2149
        %2151 = vadd.xlane.f32.xlu0 %v2122
        %v2152 = vpop.xlane.xlu0 %2151
        %2153 = vadd.xlane.f32.xlu0 %v2123
        %v2154 = vpop.xlane.xlu0 %2153
        %2155 = vadd.xlane.f32.xlu0 %v2124
        %v2156 = vpop.xlane.xlu0 %2155
        %v2157 = vadd.f32 %v2077, %v2126
        %v2158 = vadd.f32 %v2078, %v2128
        %v2159 = vadd.f32 %v2079, %v2130
        %v2160 = vadd.f32 %v2080, %v2132
        %v2161 = vadd.f32 %v2081, %v2134
        %v2162 = vadd.f32 %v2082, %v2136
        %v2163 = vadd.f32 %v2083, %v2138
        %v2164 = vadd.f32 %v2084, %v2140
        %v2165 = vadd.f32 %v2085, %v2142
        %v2166 = vadd.f32 %v2086, %v2144
        %v2167 = vadd.f32 %v2087, %v2146
        %v2168 = vadd.f32 %v2088, %v2148
        %v2169 = vadd.f32 %v2089, %v2150
        %v2170 = vadd.f32 %v2090, %v2152
        %v2171 = vadd.f32 %v2091, %v2154
        %v2172 = vadd.f32 %v2092, %v2156
        %vm2173 = vcmask 23568
        %2174 = vst.msk [vmem:[#allocation2] sm:$0xff] %vm2173, %v2157
        %2175 = vst.msk [vmem:[#allocation2 + $0x8] sm:$0xff] %vm2173, %v2158
        %2176 = vst.msk [vmem:[#allocation2 + $0x10] sm:$0xff] %vm2173, %v2159
        %2177 = vst.msk [vmem:[#allocation2 + $0x18] sm:$0xff] %vm2173, %v2160
        %2178 = vst.msk [vmem:[#allocation2 + $0x20] sm:$0xff] %vm2173, %v2161
        %2179 = vst.msk [vmem:[#allocation2 + $0x28] sm:$0xff] %vm2173, %v2162
        %2180 = vst.msk [vmem:[#allocation2 + $0x30] sm:$0xff] %vm2173, %v2163
        %2181 = vst.msk [vmem:[#allocation2 + $0x38] sm:$0xff] %vm2173, %v2164
        %2182 = vst.msk [vmem:[#allocation2 + $0x40] sm:$0xff] %vm2173, %v2165
        %2183 = vst.msk [vmem:[#allocation2 + $0x48] sm:$0xff] %vm2173, %v2166
        %2184 = vst.msk [vmem:[#allocation2 + $0x50] sm:$0xff] %vm2173, %v2167
        %2185 = vst.msk [vmem:[#allocation2 + $0x58] sm:$0xff] %vm2173, %v2168
        %2186 = vst.msk [vmem:[#allocation2 + $0x60] sm:$0xff] %vm2173, %v2169
        %2187 = vst.msk [vmem:[#allocation2 + $0x68] sm:$0xff] %vm2173, %v2170
        %2188 = vst.msk [vmem:[#allocation2 + $0x70] sm:$0xff] %vm2173, %v2171
        %2189 = vst.msk [vmem:[#allocation2 + $0x78] sm:$0xff] %vm2173, %v2172
        %v2190 = vld [vmem:[%s5] sm:$0xff]
        %v2191 = vld [vmem:[%s5 + $0x8] sm:$0xff]
        %v2192 = vld [vmem:[%s5 + $0x10] sm:$0xff]
        %v2193 = vld [vmem:[%s5 + $0x18] sm:$0xff]
        %v2194 = vld [vmem:[%s5 + $0x20] sm:$0xff]
        %v2195 = vld [vmem:[%s5 + $0x28] sm:$0xff]
        %v2196 = vld [vmem:[%s5 + $0x30] sm:$0xff]
        %v2197 = vld [vmem:[%s5 + $0x38] sm:$0xff]
        %v2198 = vld [vmem:[%s5 + $0x40] sm:$0xff]
        %v2199 = vld [vmem:[%s5 + $0x48] sm:$0xff]
        %v2200 = vld [vmem:[%s5 + $0x50] sm:$0xff]
        %v2201 = vld [vmem:[%s5 + $0x58] sm:$0xff]
        %v2202 = vld [vmem:[%s5 + $0x60] sm:$0xff]
        %v2203 = vld [vmem:[%s5 + $0x68] sm:$0xff]
        %v2204 = vld [vmem:[%s5 + $0x70] sm:$0xff]
        %v2205 = vld [vmem:[%s5 + $0x78] sm:$0xff]
        %s2206 = scalar_lea.vmem %s398, 8 [#allocation7]
        %v2207 = vld [vmem:[%s2206] sm:$0x7]
        %v2209 = vsel %vm836, %v2190, 0
        %v2212 = vsel %vm836, %v2191, 0
        %v2215 = vsel %vm836, %v2192, 0
        %v2218 = vsel %vm836, %v2193, 0
        %v2221 = vsel %vm836, %v2194, 0
        %v2224 = vsel %vm836, %v2195, 0
        %v2227 = vsel %vm836, %v2196, 0
        %v2230 = vsel %vm836, %v2197, 0
        %v2233 = vsel %vm836, %v2198, 0
        %v2236 = vsel %vm836, %v2199, 0
        %v2239 = vsel %vm836, %v2200, 0
        %v2242 = vsel %vm836, %v2201, 0
        %v2245 = vsel %vm836, %v2202, 0
        %v2248 = vsel %vm836, %v2203, 0
        %v2251 = vsel %vm836, %v2204, 0
        %v2254 = vsel %vm836, %v2205, 0
        %v2257 = vsel %vm885, %v2207, 0
        %2259 = vmatprep.subr.mxu0 0.0
        %2260 = vmatpush1.msra.mxu0 %v2257
        %2261 = vmatprep.subr.mxu0 0.0
        %2262 = vmatpush1.msra.mxu0 0.0
        %2263 = vmatprep.subr.mxu0 0.0
        %2264 = vmatpush1.msra.mxu0 0.0
        %2265 = vmatprep.subr.mxu0 0.0
        %2266 = vmatpush1.msra.mxu0 0.0
        %2267 = vmatprep.subr.mxu0 0.0
        %2268 = vmatpush1.msra.mxu0 0.0
        %2269 = vmatprep.subr.mxu0 0.0
        %2270 = vmatpush1.msra.mxu0 0.0
        %2271 = vmatprep.subr.mxu0 0.0
        %2272 = vmatpush1.msra.mxu0 0.0
        %2273 = vmatprep.subr.mxu0 0.0
        %2274 = vmatpush1.msra.mxu0 0.0
        %2275 = vmatprep.subr.mxu0 0.0
        %2276 = vmatpush1.msra.mxu0 0.0
        %2277 = vmatprep.subr.mxu0 0.0
        %2278 = vmatpush1.msra.mxu0 0.0
        %2279 = vmatprep.subr.mxu0 0.0
        %2280 = vmatpush1.msra.mxu0 0.0
        %2281 = vmatprep.subr.mxu0 0.0
        %2282 = vmatpush1.msra.mxu0 0.0
        %2283 = vmatprep.subr.mxu0 0.0
        %2284 = vmatpush1.msra.mxu0 0.0
        %2285 = vmatprep.subr.mxu0 0.0
        %2286 = vmatpush1.msra.mxu0 0.0
        %2287 = vmatprep.subr.mxu0 0.0
        %2288 = vmatpush1.msra.mxu0 0.0
        %2289 = vmatprep.subr.mxu0 0.0
        %2290 = vmatpush1.msra.mxu0 0.0
        %2291 = vmatprep.subr.mxu0 0.0
        %2292 = vmatpush1.msra.mxu0 0.0
        %2293 = vmatprep.subr.mxu0 0.0
        %2294 = vmatpush1.msra.mxu0 0.0
        %2295 = vmatprep.subr.mxu0 0.0
        %2296 = vmatpush1.msra.mxu0 0.0
        %2297 = vmatprep.subr.mxu0 0.0
        %2298 = vmatpush1.msra.mxu0 0.0
        %2299 = vmatprep.subr.mxu0 0.0
        %2300 = vmatpush1.msra.mxu0 0.0
        %2301 = vmatprep.subr.mxu0 0.0
        %2302 = vmatpush1.msra.mxu0 0.0
        %2303 = vmatprep.subr.mxu0 0.0
        %2304 = vmatpush1.msra.mxu0 0.0
        %2305 = vmatprep.subr.mxu0 0.0
        %2306 = vmatpush1.msra.mxu0 0.0
        %2307 = vmatprep.subr.mxu0 0.0
        %2308 = vmatpush1.msra.mxu0 0.0
        %2309 = vmatprep.subr.mxu0 0.0
        %2310 = vmatpush1.msra.mxu0 0.0
        %2311 = vmatprep.subr.mxu0 0.0
        %2312 = vmatpush1.msra.mxu0 0.0
        %2313 = vmatprep.subr.mxu0 0.0
        %2314 = vmatpush1.msra.mxu0 0.0
        %2315 = vmatprep.subr.mxu0 0.0
        %2316 = vmatpush1.msra.mxu0 0.0
        %2317 = vmatprep.subr.mxu0 0.0
        %2318 = vmatpush1.msra.mxu0 0.0
        %2319 = vmatprep.subr.mxu0 0.0
        %2320 = vmatpush1.msra.mxu0 0.0
        %2321 = vmatprep.subr.mxu0 0.0
        %2322 = vmatpush1.msra.mxu0 0.0
        %2323 = vmatprep.mubr.f32.mxu0 0.0
        %2324 = vmatmul.mubr.f32.gmra.mrb[0].mxu0 %v2209
        %v2325 = vpop.f32.mrb[0].mxu0
        %v2326 = vadd.f32 0.0, %v2325
        %v2327 = vpop.f32.mrb[0].mxu0
        %2328 = vmatprep.mubr.f32.mxu0 0.0
        %2329 = vmatmul.mubr.f32.gmra.mrb[0].mxu0 %v2212
        %v2330 = vpop.f32.mrb[0].mxu0
        %v2331 = vadd.f32 0.0, %v2330
        %v2332 = vpop.f32.mrb[0].mxu0
        %2333 = vmatprep.mubr.f32.mxu0 0.0
        %2334 = vmatmul.mubr.f32.gmra.mrb[0].mxu0 %v2215
        %v2335 = vpop.f32.mrb[0].mxu0
        %v2336 = vadd.f32 0.0, %v2335
        %v2337 = vpop.f32.mrb[0].mxu0
        %2338 = vmatprep.mubr.f32.mxu0 0.0
        %2339 = vmatmul.mubr.f32.gmra.mrb[0].mxu0 %v2218
        %v2340 = vpop.f32.mrb[0].mxu0
        %v2341 = vadd.f32 0.0, %v2340
        %v2342 = vpop.f32.mrb[0].mxu0
        %2343 = vmatprep.mubr.f32.mxu0 0.0
        %2344 = vmatmul.mubr.f32.gmra.mrb[0].mxu0 %v2221
        %v2345 = vpop.f32.mrb[0].mxu0
        %v2346 = vadd.f32 0.0, %v2345
        %v2347 = vpop.f32.mrb[0].mxu0
        %2348 = vmatprep.mubr.f32.mxu0 0.0
        %2349 = vmatmul.mubr.f32.gmra.mrb[0].mxu0 %v2224
        %v2350 = vpop.f32.mrb[0].mxu0
        %v2351 = vadd.f32 0.0, %v2350
        %v2352 = vpop.f32.mrb[0].mxu0
        %2353 = vmatprep.mubr.f32.mxu0 0.0
        %2354 = vmatmul.mubr.f32.gmra.mrb[0].mxu0 %v2227
        %v2355 = vpop.f32.mrb[0].mxu0
        %v2356 = vadd.f32 0.0, %v2355
        %v2357 = vpop.f32.mrb[0].mxu0
        %2358 = vmatprep.mubr.f32.mxu0 0.0
        %2359 = vmatmul.mubr.f32.gmra.mrb[0].mxu0 %v2230
        %v2360 = vpop.f32.mrb[0].mxu0
        %v2361 = vadd.f32 0.0, %v2360
        %v2362 = vpop.f32.mrb[0].mxu0
        %2363 = vmatprep.mubr.f32.mxu0 0.0
        %2364 = vmatmul.mubr.f32.gmra.mrb[0].mxu0 %v2233
        %v2365 = vpop.f32.mrb[0].mxu0
        %v2366 = vadd.f32 0.0, %v2365
        %v2367 = vpop.f32.mrb[0].mxu0
        %2368 = vmatprep.mubr.f32.mxu0 0.0
        %2369 = vmatmul.mubr.f32.gmra.mrb[0].mxu0 %v2236
        %v2370 = vpop.f32.mrb[0].mxu0
        %v2371 = vadd.f32 0.0, %v2370
        %v2372 = vpop.f32.mrb[0].mxu0
        %2373 = vmatprep.mubr.f32.mxu0 0.0
        %2374 = vmatmul.mubr.f32.gmra.mrb[0].mxu0 %v2239
        %v2375 = vpop.f32.mrb[0].mxu0
        %v2376 = vadd.f32 0.0, %v2375
        %v2377 = vpop.f32.mrb[0].mxu0
        %2378 = vmatprep.mubr.f32.mxu0 0.0
        %2379 = vmatmul.mubr.f32.gmra.mrb[0].mxu0 %v2242
        %v2380 = vpop.f32.mrb[0].mxu0
        %v2381 = vadd.f32 0.0, %v2380
        %v2382 = vpop.f32.mrb[0].mxu0
        %2383 = vmatprep.mubr.f32.mxu0 0.0
        %2384 = vmatmul.mubr.f32.gmra.mrb[0].mxu0 %v2245
        %v2385 = vpop.f32.mrb[0].mxu0
        %v2386 = vadd.f32 0.0, %v2385
        %v2387 = vpop.f32.mrb[0].mxu0
        %2388 = vmatprep.mubr.f32.mxu0 0.0
        %2389 = vmatmul.mubr.f32.gmra.mrb[0].mxu0 %v2248
        %v2390 = vpop.f32.mrb[0].mxu0
        %v2391 = vadd.f32 0.0, %v2390
        %v2392 = vpop.f32.mrb[0].mxu0
        %2393 = vmatprep.mubr.f32.mxu0 0.0
        %2394 = vmatmul.mubr.f32.gmra.mrb[0].mxu0 %v2251
        %v2395 = vpop.f32.mrb[0].mxu0
        %v2396 = vadd.f32 0.0, %v2395
        %v2397 = vpop.f32.mrb[0].mxu0
        %2398 = vmatprep.mubr.f32.mxu0 0.0
        %2399 = vmatmul.mubr.f32.gmra.mrb[0].mxu0 %v2254
        %v2400 = vpop.f32.mrb[0].mxu0
        %v2401 = vadd.f32 0.0, %v2400
        %v2402 = vpop.f32.mrb[0].mxu0
        %2403 = vdwg.mxu0
        %v2404 = vmax.f32 %v2326, 1e-06
        %v2405 = vmax.f32 %v2331, 1e-06
        %v2406 = vmax.f32 %v2336, 1e-06
        %v2407 = vmax.f32 %v2341, 1e-06
        %v2408 = vmax.f32 %v2346, 1e-06
        %v2409 = vmax.f32 %v2351, 1e-06
        %v2410 = vmax.f32 %v2356, 1e-06
        %v2411 = vmax.f32 %v2361, 1e-06
        %v2412 = vmax.f32 %v2366, 1e-06
        %v2413 = vmax.f32 %v2371, 1e-06
        %v2414 = vmax.f32 %v2376, 1e-06
        %v2415 = vmax.f32 %v2381, 1e-06
        %v2416 = vmax.f32 %v2386, 1e-06
        %v2417 = vmax.f32 %v2391, 1e-06
        %v2418 = vmax.f32 %v2396, 1e-06
        %v2419 = vmax.f32 %v2401, 1e-06
        %v2420 = vld [vmem:[#allocation3] sm:$0xff]
        %v2421 = vld [vmem:[#allocation3 + $0x8] sm:$0xff]
        %v2422 = vld [vmem:[#allocation3 + $0x10] sm:$0xff]
        %v2423 = vld [vmem:[#allocation3 + $0x18] sm:$0xff]
        %v2424 = vld [vmem:[#allocation3 + $0x20] sm:$0xff]
        %v2425 = vld [vmem:[#allocation3 + $0x28] sm:$0xff]
        %v2426 = vld [vmem:[#allocation3 + $0x30] sm:$0xff]
        %v2427 = vld [vmem:[#allocation3 + $0x38] sm:$0xff]
        %v2428 = vld [vmem:[#allocation3 + $0x40] sm:$0xff]
        %v2429 = vld [vmem:[#allocation3 + $0x48] sm:$0xff]
        %v2430 = vld [vmem:[#allocation3 + $0x50] sm:$0xff]
        %v2431 = vld [vmem:[#allocation3 + $0x58] sm:$0xff]
        %v2432 = vld [vmem:[#allocation3 + $0x60] sm:$0xff]
        %v2433 = vld [vmem:[#allocation3 + $0x68] sm:$0xff]
        %v2434 = vld [vmem:[#allocation3 + $0x70] sm:$0xff]
        %v2435 = vld [vmem:[#allocation3 + $0x78] sm:$0xff]
        %v2436 = vmul.f32 %v2404, %v2404
        %v2437 = vmul.f32 %v2405, %v2405
        %v2438 = vmul.f32 %v2406, %v2406
        %v2439 = vmul.f32 %v2407, %v2407
        %v2440 = vmul.f32 %v2408, %v2408
        %v2441 = vmul.f32 %v2409, %v2409
        %v2442 = vmul.f32 %v2410, %v2410
        %v2443 = vmul.f32 %v2411, %v2411
        %v2444 = vmul.f32 %v2412, %v2412
        %v2445 = vmul.f32 %v2413, %v2413
        %v2446 = vmul.f32 %v2414, %v2414
        %v2447 = vmul.f32 %v2415, %v2415
        %v2448 = vmul.f32 %v2416, %v2416
        %v2449 = vmul.f32 %v2417, %v2417
        %v2450 = vmul.f32 %v2418, %v2418
        %v2451 = vmul.f32 %v2419, %v2419
        %v2452 = vmul.f32 %v2436, %v2404
        %v2453 = vmul.f32 %v2437, %v2405
        %v2454 = vmul.f32 %v2438, %v2406
        %v2455 = vmul.f32 %v2439, %v2407
        %v2456 = vmul.f32 %v2440, %v2408
        %v2457 = vmul.f32 %v2441, %v2409
        %v2458 = vmul.f32 %v2442, %v2410
        %v2459 = vmul.f32 %v2443, %v2411
        %v2460 = vmul.f32 %v2444, %v2412
        %v2461 = vmul.f32 %v2445, %v2413
        %v2462 = vmul.f32 %v2446, %v2414
        %v2463 = vmul.f32 %v2447, %v2415
        %v2464 = vmul.f32 %v2448, %v2416
        %v2465 = vmul.f32 %v2449, %v2417
        %v2466 = vmul.f32 %v2450, %v2418
        %v2467 = vmul.f32 %v2451, %v2419
        %2468 = vadd.xlane.f32.xlu0 %v2452
        %v2469 = vpop.xlane.xlu0 %2468
        %2470 = vadd.xlane.f32.xlu0 %v2453
        %v2471 = vpop.xlane.xlu0 %2470
        %2472 = vadd.xlane.f32.xlu0 %v2454
        %v2473 = vpop.xlane.xlu0 %2472
        %2474 = vadd.xlane.f32.xlu0 %v2455
        %v2475 = vpop.xlane.xlu0 %2474
        %2476 = vadd.xlane.f32.xlu0 %v2456
        %v2477 = vpop.xlane.xlu0 %2476
        %2478 = vadd.xlane.f32.xlu0 %v2457
        %v2479 = vpop.xlane.xlu0 %2478
        %2480 = vadd.xlane.f32.xlu0 %v2458
        %v2481 = vpop.xlane.xlu0 %2480
        %2482 = vadd.xlane.f32.xlu0 %v2459
        %v2483 = vpop.xlane.xlu0 %2482
        %2484 = vadd.xlane.f32.xlu0 %v2460
        %v2485 = vpop.xlane.xlu0 %2484
        %2486 = vadd.xlane.f32.xlu0 %v2461
        %v2487 = vpop.xlane.xlu0 %2486
        %2488 = vadd.xlane.f32.xlu0 %v2462
        %v2489 = vpop.xlane.xlu0 %2488
        %2490 = vadd.xlane.f32.xlu0 %v2463
        %v2491 = vpop.xlane.xlu0 %2490
        %2492 = vadd.xlane.f32.xlu0 %v2464
        %v2493 = vpop.xlane.xlu0 %2492
        %2494 = vadd.xlane.f32.xlu0 %v2465
        %v2495 = vpop.xlane.xlu0 %2494
        %2496 = vadd.xlane.f32.xlu0 %v2466
        %v2497 = vpop.xlane.xlu0 %2496
        %2498 = vadd.xlane.f32.xlu0 %v2467
        %v2499 = vpop.xlane.xlu0 %2498
        %v2500 = vadd.f32 %v2420, %v2469
        %v2501 = vadd.f32 %v2421, %v2471
        %v2502 = vadd.f32 %v2422, %v2473
        %v2503 = vadd.f32 %v2423, %v2475
        %v2504 = vadd.f32 %v2424, %v2477
        %v2505 = vadd.f32 %v2425, %v2479
        %v2506 = vadd.f32 %v2426, %v2481
        %v2507 = vadd.f32 %v2427, %v2483
        %v2508 = vadd.f32 %v2428, %v2485
        %v2509 = vadd.f32 %v2429, %v2487
        %v2510 = vadd.f32 %v2430, %v2489
        %v2511 = vadd.f32 %v2431, %v2491
        %v2512 = vadd.f32 %v2432, %v2493
        %v2513 = vadd.f32 %v2433, %v2495
        %v2514 = vadd.f32 %v2434, %v2497
        %v2515 = vadd.f32 %v2435, %v2499
        %2516 = vst.msk [vmem:[#allocation3] sm:$0xff] %vm2173, %v2500
        %2517 = vst.msk [vmem:[#allocation3 + $0x8] sm:$0xff] %vm2173, %v2501
        %2518 = vst.msk [vmem:[#allocation3 + $0x10] sm:$0xff] %vm2173, %v2502
        %2519 = vst.msk [vmem:[#allocation3 + $0x18] sm:$0xff] %vm2173, %v2503
        %2520 = vst.msk [vmem:[#allocation3 + $0x20] sm:$0xff] %vm2173, %v2504
        %2521 = vst.msk [vmem:[#allocation3 + $0x28] sm:$0xff] %vm2173, %v2505
        %2522 = vst.msk [vmem:[#allocation3 + $0x30] sm:$0xff] %vm2173, %v2506
        %2523 = vst.msk [vmem:[#allocation3 + $0x38] sm:$0xff] %vm2173, %v2507
        %2524 = vst.msk [vmem:[#allocation3 + $0x40] sm:$0xff] %vm2173, %v2508
        %2525 = vst.msk [vmem:[#allocation3 + $0x48] sm:$0xff] %vm2173, %v2509
        %2526 = vst.msk [vmem:[#allocation3 + $0x50] sm:$0xff] %vm2173, %v2510
        %2527 = vst.msk [vmem:[#allocation3 + $0x58] sm:$0xff] %vm2173, %v2511
        %2528 = vst.msk [vmem:[#allocation3 + $0x60] sm:$0xff] %vm2173, %v2512
        %2529 = vst.msk [vmem:[#allocation3 + $0x68] sm:$0xff] %vm2173, %v2513
        %2530 = vst.msk [vmem:[#allocation3 + $0x70] sm:$0xff] %vm2173, %v2514
        %2531 = vst.msk [vmem:[#allocation3 + $0x78] sm:$0xff] %vm2173, %v2515
        %v2532 = vld [vmem:[%s4] sm:$0xff]
        %v2533 = vld [vmem:[%s4 + $0x8] sm:$0xff]
        %v2534 = vld [vmem:[%s4 + $0x10] sm:$0xff]
        %v2535 = vld [vmem:[%s4 + $0x18] sm:$0xff]
        %v2536 = vld [vmem:[%s4 + $0x20] sm:$0xff]
        %v2537 = vld [vmem:[%s4 + $0x28] sm:$0xff]
        %v2538 = vld [vmem:[%s4 + $0x30] sm:$0xff]
        %v2539 = vld [vmem:[%s4 + $0x38] sm:$0xff]
        %v2540 = vld [vmem:[%s4 + $0x40] sm:$0xff]
        %v2541 = vld [vmem:[%s4 + $0x48] sm:$0xff]
        %v2542 = vld [vmem:[%s4 + $0x50] sm:$0xff]
        %v2543 = vld [vmem:[%s4 + $0x58] sm:$0xff]
        %v2544 = vld [vmem:[%s4 + $0x60] sm:$0xff]
        %v2545 = vld [vmem:[%s4 + $0x68] sm:$0xff]
        %v2546 = vld [vmem:[%s4 + $0x70] sm:$0xff]
        %v2547 = vld [vmem:[%s4 + $0x78] sm:$0xff]
        %s2548 = scalar_lea.vmem %s391, 12 [#allocation6]
        %v2549 = vld [vmem:[%s2548] sm:$0xf]
        %v2551 = vsel %vm492, %v2532, 0
        %v2554 = vsel %vm492, %v2533, 0
        %v2557 = vsel %vm492, %v2534, 0
        %v2560 = vsel %vm492, %v2535, 0
        %v2563 = vsel %vm492, %v2536, 0
        %v2566 = vsel %vm492, %v2537, 0
        %v2569 = vsel %vm492, %v2538, 0
        %v2572 = vsel %vm492, %v2539, 0
        %v2575 = vsel %vm492, %v2540, 0
        %v2578 = vsel %vm492, %v2541, 0
        %v2581 = vsel %vm492, %v2542, 0
        %v2584 = vsel %vm492, %v2543, 0
        %v2587 = vsel %vm492, %v2544, 0
        %v2590 = vsel %vm492, %v2545, 0
        %v2593 = vsel %vm492, %v2546, 0
        %v2596 = vsel %vm492, %v2547, 0
        %v2599 = vsel %vm541, %v2549, 0
        %2601 = vmatprep.subr.mxu0 0.0
        %2602 = vmatpush1.msra.mxu0 %v2599
        %2603 = vmatprep.subr.mxu0 0.0
        %2604 = vmatpush1.msra.mxu0 0.0
        %2605 = vmatprep.subr.mxu0 0.0
        %2606 = vmatpush1.msra.mxu0 0.0
        %2607 = vmatprep.subr.mxu0 0.0
        %2608 = vmatpush1.msra.mxu0 0.0
        %2609 = vmatprep.subr.mxu0 0.0
        %2610 = vmatpush1.msra.mxu0 0.0
        %2611 = vmatprep.subr.mxu0 0.0
        %2612 = vmatpush1.msra.mxu0 0.0
        %2613 = vmatprep.subr.mxu0 0.0
        %2614 = vmatpush1.msra.mxu0 0.0
        %2615 = vmatprep.subr.mxu0 0.0
        %2616 = vmatpush1.msra.mxu0 0.0
        %2617 = vmatprep.subr.mxu0 0.0
        %2618 = vmatpush1.msra.mxu0 0.0
        %2619 = vmatprep.subr.mxu0 0.0
        %2620 = vmatpush1.msra.mxu0 0.0
        %2621 = vmatprep.subr.mxu0 0.0
        %2622 = vmatpush1.msra.mxu0 0.0
        %2623 = vmatprep.subr.mxu0 0.0
        %2624 = vmatpush1.msra.mxu0 0.0
        %2625 = vmatprep.subr.mxu0 0.0
        %2626 = vmatpush1.msra.mxu0 0.0
        %2627 = vmatprep.subr.mxu0 0.0
        %2628 = vmatpush1.msra.mxu0 0.0
        %2629 = vmatprep.subr.mxu0 0.0
        %2630 = vmatpush1.msra.mxu0 0.0
        %2631 = vmatprep.subr.mxu0 0.0
        %2632 = vmatpush1.msra.mxu0 0.0
        %2633 = vmatprep.subr.mxu0 0.0
        %2634 = vmatpush1.msra.mxu0 0.0
        %2635 = vmatprep.subr.mxu0 0.0
        %2636 = vmatpush1.msra.mxu0 0.0
        %2637 = vmatprep.subr.mxu0 0.0
        %2638 = vmatpush1.msra.mxu0 0.0
        %2639 = vmatprep.subr.mxu0 0.0
        %2640 = vmatpush1.msra.mxu0 0.0
        %2641 = vmatprep.subr.mxu0 0.0
        %2642 = vmatpush1.msra.mxu0 0.0
        %2643 = vmatprep.subr.mxu0 0.0
        %2644 = vmatpush1.msra.mxu0 0.0
        %2645 = vmatprep.subr.mxu0 0.0
        %2646 = vmatpush1.msra.mxu0 0.0
        %2647 = vmatprep.subr.mxu0 0.0
        %2648 = vmatpush1.msra.mxu0 0.0
        %2649 = vmatprep.subr.mxu0 0.0
        %2650 = vmatpush1.msra.mxu0 0.0
        %2651 = vmatprep.subr.mxu0 0.0
        %2652 = vmatpush1.msra.mxu0 0.0
        %2653 = vmatprep.subr.mxu0 0.0
        %2654 = vmatpush1.msra.mxu0 0.0
        %2655 = vmatprep.subr.mxu0 0.0
        %2656 = vmatpush1.msra.mxu0 0.0
        %2657 = vmatprep.subr.mxu0 0.0
        %2658 = vmatpush1.msra.mxu0 0.0
        %2659 = vmatprep.subr.mxu0 0.0
        %2660 = vmatpush1.msra.mxu0 0.0
        %2661 = vmatprep.subr.mxu0 0.0
        %2662 = vmatpush1.msra.mxu0 0.0
        %2663 = vmatprep.subr.mxu0 0.0
        %2664 = vmatpush1.msra.mxu0 0.0
        %2665 = vmatprep.mubr.f32.mxu0 0.0
        %2666 = vmatmul.mubr.f32.gmra.mrb[0].mxu0 %v2551
        %v2667 = vpop.f32.mrb[0].mxu0
        %v2668 = vadd.f32 0.0, %v2667
        %v2669 = vpop.f32.mrb[0].mxu0
        %2670 = vmatprep.mubr.f32.mxu0 0.0
        %2671 = vmatmul.mubr.f32.gmra.mrb[0].mxu0 %v2554
        %v2672 = vpop.f32.mrb[0].mxu0
        %v2673 = vadd.f32 0.0, %v2672
        %v2674 = vpop.f32.mrb[0].mxu0
        %2675 = vmatprep.mubr.f32.mxu0 0.0
        %2676 = vmatmul.mubr.f32.gmra.mrb[0].mxu0 %v2557
        %v2677 = vpop.f32.mrb[0].mxu0
        %v2678 = vadd.f32 0.0, %v2677
        %v2679 = vpop.f32.mrb[0].mxu0
        %2680 = vmatprep.mubr.f32.mxu0 0.0
        %2681 = vmatmul.mubr.f32.gmra.mrb[0].mxu0 %v2560
        %v2682 = vpop.f32.mrb[0].mxu0
        %v2683 = vadd.f32 0.0, %v2682
        %v2684 = vpop.f32.mrb[0].mxu0
        %2685 = vmatprep.mubr.f32.mxu0 0.0
        %2686 = vmatmul.mubr.f32.gmra.mrb[0].mxu0 %v2563
        %v2687 = vpop.f32.mrb[0].mxu0
        %v2688 = vadd.f32 0.0, %v2687
        %v2689 = vpop.f32.mrb[0].mxu0
        %2690 = vmatprep.mubr.f32.mxu0 0.0
        %2691 = vmatmul.mubr.f32.gmra.mrb[0].mxu0 %v2566
        %v2692 = vpop.f32.mrb[0].mxu0
        %v2693 = vadd.f32 0.0, %v2692
        %v2694 = vpop.f32.mrb[0].mxu0
        %2695 = vmatprep.mubr.f32.mxu0 0.0
        %2696 = vmatmul.mubr.f32.gmra.mrb[0].mxu0 %v2569
        %v2697 = vpop.f32.mrb[0].mxu0
        %v2698 = vadd.f32 0.0, %v2697
        %v2699 = vpop.f32.mrb[0].mxu0
        %2700 = vmatprep.mubr.f32.mxu0 0.0
        %2701 = vmatmul.mubr.f32.gmra.mrb[0].mxu0 %v2572
        %v2702 = vpop.f32.mrb[0].mxu0
        %v2703 = vadd.f32 0.0, %v2702
        %v2704 = vpop.f32.mrb[0].mxu0
        %2705 = vmatprep.mubr.f32.mxu0 0.0
        %2706 = vmatmul.mubr.f32.gmra.mrb[0].mxu0 %v2575
        %v2707 = vpop.f32.mrb[0].mxu0
        %v2708 = vadd.f32 0.0, %v2707
        %v2709 = vpop.f32.mrb[0].mxu0
        %2710 = vmatprep.mubr.f32.mxu0 0.0
        %2711 = vmatmul.mubr.f32.gmra.mrb[0].mxu0 %v2578
        %v2712 = vpop.f32.mrb[0].mxu0
        %v2713 = vadd.f32 0.0, %v2712
        %v2714 = vpop.f32.mrb[0].mxu0
        %2715 = vmatprep.mubr.f32.mxu0 0.0
        %2716 = vmatmul.mubr.f32.gmra.mrb[0].mxu0 %v2581
        %v2717 = vpop.f32.mrb[0].mxu0
        %v2718 = vadd.f32 0.0, %v2717
        %v2719 = vpop.f32.mrb[0].mxu0
        %2720 = vmatprep.mubr.f32.mxu0 0.0
        %2721 = vmatmul.mubr.f32.gmra.mrb[0].mxu0 %v2584
        %v2722 = vpop.f32.mrb[0].mxu0
        %v2723 = vadd.f32 0.0, %v2722
        %v2724 = vpop.f32.mrb[0].mxu0
        %2725 = vmatprep.mubr.f32.mxu0 0.0
        %2726 = vmatmul.mubr.f32.gmra.mrb[0].mxu0 %v2587
        %v2727 = vpop.f32.mrb[0].mxu0
        %v2728 = vadd.f32 0.0, %v2727
        %v2729 = vpop.f32.mrb[0].mxu0
        %2730 = vmatprep.mubr.f32.mxu0 0.0
        %2731 = vmatmul.mubr.f32.gmra.mrb[0].mxu0 %v2590
        %v2732 = vpop.f32.mrb[0].mxu0
        %v2733 = vadd.f32 0.0, %v2732
        %v2734 = vpop.f32.mrb[0].mxu0
        %2735 = vmatprep.mubr.f32.mxu0 0.0
        %2736 = vmatmul.mubr.f32.gmra.mrb[0].mxu0 %v2593
        %v2737 = vpop.f32.mrb[0].mxu0
        %v2738 = vadd.f32 0.0, %v2737
        %v2739 = vpop.f32.mrb[0].mxu0
        %2740 = vmatprep.mubr.f32.mxu0 0.0
        %2741 = vmatmul.mubr.f32.gmra.mrb[0].mxu0 %v2596
        %v2742 = vpop.f32.mrb[0].mxu0
        %v2743 = vadd.f32 0.0, %v2742
        %v2744 = vpop.f32.mrb[0].mxu0
        %2745 = vdwg.mxu0
        %v2746 = vmax.f32 %v2668, 1e-06
        %v2747 = vmax.f32 %v2673, 1e-06
        %v2748 = vmax.f32 %v2678, 1e-06
        %v2749 = vmax.f32 %v2683, 1e-06
        %v2750 = vmax.f32 %v2688, 1e-06
        %v2751 = vmax.f32 %v2693, 1e-06
        %v2752 = vmax.f32 %v2698, 1e-06
        %v2753 = vmax.f32 %v2703, 1e-06
        %v2754 = vmax.f32 %v2708, 1e-06
        %v2755 = vmax.f32 %v2713, 1e-06
        %v2756 = vmax.f32 %v2718, 1e-06
        %v2757 = vmax.f32 %v2723, 1e-06
        %v2758 = vmax.f32 %v2728, 1e-06
        %v2759 = vmax.f32 %v2733, 1e-06
        %v2760 = vmax.f32 %v2738, 1e-06
        %v2761 = vmax.f32 %v2743, 1e-06
        %v2762 = vld [vmem:[#allocation2] sm:$0xff]
        %v2763 = vld [vmem:[#allocation2 + $0x8] sm:$0xff]
        %v2764 = vld [vmem:[#allocation2 + $0x10] sm:$0xff]
        %v2765 = vld [vmem:[#allocation2 + $0x18] sm:$0xff]
        %v2766 = vld [vmem:[#allocation2 + $0x20] sm:$0xff]
        %v2767 = vld [vmem:[#allocation2 + $0x28] sm:$0xff]
        %v2768 = vld [vmem:[#allocation2 + $0x30] sm:$0xff]
        %v2769 = vld [vmem:[#allocation2 + $0x38] sm:$0xff]
        %v2770 = vld [vmem:[#allocation2 + $0x40] sm:$0xff]
        %v2771 = vld [vmem:[#allocation2 + $0x48] sm:$0xff]
        %v2772 = vld [vmem:[#allocation2 + $0x50] sm:$0xff]
        %v2773 = vld [vmem:[#allocation2 + $0x58] sm:$0xff]
        %v2774 = vld [vmem:[#allocation2 + $0x60] sm:$0xff]
        %v2775 = vld [vmem:[#allocation2 + $0x68] sm:$0xff]
        %v2776 = vld [vmem:[#allocation2 + $0x70] sm:$0xff]
        %v2777 = vld [vmem:[#allocation2 + $0x78] sm:$0xff]
        %v2778 = vmul.f32 %v2746, %v2746
        %v2779 = vmul.f32 %v2747, %v2747
        %v2780 = vmul.f32 %v2748, %v2748
        %v2781 = vmul.f32 %v2749, %v2749
        %v2782 = vmul.f32 %v2750, %v2750
        %v2783 = vmul.f32 %v2751, %v2751
        %v2784 = vmul.f32 %v2752, %v2752
        %v2785 = vmul.f32 %v2753, %v2753
        %v2786 = vmul.f32 %v2754, %v2754
        %v2787 = vmul.f32 %v2755, %v2755
        %v2788 = vmul.f32 %v2756, %v2756
        %v2789 = vmul.f32 %v2757, %v2757
        %v2790 = vmul.f32 %v2758, %v2758
        %v2791 = vmul.f32 %v2759, %v2759
        %v2792 = vmul.f32 %v2760, %v2760
        %v2793 = vmul.f32 %v2761, %v2761
        %v2794 = vmul.f32 %v2778, %v2746
        %v2795 = vmul.f32 %v2779, %v2747
        %v2796 = vmul.f32 %v2780, %v2748
        %v2797 = vmul.f32 %v2781, %v2749
        %v2798 = vmul.f32 %v2782, %v2750
        %v2799 = vmul.f32 %v2783, %v2751
        %v2800 = vmul.f32 %v2784, %v2752
        %v2801 = vmul.f32 %v2785, %v2753
        %v2802 = vmul.f32 %v2786, %v2754
        %v2803 = vmul.f32 %v2787, %v2755
        %v2804 = vmul.f32 %v2788, %v2756
        %v2805 = vmul.f32 %v2789, %v2757
        %v2806 = vmul.f32 %v2790, %v2758
        %v2807 = vmul.f32 %v2791, %v2759
        %v2808 = vmul.f32 %v2792, %v2760
        %v2809 = vmul.f32 %v2793, %v2761
        %2810 = vadd.xlane.f32.xlu0 %v2794
        %v2811 = vpop.xlane.xlu0 %2810
        %2812 = vadd.xlane.f32.xlu0 %v2795
        %v2813 = vpop.xlane.xlu0 %2812
        %2814 = vadd.xlane.f32.xlu0 %v2796
        %v2815 = vpop.xlane.xlu0 %2814
        %2816 = vadd.xlane.f32.xlu0 %v2797
        %v2817 = vpop.xlane.xlu0 %2816
        %2818 = vadd.xlane.f32.xlu0 %v2798
        %v2819 = vpop.xlane.xlu0 %2818
        %2820 = vadd.xlane.f32.xlu0 %v2799
        %v2821 = vpop.xlane.xlu0 %2820
        %2822 = vadd.xlane.f32.xlu0 %v2800
        %v2823 = vpop.xlane.xlu0 %2822
        %2824 = vadd.xlane.f32.xlu0 %v2801
        %v2825 = vpop.xlane.xlu0 %2824
        %2826 = vadd.xlane.f32.xlu0 %v2802
        %v2827 = vpop.xlane.xlu0 %2826
        %2828 = vadd.xlane.f32.xlu0 %v2803
        %v2829 = vpop.xlane.xlu0 %2828
        %2830 = vadd.xlane.f32.xlu0 %v2804
        %v2831 = vpop.xlane.xlu0 %2830
        %2832 = vadd.xlane.f32.xlu0 %v2805
        %v2833 = vpop.xlane.xlu0 %2832
        %2834 = vadd.xlane.f32.xlu0 %v2806
        %v2835 = vpop.xlane.xlu0 %2834
        %2836 = vadd.xlane.f32.xlu0 %v2807
        %v2837 = vpop.xlane.xlu0 %2836
        %2838 = vadd.xlane.f32.xlu0 %v2808
        %v2839 = vpop.xlane.xlu0 %2838
        %2840 = vadd.xlane.f32.xlu0 %v2809
        %v2841 = vpop.xlane.xlu0 %2840
        %v2842 = vadd.f32 %v2762, %v2811
        %v2843 = vadd.f32 %v2763, %v2813
        %v2844 = vadd.f32 %v2764, %v2815
        %v2845 = vadd.f32 %v2765, %v2817
        %v2846 = vadd.f32 %v2766, %v2819
        %v2847 = vadd.f32 %v2767, %v2821
        %v2848 = vadd.f32 %v2768, %v2823
        %v2849 = vadd.f32 %v2769, %v2825
        %v2850 = vadd.f32 %v2770, %v2827
        %v2851 = vadd.f32 %v2771, %v2829
        %v2852 = vadd.f32 %v2772, %v2831
        %v2853 = vadd.f32 %v2773, %v2833
        %v2854 = vadd.f32 %v2774, %v2835
        %v2855 = vadd.f32 %v2775, %v2837
        %v2856 = vadd.f32 %v2776, %v2839
        %v2857 = vadd.f32 %v2777, %v2841
        %vm2858 = vcmask 31768
        %2859 = vst.msk [vmem:[#allocation2] sm:$0xff] %vm2858, %v2842
        %2860 = vst.msk [vmem:[#allocation2 + $0x8] sm:$0xff] %vm2858, %v2843
        %2861 = vst.msk [vmem:[#allocation2 + $0x10] sm:$0xff] %vm2858, %v2844
        %2862 = vst.msk [vmem:[#allocation2 + $0x18] sm:$0xff] %vm2858, %v2845
        %2863 = vst.msk [vmem:[#allocation2 + $0x20] sm:$0xff] %vm2858, %v2846
        %2864 = vst.msk [vmem:[#allocation2 + $0x28] sm:$0xff] %vm2858, %v2847
        %2865 = vst.msk [vmem:[#allocation2 + $0x30] sm:$0xff] %vm2858, %v2848
        %2866 = vst.msk [vmem:[#allocation2 + $0x38] sm:$0xff] %vm2858, %v2849
        %2867 = vst.msk [vmem:[#allocation2 + $0x40] sm:$0xff] %vm2858, %v2850
        %2868 = vst.msk [vmem:[#allocation2 + $0x48] sm:$0xff] %vm2858, %v2851
        %2869 = vst.msk [vmem:[#allocation2 + $0x50] sm:$0xff] %vm2858, %v2852
        %2870 = vst.msk [vmem:[#allocation2 + $0x58] sm:$0xff] %vm2858, %v2853
        %2871 = vst.msk [vmem:[#allocation2 + $0x60] sm:$0xff] %vm2858, %v2854
        %2872 = vst.msk [vmem:[#allocation2 + $0x68] sm:$0xff] %vm2858, %v2855
        %2873 = vst.msk [vmem:[#allocation2 + $0x70] sm:$0xff] %vm2858, %v2856
        %2874 = vst.msk [vmem:[#allocation2 + $0x78] sm:$0xff] %vm2858, %v2857
        %v2875 = vld [vmem:[%s5] sm:$0xff]
        %v2876 = vld [vmem:[%s5 + $0x8] sm:$0xff]
        %v2877 = vld [vmem:[%s5 + $0x10] sm:$0xff]
        %v2878 = vld [vmem:[%s5 + $0x18] sm:$0xff]
        %v2879 = vld [vmem:[%s5 + $0x20] sm:$0xff]
        %v2880 = vld [vmem:[%s5 + $0x28] sm:$0xff]
        %v2881 = vld [vmem:[%s5 + $0x30] sm:$0xff]
        %v2882 = vld [vmem:[%s5 + $0x38] sm:$0xff]
        %v2883 = vld [vmem:[%s5 + $0x40] sm:$0xff]
        %v2884 = vld [vmem:[%s5 + $0x48] sm:$0xff]
        %v2885 = vld [vmem:[%s5 + $0x50] sm:$0xff]
        %v2886 = vld [vmem:[%s5 + $0x58] sm:$0xff]
        %v2887 = vld [vmem:[%s5 + $0x60] sm:$0xff]
        %v2888 = vld [vmem:[%s5 + $0x68] sm:$0xff]
        %v2889 = vld [vmem:[%s5 + $0x70] sm:$0xff]
        %v2890 = vld [vmem:[%s5 + $0x78] sm:$0xff]
        %s2891 = scalar_lea.vmem %s398, 12 [#allocation7]
        %v2892 = vld [vmem:[%s2891] sm:$0x7]
        %v2894 = vsel %vm836, %v2875, 0
        %v2897 = vsel %vm836, %v2876, 0
        %v2900 = vsel %vm836, %v2877, 0
        %v2903 = vsel %vm836, %v2878, 0
        %v2906 = vsel %vm836, %v2879, 0
        %v2909 = vsel %vm836, %v2880, 0
        %v2912 = vsel %vm836, %v2881, 0
        %v2915 = vsel %vm836, %v2882, 0
        %v2918 = vsel %vm836, %v2883, 0
        %v2921 = vsel %vm836, %v2884, 0
        %v2924 = vsel %vm836, %v2885, 0
        %v2927 = vsel %vm836, %v2886, 0
        %v2930 = vsel %vm836, %v2887, 0
        %v2933 = vsel %vm836, %v2888, 0
        %v2936 = vsel %vm836, %v2889, 0
        %v2939 = vsel %vm836, %v2890, 0
        %v2942 = vsel %vm885, %v2892, 0
        %2944 = vmatprep.subr.mxu0 0.0
        %2945 = vmatpush1.msra.mxu0 %v2942
        %2946 = vmatprep.subr.mxu0 0.0
        %2947 = vmatpush1.msra.mxu0 0.0
        %2948 = vmatprep.subr.mxu0 0.0
        %2949 = vmatpush1.msra.mxu0 0.0
        %2950 = vmatprep.subr.mxu0 0.0
        %2951 = vmatpush1.msra.mxu0 0.0
        %2952 = vmatprep.subr.mxu0 0.0
        %2953 = vmatpush1.msra.mxu0 0.0
        %2954 = vmatprep.subr.mxu0 0.0
        %2955 = vmatpush1.msra.mxu0 0.0
        %2956 = vmatprep.subr.mxu0 0.0
        %2957 = vmatpush1.msra.mxu0 0.0
        %2958 = vmatprep.subr.mxu0 0.0
        %2959 = vmatpush1.msra.mxu0 0.0
        %2960 = vmatprep.subr.mxu0 0.0
        %2961 = vmatpush1.msra.mxu0 0.0
        %2962 = vmatprep.subr.mxu0 0.0
        %2963 = vmatpush1.msra.mxu0 0.0
        %2964 = vmatprep.subr.mxu0 0.0
        %2965 = vmatpush1.msra.mxu0 0.0
        %2966 = vmatprep.subr.mxu0 0.0
        %2967 = vmatpush1.msra.mxu0 0.0
        %2968 = vmatprep.subr.mxu0 0.0
        %2969 = vmatpush1.msra.mxu0 0.0
        %2970 = vmatprep.subr.mxu0 0.0
        %2971 = vmatpush1.msra.mxu0 0.0
        %2972 = vmatprep.subr.mxu0 0.0
        %2973 = vmatpush1.msra.mxu0 0.0
        %2974 = vmatprep.subr.mxu0 0.0
        %2975 = vmatpush1.msra.mxu0 0.0
        %2976 = vmatprep.subr.mxu0 0.0
        %2977 = vmatpush1.msra.mxu0 0.0
        %2978 = vmatprep.subr.mxu0 0.0
        %2979 = vmatpush1.msra.mxu0 0.0
        %2980 = vmatprep.subr.mxu0 0.0
        %2981 = vmatpush1.msra.mxu0 0.0
        %2982 = vmatprep.subr.mxu0 0.0
        %2983 = vmatpush1.msra.mxu0 0.0
        %2984 = vmatprep.subr.mxu0 0.0
        %2985 = vmatpush1.msra.mxu0 0.0
        %2986 = vmatprep.subr.mxu0 0.0
        %2987 = vmatpush1.msra.mxu0 0.0
        %2988 = vmatprep.subr.mxu0 0.0
        %2989 = vmatpush1.msra.mxu0 0.0
        %2990 = vmatprep.subr.mxu0 0.0
        %2991 = vmatpush1.msra.mxu0 0.0
        %2992 = vmatprep.subr.mxu0 0.0
        %2993 = vmatpush1.msra.mxu0 0.0
        %2994 = vmatprep.subr.mxu0 0.0
        %2995 = vmatpush1.msra.mxu0 0.0
        %2996 = vmatprep.subr.mxu0 0.0
        %2997 = vmatpush1.msra.mxu0 0.0
        %2998 = vmatprep.subr.mxu0 0.0
        %2999 = vmatpush1.msra.mxu0 0.0
        %3000 = vmatprep.subr.mxu0 0.0
        %3001 = vmatpush1.msra.mxu0 0.0
        %3002 = vmatprep.subr.mxu0 0.0
        %3003 = vmatpush1.msra.mxu0 0.0
        %3004 = vmatprep.subr.mxu0 0.0
        %3005 = vmatpush1.msra.mxu0 0.0
        %3006 = vmatprep.subr.mxu0 0.0
        %3007 = vmatpush1.msra.mxu0 0.0
        %3008 = vmatprep.mubr.f32.mxu0 0.0
        %3009 = vmatmul.mubr.f32.gmra.mrb[0].mxu0 %v2894
        %v3010 = vpop.f32.mrb[0].mxu0
        %v3011 = vadd.f32 0.0, %v3010
        %v3012 = vpop.f32.mrb[0].mxu0
        %3013 = vmatprep.mubr.f32.mxu0 0.0
        %3014 = vmatmul.mubr.f32.gmra.mrb[0].mxu0 %v2897
        %v3015 = vpop.f32.mrb[0].mxu0
        %v3016 = vadd.f32 0.0, %v3015
        %v3017 = vpop.f32.mrb[0].mxu0
        %3018 = vmatprep.mubr.f32.mxu0 0.0
        %3019 = vmatmul.mubr.f32.gmra.mrb[0].mxu0 %v2900
        %v3020 = vpop.f32.mrb[0].mxu0
        %v3021 = vadd.f32 0.0, %v3020
        %v3022 = vpop.f32.mrb[0].mxu0
        %3023 = vmatprep.mubr.f32.mxu0 0.0
        %3024 = vmatmul.mubr.f32.gmra.mrb[0].mxu0 %v2903
        %v3025 = vpop.f32.mrb[0].mxu0
        %v3026 = vadd.f32 0.0, %v3025
        %v3027 = vpop.f32.mrb[0].mxu0
        %3028 = vmatprep.mubr.f32.mxu0 0.0
        %3029 = vmatmul.mubr.f32.gmra.mrb[0].mxu0 %v2906
        %v3030 = vpop.f32.mrb[0].mxu0
        %v3031 = vadd.f32 0.0, %v3030
        %v3032 = vpop.f32.mrb[0].mxu0
        %3033 = vmatprep.mubr.f32.mxu0 0.0
        %3034 = vmatmul.mubr.f32.gmra.mrb[0].mxu0 %v2909
        %v3035 = vpop.f32.mrb[0].mxu0
        %v3036 = vadd.f32 0.0, %v3035
        %v3037 = vpop.f32.mrb[0].mxu0
        %3038 = vmatprep.mubr.f32.mxu0 0.0
        %3039 = vmatmul.mubr.f32.gmra.mrb[0].mxu0 %v2912
        %v3040 = vpop.f32.mrb[0].mxu0
        %v3041 = vadd.f32 0.0, %v3040
        %v3042 = vpop.f32.mrb[0].mxu0
        %3043 = vmatprep.mubr.f32.mxu0 0.0
        %3044 = vmatmul.mubr.f32.gmra.mrb[0].mxu0 %v2915
        %v3045 = vpop.f32.mrb[0].mxu0
        %v3046 = vadd.f32 0.0, %v3045
        %v3047 = vpop.f32.mrb[0].mxu0
        %3048 = vmatprep.mubr.f32.mxu0 0.0
        %3049 = vmatmul.mubr.f32.gmra.mrb[0].mxu0 %v2918
        %v3050 = vpop.f32.mrb[0].mxu0
        %v3051 = vadd.f32 0.0, %v3050
        %v3052 = vpop.f32.mrb[0].mxu0
        %3053 = vmatprep.mubr.f32.mxu0 0.0
        %3054 = vmatmul.mubr.f32.gmra.mrb[0].mxu0 %v2921
        %v3055 = vpop.f32.mrb[0].mxu0
        %v3056 = vadd.f32 0.0, %v3055
        %v3057 = vpop.f32.mrb[0].mxu0
        %3058 = vmatprep.mubr.f32.mxu0 0.0
        %3059 = vmatmul.mubr.f32.gmra.mrb[0].mxu0 %v2924
        %v3060 = vpop.f32.mrb[0].mxu0
        %v3061 = vadd.f32 0.0, %v3060
        %v3062 = vpop.f32.mrb[0].mxu0
        %3063 = vmatprep.mubr.f32.mxu0 0.0
        %3064 = vmatmul.mubr.f32.gmra.mrb[0].mxu0 %v2927
        %v3065 = vpop.f32.mrb[0].mxu0
        %v3066 = vadd.f32 0.0, %v3065
        %v3067 = vpop.f32.mrb[0].mxu0
        %3068 = vmatprep.mubr.f32.mxu0 0.0
        %3069 = vmatmul.mubr.f32.gmra.mrb[0].mxu0 %v2930
        %v3070 = vpop.f32.mrb[0].mxu0
        %v3071 = vadd.f32 0.0, %v3070
        %v3072 = vpop.f32.mrb[0].mxu0
        %3073 = vmatprep.mubr.f32.mxu0 0.0
        %3074 = vmatmul.mubr.f32.gmra.mrb[0].mxu0 %v2933
        %v3075 = vpop.f32.mrb[0].mxu0
        %v3076 = vadd.f32 0.0, %v3075
        %v3077 = vpop.f32.mrb[0].mxu0
        %3078 = vmatprep.mubr.f32.mxu0 0.0
        %3079 = vmatmul.mubr.f32.gmra.mrb[0].mxu0 %v2936
        %v3080 = vpop.f32.mrb[0].mxu0
        %v3081 = vadd.f32 0.0, %v3080
        %v3082 = vpop.f32.mrb[0].mxu0
        %3083 = vmatprep.mubr.f32.mxu0 0.0
        %3084 = vmatmul.mubr.f32.gmra.mrb[0].mxu0 %v2939
        %v3085 = vpop.f32.mrb[0].mxu0
        %v3086 = vadd.f32 0.0, %v3085
        %v3087 = vpop.f32.mrb[0].mxu0
        %3088 = vdwg.mxu0
        %v3089 = vmax.f32 %v3011, 1e-06
        %v3090 = vmax.f32 %v3016, 1e-06
        %v3091 = vmax.f32 %v3021, 1e-06
        %v3092 = vmax.f32 %v3026, 1e-06
        %v3093 = vmax.f32 %v3031, 1e-06
        %v3094 = vmax.f32 %v3036, 1e-06
        %v3095 = vmax.f32 %v3041, 1e-06
        %v3096 = vmax.f32 %v3046, 1e-06
        %v3097 = vmax.f32 %v3051, 1e-06
        %v3098 = vmax.f32 %v3056, 1e-06
        %v3099 = vmax.f32 %v3061, 1e-06
        %v3100 = vmax.f32 %v3066, 1e-06
        %v3101 = vmax.f32 %v3071, 1e-06
        %v3102 = vmax.f32 %v3076, 1e-06
        %v3103 = vmax.f32 %v3081, 1e-06
        %v3104 = vmax.f32 %v3086, 1e-06
        %v3105 = vld [vmem:[#allocation3] sm:$0xff]
        %v3106 = vld [vmem:[#allocation3 + $0x8] sm:$0xff]
        %v3107 = vld [vmem:[#allocation3 + $0x10] sm:$0xff]
        %v3108 = vld [vmem:[#allocation3 + $0x18] sm:$0xff]
        %v3109 = vld [vmem:[#allocation3 + $0x20] sm:$0xff]
        %v3110 = vld [vmem:[#allocation3 + $0x28] sm:$0xff]
        %v3111 = vld [vmem:[#allocation3 + $0x30] sm:$0xff]
        %v3112 = vld [vmem:[#allocation3 + $0x38] sm:$0xff]
        %v3113 = vld [vmem:[#allocation3 + $0x40] sm:$0xff]
        %v3114 = vld [vmem:[#allocation3 + $0x48] sm:$0xff]
        %v3115 = vld [vmem:[#allocation3 + $0x50] sm:$0xff]
        %v3116 = vld [vmem:[#allocation3 + $0x58] sm:$0xff]
        %v3117 = vld [vmem:[#allocation3 + $0x60] sm:$0xff]
        %v3118 = vld [vmem:[#allocation3 + $0x68] sm:$0xff]
        %v3119 = vld [vmem:[#allocation3 + $0x70] sm:$0xff]
        %v3120 = vld [vmem:[#allocation3 + $0x78] sm:$0xff]
        %v3121 = vmul.f32 %v3089, %v3089
        %v3122 = vmul.f32 %v3090, %v3090
        %v3123 = vmul.f32 %v3091, %v3091
        %v3124 = vmul.f32 %v3092, %v3092
        %v3125 = vmul.f32 %v3093, %v3093
        %v3126 = vmul.f32 %v3094, %v3094
        %v3127 = vmul.f32 %v3095, %v3095
        %v3128 = vmul.f32 %v3096, %v3096
        %v3129 = vmul.f32 %v3097, %v3097
        %v3130 = vmul.f32 %v3098, %v3098
        %v3131 = vmul.f32 %v3099, %v3099
        %v3132 = vmul.f32 %v3100, %v3100
        %v3133 = vmul.f32 %v3101, %v3101
        %v3134 = vmul.f32 %v3102, %v3102
        %v3135 = vmul.f32 %v3103, %v3103
        %v3136 = vmul.f32 %v3104, %v3104
        %v3137 = vmul.f32 %v3121, %v3089
        %v3138 = vmul.f32 %v3122, %v3090
        %v3139 = vmul.f32 %v3123, %v3091
        %v3140 = vmul.f32 %v3124, %v3092
        %v3141 = vmul.f32 %v3125, %v3093
        %v3142 = vmul.f32 %v3126, %v3094
        %v3143 = vmul.f32 %v3127, %v3095
        %v3144 = vmul.f32 %v3128, %v3096
        %v3145 = vmul.f32 %v3129, %v3097
        %v3146 = vmul.f32 %v3130, %v3098
        %v3147 = vmul.f32 %v3131, %v3099
        %v3148 = vmul.f32 %v3132, %v3100
        %v3149 = vmul.f32 %v3133, %v3101
        %v3150 = vmul.f32 %v3134, %v3102
        %v3151 = vmul.f32 %v3135, %v3103
        %v3152 = vmul.f32 %v3136, %v3104
        %3153 = vadd.xlane.f32.xlu0 %v3137
        %v3154 = vpop.xlane.xlu0 %3153
        %3155 = vadd.xlane.f32.xlu0 %v3138
        %v3156 = vpop.xlane.xlu0 %3155
        %3157 = vadd.xlane.f32.xlu0 %v3139
        %v3158 = vpop.xlane.xlu0 %3157
        %3159 = vadd.xlane.f32.xlu0 %v3140
        %v3160 = vpop.xlane.xlu0 %3159
        %3161 = vadd.xlane.f32.xlu0 %v3141
        %v3162 = vpop.xlane.xlu0 %3161
        %3163 = vadd.xlane.f32.xlu0 %v3142
        %v3164 = vpop.xlane.xlu0 %3163
        %3165 = vadd.xlane.f32.xlu0 %v3143
        %v3166 = vpop.xlane.xlu0 %3165
        %3167 = vadd.xlane.f32.xlu0 %v3144
        %v3168 = vpop.xlane.xlu0 %3167
        %3169 = vadd.xlane.f32.xlu0 %v3145
        %v3170 = vpop.xlane.xlu0 %3169
        %3171 = vadd.xlane.f32.xlu0 %v3146
        %v3172 = vpop.xlane.xlu0 %3171
        %3173 = vadd.xlane.f32.xlu0 %v3147
        %v3174 = vpop.xlane.xlu0 %3173
        %3175 = vadd.xlane.f32.xlu0 %v3148
        %v3176 = vpop.xlane.xlu0 %3175
        %3177 = vadd.xlane.f32.xlu0 %v3149
        %v3178 = vpop.xlane.xlu0 %3177
        %3179 = vadd.xlane.f32.xlu0 %v3150
        %v3180 = vpop.xlane.xlu0 %3179
        %3181 = vadd.xlane.f32.xlu0 %v3151
        %v3182 = vpop.xlane.xlu0 %3181
        %3183 = vadd.xlane.f32.xlu0 %v3152
        %v3184 = vpop.xlane.xlu0 %3183
        %v3185 = vadd.f32 %v3105, %v3154
        %v3186 = vadd.f32 %v3106, %v3156
        %v3187 = vadd.f32 %v3107, %v3158
        %v3188 = vadd.f32 %v3108, %v3160
        %v3189 = vadd.f32 %v3109, %v3162
        %v3190 = vadd.f32 %v3110, %v3164
        %v3191 = vadd.f32 %v3111, %v3166
        %v3192 = vadd.f32 %v3112, %v3168
        %v3193 = vadd.f32 %v3113, %v3170
        %v3194 = vadd.f32 %v3114, %v3172
        %v3195 = vadd.f32 %v3115, %v3174
        %v3196 = vadd.f32 %v3116, %v3176
        %v3197 = vadd.f32 %v3117, %v3178
        %v3198 = vadd.f32 %v3118, %v3180
        %v3199 = vadd.f32 %v3119, %v3182
        %v3200 = vadd.f32 %v3120, %v3184
        %3201 = vst.msk [vmem:[#allocation3] sm:$0xff] %vm2858, %v3185
        %3202 = vst.msk [vmem:[#allocation3 + $0x8] sm:$0xff] %vm2858, %v3186
        %3203 = vst.msk [vmem:[#allocation3 + $0x10] sm:$0xff] %vm2858, %v3187
        %3204 = vst.msk [vmem:[#allocation3 + $0x18] sm:$0xff] %vm2858, %v3188
        %3205 = vst.msk [vmem:[#allocation3 + $0x20] sm:$0xff] %vm2858, %v3189
        %3206 = vst.msk [vmem:[#allocation3 + $0x28] sm:$0xff] %vm2858, %v3190
        %3207 = vst.msk [vmem:[#allocation3 + $0x30] sm:$0xff] %vm2858, %v3191
        %3208 = vst.msk [vmem:[#allocation3 + $0x38] sm:$0xff] %vm2858, %v3192
        %3209 = vst.msk [vmem:[#allocation3 + $0x40] sm:$0xff] %vm2858, %v3193
        %3210 = vst.msk [vmem:[#allocation3 + $0x48] sm:$0xff] %vm2858, %v3194
        %3211 = vst.msk [vmem:[#allocation3 + $0x50] sm:$0xff] %vm2858, %v3195
        %3212 = vst.msk [vmem:[#allocation3 + $0x58] sm:$0xff] %vm2858, %v3196
        %3213 = vst.msk [vmem:[#allocation3 + $0x60] sm:$0xff] %vm2858, %v3197
        %3214 = vst.msk [vmem:[#allocation3 + $0x68] sm:$0xff] %vm2858, %v3198
        %3215 = vst.msk [vmem:[#allocation3 + $0x70] sm:$0xff] %vm2858, %v3199
        %3216 = vst.msk [vmem:[#allocation3 + $0x78] sm:$0xff] %vm2858, %v3200
        %v3217 = vld [vmem:[%s4] sm:$0xff]
        %v3218 = vld [vmem:[%s4 + $0x8] sm:$0xff]
        %v3219 = vld [vmem:[%s4 + $0x10] sm:$0xff]
        %v3220 = vld [vmem:[%s4 + $0x18] sm:$0xff]
        %v3221 = vld [vmem:[%s4 + $0x20] sm:$0xff]
        %v3222 = vld [vmem:[%s4 + $0x28] sm:$0xff]
        %v3223 = vld [vmem:[%s4 + $0x30] sm:$0xff]
        %v3224 = vld [vmem:[%s4 + $0x38] sm:$0xff]
        %v3225 = vld [vmem:[%s4 + $0x40] sm:$0xff]
        %v3226 = vld [vmem:[%s4 + $0x48] sm:$0xff]
        %v3227 = vld [vmem:[%s4 + $0x50] sm:$0xff]
        %v3228 = vld [vmem:[%s4 + $0x58] sm:$0xff]
        %v3229 = vld [vmem:[%s4 + $0x60] sm:$0xff]
        %v3230 = vld [vmem:[%s4 + $0x68] sm:$0xff]
        %v3231 = vld [vmem:[%s4 + $0x70] sm:$0xff]
        %v3232 = vld [vmem:[%s4 + $0x78] sm:$0xff]
        %s3233 = scalar_lea.vmem %s391, 16 [#allocation6]
        %v3234 = vld [vmem:[%s3233] sm:$0xf]
        %v3236 = vsel %vm492, %v3217, 0
        %v3239 = vsel %vm492, %v3218, 0
        %v3242 = vsel %vm492, %v3219, 0
        %v3245 = vsel %vm492, %v3220, 0
        %v3248 = vsel %vm492, %v3221, 0
        %v3251 = vsel %vm492, %v3222, 0
        %v3254 = vsel %vm492, %v3223, 0
        %v3257 = vsel %vm492, %v3224, 0
        %v3260 = vsel %vm492, %v3225, 0
        %v3263 = vsel %vm492, %v3226, 0
        %v3266 = vsel %vm492, %v3227, 0
        %v3269 = vsel %vm492, %v3228, 0
        %v3272 = vsel %vm492, %v3229, 0
        %v3275 = vsel %vm492, %v3230, 0
        %v3278 = vsel %vm492, %v3231, 0
        %v3281 = vsel %vm492, %v3232, 0
        %v3284 = vsel %vm541, %v3234, 0
        %3286 = vmatprep.subr.mxu0 0.0
        %3287 = vmatpush1.msra.mxu0 %v3284
        %3288 = vmatprep.subr.mxu0 0.0
        %3289 = vmatpush1.msra.mxu0 0.0
        %3290 = vmatprep.subr.mxu0 0.0
        %3291 = vmatpush1.msra.mxu0 0.0
        %3292 = vmatprep.subr.mxu0 0.0
        %3293 = vmatpush1.msra.mxu0 0.0
        %3294 = vmatprep.subr.mxu0 0.0
        %3295 = vmatpush1.msra.mxu0 0.0
        %3296 = vmatprep.subr.mxu0 0.0
        %3297 = vmatpush1.msra.mxu0 0.0
        %3298 = vmatprep.subr.mxu0 0.0
        %3299 = vmatpush1.msra.mxu0 0.0
        %3300 = vmatprep.subr.mxu0 0.0
        %3301 = vmatpush1.msra.mxu0 0.0
        %3302 = vmatprep.subr.mxu0 0.0
        %3303 = vmatpush1.msra.mxu0 0.0
        %3304 = vmatprep.subr.mxu0 0.0
        %3305 = vmatpush1.msra.mxu0 0.0
        %3306 = vmatprep.subr.mxu0 0.0
        %3307 = vmatpush1.msra.mxu0 0.0
        %3308 = vmatprep.subr.mxu0 0.0
        %3309 = vmatpush1.msra.mxu0 0.0
        %3310 = vmatprep.subr.mxu0 0.0
        %3311 = vmatpush1.msra.mxu0 0.0
        %3312 = vmatprep.subr.mxu0 0.0
        %3313 = vmatpush1.msra.mxu0 0.0
        %3314 = vmatprep.subr.mxu0 0.0
        %3315 = vmatpush1.msra.mxu0 0.0
        %3316 = vmatprep.subr.mxu0 0.0
        %3317 = vmatpush1.msra.mxu0 0.0
        %3318 = vmatprep.subr.mxu0 0.0
        %3319 = vmatpush1.msra.mxu0 0.0
        %3320 = vmatprep.subr.mxu0 0.0
        %3321 = vmatpush1.msra.mxu0 0.0
        %3322 = vmatprep.subr.mxu0 0.0
        %3323 = vmatpush1.msra.mxu0 0.0
        %3324 = vmatprep.subr.mxu0 0.0
        %3325 = vmatpush1.msra.mxu0 0.0
        %3326 = vmatprep.subr.mxu0 0.0
        %3327 = vmatpush1.msra.mxu0 0.0
        %3328 = vmatprep.subr.mxu0 0.0
        %3329 = vmatpush1.msra.mxu0 0.0
        %3330 = vmatprep.subr.mxu0 0.0
        %3331 = vmatpush1.msra.mxu0 0.0
        %3332 = vmatprep.subr.mxu0 0.0
        %3333 = vmatpush1.msra.mxu0 0.0
        %3334 = vmatprep.subr.mxu0 0.0
        %3335 = vmatpush1.msra.mxu0 0.0
        %3336 = vmatprep.subr.mxu0 0.0
        %3337 = vmatpush1.msra.mxu0 0.0
        %3338 = vmatprep.subr.mxu0 0.0
        %3339 = vmatpush1.msra.mxu0 0.0
        %3340 = vmatprep.subr.mxu0 0.0
        %3341 = vmatpush1.msra.mxu0 0.0
        %3342 = vmatprep.subr.mxu0 0.0
        %3343 = vmatpush1.msra.mxu0 0.0
        %3344 = vmatprep.subr.mxu0 0.0
        %3345 = vmatpush1.msra.mxu0 0.0
        %3346 = vmatprep.subr.mxu0 0.0
        %3347 = vmatpush1.msra.mxu0 0.0
        %3348 = vmatprep.subr.mxu0 0.0
        %3349 = vmatpush1.msra.mxu0 0.0
        %3350 = vmatprep.mubr.f32.mxu0 0.0
        %3351 = vmatmul.mubr.f32.gmra.mrb[0].mxu0 %v3236
        %v3352 = vpop.f32.mrb[0].mxu0
        %v3353 = vadd.f32 0.0, %v3352
        %v3354 = vpop.f32.mrb[0].mxu0
        %3355 = vmatprep.mubr.f32.mxu0 0.0
        %3356 = vmatmul.mubr.f32.gmra.mrb[0].mxu0 %v3239
        %v3357 = vpop.f32.mrb[0].mxu0
        %v3358 = vadd.f32 0.0, %v3357
        %v3359 = vpop.f32.mrb[0].mxu0
        %3360 = vmatprep.mubr.f32.mxu0 0.0
        %3361 = vmatmul.mubr.f32.gmra.mrb[0].mxu0 %v3242
        %v3362 = vpop.f32.mrb[0].mxu0
        %v3363 = vadd.f32 0.0, %v3362
        %v3364 = vpop.f32.mrb[0].mxu0
        %3365 = vmatprep.mubr.f32.mxu0 0.0
        %3366 = vmatmul.mubr.f32.gmra.mrb[0].mxu0 %v3245
        %v3367 = vpop.f32.mrb[0].mxu0
        %v3368 = vadd.f32 0.0, %v3367
        %v3369 = vpop.f32.mrb[0].mxu0
        %3370 = vmatprep.mubr.f32.mxu0 0.0
        %3371 = vmatmul.mubr.f32.gmra.mrb[0].mxu0 %v3248
        %v3372 = vpop.f32.mrb[0].mxu0
        %v3373 = vadd.f32 0.0, %v3372
        %v3374 = vpop.f32.mrb[0].mxu0
        %3375 = vmatprep.mubr.f32.mxu0 0.0
        %3376 = vmatmul.mubr.f32.gmra.mrb[0].mxu0 %v3251
        %v3377 = vpop.f32.mrb[0].mxu0
        %v3378 = vadd.f32 0.0, %v3377
        %v3379 = vpop.f32.mrb[0].mxu0
        %3380 = vmatprep.mubr.f32.mxu0 0.0
        %3381 = vmatmul.mubr.f32.gmra.mrb[0].mxu0 %v3254
        %v3382 = vpop.f32.mrb[0].mxu0
        %v3383 = vadd.f32 0.0, %v3382
        %v3384 = vpop.f32.mrb[0].mxu0
        %3385 = vmatprep.mubr.f32.mxu0 0.0
        %3386 = vmatmul.mubr.f32.gmra.mrb[0].mxu0 %v3257
        %v3387 = vpop.f32.mrb[0].mxu0
        %v3388 = vadd.f32 0.0, %v3387
        %v3389 = vpop.f32.mrb[0].mxu0
        %3390 = vmatprep.mubr.f32.mxu0 0.0
        %3391 = vmatmul.mubr.f32.gmra.mrb[0].mxu0 %v3260
        %v3392 = vpop.f32.mrb[0].mxu0
        %v3393 = vadd.f32 0.0, %v3392
        %v3394 = vpop.f32.mrb[0].mxu0
        %3395 = vmatprep.mubr.f32.mxu0 0.0
        %3396 = vmatmul.mubr.f32.gmra.mrb[0].mxu0 %v3263
        %v3397 = vpop.f32.mrb[0].mxu0
        %v3398 = vadd.f32 0.0, %v3397
        %v3399 = vpop.f32.mrb[0].mxu0
        %3400 = vmatprep.mubr.f32.mxu0 0.0
        %3401 = vmatmul.mubr.f32.gmra.mrb[0].mxu0 %v3266
        %v3402 = vpop.f32.mrb[0].mxu0
        %v3403 = vadd.f32 0.0, %v3402
        %v3404 = vpop.f32.mrb[0].mxu0
        %3405 = vmatprep.mubr.f32.mxu0 0.0
        %3406 = vmatmul.mubr.f32.gmra.mrb[0].mxu0 %v3269
        %v3407 = vpop.f32.mrb[0].mxu0
        %v3408 = vadd.f32 0.0, %v3407
        %v3409 = vpop.f32.mrb[0].mxu0
        %3410 = vmatprep.mubr.f32.mxu0 0.0
        %3411 = vmatmul.mubr.f32.gmra.mrb[0].mxu0 %v3272
        %v3412 = vpop.f32.mrb[0].mxu0
        %v3413 = vadd.f32 0.0, %v3412
        %v3414 = vpop.f32.mrb[0].mxu0
        %3415 = vmatprep.mubr.f32.mxu0 0.0
        %3416 = vmatmul.mubr.f32.gmra.mrb[0].mxu0 %v3275
        %v3417 = vpop.f32.mrb[0].mxu0
        %v3418 = vadd.f32 0.0, %v3417
        %v3419 = vpop.f32.mrb[0].mxu0
        %3420 = vmatprep.mubr.f32.mxu0 0.0
        %3421 = vmatmul.mubr.f32.gmra.mrb[0].mxu0 %v3278
        %v3422 = vpop.f32.mrb[0].mxu0
        %v3423 = vadd.f32 0.0, %v3422
        %v3424 = vpop.f32.mrb[0].mxu0
        %3425 = vmatprep.mubr.f32.mxu0 0.0
        %3426 = vmatmul.mubr.f32.gmra.mrb[0].mxu0 %v3281
        %v3427 = vpop.f32.mrb[0].mxu0
        %v3428 = vadd.f32 0.0, %v3427
        %v3429 = vpop.f32.mrb[0].mxu0
        %3430 = vdwg.mxu0
        %v3431 = vmax.f32 %v3353, 1e-06
        %v3432 = vmax.f32 %v3358, 1e-06
        %v3433 = vmax.f32 %v3363, 1e-06
        %v3434 = vmax.f32 %v3368, 1e-06
        %v3435 = vmax.f32 %v3373, 1e-06
        %v3436 = vmax.f32 %v3378, 1e-06
        %v3437 = vmax.f32 %v3383, 1e-06
        %v3438 = vmax.f32 %v3388, 1e-06
        %v3439 = vmax.f32 %v3393, 1e-06
        %v3440 = vmax.f32 %v3398, 1e-06
        %v3441 = vmax.f32 %v3403, 1e-06
        %v3442 = vmax.f32 %v3408, 1e-06
        %v3443 = vmax.f32 %v3413, 1e-06
        %v3444 = vmax.f32 %v3418, 1e-06
        %v3445 = vmax.f32 %v3423, 1e-06
        %v3446 = vmax.f32 %v3428, 1e-06
        %v3447 = vld [vmem:[#allocation2] sm:$0xff]
        %v3448 = vld [vmem:[#allocation2 + $0x8] sm:$0xff]
        %v3449 = vld [vmem:[#allocation2 + $0x10] sm:$0xff]
        %v3450 = vld [vmem:[#allocation2 + $0x18] sm:$0xff]
        %v3451 = vld [vmem:[#allocation2 + $0x20] sm:$0xff]
        %v3452 = vld [vmem:[#allocation2 + $0x28] sm:$0xff]
        %v3453 = vld [vmem:[#allocation2 + $0x30] sm:$0xff]
        %v3454 = vld [vmem:[#allocation2 + $0x38] sm:$0xff]
        %v3455 = vld [vmem:[#allocation2 + $0x40] sm:$0xff]
        %v3456 = vld [vmem:[#allocation2 + $0x48] sm:$0xff]
        %v3457 = vld [vmem:[#allocation2 + $0x50] sm:$0xff]
        %v3458 = vld [vmem:[#allocation2 + $0x58] sm:$0xff]
        %v3459 = vld [vmem:[#allocation2 + $0x60] sm:$0xff]
        %v3460 = vld [vmem:[#allocation2 + $0x68] sm:$0xff]
        %v3461 = vld [vmem:[#allocation2 + $0x70] sm:$0xff]
        %v3462 = vld [vmem:[#allocation2 + $0x78] sm:$0xff]
        %v3463 = vmul.f32 %v3431, %v3431
        %v3464 = vmul.f32 %v3432, %v3432
        %v3465 = vmul.f32 %v3433, %v3433
        %v3466 = vmul.f32 %v3434, %v3434
        %v3467 = vmul.f32 %v3435, %v3435
        %v3468 = vmul.f32 %v3436, %v3436
        %v3469 = vmul.f32 %v3437, %v3437
        %v3470 = vmul.f32 %v3438, %v3438
        %v3471 = vmul.f32 %v3439, %v3439
        %v3472 = vmul.f32 %v3440, %v3440
        %v3473 = vmul.f32 %v3441, %v3441
        %v3474 = vmul.f32 %v3442, %v3442
        %v3475 = vmul.f32 %v3443, %v3443
        %v3476 = vmul.f32 %v3444, %v3444
        %v3477 = vmul.f32 %v3445, %v3445
        %v3478 = vmul.f32 %v3446, %v3446
        %v3479 = vmul.f32 %v3463, %v3431
        %v3480 = vmul.f32 %v3464, %v3432
        %v3481 = vmul.f32 %v3465, %v3433
        %v3482 = vmul.f32 %v3466, %v3434
        %v3483 = vmul.f32 %v3467, %v3435
        %v3484 = vmul.f32 %v3468, %v3436
        %v3485 = vmul.f32 %v3469, %v3437
        %v3486 = vmul.f32 %v3470, %v3438
        %v3487 = vmul.f32 %v3471, %v3439
        %v3488 = vmul.f32 %v3472, %v3440
        %v3489 = vmul.f32 %v3473, %v3441
        %v3490 = vmul.f32 %v3474, %v3442
        %v3491 = vmul.f32 %v3475, %v3443
        %v3492 = vmul.f32 %v3476, %v3444
        %v3493 = vmul.f32 %v3477, %v3445
        %v3494 = vmul.f32 %v3478, %v3446
        %3495 = vadd.xlane.f32.xlu0 %v3479
        %v3496 = vpop.xlane.xlu0 %3495
        %3497 = vadd.xlane.f32.xlu0 %v3480
        %v3498 = vpop.xlane.xlu0 %3497
        %3499 = vadd.xlane.f32.xlu0 %v3481
        %v3500 = vpop.xlane.xlu0 %3499
        %3501 = vadd.xlane.f32.xlu0 %v3482
        %v3502 = vpop.xlane.xlu0 %3501
        %3503 = vadd.xlane.f32.xlu0 %v3483
        %v3504 = vpop.xlane.xlu0 %3503
        %3505 = vadd.xlane.f32.xlu0 %v3484
        %v3506 = vpop.xlane.xlu0 %3505
        %3507 = vadd.xlane.f32.xlu0 %v3485
        %v3508 = vpop.xlane.xlu0 %3507
        %3509 = vadd.xlane.f32.xlu0 %v3486
        %v3510 = vpop.xlane.xlu0 %3509
        %3511 = vadd.xlane.f32.xlu0 %v3487
        %v3512 = vpop.xlane.xlu0 %3511
        %3513 = vadd.xlane.f32.xlu0 %v3488
        %v3514 = vpop.xlane.xlu0 %3513
        %3515 = vadd.xlane.f32.xlu0 %v3489
        %v3516 = vpop.xlane.xlu0 %3515
        %3517 = vadd.xlane.f32.xlu0 %v3490
        %v3518 = vpop.xlane.xlu0 %3517
        %3519 = vadd.xlane.f32.xlu0 %v3491
        %v3520 = vpop.xlane.xlu0 %3519
        %3521 = vadd.xlane.f32.xlu0 %v3492
        %v3522 = vpop.xlane.xlu0 %3521
        %3523 = vadd.xlane.f32.xlu0 %v3493
        %v3524 = vpop.xlane.xlu0 %3523
        %3525 = vadd.xlane.f32.xlu0 %v3494
        %v3526 = vpop.xlane.xlu0 %3525
        %v3527 = vadd.f32 %v3447, %v3496
        %v3528 = vadd.f32 %v3448, %v3498
        %v3529 = vadd.f32 %v3449, %v3500
        %v3530 = vadd.f32 %v3450, %v3502
        %v3531 = vadd.f32 %v3451, %v3504
        %v3532 = vadd.f32 %v3452, %v3506
        %v3533 = vadd.f32 %v3453, %v3508
        %v3534 = vadd.f32 %v3454, %v3510
        %v3535 = vadd.f32 %v3455, %v3512
        %v3536 = vadd.f32 %v3456, %v3514
        %v3537 = vadd.f32 %v3457, %v3516
        %v3538 = vadd.f32 %v3458, %v3518
        %v3539 = vadd.f32 %v3459, %v3520
        %v3540 = vadd.f32 %v3460, %v3522
        %v3541 = vadd.f32 %v3461, %v3524
        %v3542 = vadd.f32 %v3462, %v3526
        %vm3543 = vcmask 39968
        %3544 = vst.msk [vmem:[#allocation2] sm:$0xff] %vm3543, %v3527
        %3545 = vst.msk [vmem:[#allocation2 + $0x8] sm:$0xff] %vm3543, %v3528
        %3546 = vst.msk [vmem:[#allocation2 + $0x10] sm:$0xff] %vm3543, %v3529
        %3547 = vst.msk [vmem:[#allocation2 + $0x18] sm:$0xff] %vm3543, %v3530
        %3548 = vst.msk [vmem:[#allocation2 + $0x20] sm:$0xff] %vm3543, %v3531
        %3549 = vst.msk [vmem:[#allocation2 + $0x28] sm:$0xff] %vm3543, %v3532
        %3550 = vst.msk [vmem:[#allocation2 + $0x30] sm:$0xff] %vm3543, %v3533
        %3551 = vst.msk [vmem:[#allocation2 + $0x38] sm:$0xff] %vm3543, %v3534
        %3552 = vst.msk [vmem:[#allocation2 + $0x40] sm:$0xff] %vm3543, %v3535
        %3553 = vst.msk [vmem:[#allocation2 + $0x48] sm:$0xff] %vm3543, %v3536
        %3554 = vst.msk [vmem:[#allocation2 + $0x50] sm:$0xff] %vm3543, %v3537
        %3555 = vst.msk [vmem:[#allocation2 + $0x58] sm:$0xff] %vm3543, %v3538
        %3556 = vst.msk [vmem:[#allocation2 + $0x60] sm:$0xff] %vm3543, %v3539
        %3557 = vst.msk [vmem:[#allocation2 + $0x68] sm:$0xff] %vm3543, %v3540
        %3558 = vst.msk [vmem:[#allocation2 + $0x70] sm:$0xff] %vm3543, %v3541
        %3559 = vst.msk [vmem:[#allocation2 + $0x78] sm:$0xff] %vm3543, %v3542
        %v3560 = vld [vmem:[%s5] sm:$0xff]
        %v3561 = vld [vmem:[%s5 + $0x8] sm:$0xff]
        %v3562 = vld [vmem:[%s5 + $0x10] sm:$0xff]
        %v3563 = vld [vmem:[%s5 + $0x18] sm:$0xff]
        %v3564 = vld [vmem:[%s5 + $0x20] sm:$0xff]
        %v3565 = vld [vmem:[%s5 + $0x28] sm:$0xff]
        %v3566 = vld [vmem:[%s5 + $0x30] sm:$0xff]
        %v3567 = vld [vmem:[%s5 + $0x38] sm:$0xff]
        %v3568 = vld [vmem:[%s5 + $0x40] sm:$0xff]
        %v3569 = vld [vmem:[%s5 + $0x48] sm:$0xff]
        %v3570 = vld [vmem:[%s5 + $0x50] sm:$0xff]
        %v3571 = vld [vmem:[%s5 + $0x58] sm:$0xff]
        %v3572 = vld [vmem:[%s5 + $0x60] sm:$0xff]
        %v3573 = vld [vmem:[%s5 + $0x68] sm:$0xff]
        %v3574 = vld [vmem:[%s5 + $0x70] sm:$0xff]
        %v3575 = vld [vmem:[%s5 + $0x78] sm:$0xff]
        %s3576 = scalar_lea.vmem %s398, 16 [#allocation7]
        %v3577 = vld [vmem:[%s3576] sm:$0x7]
        %v3579 = vsel %vm836, %v3560, 0
        %v3582 = vsel %vm836, %v3561, 0
        %v3585 = vsel %vm836, %v3562, 0
        %v3588 = vsel %vm836, %v3563, 0
        %v3591 = vsel %vm836, %v3564, 0
        %v3594 = vsel %vm836, %v3565, 0
        %v3597 = vsel %vm836, %v3566, 0
        %v3600 = vsel %vm836, %v3567, 0
        %v3603 = vsel %vm836, %v3568, 0
        %v3606 = vsel %vm836, %v3569, 0
        %v3609 = vsel %vm836, %v3570, 0
        %v3612 = vsel %vm836, %v3571, 0
        %v3615 = vsel %vm836, %v3572, 0
        %v3618 = vsel %vm836, %v3573, 0
        %v3621 = vsel %vm836, %v3574, 0
        %v3624 = vsel %vm836, %v3575, 0
        %v3627 = vsel %vm885, %v3577, 0
        %3629 = vmatprep.subr.mxu0 0.0
        %3630 = vmatpush1.msra.mxu0 %v3627
        %3631 = vmatprep.subr.mxu0 0.0
        %3632 = vmatpush1.msra.mxu0 0.0
        %3633 = vmatprep.subr.mxu0 0.0
        %3634 = vmatpush1.msra.mxu0 0.0
        %3635 = vmatprep.subr.mxu0 0.0
        %3636 = vmatpush1.msra.mxu0 0.0
        %3637 = vmatprep.subr.mxu0 0.0
        %3638 = vmatpush1.msra.mxu0 0.0
        %3639 = vmatprep.subr.mxu0 0.0
        %3640 = vmatpush1.msra.mxu0 0.0
        %3641 = vmatprep.subr.mxu0 0.0
        %3642 = vmatpush1.msra.mxu0 0.0
        %3643 = vmatprep.subr.mxu0 0.0
        %3644 = vmatpush1.msra.mxu0 0.0
        %3645 = vmatprep.subr.mxu0 0.0
        %3646 = vmatpush1.msra.mxu0 0.0
        %3647 = vmatprep.subr.mxu0 0.0
        %3648 = vmatpush1.msra.mxu0 0.0
        %3649 = vmatprep.subr.mxu0 0.0
        %3650 = vmatpush1.msra.mxu0 0.0
        %3651 = vmatprep.subr.mxu0 0.0
        %3652 = vmatpush1.msra.mxu0 0.0
        %3653 = vmatprep.subr.mxu0 0.0
        %3654 = vmatpush1.msra.mxu0 0.0
        %3655 = vmatprep.subr.mxu0 0.0
        %3656 = vmatpush1.msra.mxu0 0.0
        %3657 = vmatprep.subr.mxu0 0.0
        %3658 = vmatpush1.msra.mxu0 0.0
        %3659 = vmatprep.subr.mxu0 0.0
        %3660 = vmatpush1.msra.mxu0 0.0
        %3661 = vmatprep.subr.mxu0 0.0
        %3662 = vmatpush1.msra.mxu0 0.0
        %3663 = vmatprep.subr.mxu0 0.0
        %3664 = vmatpush1.msra.mxu0 0.0
        %3665 = vmatprep.subr.mxu0 0.0
        %3666 = vmatpush1.msra.mxu0 0.0
        %3667 = vmatprep.subr.mxu0 0.0
        %3668 = vmatpush1.msra.mxu0 0.0
        %3669 = vmatprep.subr.mxu0 0.0
        %3670 = vmatpush1.msra.mxu0 0.0
        %3671 = vmatprep.subr.mxu0 0.0
        %3672 = vmatpush1.msra.mxu0 0.0
        %3673 = vmatprep.subr.mxu0 0.0
        %3674 = vmatpush1.msra.mxu0 0.0
        %3675 = vmatprep.subr.mxu0 0.0
        %3676 = vmatpush1.msra.mxu0 0.0
        %3677 = vmatprep.subr.mxu0 0.0
        %3678 = vmatpush1.msra.mxu0 0.0
        %3679 = vmatprep.subr.mxu0 0.0
        %3680 = vmatpush1.msra.mxu0 0.0
        %3681 = vmatprep.subr.mxu0 0.0
        %3682 = vmatpush1.msra.mxu0 0.0
        %3683 = vmatprep.subr.mxu0 0.0
        %3684 = vmatpush1.msra.mxu0 0.0
        %3685 = vmatprep.subr.mxu0 0.0
        %3686 = vmatpush1.msra.mxu0 0.0
        %3687 = vmatprep.subr.mxu0 0.0
        %3688 = vmatpush1.msra.mxu0 0.0
        %3689 = vmatprep.subr.mxu0 0.0
        %3690 = vmatpush1.msra.mxu0 0.0
        %3691 = vmatprep.subr.mxu0 0.0
        %3692 = vmatpush1.msra.mxu0 0.0
        %3693 = vmatprep.mubr.f32.mxu0 0.0
        %3694 = vmatmul.mubr.f32.gmra.mrb[0].mxu0 %v3579
        %v3695 = vpop.f32.mrb[0].mxu0
        %v3696 = vadd.f32 0.0, %v3695
        %v3697 = vpop.f32.mrb[0].mxu0
        %3698 = vmatprep.mubr.f32.mxu0 0.0
        %3699 = vmatmul.mubr.f32.gmra.mrb[0].mxu0 %v3582
        %v3700 = vpop.f32.mrb[0].mxu0
        %v3701 = vadd.f32 0.0, %v3700
        %v3702 = vpop.f32.mrb[0].mxu0
        %3703 = vmatprep.mubr.f32.mxu0 0.0
        %3704 = vmatmul.mubr.f32.gmra.mrb[0].mxu0 %v3585
        %v3705 = vpop.f32.mrb[0].mxu0
        %v3706 = vadd.f32 0.0, %v3705
        %v3707 = vpop.f32.mrb[0].mxu0
        %3708 = vmatprep.mubr.f32.mxu0 0.0
        %3709 = vmatmul.mubr.f32.gmra.mrb[0].mxu0 %v3588
        %v3710 = vpop.f32.mrb[0].mxu0
        %v3711 = vadd.f32 0.0, %v3710
        %v3712 = vpop.f32.mrb[0].mxu0
        %3713 = vmatprep.mubr.f32.mxu0 0.0
        %3714 = vmatmul.mubr.f32.gmra.mrb[0].mxu0 %v3591
        %v3715 = vpop.f32.mrb[0].mxu0
        %v3716 = vadd.f32 0.0, %v3715
        %v3717 = vpop.f32.mrb[0].mxu0
        %3718 = vmatprep.mubr.f32.mxu0 0.0
        %3719 = vmatmul.mubr.f32.gmra.mrb[0].mxu0 %v3594
        %v3720 = vpop.f32.mrb[0].mxu0
        %v3721 = vadd.f32 0.0, %v3720
        %v3722 = vpop.f32.mrb[0].mxu0
        %3723 = vmatprep.mubr.f32.mxu0 0.0
        %3724 = vmatmul.mubr.f32.gmra.mrb[0].mxu0 %v3597
        %v3725 = vpop.f32.mrb[0].mxu0
        %v3726 = vadd.f32 0.0, %v3725
        %v3727 = vpop.f32.mrb[0].mxu0
        %3728 = vmatprep.mubr.f32.mxu0 0.0
        %3729 = vmatmul.mubr.f32.gmra.mrb[0].mxu0 %v3600
        %v3730 = vpop.f32.mrb[0].mxu0
        %v3731 = vadd.f32 0.0, %v3730
        %v3732 = vpop.f32.mrb[0].mxu0
        %3733 = vmatprep.mubr.f32.mxu0 0.0
        %3734 = vmatmul.mubr.f32.gmra.mrb[0].mxu0 %v3603
        %v3735 = vpop.f32.mrb[0].mxu0
        %v3736 = vadd.f32 0.0, %v3735
        %v3737 = vpop.f32.mrb[0].mxu0
        %3738 = vmatprep.mubr.f32.mxu0 0.0
        %3739 = vmatmul.mubr.f32.gmra.mrb[0].mxu0 %v3606
        %v3740 = vpop.f32.mrb[0].mxu0
        %v3741 = vadd.f32 0.0, %v3740
        %v3742 = vpop.f32.mrb[0].mxu0
        %3743 = vmatprep.mubr.f32.mxu0 0.0
        %3744 = vmatmul.mubr.f32.gmra.mrb[0].mxu0 %v3609
        %v3745 = vpop.f32.mrb[0].mxu0
        %v3746 = vadd.f32 0.0, %v3745
        %v3747 = vpop.f32.mrb[0].mxu0
        %3748 = vmatprep.mubr.f32.mxu0 0.0
        %3749 = vmatmul.mubr.f32.gmra.mrb[0].mxu0 %v3612
        %v3750 = vpop.f32.mrb[0].mxu0
        %v3751 = vadd.f32 0.0, %v3750
        %v3752 = vpop.f32.mrb[0].mxu0
        %3753 = vmatprep.mubr.f32.mxu0 0.0
        %3754 = vmatmul.mubr.f32.gmra.mrb[0].mxu0 %v3615
        %v3755 = vpop.f32.mrb[0].mxu0
        %v3756 = vadd.f32 0.0, %v3755
        %v3757 = vpop.f32.mrb[0].mxu0
        %3758 = vmatprep.mubr.f32.mxu0 0.0
        %3759 = vmatmul.mubr.f32.gmra.mrb[0].mxu0 %v3618
        %v3760 = vpop.f32.mrb[0].mxu0
        %v3761 = vadd.f32 0.0, %v3760
        %v3762 = vpop.f32.mrb[0].mxu0
        %3763 = vmatprep.mubr.f32.mxu0 0.0
        %3764 = vmatmul.mubr.f32.gmra.mrb[0].mxu0 %v3621
        %v3765 = vpop.f32.mrb[0].mxu0
        %v3766 = vadd.f32 0.0, %v3765
        %v3767 = vpop.f32.mrb[0].mxu0
        %3768 = vmatprep.mubr.f32.mxu0 0.0
        %3769 = vmatmul.mubr.f32.gmra.mrb[0].mxu0 %v3624
        %v3770 = vpop.f32.mrb[0].mxu0
        %v3771 = vadd.f32 0.0, %v3770
        %v3772 = vpop.f32.mrb[0].mxu0
        %3773 = vdwg.mxu0
        %v3774 = vmax.f32 %v3696, 1e-06
        %v3775 = vmax.f32 %v3701, 1e-06
        %v3776 = vmax.f32 %v3706, 1e-06
        %v3777 = vmax.f32 %v3711, 1e-06
        %v3778 = vmax.f32 %v3716, 1e-06
        %v3779 = vmax.f32 %v3721, 1e-06
        %v3780 = vmax.f32 %v3726, 1e-06
        %v3781 = vmax.f32 %v3731, 1e-06
        %v3782 = vmax.f32 %v3736, 1e-06
        %v3783 = vmax.f32 %v3741, 1e-06
        %v3784 = vmax.f32 %v3746, 1e-06
        %v3785 = vmax.f32 %v3751, 1e-06
        %v3786 = vmax.f32 %v3756, 1e-06
        %v3787 = vmax.f32 %v3761, 1e-06
        %v3788 = vmax.f32 %v3766, 1e-06
        %v3789 = vmax.f32 %v3771, 1e-06
        %v3790 = vld [vmem:[#allocation3] sm:$0xff]
        %v3791 = vld [vmem:[#allocation3 + $0x8] sm:$0xff]
        %v3792 = vld [vmem:[#allocation3 + $0x10] sm:$0xff]
        %v3793 = vld [vmem:[#allocation3 + $0x18] sm:$0xff]
        %v3794 = vld [vmem:[#allocation3 + $0x20] sm:$0xff]
        %v3795 = vld [vmem:[#allocation3 + $0x28] sm:$0xff]
        %v3796 = vld [vmem:[#allocation3 + $0x30] sm:$0xff]
        %v3797 = vld [vmem:[#allocation3 + $0x38] sm:$0xff]
        %v3798 = vld [vmem:[#allocation3 + $0x40] sm:$0xff]
        %v3799 = vld [vmem:[#allocation3 + $0x48] sm:$0xff]
        %v3800 = vld [vmem:[#allocation3 + $0x50] sm:$0xff]
        %v3801 = vld [vmem:[#allocation3 + $0x58] sm:$0xff]
        %v3802 = vld [vmem:[#allocation3 + $0x60] sm:$0xff]
        %v3803 = vld [vmem:[#allocation3 + $0x68] sm:$0xff]
        %v3804 = vld [vmem:[#allocation3 + $0x70] sm:$0xff]
        %v3805 = vld [vmem:[#allocation3 + $0x78] sm:$0xff]
        %v3806 = vmul.f32 %v3774, %v3774
        %v3807 = vmul.f32 %v3775, %v3775
        %v3808 = vmul.f32 %v3776, %v3776
        %v3809 = vmul.f32 %v3777, %v3777
        %v3810 = vmul.f32 %v3778, %v3778
        %v3811 = vmul.f32 %v3779, %v3779
        %v3812 = vmul.f32 %v3780, %v3780
        %v3813 = vmul.f32 %v3781, %v3781
        %v3814 = vmul.f32 %v3782, %v3782
        %v3815 = vmul.f32 %v3783, %v3783
        %v3816 = vmul.f32 %v3784, %v3784
        %v3817 = vmul.f32 %v3785, %v3785
        %v3818 = vmul.f32 %v3786, %v3786
        %v3819 = vmul.f32 %v3787, %v3787
        %v3820 = vmul.f32 %v3788, %v3788
        %v3821 = vmul.f32 %v3789, %v3789
        %v3822 = vmul.f32 %v3806, %v3774
        %v3823 = vmul.f32 %v3807, %v3775
        %v3824 = vmul.f32 %v3808, %v3776
        %v3825 = vmul.f32 %v3809, %v3777
        %v3826 = vmul.f32 %v3810, %v3778
        %v3827 = vmul.f32 %v3811, %v3779
        %v3828 = vmul.f32 %v3812, %v3780
        %v3829 = vmul.f32 %v3813, %v3781
        %v3830 = vmul.f32 %v3814, %v3782
        %v3831 = vmul.f32 %v3815, %v3783
        %v3832 = vmul.f32 %v3816, %v3784
        %v3833 = vmul.f32 %v3817, %v3785
        %v3834 = vmul.f32 %v3818, %v3786
        %v3835 = vmul.f32 %v3819, %v3787
        %v3836 = vmul.f32 %v3820, %v3788
        %v3837 = vmul.f32 %v3821, %v3789
        %3838 = vadd.xlane.f32.xlu0 %v3822
        %v3839 = vpop.xlane.xlu0 %3838
        %3840 = vadd.xlane.f32.xlu0 %v3823
        %v3841 = vpop.xlane.xlu0 %3840
        %3842 = vadd.xlane.f32.xlu0 %v3824
        %v3843 = vpop.xlane.xlu0 %3842
        %3844 = vadd.xlane.f32.xlu0 %v3825
        %v3845 = vpop.xlane.xlu0 %3844
        %3846 = vadd.xlane.f32.xlu0 %v3826
        %v3847 = vpop.xlane.xlu0 %3846
        %3848 = vadd.xlane.f32.xlu0 %v3827
        %v3849 = vpop.xlane.xlu0 %3848
        %3850 = vadd.xlane.f32.xlu0 %v3828
        %v3851 = vpop.xlane.xlu0 %3850
        %3852 = vadd.xlane.f32.xlu0 %v3829
        %v3853 = vpop.xlane.xlu0 %3852
        %3854 = vadd.xlane.f32.xlu0 %v3830
        %v3855 = vpop.xlane.xlu0 %3854
        %3856 = vadd.xlane.f32.xlu0 %v3831
        %v3857 = vpop.xlane.xlu0 %3856
        %3858 = vadd.xlane.f32.xlu0 %v3832
        %v3859 = vpop.xlane.xlu0 %3858
        %3860 = vadd.xlane.f32.xlu0 %v3833
        %v3861 = vpop.xlane.xlu0 %3860
        %3862 = vadd.xlane.f32.xlu0 %v3834
        %v3863 = vpop.xlane.xlu0 %3862
        %3864 = vadd.xlane.f32.xlu0 %v3835
        %v3865 = vpop.xlane.xlu0 %3864
        %3866 = vadd.xlane.f32.xlu0 %v3836
        %v3867 = vpop.xlane.xlu0 %3866
        %3868 = vadd.xlane.f32.xlu0 %v3837
        %v3869 = vpop.xlane.xlu0 %3868
        %v3870 = vadd.f32 %v3790, %v3839
        %v3871 = vadd.f32 %v3791, %v3841
        %v3872 = vadd.f32 %v3792, %v3843
        %v3873 = vadd.f32 %v3793, %v3845
        %v3874 = vadd.f32 %v3794, %v3847
        %v3875 = vadd.f32 %v3795, %v3849
        %v3876 = vadd.f32 %v3796, %v3851
        %v3877 = vadd.f32 %v3797, %v3853
        %v3878 = vadd.f32 %v3798, %v3855
        %v3879 = vadd.f32 %v3799, %v3857
        %v3880 = vadd.f32 %v3800, %v3859
        %v3881 = vadd.f32 %v3801, %v3861
        %v3882 = vadd.f32 %v3802, %v3863
        %v3883 = vadd.f32 %v3803, %v3865
        %v3884 = vadd.f32 %v3804, %v3867
        %v3885 = vadd.f32 %v3805, %v3869
        %3886 = vst.msk [vmem:[#allocation3] sm:$0xff] %vm3543, %v3870
        %3887 = vst.msk [vmem:[#allocation3 + $0x8] sm:$0xff] %vm3543, %v3871
        %3888 = vst.msk [vmem:[#allocation3 + $0x10] sm:$0xff] %vm3543, %v3872
        %3889 = vst.msk [vmem:[#allocation3 + $0x18] sm:$0xff] %vm3543, %v3873
        %3890 = vst.msk [vmem:[#allocation3 + $0x20] sm:$0xff] %vm3543, %v3874
        %3891 = vst.msk [vmem:[#allocation3 + $0x28] sm:$0xff] %vm3543, %v3875
        %3892 = vst.msk [vmem:[#allocation3 + $0x30] sm:$0xff] %vm3543, %v3876
        %3893 = vst.msk [vmem:[#allocation3 + $0x38] sm:$0xff] %vm3543, %v3877
        %3894 = vst.msk [vmem:[#allocation3 + $0x40] sm:$0xff] %vm3543, %v3878
        %3895 = vst.msk [vmem:[#allocation3 + $0x48] sm:$0xff] %vm3543, %v3879
        %3896 = vst.msk [vmem:[#allocation3 + $0x50] sm:$0xff] %vm3543, %v3880
        %3897 = vst.msk [vmem:[#allocation3 + $0x58] sm:$0xff] %vm3543, %v3881
        %3898 = vst.msk [vmem:[#allocation3 + $0x60] sm:$0xff] %vm3543, %v3882
        %3899 = vst.msk [vmem:[#allocation3 + $0x68] sm:$0xff] %vm3543, %v3883
        %3900 = vst.msk [vmem:[#allocation3 + $0x70] sm:$0xff] %vm3543, %v3884
        %3901 = vst.msk [vmem:[#allocation3 + $0x78] sm:$0xff] %vm3543, %v3885
        %v3902 = vld [vmem:[%s4] sm:$0xff]
        %v3903 = vld [vmem:[%s4 + $0x8] sm:$0xff]
        %v3904 = vld [vmem:[%s4 + $0x10] sm:$0xff]
        %v3905 = vld [vmem:[%s4 + $0x18] sm:$0xff]
        %v3906 = vld [vmem:[%s4 + $0x20] sm:$0xff]
        %v3907 = vld [vmem:[%s4 + $0x28] sm:$0xff]
        %v3908 = vld [vmem:[%s4 + $0x30] sm:$0xff]
        %v3909 = vld [vmem:[%s4 + $0x38] sm:$0xff]
        %v3910 = vld [vmem:[%s4 + $0x40] sm:$0xff]
        %v3911 = vld [vmem:[%s4 + $0x48] sm:$0xff]
        %v3912 = vld [vmem:[%s4 + $0x50] sm:$0xff]
        %v3913 = vld [vmem:[%s4 + $0x58] sm:$0xff]
        %v3914 = vld [vmem:[%s4 + $0x60] sm:$0xff]
        %v3915 = vld [vmem:[%s4 + $0x68] sm:$0xff]
        %v3916 = vld [vmem:[%s4 + $0x70] sm:$0xff]
        %v3917 = vld [vmem:[%s4 + $0x78] sm:$0xff]
        %s3918 = scalar_lea.vmem %s391, 20 [#allocation6]
        %v3919 = vld [vmem:[%s3918] sm:$0xf]
        %v3921 = vsel %vm492, %v3902, 0
        %v3924 = vsel %vm492, %v3903, 0
        %v3927 = vsel %vm492, %v3904, 0
        %v3930 = vsel %vm492, %v3905, 0
        %v3933 = vsel %vm492, %v3906, 0
        %v3936 = vsel %vm492, %v3907, 0
        %v3939 = vsel %vm492, %v3908, 0
        %v3942 = vsel %vm492, %v3909, 0
        %v3945 = vsel %vm492, %v3910, 0
        %v3948 = vsel %vm492, %v3911, 0
        %v3951 = vsel %vm492, %v3912, 0
        %v3954 = vsel %vm492, %v3913, 0
        %v3957 = vsel %vm492, %v3914, 0
        %v3960 = vsel %vm492, %v3915, 0
        %v3963 = vsel %vm492, %v3916, 0
        %v3966 = vsel %vm492, %v3917, 0
        %v3969 = vsel %vm541, %v3919, 0
        %3971 = vmatprep.subr.mxu0 0.0
        %3972 = vmatpush1.msra.mxu0 %v3969
        %3973 = vmatprep.subr.mxu0 0.0
        %3974 = vmatpush1.msra.mxu0 0.0
        %3975 = vmatprep.subr.mxu0 0.0
        %3976 = vmatpush1.msra.mxu0 0.0
        %3977 = vmatprep.subr.mxu0 0.0
        %3978 = vmatpush1.msra.mxu0 0.0
        %3979 = vmatprep.subr.mxu0 0.0
        %3980 = vmatpush1.msra.mxu0 0.0
        %3981 = vmatprep.subr.mxu0 0.0
        %3982 = vmatpush1.msra.mxu0 0.0
        %3983 = vmatprep.subr.mxu0 0.0
        %3984 = vmatpush1.msra.mxu0 0.0
        %3985 = vmatprep.subr.mxu0 0.0
        %3986 = vmatpush1.msra.mxu0 0.0
        %3987 = vmatprep.subr.mxu0 0.0
        %3988 = vmatpush1.msra.mxu0 0.0
        %3989 = vmatprep.subr.mxu0 0.0
        %3990 = vmatpush1.msra.mxu0 0.0
        %3991 = vmatprep.subr.mxu0 0.0
        %3992 = vmatpush1.msra.mxu0 0.0
        %3993 = vmatprep.subr.mxu0 0.0
        %3994 = vmatpush1.msra.mxu0 0.0
        %3995 = vmatprep.subr.mxu0 0.0
        %3996 = vmatpush1.msra.mxu0 0.0
        %3997 = vmatprep.subr.mxu0 0.0
        %3998 = vmatpush1.msra.mxu0 0.0
        %3999 = vmatprep.subr.mxu0 0.0
        %4000 = vmatpush1.msra.mxu0 0.0
        %4001 = vmatprep.subr.mxu0 0.0
        %4002 = vmatpush1.msra.mxu0 0.0
        %4003 = vmatprep.subr.mxu0 0.0
        %4004 = vmatpush1.msra.mxu0 0.0
        %4005 = vmatprep.subr.mxu0 0.0
        %4006 = vmatpush1.msra.mxu0 0.0
        %4007 = vmatprep.subr.mxu0 0.0
        %4008 = vmatpush1.msra.mxu0 0.0
        %4009 = vmatprep.subr.mxu0 0.0
        %4010 = vmatpush1.msra.mxu0 0.0
        %4011 = vmatprep.subr.mxu0 0.0
        %4012 = vmatpush1.msra.mxu0 0.0
        %4013 = vmatprep.subr.mxu0 0.0
        %4014 = vmatpush1.msra.mxu0 0.0
        %4015 = vmatprep.subr.mxu0 0.0
        %4016 = vmatpush1.msra.mxu0 0.0
        %4017 = vmatprep.subr.mxu0 0.0
        %4018 = vmatpush1.msra.mxu0 0.0
        %4019 = vmatprep.subr.mxu0 0.0
        %4020 = vmatpush1.msra.mxu0 0.0
        %4021 = vmatprep.subr.mxu0 0.0
        %4022 = vmatpush1.msra.mxu0 0.0
        %4023 = vmatprep.subr.mxu0 0.0
        %4024 = vmatpush1.msra.mxu0 0.0
        %4025 = vmatprep.subr.mxu0 0.0
        %4026 = vmatpush1.msra.mxu0 0.0
        %4027 = vmatprep.subr.mxu0 0.0
        %4028 = vmatpush1.msra.mxu0 0.0
        %4029 = vmatprep.subr.mxu0 0.0
        %4030 = vmatpush1.msra.mxu0 0.0
        %4031 = vmatprep.subr.mxu0 0.0
        %4032 = vmatpush1.msra.mxu0 0.0
        %4033 = vmatprep.subr.mxu0 0.0
        %4034 = vmatpush1.msra.mxu0 0.0
        %4035 = vmatprep.mubr.f32.mxu0 0.0
        %4036 = vmatmul.mubr.f32.gmra.mrb[0].mxu0 %v3921
        %v4037 = vpop.f32.mrb[0].mxu0
        %v4038 = vadd.f32 0.0, %v4037
        %v4039 = vpop.f32.mrb[0].mxu0
        %4040 = vmatprep.mubr.f32.mxu0 0.0
        %4041 = vmatmul.mubr.f32.gmra.mrb[0].mxu0 %v3924
        %v4042 = vpop.f32.mrb[0].mxu0
        %v4043 = vadd.f32 0.0, %v4042
        %v4044 = vpop.f32.mrb[0].mxu0
        %4045 = vmatprep.mubr.f32.mxu0 0.0
        %4046 = vmatmul.mubr.f32.gmra.mrb[0].mxu0 %v3927
        %v4047 = vpop.f32.mrb[0].mxu0
        %v4048 = vadd.f32 0.0, %v4047
        %v4049 = vpop.f32.mrb[0].mxu0
        %4050 = vmatprep.mubr.f32.mxu0 0.0
        %4051 = vmatmul.mubr.f32.gmra.mrb[0].mxu0 %v3930
        %v4052 = vpop.f32.mrb[0].mxu0
        %v4053 = vadd.f32 0.0, %v4052
        %v4054 = vpop.f32.mrb[0].mxu0
        %4055 = vmatprep.mubr.f32.mxu0 0.0
        %4056 = vmatmul.mubr.f32.gmra.mrb[0].mxu0 %v3933
        %v4057 = vpop.f32.mrb[0].mxu0
        %v4058 = vadd.f32 0.0, %v4057
        %v4059 = vpop.f32.mrb[0].mxu0
        %4060 = vmatprep.mubr.f32.mxu0 0.0
        %4061 = vmatmul.mubr.f32.gmra.mrb[0].mxu0 %v3936
        %v4062 = vpop.f32.mrb[0].mxu0
        %v4063 = vadd.f32 0.0, %v4062
        %v4064 = vpop.f32.mrb[0].mxu0
        %4065 = vmatprep.mubr.f32.mxu0 0.0
        %4066 = vmatmul.mubr.f32.gmra.mrb[0].mxu0 %v3939
        %v4067 = vpop.f32.mrb[0].mxu0
        %v4068 = vadd.f32 0.0, %v4067
        %v4069 = vpop.f32.mrb[0].mxu0
        %4070 = vmatprep.mubr.f32.mxu0 0.0
        %4071 = vmatmul.mubr.f32.gmra.mrb[0].mxu0 %v3942
        %v4072 = vpop.f32.mrb[0].mxu0
        %v4073 = vadd.f32 0.0, %v4072
        %v4074 = vpop.f32.mrb[0].mxu0
        %4075 = vmatprep.mubr.f32.mxu0 0.0
        %4076 = vmatmul.mubr.f32.gmra.mrb[0].mxu0 %v3945
        %v4077 = vpop.f32.mrb[0].mxu0
        %v4078 = vadd.f32 0.0, %v4077
        %v4079 = vpop.f32.mrb[0].mxu0
        %4080 = vmatprep.mubr.f32.mxu0 0.0
        %4081 = vmatmul.mubr.f32.gmra.mrb[0].mxu0 %v3948
        %v4082 = vpop.f32.mrb[0].mxu0
        %v4083 = vadd.f32 0.0, %v4082
        %v4084 = vpop.f32.mrb[0].mxu0
        %4085 = vmatprep.mubr.f32.mxu0 0.0
        %4086 = vmatmul.mubr.f32.gmra.mrb[0].mxu0 %v3951
        %v4087 = vpop.f32.mrb[0].mxu0
        %v4088 = vadd.f32 0.0, %v4087
        %v4089 = vpop.f32.mrb[0].mxu0
        %4090 = vmatprep.mubr.f32.mxu0 0.0
        %4091 = vmatmul.mubr.f32.gmra.mrb[0].mxu0 %v3954
        %v4092 = vpop.f32.mrb[0].mxu0
        %v4093 = vadd.f32 0.0, %v4092
        %v4094 = vpop.f32.mrb[0].mxu0
        %4095 = vmatprep.mubr.f32.mxu0 0.0
        %4096 = vmatmul.mubr.f32.gmra.mrb[0].mxu0 %v3957
        %v4097 = vpop.f32.mrb[0].mxu0
        %v4098 = vadd.f32 0.0, %v4097
        %v4099 = vpop.f32.mrb[0].mxu0
        %4100 = vmatprep.mubr.f32.mxu0 0.0
        %4101 = vmatmul.mubr.f32.gmra.mrb[0].mxu0 %v3960
        %v4102 = vpop.f32.mrb[0].mxu0
        %v4103 = vadd.f32 0.0, %v4102
        %v4104 = vpop.f32.mrb[0].mxu0
        %4105 = vmatprep.mubr.f32.mxu0 0.0
        %4106 = vmatmul.mubr.f32.gmra.mrb[0].mxu0 %v3963
        %v4107 = vpop.f32.mrb[0].mxu0
        %v4108 = vadd.f32 0.0, %v4107
        %v4109 = vpop.f32.mrb[0].mxu0
        %4110 = vmatprep.mubr.f32.mxu0 0.0
        %4111 = vmatmul.mubr.f32.gmra.mrb[0].mxu0 %v3966
        %v4112 = vpop.f32.mrb[0].mxu0
        %v4113 = vadd.f32 0.0, %v4112
        %v4114 = vpop.f32.mrb[0].mxu0
        %4115 = vdwg.mxu0
        %v4116 = vmax.f32 %v4038, 1e-06
        %v4117 = vmax.f32 %v4043, 1e-06
        %v4118 = vmax.f32 %v4048, 1e-06
        %v4119 = vmax.f32 %v4053, 1e-06
        %v4120 = vmax.f32 %v4058, 1e-06
        %v4121 = vmax.f32 %v4063, 1e-06
        %v4122 = vmax.f32 %v4068, 1e-06
        %v4123 = vmax.f32 %v4073, 1e-06
        %v4124 = vmax.f32 %v4078, 1e-06
        %v4125 = vmax.f32 %v4083, 1e-06
        %v4126 = vmax.f32 %v4088, 1e-06
        %v4127 = vmax.f32 %v4093, 1e-06
        %v4128 = vmax.f32 %v4098, 1e-06
        %v4129 = vmax.f32 %v4103, 1e-06
        %v4130 = vmax.f32 %v4108, 1e-06
        %v4131 = vmax.f32 %v4113, 1e-06
        %v4132 = vld [vmem:[#allocation2] sm:$0xff]
        %v4133 = vld [vmem:[#allocation2 + $0x8] sm:$0xff]
        %v4134 = vld [vmem:[#allocation2 + $0x10] sm:$0xff]
        %v4135 = vld [vmem:[#allocation2 + $0x18] sm:$0xff]
        %v4136 = vld [vmem:[#allocation2 + $0x20] sm:$0xff]
        %v4137 = vld [vmem:[#allocation2 + $0x28] sm:$0xff]
        %v4138 = vld [vmem:[#allocation2 + $0x30] sm:$0xff]
        %v4139 = vld [vmem:[#allocation2 + $0x38] sm:$0xff]
        %v4140 = vld [vmem:[#allocation2 + $0x40] sm:$0xff]
        %v4141 = vld [vmem:[#allocation2 + $0x48] sm:$0xff]
        %v4142 = vld [vmem:[#allocation2 + $0x50] sm:$0xff]
        %v4143 = vld [vmem:[#allocation2 + $0x58] sm:$0xff]
        %v4144 = vld [vmem:[#allocation2 + $0x60] sm:$0xff]
        %v4145 = vld [vmem:[#allocation2 + $0x68] sm:$0xff]
        %v4146 = vld [vmem:[#allocation2 + $0x70] sm:$0xff]
        %v4147 = vld [vmem:[#allocation2 + $0x78] sm:$0xff]
        %v4148 = vmul.f32 %v4116, %v4116
        %v4149 = vmul.f32 %v4117, %v4117
        %v4150 = vmul.f32 %v4118, %v4118
        %v4151 = vmul.f32 %v4119, %v4119
        %v4152 = vmul.f32 %v4120, %v4120
        %v4153 = vmul.f32 %v4121, %v4121
        %v4154 = vmul.f32 %v4122, %v4122
        %v4155 = vmul.f32 %v4123, %v4123
        %v4156 = vmul.f32 %v4124, %v4124
        %v4157 = vmul.f32 %v4125, %v4125
        %v4158 = vmul.f32 %v4126, %v4126
        %v4159 = vmul.f32 %v4127, %v4127
        %v4160 = vmul.f32 %v4128, %v4128
        %v4161 = vmul.f32 %v4129, %v4129
        %v4162 = vmul.f32 %v4130, %v4130
        %v4163 = vmul.f32 %v4131, %v4131
        %v4164 = vmul.f32 %v4148, %v4116
        %v4165 = vmul.f32 %v4149, %v4117
        %v4166 = vmul.f32 %v4150, %v4118
        %v4167 = vmul.f32 %v4151, %v4119
        %v4168 = vmul.f32 %v4152, %v4120
        %v4169 = vmul.f32 %v4153, %v4121
        %v4170 = vmul.f32 %v4154, %v4122
        %v4171 = vmul.f32 %v4155, %v4123
        %v4172 = vmul.f32 %v4156, %v4124
        %v4173 = vmul.f32 %v4157, %v4125
        %v4174 = vmul.f32 %v4158, %v4126
        %v4175 = vmul.f32 %v4159, %v4127
        %v4176 = vmul.f32 %v4160, %v4128
        %v4177 = vmul.f32 %v4161, %v4129
        %v4178 = vmul.f32 %v4162, %v4130
        %v4179 = vmul.f32 %v4163, %v4131
        %4180 = vadd.xlane.f32.xlu0 %v4164
        %v4181 = vpop.xlane.xlu0 %4180
        %4182 = vadd.xlane.f32.xlu0 %v4165
        %v4183 = vpop.xlane.xlu0 %4182
        %4184 = vadd.xlane.f32.xlu0 %v4166
        %v4185 = vpop.xlane.xlu0 %4184
        %4186 = vadd.xlane.f32.xlu0 %v4167
        %v4187 = vpop.xlane.xlu0 %4186
        %4188 = vadd.xlane.f32.xlu0 %v4168
        %v4189 = vpop.xlane.xlu0 %4188
        %4190 = vadd.xlane.f32.xlu0 %v4169
        %v4191 = vpop.xlane.xlu0 %4190
        %4192 = vadd.xlane.f32.xlu0 %v4170
        %v4193 = vpop.xlane.xlu0 %4192
        %4194 = vadd.xlane.f32.xlu0 %v4171
        %v4195 = vpop.xlane.xlu0 %4194
        %4196 = vadd.xlane.f32.xlu0 %v4172
        %v4197 = vpop.xlane.xlu0 %4196
        %4198 = vadd.xlane.f32.xlu0 %v4173
        %v4199 = vpop.xlane.xlu0 %4198
        %4200 = vadd.xlane.f32.xlu0 %v4174
        %v4201 = vpop.xlane.xlu0 %4200
        %4202 = vadd.xlane.f32.xlu0 %v4175
        %v4203 = vpop.xlane.xlu0 %4202
        %4204 = vadd.xlane.f32.xlu0 %v4176
        %v4205 = vpop.xlane.xlu0 %4204
        %4206 = vadd.xlane.f32.xlu0 %v4177
        %v4207 = vpop.xlane.xlu0 %4206
        %4208 = vadd.xlane.f32.xlu0 %v4178
        %v4209 = vpop.xlane.xlu0 %4208
        %4210 = vadd.xlane.f32.xlu0 %v4179
        %v4211 = vpop.xlane.xlu0 %4210
        %v4212 = vadd.f32 %v4132, %v4181
        %v4213 = vadd.f32 %v4133, %v4183
        %v4214 = vadd.f32 %v4134, %v4185
        %v4215 = vadd.f32 %v4135, %v4187
        %v4216 = vadd.f32 %v4136, %v4189
        %v4217 = vadd.f32 %v4137, %v4191
        %v4218 = vadd.f32 %v4138, %v4193
        %v4219 = vadd.f32 %v4139, %v4195
        %v4220 = vadd.f32 %v4140, %v4197
        %v4221 = vadd.f32 %v4141, %v4199
        %v4222 = vadd.f32 %v4142, %v4201
        %v4223 = vadd.f32 %v4143, %v4203
        %v4224 = vadd.f32 %v4144, %v4205
        %v4225 = vadd.f32 %v4145, %v4207
        %v4226 = vadd.f32 %v4146, %v4209
        %v4227 = vadd.f32 %v4147, %v4211
        %vm4228 = vcmask 48168
        %4229 = vst.msk [vmem:[#allocation2] sm:$0xff] %vm4228, %v4212
        %4230 = vst.msk [vmem:[#allocation2 + $0x8] sm:$0xff] %vm4228, %v4213
        %4231 = vst.msk [vmem:[#allocation2 + $0x10] sm:$0xff] %vm4228, %v4214
        %4232 = vst.msk [vmem:[#allocation2 + $0x18] sm:$0xff] %vm4228, %v4215
        %4233 = vst.msk [vmem:[#allocation2 + $0x20] sm:$0xff] %vm4228, %v4216
        %4234 = vst.msk [vmem:[#allocation2 + $0x28] sm:$0xff] %vm4228, %v4217
        %4235 = vst.msk [vmem:[#allocation2 + $0x30] sm:$0xff] %vm4228, %v4218
        %4236 = vst.msk [vmem:[#allocation2 + $0x38] sm:$0xff] %vm4228, %v4219
        %4237 = vst.msk [vmem:[#allocation2 + $0x40] sm:$0xff] %vm4228, %v4220
        %4238 = vst.msk [vmem:[#allocation2 + $0x48] sm:$0xff] %vm4228, %v4221
        %4239 = vst.msk [vmem:[#allocation2 + $0x50] sm:$0xff] %vm4228, %v4222
        %4240 = vst.msk [vmem:[#allocation2 + $0x58] sm:$0xff] %vm4228, %v4223
        %4241 = vst.msk [vmem:[#allocation2 + $0x60] sm:$0xff] %vm4228, %v4224
        %4242 = vst.msk [vmem:[#allocation2 + $0x68] sm:$0xff] %vm4228, %v4225
        %4243 = vst.msk [vmem:[#allocation2 + $0x70] sm:$0xff] %vm4228, %v4226
        %4244 = vst.msk [vmem:[#allocation2 + $0x78] sm:$0xff] %vm4228, %v4227
        %v4245 = vld [vmem:[%s5] sm:$0xff]
        %v4246 = vld [vmem:[%s5 + $0x8] sm:$0xff]
        %v4247 = vld [vmem:[%s5 + $0x10] sm:$0xff]
        %v4248 = vld [vmem:[%s5 + $0x18] sm:$0xff]
        %v4249 = vld [vmem:[%s5 + $0x20] sm:$0xff]
        %v4250 = vld [vmem:[%s5 + $0x28] sm:$0xff]
        %v4251 = vld [vmem:[%s5 + $0x30] sm:$0xff]
        %v4252 = vld [vmem:[%s5 + $0x38] sm:$0xff]
        %v4253 = vld [vmem:[%s5 + $0x40] sm:$0xff]
        %v4254 = vld [vmem:[%s5 + $0x48] sm:$0xff]
        %v4255 = vld [vmem:[%s5 + $0x50] sm:$0xff]
        %v4256 = vld [vmem:[%s5 + $0x58] sm:$0xff]
        %v4257 = vld [vmem:[%s5 + $0x60] sm:$0xff]
        %v4258 = vld [vmem:[%s5 + $0x68] sm:$0xff]
        %v4259 = vld [vmem:[%s5 + $0x70] sm:$0xff]
        %v4260 = vld [vmem:[%s5 + $0x78] sm:$0xff]
        %s4261 = scalar_lea.vmem %s398, 20 [#allocation7]
        %v4262 = vld [vmem:[%s4261] sm:$0x7]
        %v4264 = vsel %vm836, %v4245, 0
        %v4267 = vsel %vm836, %v4246, 0
        %v4270 = vsel %vm836, %v4247, 0
        %v4273 = vsel %vm836, %v4248, 0
        %v4276 = vsel %vm836, %v4249, 0
        %v4279 = vsel %vm836, %v4250, 0
        %v4282 = vsel %vm836, %v4251, 0
        %v4285 = vsel %vm836, %v4252, 0
        %v4288 = vsel %vm836, %v4253, 0
        %v4291 = vsel %vm836, %v4254, 0
        %v4294 = vsel %vm836, %v4255, 0
        %v4297 = vsel %vm836, %v4256, 0
        %v4300 = vsel %vm836, %v4257, 0
        %v4303 = vsel %vm836, %v4258, 0
        %v4306 = vsel %vm836, %v4259, 0
        %v4309 = vsel %vm836, %v4260, 0
        %v4312 = vsel %vm885, %v4262, 0
        %4314 = vmatprep.subr.mxu0 0.0
        %4315 = vmatpush1.msra.mxu0 %v4312
        %4316 = vmatprep.subr.mxu0 0.0
        %4317 = vmatpush1.msra.mxu0 0.0
        %4318 = vmatprep.subr.mxu0 0.0
        %4319 = vmatpush1.msra.mxu0 0.0
        %4320 = vmatprep.subr.mxu0 0.0
        %4321 = vmatpush1.msra.mxu0 0.0
        %4322 = vmatprep.subr.mxu0 0.0
        %4323 = vmatpush1.msra.mxu0 0.0
        %4324 = vmatprep.subr.mxu0 0.0
        %4325 = vmatpush1.msra.mxu0 0.0
        %4326 = vmatprep.subr.mxu0 0.0
        %4327 = vmatpush1.msra.mxu0 0.0
        %4328 = vmatprep.subr.mxu0 0.0
        %4329 = vmatpush1.msra.mxu0 0.0
        %4330 = vmatprep.subr.mxu0 0.0
        %4331 = vmatpush1.msra.mxu0 0.0
        %4332 = vmatprep.subr.mxu0 0.0
        %4333 = vmatpush1.msra.mxu0 0.0
        %4334 = vmatprep.subr.mxu0 0.0
        %4335 = vmatpush1.msra.mxu0 0.0
        %4336 = vmatprep.subr.mxu0 0.0
        %4337 = vmatpush1.msra.mxu0 0.0
        %4338 = vmatprep.subr.mxu0 0.0
        %4339 = vmatpush1.msra.mxu0 0.0
        %4340 = vmatprep.subr.mxu0 0.0
        %4341 = vmatpush1.msra.mxu0 0.0
        %4342 = vmatprep.subr.mxu0 0.0
        %4343 = vmatpush1.msra.mxu0 0.0
        %4344 = vmatprep.subr.mxu0 0.0
        %4345 = vmatpush1.msra.mxu0 0.0
        %4346 = vmatprep.subr.mxu0 0.0
        %4347 = vmatpush1.msra.mxu0 0.0
        %4348 = vmatprep.subr.mxu0 0.0
        %4349 = vmatpush1.msra.mxu0 0.0
        %4350 = vmatprep.subr.mxu0 0.0
        %4351 = vmatpush1.msra.mxu0 0.0
        %4352 = vmatprep.subr.mxu0 0.0
        %4353 = vmatpush1.msra.mxu0 0.0
        %4354 = vmatprep.subr.mxu0 0.0
        %4355 = vmatpush1.msra.mxu0 0.0
        %4356 = vmatprep.subr.mxu0 0.0
        %4357 = vmatpush1.msra.mxu0 0.0
        %4358 = vmatprep.subr.mxu0 0.0
        %4359 = vmatpush1.msra.mxu0 0.0
        %4360 = vmatprep.subr.mxu0 0.0
        %4361 = vmatpush1.msra.mxu0 0.0
        %4362 = vmatprep.subr.mxu0 0.0
        %4363 = vmatpush1.msra.mxu0 0.0
        %4364 = vmatprep.subr.mxu0 0.0
        %4365 = vmatpush1.msra.mxu0 0.0
        %4366 = vmatprep.subr.mxu0 0.0
        %4367 = vmatpush1.msra.mxu0 0.0
        %4368 = vmatprep.subr.mxu0 0.0
        %4369 = vmatpush1.msra.mxu0 0.0
        %4370 = vmatprep.subr.mxu0 0.0
        %4371 = vmatpush1.msra.mxu0 0.0
        %4372 = vmatprep.subr.mxu0 0.0
        %4373 = vmatpush1.msra.mxu0 0.0
        %4374 = vmatprep.subr.mxu0 0.0
        %4375 = vmatpush1.msra.mxu0 0.0
        %4376 = vmatprep.subr.mxu0 0.0
        %4377 = vmatpush1.msra.mxu0 0.0
        %4378 = vmatprep.mubr.f32.mxu0 0.0
        %4379 = vmatmul.mubr.f32.gmra.mrb[0].mxu0 %v4264
        %v4380 = vpop.f32.mrb[0].mxu0
        %v4381 = vadd.f32 0.0, %v4380
        %v4382 = vpop.f32.mrb[0].mxu0
        %4383 = vmatprep.mubr.f32.mxu0 0.0
        %4384 = vmatmul.mubr.f32.gmra.mrb[0].mxu0 %v4267
        %v4385 = vpop.f32.mrb[0].mxu0
        %v4386 = vadd.f32 0.0, %v4385
        %v4387 = vpop.f32.mrb[0].mxu0
        %4388 = vmatprep.mubr.f32.mxu0 0.0
        %4389 = vmatmul.mubr.f32.gmra.mrb[0].mxu0 %v4270
        %v4390 = vpop.f32.mrb[0].mxu0
        %v4391 = vadd.f32 0.0, %v4390
        %v4392 = vpop.f32.mrb[0].mxu0
        %4393 = vmatprep.mubr.f32.mxu0 0.0
        %4394 = vmatmul.mubr.f32.gmra.mrb[0].mxu0 %v4273
        %v4395 = vpop.f32.mrb[0].mxu0
        %v4396 = vadd.f32 0.0, %v4395
        %v4397 = vpop.f32.mrb[0].mxu0
        %4398 = vmatprep.mubr.f32.mxu0 0.0
        %4399 = vmatmul.mubr.f32.gmra.mrb[0].mxu0 %v4276
        %v4400 = vpop.f32.mrb[0].mxu0
        %v4401 = vadd.f32 0.0, %v4400
        %v4402 = vpop.f32.mrb[0].mxu0
        %4403 = vmatprep.mubr.f32.mxu0 0.0
        %4404 = vmatmul.mubr.f32.gmra.mrb[0].mxu0 %v4279
        %v4405 = vpop.f32.mrb[0].mxu0
        %v4406 = vadd.f32 0.0, %v4405
        %v4407 = vpop.f32.mrb[0].mxu0
        %4408 = vmatprep.mubr.f32.mxu0 0.0
        %4409 = vmatmul.mubr.f32.gmra.mrb[0].mxu0 %v4282
        %v4410 = vpop.f32.mrb[0].mxu0
        %v4411 = vadd.f32 0.0, %v4410
        %v4412 = vpop.f32.mrb[0].mxu0
        %4413 = vmatprep.mubr.f32.mxu0 0.0
        %4414 = vmatmul.mubr.f32.gmra.mrb[0].mxu0 %v4285
        %v4415 = vpop.f32.mrb[0].mxu0
        %v4416 = vadd.f32 0.0, %v4415
        %v4417 = vpop.f32.mrb[0].mxu0
        %4418 = vmatprep.mubr.f32.mxu0 0.0
        %4419 = vmatmul.mubr.f32.gmra.mrb[0].mxu0 %v4288
        %v4420 = vpop.f32.mrb[0].mxu0
        %v4421 = vadd.f32 0.0, %v4420
        %v4422 = vpop.f32.mrb[0].mxu0
        %4423 = vmatprep.mubr.f32.mxu0 0.0
        %4424 = vmatmul.mubr.f32.gmra.mrb[0].mxu0 %v4291
        %v4425 = vpop.f32.mrb[0].mxu0
        %v4426 = vadd.f32 0.0, %v4425
        %v4427 = vpop.f32.mrb[0].mxu0
        %4428 = vmatprep.mubr.f32.mxu0 0.0
        %4429 = vmatmul.mubr.f32.gmra.mrb[0].mxu0 %v4294
        %v4430 = vpop.f32.mrb[0].mxu0
        %v4431 = vadd.f32 0.0, %v4430
        %v4432 = vpop.f32.mrb[0].mxu0
        %4433 = vmatprep.mubr.f32.mxu0 0.0
        %4434 = vmatmul.mubr.f32.gmra.mrb[0].mxu0 %v4297
        %v4435 = vpop.f32.mrb[0].mxu0
        %v4436 = vadd.f32 0.0, %v4435
        %v4437 = vpop.f32.mrb[0].mxu0
        %4438 = vmatprep.mubr.f32.mxu0 0.0
        %4439 = vmatmul.mubr.f32.gmra.mrb[0].mxu0 %v4300
        %v4440 = vpop.f32.mrb[0].mxu0
        %v4441 = vadd.f32 0.0, %v4440
        %v4442 = vpop.f32.mrb[0].mxu0
        %4443 = vmatprep.mubr.f32.mxu0 0.0
        %4444 = vmatmul.mubr.f32.gmra.mrb[0].mxu0 %v4303
        %v4445 = vpop.f32.mrb[0].mxu0
        %v4446 = vadd.f32 0.0, %v4445
        %v4447 = vpop.f32.mrb[0].mxu0
        %4448 = vmatprep.mubr.f32.mxu0 0.0
        %4449 = vmatmul.mubr.f32.gmra.mrb[0].mxu0 %v4306
        %v4450 = vpop.f32.mrb[0].mxu0
        %v4451 = vadd.f32 0.0, %v4450
        %v4452 = vpop.f32.mrb[0].mxu0
        %4453 = vmatprep.mubr.f32.mxu0 0.0
        %4454 = vmatmul.mubr.f32.gmra.mrb[0].mxu0 %v4309
        %v4455 = vpop.f32.mrb[0].mxu0
        %v4456 = vadd.f32 0.0, %v4455
        %v4457 = vpop.f32.mrb[0].mxu0
        %4458 = vdwg.mxu0
        %v4459 = vmax.f32 %v4381, 1e-06
        %v4460 = vmax.f32 %v4386, 1e-06
        %v4461 = vmax.f32 %v4391, 1e-06
        %v4462 = vmax.f32 %v4396, 1e-06
        %v4463 = vmax.f32 %v4401, 1e-06
        %v4464 = vmax.f32 %v4406, 1e-06
        %v4465 = vmax.f32 %v4411, 1e-06
        %v4466 = vmax.f32 %v4416, 1e-06
        %v4467 = vmax.f32 %v4421, 1e-06
        %v4468 = vmax.f32 %v4426, 1e-06
        %v4469 = vmax.f32 %v4431, 1e-06
        %v4470 = vmax.f32 %v4436, 1e-06
        %v4471 = vmax.f32 %v4441, 1e-06
        %v4472 = vmax.f32 %v4446, 1e-06
        %v4473 = vmax.f32 %v4451, 1e-06
        %v4474 = vmax.f32 %v4456, 1e-06
        %v4475 = vld [vmem:[#allocation3] sm:$0xff]
        %v4476 = vld [vmem:[#allocation3 + $0x8] sm:$0xff]
        %v4477 = vld [vmem:[#allocation3 + $0x10] sm:$0xff]
        %v4478 = vld [vmem:[#allocation3 + $0x18] sm:$0xff]
        %v4479 = vld [vmem:[#allocation3 + $0x20] sm:$0xff]
        %v4480 = vld [vmem:[#allocation3 + $0x28] sm:$0xff]
        %v4481 = vld [vmem:[#allocation3 + $0x30] sm:$0xff]
        %v4482 = vld [vmem:[#allocation3 + $0x38] sm:$0xff]
        %v4483 = vld [vmem:[#allocation3 + $0x40] sm:$0xff]
        %v4484 = vld [vmem:[#allocation3 + $0x48] sm:$0xff]
        %v4485 = vld [vmem:[#allocation3 + $0x50] sm:$0xff]
        %v4486 = vld [vmem:[#allocation3 + $0x58] sm:$0xff]
        %v4487 = vld [vmem:[#allocation3 + $0x60] sm:$0xff]
        %v4488 = vld [vmem:[#allocation3 + $0x68] sm:$0xff]
        %v4489 = vld [vmem:[#allocation3 + $0x70] sm:$0xff]
        %v4490 = vld [vmem:[#allocation3 + $0x78] sm:$0xff]
        %v4491 = vmul.f32 %v4459, %v4459
        %v4492 = vmul.f32 %v4460, %v4460
        %v4493 = vmul.f32 %v4461, %v4461
        %v4494 = vmul.f32 %v4462, %v4462
        %v4495 = vmul.f32 %v4463, %v4463
        %v4496 = vmul.f32 %v4464, %v4464
        %v4497 = vmul.f32 %v4465, %v4465
        %v4498 = vmul.f32 %v4466, %v4466
        %v4499 = vmul.f32 %v4467, %v4467
        %v4500 = vmul.f32 %v4468, %v4468
        %v4501 = vmul.f32 %v4469, %v4469
        %v4502 = vmul.f32 %v4470, %v4470
        %v4503 = vmul.f32 %v4471, %v4471
        %v4504 = vmul.f32 %v4472, %v4472
        %v4505 = vmul.f32 %v4473, %v4473
        %v4506 = vmul.f32 %v4474, %v4474
        %v4507 = vmul.f32 %v4491, %v4459
        %v4508 = vmul.f32 %v4492, %v4460
        %v4509 = vmul.f32 %v4493, %v4461
        %v4510 = vmul.f32 %v4494, %v4462
        %v4511 = vmul.f32 %v4495, %v4463
        %v4512 = vmul.f32 %v4496, %v4464
        %v4513 = vmul.f32 %v4497, %v4465
        %v4514 = vmul.f32 %v4498, %v4466
        %v4515 = vmul.f32 %v4499, %v4467
        %v4516 = vmul.f32 %v4500, %v4468
        %v4517 = vmul.f32 %v4501, %v4469
        %v4518 = vmul.f32 %v4502, %v4470
        %v4519 = vmul.f32 %v4503, %v4471
        %v4520 = vmul.f32 %v4504, %v4472
        %v4521 = vmul.f32 %v4505, %v4473
        %v4522 = vmul.f32 %v4506, %v4474
        %4523 = vadd.xlane.f32.xlu0 %v4507
        %v4524 = vpop.xlane.xlu0 %4523
        %4525 = vadd.xlane.f32.xlu0 %v4508
        %v4526 = vpop.xlane.xlu0 %4525
        %4527 = vadd.xlane.f32.xlu0 %v4509
        %v4528 = vpop.xlane.xlu0 %4527
        %4529 = vadd.xlane.f32.xlu0 %v4510
        %v4530 = vpop.xlane.xlu0 %4529
        %4531 = vadd.xlane.f32.xlu0 %v4511
        %v4532 = vpop.xlane.xlu0 %4531
        %4533 = vadd.xlane.f32.xlu0 %v4512
        %v4534 = vpop.xlane.xlu0 %4533
        %4535 = vadd.xlane.f32.xlu0 %v4513
        %v4536 = vpop.xlane.xlu0 %4535
        %4537 = vadd.xlane.f32.xlu0 %v4514
        %v4538 = vpop.xlane.xlu0 %4537
        %4539 = vadd.xlane.f32.xlu0 %v4515
        %v4540 = vpop.xlane.xlu0 %4539
        %4541 = vadd.xlane.f32.xlu0 %v4516
        %v4542 = vpop.xlane.xlu0 %4541
        %4543 = vadd.xlane.f32.xlu0 %v4517
        %v4544 = vpop.xlane.xlu0 %4543
        %4545 = vadd.xlane.f32.xlu0 %v4518
        %v4546 = vpop.xlane.xlu0 %4545
        %4547 = vadd.xlane.f32.xlu0 %v4519
        %v4548 = vpop.xlane.xlu0 %4547
        %4549 = vadd.xlane.f32.xlu0 %v4520
        %v4550 = vpop.xlane.xlu0 %4549
        %4551 = vadd.xlane.f32.xlu0 %v4521
        %v4552 = vpop.xlane.xlu0 %4551
        %4553 = vadd.xlane.f32.xlu0 %v4522
        %v4554 = vpop.xlane.xlu0 %4553
        %v4555 = vadd.f32 %v4475, %v4524
        %v4556 = vadd.f32 %v4476, %v4526
        %v4557 = vadd.f32 %v4477, %v4528
        %v4558 = vadd.f32 %v4478, %v4530
        %v4559 = vadd.f32 %v4479, %v4532
        %v4560 = vadd.f32 %v4480, %v4534
        %v4561 = vadd.f32 %v4481, %v4536
        %v4562 = vadd.f32 %v4482, %v4538
        %v4563 = vadd.f32 %v4483, %v4540
        %v4564 = vadd.f32 %v4484, %v4542
        %v4565 = vadd.f32 %v4485, %v4544
        %v4566 = vadd.f32 %v4486, %v4546
        %v4567 = vadd.f32 %v4487, %v4548
        %v4568 = vadd.f32 %v4488, %v4550
        %v4569 = vadd.f32 %v4489, %v4552
        %v4570 = vadd.f32 %v4490, %v4554
        %4571 = vst.msk [vmem:[#allocation3] sm:$0xff] %vm4228, %v4555
        %4572 = vst.msk [vmem:[#allocation3 + $0x8] sm:$0xff] %vm4228, %v4556
        %4573 = vst.msk [vmem:[#allocation3 + $0x10] sm:$0xff] %vm4228, %v4557
        %4574 = vst.msk [vmem:[#allocation3 + $0x18] sm:$0xff] %vm4228, %v4558
        %4575 = vst.msk [vmem:[#allocation3 + $0x20] sm:$0xff] %vm4228, %v4559
        %4576 = vst.msk [vmem:[#allocation3 + $0x28] sm:$0xff] %vm4228, %v4560
        %4577 = vst.msk [vmem:[#allocation3 + $0x30] sm:$0xff] %vm4228, %v4561
        %4578 = vst.msk [vmem:[#allocation3 + $0x38] sm:$0xff] %vm4228, %v4562
        %4579 = vst.msk [vmem:[#allocation3 + $0x40] sm:$0xff] %vm4228, %v4563
        %4580 = vst.msk [vmem:[#allocation3 + $0x48] sm:$0xff] %vm4228, %v4564
        %4581 = vst.msk [vmem:[#allocation3 + $0x50] sm:$0xff] %vm4228, %v4565
        %4582 = vst.msk [vmem:[#allocation3 + $0x58] sm:$0xff] %vm4228, %v4566
        %4583 = vst.msk [vmem:[#allocation3 + $0x60] sm:$0xff] %vm4228, %v4567
        %4584 = vst.msk [vmem:[#allocation3 + $0x68] sm:$0xff] %vm4228, %v4568
        %4585 = vst.msk [vmem:[#allocation3 + $0x70] sm:$0xff] %vm4228, %v4569
        %4586 = vst.msk [vmem:[#allocation3 + $0x78] sm:$0xff] %vm4228, %v4570
        %v4587 = vld [vmem:[%s4] sm:$0xff]
        %v4588 = vld [vmem:[%s4 + $0x8] sm:$0xff]
        %v4589 = vld [vmem:[%s4 + $0x10] sm:$0xff]
        %v4590 = vld [vmem:[%s4 + $0x18] sm:$0xff]
        %v4591 = vld [vmem:[%s4 + $0x20] sm:$0xff]
        %v4592 = vld [vmem:[%s4 + $0x28] sm:$0xff]
        %v4593 = vld [vmem:[%s4 + $0x30] sm:$0xff]
        %v4594 = vld [vmem:[%s4 + $0x38] sm:$0xff]
        %v4595 = vld [vmem:[%s4 + $0x40] sm:$0xff]
        %v4596 = vld [vmem:[%s4 + $0x48] sm:$0xff]
        %v4597 = vld [vmem:[%s4 + $0x50] sm:$0xff]
        %v4598 = vld [vmem:[%s4 + $0x58] sm:$0xff]
        %v4599 = vld [vmem:[%s4 + $0x60] sm:$0xff]
        %v4600 = vld [vmem:[%s4 + $0x68] sm:$0xff]
        %v4601 = vld [vmem:[%s4 + $0x70] sm:$0xff]
        %v4602 = vld [vmem:[%s4 + $0x78] sm:$0xff]
        %s4603 = scalar_lea.vmem %s391, 24 [#allocation6]
        %v4604 = vld [vmem:[%s4603] sm:$0xf]
        %v4606 = vsel %vm492, %v4587, 0
        %v4609 = vsel %vm492, %v4588, 0
        %v4612 = vsel %vm492, %v4589, 0
        %v4615 = vsel %vm492, %v4590, 0
        %v4618 = vsel %vm492, %v4591, 0
        %v4621 = vsel %vm492, %v4592, 0
        %v4624 = vsel %vm492, %v4593, 0
        %v4627 = vsel %vm492, %v4594, 0
        %v4630 = vsel %vm492, %v4595, 0
        %v4633 = vsel %vm492, %v4596, 0
        %v4636 = vsel %vm492, %v4597, 0
        %v4639 = vsel %vm492, %v4598, 0
        %v4642 = vsel %vm492, %v4599, 0
        %v4645 = vsel %vm492, %v4600, 0
        %v4648 = vsel %vm492, %v4601, 0
        %v4651 = vsel %vm492, %v4602, 0
        %v4654 = vsel %vm541, %v4604, 0
        %4656 = vmatprep.subr.mxu0 0.0
        %4657 = vmatpush1.msra.mxu0 %v4654
        %4658 = vmatprep.subr.mxu0 0.0
        %4659 = vmatpush1.msra.mxu0 0.0
        %4660 = vmatprep.subr.mxu0 0.0
        %4661 = vmatpush1.msra.mxu0 0.0
        %4662 = vmatprep.subr.mxu0 0.0
        %4663 = vmatpush1.msra.mxu0 0.0
        %4664 = vmatprep.subr.mxu0 0.0
        %4665 = vmatpush1.msra.mxu0 0.0
        %4666 = vmatprep.subr.mxu0 0.0
        %4667 = vmatpush1.msra.mxu0 0.0
        %4668 = vmatprep.subr.mxu0 0.0
        %4669 = vmatpush1.msra.mxu0 0.0
        %4670 = vmatprep.subr.mxu0 0.0
        %4671 = vmatpush1.msra.mxu0 0.0
        %4672 = vmatprep.subr.mxu0 0.0
        %4673 = vmatpush1.msra.mxu0 0.0
        %4674 = vmatprep.subr.mxu0 0.0
        %4675 = vmatpush1.msra.mxu0 0.0
        %4676 = vmatprep.subr.mxu0 0.0
        %4677 = vmatpush1.msra.mxu0 0.0
        %4678 = vmatprep.subr.mxu0 0.0
        %4679 = vmatpush1.msra.mxu0 0.0
        %4680 = vmatprep.subr.mxu0 0.0
        %4681 = vmatpush1.msra.mxu0 0.0
        %4682 = vmatprep.subr.mxu0 0.0
        %4683 = vmatpush1.msra.mxu0 0.0
        %4684 = vmatprep.subr.mxu0 0.0
        %4685 = vmatpush1.msra.mxu0 0.0
        %4686 = vmatprep.subr.mxu0 0.0
        %4687 = vmatpush1.msra.mxu0 0.0
        %4688 = vmatprep.subr.mxu0 0.0
        %4689 = vmatpush1.msra.mxu0 0.0
        %4690 = vmatprep.subr.mxu0 0.0
        %4691 = vmatpush1.msra.mxu0 0.0
        %4692 = vmatprep.subr.mxu0 0.0
        %4693 = vmatpush1.msra.mxu0 0.0
        %4694 = vmatprep.subr.mxu0 0.0
        %4695 = vmatpush1.msra.mxu0 0.0
        %4696 = vmatprep.subr.mxu0 0.0
        %4697 = vmatpush1.msra.mxu0 0.0
        %4698 = vmatprep.subr.mxu0 0.0
        %4699 = vmatpush1.msra.mxu0 0.0
        %4700 = vmatprep.subr.mxu0 0.0
        %4701 = vmatpush1.msra.mxu0 0.0
        %4702 = vmatprep.subr.mxu0 0.0
        %4703 = vmatpush1.msra.mxu0 0.0
        %4704 = vmatprep.subr.mxu0 0.0
        %4705 = vmatpush1.msra.mxu0 0.0
        %4706 = vmatprep.subr.mxu0 0.0
        %4707 = vmatpush1.msra.mxu0 0.0
        %4708 = vmatprep.subr.mxu0 0.0
        %4709 = vmatpush1.msra.mxu0 0.0
        %4710 = vmatprep.subr.mxu0 0.0
        %4711 = vmatpush1.msra.mxu0 0.0
        %4712 = vmatprep.subr.mxu0 0.0
        %4713 = vmatpush1.msra.mxu0 0.0
        %4714 = vmatprep.subr.mxu0 0.0
        %4715 = vmatpush1.msra.mxu0 0.0
        %4716 = vmatprep.subr.mxu0 0.0
        %4717 = vmatpush1.msra.mxu0 0.0
        %4718 = vmatprep.subr.mxu0 0.0
        %4719 = vmatpush1.msra.mxu0 0.0
        %4720 = vmatprep.mubr.f32.mxu0 0.0
        %4721 = vmatmul.mubr.f32.gmra.mrb[0].mxu0 %v4606
        %v4722 = vpop.f32.mrb[0].mxu0
        %v4723 = vadd.f32 0.0, %v4722
        %v4724 = vpop.f32.mrb[0].mxu0
        %4725 = vmatprep.mubr.f32.mxu0 0.0
        %4726 = vmatmul.mubr.f32.gmra.mrb[0].mxu0 %v4609
        %v4727 = vpop.f32.mrb[0].mxu0
        %v4728 = vadd.f32 0.0, %v4727
        %v4729 = vpop.f32.mrb[0].mxu0
        %4730 = vmatprep.mubr.f32.mxu0 0.0
        %4731 = vmatmul.mubr.f32.gmra.mrb[0].mxu0 %v4612
        %v4732 = vpop.f32.mrb[0].mxu0
        %v4733 = vadd.f32 0.0, %v4732
        %v4734 = vpop.f32.mrb[0].mxu0
        %4735 = vmatprep.mubr.f32.mxu0 0.0
        %4736 = vmatmul.mubr.f32.gmra.mrb[0].mxu0 %v4615
        %v4737 = vpop.f32.mrb[0].mxu0
        %v4738 = vadd.f32 0.0, %v4737
        %v4739 = vpop.f32.mrb[0].mxu0
        %4740 = vmatprep.mubr.f32.mxu0 0.0
        %4741 = vmatmul.mubr.f32.gmra.mrb[0].mxu0 %v4618
        %v4742 = vpop.f32.mrb[0].mxu0
        %v4743 = vadd.f32 0.0, %v4742
        %v4744 = vpop.f32.mrb[0].mxu0
        %4745 = vmatprep.mubr.f32.mxu0 0.0
        %4746 = vmatmul.mubr.f32.gmra.mrb[0].mxu0 %v4621
        %v4747 = vpop.f32.mrb[0].mxu0
        %v4748 = vadd.f32 0.0, %v4747
        %v4749 = vpop.f32.mrb[0].mxu0
        %4750 = vmatprep.mubr.f32.mxu0 0.0
        %4751 = vmatmul.mubr.f32.gmra.mrb[0].mxu0 %v4624
        %v4752 = vpop.f32.mrb[0].mxu0
        %v4753 = vadd.f32 0.0, %v4752
        %v4754 = vpop.f32.mrb[0].mxu0
        %4755 = vmatprep.mubr.f32.mxu0 0.0
        %4756 = vmatmul.mubr.f32.gmra.mrb[0].mxu0 %v4627
        %v4757 = vpop.f32.mrb[0].mxu0
        %v4758 = vadd.f32 0.0, %v4757
        %v4759 = vpop.f32.mrb[0].mxu0
        %4760 = vmatprep.mubr.f32.mxu0 0.0
        %4761 = vmatmul.mubr.f32.gmra.mrb[0].mxu0 %v4630
        %v4762 = vpop.f32.mrb[0].mxu0
        %v4763 = vadd.f32 0.0, %v4762
        %v4764 = vpop.f32.mrb[0].mxu0
        %4765 = vmatprep.mubr.f32.mxu0 0.0
        %4766 = vmatmul.mubr.f32.gmra.mrb[0].mxu0 %v4633
        %v4767 = vpop.f32.mrb[0].mxu0
        %v4768 = vadd.f32 0.0, %v4767
        %v4769 = vpop.f32.mrb[0].mxu0
        %4770 = vmatprep.mubr.f32.mxu0 0.0
        %4771 = vmatmul.mubr.f32.gmra.mrb[0].mxu0 %v4636
        %v4772 = vpop.f32.mrb[0].mxu0
        %v4773 = vadd.f32 0.0, %v4772
        %v4774 = vpop.f32.mrb[0].mxu0
        %4775 = vmatprep.mubr.f32.mxu0 0.0
        %4776 = vmatmul.mubr.f32.gmra.mrb[0].mxu0 %v4639
        %v4777 = vpop.f32.mrb[0].mxu0
        %v4778 = vadd.f32 0.0, %v4777
        %v4779 = vpop.f32.mrb[0].mxu0
        %4780 = vmatprep.mubr.f32.mxu0 0.0
        %4781 = vmatmul.mubr.f32.gmra.mrb[0].mxu0 %v4642
        %v4782 = vpop.f32.mrb[0].mxu0
        %v4783 = vadd.f32 0.0, %v4782
        %v4784 = vpop.f32.mrb[0].mxu0
        %4785 = vmatprep.mubr.f32.mxu0 0.0
        %4786 = vmatmul.mubr.f32.gmra.mrb[0].mxu0 %v4645
        %v4787 = vpop.f32.mrb[0].mxu0
        %v4788 = vadd.f32 0.0, %v4787
        %v4789 = vpop.f32.mrb[0].mxu0
        %4790 = vmatprep.mubr.f32.mxu0 0.0
        %4791 = vmatmul.mubr.f32.gmra.mrb[0].mxu0 %v4648
        %v4792 = vpop.f32.mrb[0].mxu0
        %v4793 = vadd.f32 0.0, %v4792
        %v4794 = vpop.f32.mrb[0].mxu0
        %4795 = vmatprep.mubr.f32.mxu0 0.0
        %4796 = vmatmul.mubr.f32.gmra.mrb[0].mxu0 %v4651
        %v4797 = vpop.f32.mrb[0].mxu0
        %v4798 = vadd.f32 0.0, %v4797
        %v4799 = vpop.f32.mrb[0].mxu0
        %4800 = vdwg.mxu0
        %v4801 = vmax.f32 %v4723, 1e-06
        %v4802 = vmax.f32 %v4728, 1e-06
        %v4803 = vmax.f32 %v4733, 1e-06
        %v4804 = vmax.f32 %v4738, 1e-06
        %v4805 = vmax.f32 %v4743, 1e-06
        %v4806 = vmax.f32 %v4748, 1e-06
        %v4807 = vmax.f32 %v4753, 1e-06
        %v4808 = vmax.f32 %v4758, 1e-06
        %v4809 = vmax.f32 %v4763, 1e-06
        %v4810 = vmax.f32 %v4768, 1e-06
        %v4811 = vmax.f32 %v4773, 1e-06
        %v4812 = vmax.f32 %v4778, 1e-06
        %v4813 = vmax.f32 %v4783, 1e-06
        %v4814 = vmax.f32 %v4788, 1e-06
        %v4815 = vmax.f32 %v4793, 1e-06
        %v4816 = vmax.f32 %v4798, 1e-06
        %v4817 = vld [vmem:[#allocation2] sm:$0xff]
        %v4818 = vld [vmem:[#allocation2 + $0x8] sm:$0xff]
        %v4819 = vld [vmem:[#allocation2 + $0x10] sm:$0xff]
        %v4820 = vld [vmem:[#allocation2 + $0x18] sm:$0xff]
        %v4821 = vld [vmem:[#allocation2 + $0x20] sm:$0xff]
        %v4822 = vld [vmem:[#allocation2 + $0x28] sm:$0xff]
        %v4823 = vld [vmem:[#allocation2 + $0x30] sm:$0xff]
        %v4824 = vld [vmem:[#allocation2 + $0x38] sm:$0xff]
        %v4825 = vld [vmem:[#allocation2 + $0x40] sm:$0xff]
        %v4826 = vld [vmem:[#allocation2 + $0x48] sm:$0xff]
        %v4827 = vld [vmem:[#allocation2 + $0x50] sm:$0xff]
        %v4828 = vld [vmem:[#allocation2 + $0x58] sm:$0xff]
        %v4829 = vld [vmem:[#allocation2 + $0x60] sm:$0xff]
        %v4830 = vld [vmem:[#allocation2 + $0x68] sm:$0xff]
        %v4831 = vld [vmem:[#allocation2 + $0x70] sm:$0xff]
        %v4832 = vld [vmem:[#allocation2 + $0x78] sm:$0xff]
        %v4833 = vmul.f32 %v4801, %v4801
        %v4834 = vmul.f32 %v4802, %v4802
        %v4835 = vmul.f32 %v4803, %v4803
        %v4836 = vmul.f32 %v4804, %v4804
        %v4837 = vmul.f32 %v4805, %v4805
        %v4838 = vmul.f32 %v4806, %v4806
        %v4839 = vmul.f32 %v4807, %v4807
        %v4840 = vmul.f32 %v4808, %v4808
        %v4841 = vmul.f32 %v4809, %v4809
        %v4842 = vmul.f32 %v4810, %v4810
        %v4843 = vmul.f32 %v4811, %v4811
        %v4844 = vmul.f32 %v4812, %v4812
        %v4845 = vmul.f32 %v4813, %v4813
        %v4846 = vmul.f32 %v4814, %v4814
        %v4847 = vmul.f32 %v4815, %v4815
        %v4848 = vmul.f32 %v4816, %v4816
        %v4849 = vmul.f32 %v4833, %v4801
        %v4850 = vmul.f32 %v4834, %v4802
        %v4851 = vmul.f32 %v4835, %v4803
        %v4852 = vmul.f32 %v4836, %v4804
        %v4853 = vmul.f32 %v4837, %v4805
        %v4854 = vmul.f32 %v4838, %v4806
        %v4855 = vmul.f32 %v4839, %v4807
        %v4856 = vmul.f32 %v4840, %v4808
        %v4857 = vmul.f32 %v4841, %v4809
        %v4858 = vmul.f32 %v4842, %v4810
        %v4859 = vmul.f32 %v4843, %v4811
        %v4860 = vmul.f32 %v4844, %v4812
        %v4861 = vmul.f32 %v4845, %v4813
        %v4862 = vmul.f32 %v4846, %v4814
        %v4863 = vmul.f32 %v4847, %v4815
        %v4864 = vmul.f32 %v4848, %v4816
        %4865 = vadd.xlane.f32.xlu0 %v4849
        %v4866 = vpop.xlane.xlu0 %4865
        %4867 = vadd.xlane.f32.xlu0 %v4850
        %v4868 = vpop.xlane.xlu0 %4867
        %4869 = vadd.xlane.f32.xlu0 %v4851
        %v4870 = vpop.xlane.xlu0 %4869
        %4871 = vadd.xlane.f32.xlu0 %v4852
        %v4872 = vpop.xlane.xlu0 %4871
        %4873 = vadd.xlane.f32.xlu0 %v4853
        %v4874 = vpop.xlane.xlu0 %4873
        %4875 = vadd.xlane.f32.xlu0 %v4854
        %v4876 = vpop.xlane.xlu0 %4875
        %4877 = vadd.xlane.f32.xlu0 %v4855
        %v4878 = vpop.xlane.xlu0 %4877
        %4879 = vadd.xlane.f32.xlu0 %v4856
        %v4880 = vpop.xlane.xlu0 %4879
        %4881 = vadd.xlane.f32.xlu0 %v4857
        %v4882 = vpop.xlane.xlu0 %4881
        %4883 = vadd.xlane.f32.xlu0 %v4858
        %v4884 = vpop.xlane.xlu0 %4883
        %4885 = vadd.xlane.f32.xlu0 %v4859
        %v4886 = vpop.xlane.xlu0 %4885
        %4887 = vadd.xlane.f32.xlu0 %v4860
        %v4888 = vpop.xlane.xlu0 %4887
        %4889 = vadd.xlane.f32.xlu0 %v4861
        %v4890 = vpop.xlane.xlu0 %4889
        %4891 = vadd.xlane.f32.xlu0 %v4862
        %v4892 = vpop.xlane.xlu0 %4891
        %4893 = vadd.xlane.f32.xlu0 %v4863
        %v4894 = vpop.xlane.xlu0 %4893
        %4895 = vadd.xlane.f32.xlu0 %v4864
        %v4896 = vpop.xlane.xlu0 %4895
        %v4897 = vadd.f32 %v4817, %v4866
        %v4898 = vadd.f32 %v4818, %v4868
        %v4899 = vadd.f32 %v4819, %v4870
        %v4900 = vadd.f32 %v4820, %v4872
        %v4901 = vadd.f32 %v4821, %v4874
        %v4902 = vadd.f32 %v4822, %v4876
        %v4903 = vadd.f32 %v4823, %v4878
        %v4904 = vadd.f32 %v4824, %v4880
        %v4905 = vadd.f32 %v4825, %v4882
        %v4906 = vadd.f32 %v4826, %v4884
        %v4907 = vadd.f32 %v4827, %v4886
        %v4908 = vadd.f32 %v4828, %v4888
        %v4909 = vadd.f32 %v4829, %v4890
        %v4910 = vadd.f32 %v4830, %v4892
        %v4911 = vadd.f32 %v4831, %v4894
        %v4912 = vadd.f32 %v4832, %v4896
        %vm4913 = vcmask 56368
        %4914 = vst.msk [vmem:[#allocation2] sm:$0xff] %vm4913, %v4897
        %4915 = vst.msk [vmem:[#allocation2 + $0x8] sm:$0xff] %vm4913, %v4898
        %4916 = vst.msk [vmem:[#allocation2 + $0x10] sm:$0xff] %vm4913, %v4899
        %4917 = vst.msk [vmem:[#allocation2 + $0x18] sm:$0xff] %vm4913, %v4900
        %4918 = vst.msk [vmem:[#allocation2 + $0x20] sm:$0xff] %vm4913, %v4901
        %4919 = vst.msk [vmem:[#allocation2 + $0x28] sm:$0xff] %vm4913, %v4902
        %4920 = vst.msk [vmem:[#allocation2 + $0x30] sm:$0xff] %vm4913, %v4903
        %4921 = vst.msk [vmem:[#allocation2 + $0x38] sm:$0xff] %vm4913, %v4904
        %4922 = vst.msk [vmem:[#allocation2 + $0x40] sm:$0xff] %vm4913, %v4905
        %4923 = vst.msk [vmem:[#allocation2 + $0x48] sm:$0xff] %vm4913, %v4906
        %4924 = vst.msk [vmem:[#allocation2 + $0x50] sm:$0xff] %vm4913, %v4907
        %4925 = vst.msk [vmem:[#allocation2 + $0x58] sm:$0xff] %vm4913, %v4908
        %4926 = vst.msk [vmem:[#allocation2 + $0x60] sm:$0xff] %vm4913, %v4909
        %4927 = vst.msk [vmem:[#allocation2 + $0x68] sm:$0xff] %vm4913, %v4910
        %4928 = vst.msk [vmem:[#allocation2 + $0x70] sm:$0xff] %vm4913, %v4911
        %4929 = vst.msk [vmem:[#allocation2 + $0x78] sm:$0xff] %vm4913, %v4912
        %v4930 = vld [vmem:[%s5] sm:$0xff]
        %v4931 = vld [vmem:[%s5 + $0x8] sm:$0xff]
        %v4932 = vld [vmem:[%s5 + $0x10] sm:$0xff]
        %v4933 = vld [vmem:[%s5 + $0x18] sm:$0xff]
        %v4934 = vld [vmem:[%s5 + $0x20] sm:$0xff]
        %v4935 = vld [vmem:[%s5 + $0x28] sm:$0xff]
        %v4936 = vld [vmem:[%s5 + $0x30] sm:$0xff]
        %v4937 = vld [vmem:[%s5 + $0x38] sm:$0xff]
        %v4938 = vld [vmem:[%s5 + $0x40] sm:$0xff]
        %v4939 = vld [vmem:[%s5 + $0x48] sm:$0xff]
        %v4940 = vld [vmem:[%s5 + $0x50] sm:$0xff]
        %v4941 = vld [vmem:[%s5 + $0x58] sm:$0xff]
        %v4942 = vld [vmem:[%s5 + $0x60] sm:$0xff]
        %v4943 = vld [vmem:[%s5 + $0x68] sm:$0xff]
        %v4944 = vld [vmem:[%s5 + $0x70] sm:$0xff]
        %v4945 = vld [vmem:[%s5 + $0x78] sm:$0xff]
        %s4946 = scalar_lea.vmem %s398, 24 [#allocation7]
        %v4947 = vld [vmem:[%s4946] sm:$0x7]
        %v4949 = vsel %vm836, %v4930, 0
        %v4952 = vsel %vm836, %v4931, 0
        %v4955 = vsel %vm836, %v4932, 0
        %v4958 = vsel %vm836, %v4933, 0
        %v4961 = vsel %vm836, %v4934, 0
        %v4964 = vsel %vm836, %v4935, 0
        %v4967 = vsel %vm836, %v4936, 0
        %v4970 = vsel %vm836, %v4937, 0
        %v4973 = vsel %vm836, %v4938, 0
        %v4976 = vsel %vm836, %v4939, 0
        %v4979 = vsel %vm836, %v4940, 0
        %v4982 = vsel %vm836, %v4941, 0
        %v4985 = vsel %vm836, %v4942, 0
        %v4988 = vsel %vm836, %v4943, 0
        %v4991 = vsel %vm836, %v4944, 0
        %v4994 = vsel %vm836, %v4945, 0
        %v4997 = vsel %vm885, %v4947, 0
        %4999 = vmatprep.subr.mxu0 0.0
        %5000 = vmatpush1.msra.mxu0 %v4997
        %5001 = vmatprep.subr.mxu0 0.0
        %5002 = vmatpush1.msra.mxu0 0.0
        %5003 = vmatprep.subr.mxu0 0.0
        %5004 = vmatpush1.msra.mxu0 0.0
        %5005 = vmatprep.subr.mxu0 0.0
        %5006 = vmatpush1.msra.mxu0 0.0
        %5007 = vmatprep.subr.mxu0 0.0
        %5008 = vmatpush1.msra.mxu0 0.0
        %5009 = vmatprep.subr.mxu0 0.0
        %5010 = vmatpush1.msra.mxu0 0.0
        %5011 = vmatprep.subr.mxu0 0.0
        %5012 = vmatpush1.msra.mxu0 0.0
        %5013 = vmatprep.subr.mxu0 0.0
        %5014 = vmatpush1.msra.mxu0 0.0
        %5015 = vmatprep.subr.mxu0 0.0
        %5016 = vmatpush1.msra.mxu0 0.0
        %5017 = vmatprep.subr.mxu0 0.0
        %5018 = vmatpush1.msra.mxu0 0.0
        %5019 = vmatprep.subr.mxu0 0.0
        %5020 = vmatpush1.msra.mxu0 0.0
        %5021 = vmatprep.subr.mxu0 0.0
        %5022 = vmatpush1.msra.mxu0 0.0
        %5023 = vmatprep.subr.mxu0 0.0
        %5024 = vmatpush1.msra.mxu0 0.0
        %5025 = vmatprep.subr.mxu0 0.0
        %5026 = vmatpush1.msra.mxu0 0.0
        %5027 = vmatprep.subr.mxu0 0.0
        %5028 = vmatpush1.msra.mxu0 0.0
        %5029 = vmatprep.subr.mxu0 0.0
        %5030 = vmatpush1.msra.mxu0 0.0
        %5031 = vmatprep.subr.mxu0 0.0
        %5032 = vmatpush1.msra.mxu0 0.0
        %5033 = vmatprep.subr.mxu0 0.0
        %5034 = vmatpush1.msra.mxu0 0.0
        %5035 = vmatprep.subr.mxu0 0.0
        %5036 = vmatpush1.msra.mxu0 0.0
        %5037 = vmatprep.subr.mxu0 0.0
        %5038 = vmatpush1.msra.mxu0 0.0
        %5039 = vmatprep.subr.mxu0 0.0
        %5040 = vmatpush1.msra.mxu0 0.0
        %5041 = vmatprep.subr.mxu0 0.0
        %5042 = vmatpush1.msra.mxu0 0.0
        %5043 = vmatprep.subr.mxu0 0.0
        %5044 = vmatpush1.msra.mxu0 0.0
        %5045 = vmatprep.subr.mxu0 0.0
        %5046 = vmatpush1.msra.mxu0 0.0
        %5047 = vmatprep.subr.mxu0 0.0
        %5048 = vmatpush1.msra.mxu0 0.0
        %5049 = vmatprep.subr.mxu0 0.0
        %5050 = vmatpush1.msra.mxu0 0.0
        %5051 = vmatprep.subr.mxu0 0.0
        %5052 = vmatpush1.msra.mxu0 0.0
        %5053 = vmatprep.subr.mxu0 0.0
        %5054 = vmatpush1.msra.mxu0 0.0
        %5055 = vmatprep.subr.mxu0 0.0
        %5056 = vmatpush1.msra.mxu0 0.0
        %5057 = vmatprep.subr.mxu0 0.0
        %5058 = vmatpush1.msra.mxu0 0.0
        %5059 = vmatprep.subr.mxu0 0.0
        %5060 = vmatpush1.msra.mxu0 0.0
        %5061 = vmatprep.subr.mxu0 0.0
        %5062 = vmatpush1.msra.mxu0 0.0
        %5063 = vmatprep.mubr.f32.mxu0 0.0
        %5064 = vmatmul.mubr.f32.gmra.mrb[0].mxu0 %v4949
        %v5065 = vpop.f32.mrb[0].mxu0
        %v5066 = vadd.f32 0.0, %v5065
        %v5067 = vpop.f32.mrb[0].mxu0
        %5068 = vmatprep.mubr.f32.mxu0 0.0
        %5069 = vmatmul.mubr.f32.gmra.mrb[0].mxu0 %v4952
        %v5070 = vpop.f32.mrb[0].mxu0
        %v5071 = vadd.f32 0.0, %v5070
        %v5072 = vpop.f32.mrb[0].mxu0
        %5073 = vmatprep.mubr.f32.mxu0 0.0
        %5074 = vmatmul.mubr.f32.gmra.mrb[0].mxu0 %v4955
        %v5075 = vpop.f32.mrb[0].mxu0
        %v5076 = vadd.f32 0.0, %v5075
        %v5077 = vpop.f32.mrb[0].mxu0
        %5078 = vmatprep.mubr.f32.mxu0 0.0
        %5079 = vmatmul.mubr.f32.gmra.mrb[0].mxu0 %v4958
        %v5080 = vpop.f32.mrb[0].mxu0
        %v5081 = vadd.f32 0.0, %v5080
        %v5082 = vpop.f32.mrb[0].mxu0
        %5083 = vmatprep.mubr.f32.mxu0 0.0
        %5084 = vmatmul.mubr.f32.gmra.mrb[0].mxu0 %v4961
        %v5085 = vpop.f32.mrb[0].mxu0
        %v5086 = vadd.f32 0.0, %v5085
        %v5087 = vpop.f32.mrb[0].mxu0
        %5088 = vmatprep.mubr.f32.mxu0 0.0
        %5089 = vmatmul.mubr.f32.gmra.mrb[0].mxu0 %v4964
        %v5090 = vpop.f32.mrb[0].mxu0
        %v5091 = vadd.f32 0.0, %v5090
        %v5092 = vpop.f32.mrb[0].mxu0
        %5093 = vmatprep.mubr.f32.mxu0 0.0
        %5094 = vmatmul.mubr.f32.gmra.mrb[0].mxu0 %v4967
        %v5095 = vpop.f32.mrb[0].mxu0
        %v5096 = vadd.f32 0.0, %v5095
        %v5097 = vpop.f32.mrb[0].mxu0
        %5098 = vmatprep.mubr.f32.mxu0 0.0
        %5099 = vmatmul.mubr.f32.gmra.mrb[0].mxu0 %v4970
        %v5100 = vpop.f32.mrb[0].mxu0
        %v5101 = vadd.f32 0.0, %v5100
        %v5102 = vpop.f32.mrb[0].mxu0
        %5103 = vmatprep.mubr.f32.mxu0 0.0
        %5104 = vmatmul.mubr.f32.gmra.mrb[0].mxu0 %v4973
        %v5105 = vpop.f32.mrb[0].mxu0
        %v5106 = vadd.f32 0.0, %v5105
        %v5107 = vpop.f32.mrb[0].mxu0
        %5108 = vmatprep.mubr.f32.mxu0 0.0
        %5109 = vmatmul.mubr.f32.gmra.mrb[0].mxu0 %v4976
        %v5110 = vpop.f32.mrb[0].mxu0
        %v5111 = vadd.f32 0.0, %v5110
        %v5112 = vpop.f32.mrb[0].mxu0
        %5113 = vmatprep.mubr.f32.mxu0 0.0
        %5114 = vmatmul.mubr.f32.gmra.mrb[0].mxu0 %v4979
        %v5115 = vpop.f32.mrb[0].mxu0
        %v5116 = vadd.f32 0.0, %v5115
        %v5117 = vpop.f32.mrb[0].mxu0
        %5118 = vmatprep.mubr.f32.mxu0 0.0
        %5119 = vmatmul.mubr.f32.gmra.mrb[0].mxu0 %v4982
        %v5120 = vpop.f32.mrb[0].mxu0
        %v5121 = vadd.f32 0.0, %v5120
        %v5122 = vpop.f32.mrb[0].mxu0
        %5123 = vmatprep.mubr.f32.mxu0 0.0
        %5124 = vmatmul.mubr.f32.gmra.mrb[0].mxu0 %v4985
        %v5125 = vpop.f32.mrb[0].mxu0
        %v5126 = vadd.f32 0.0, %v5125
        %v5127 = vpop.f32.mrb[0].mxu0
        %5128 = vmatprep.mubr.f32.mxu0 0.0
        %5129 = vmatmul.mubr.f32.gmra.mrb[0].mxu0 %v4988
        %v5130 = vpop.f32.mrb[0].mxu0
        %v5131 = vadd.f32 0.0, %v5130
        %v5132 = vpop.f32.mrb[0].mxu0
        %5133 = vmatprep.mubr.f32.mxu0 0.0
        %5134 = vmatmul.mubr.f32.gmra.mrb[0].mxu0 %v4991
        %v5135 = vpop.f32.mrb[0].mxu0
        %v5136 = vadd.f32 0.0, %v5135
        %v5137 = vpop.f32.mrb[0].mxu0
        %5138 = vmatprep.mubr.f32.mxu0 0.0
        %5139 = vmatmul.mubr.f32.gmra.mrb[0].mxu0 %v4994
        %v5140 = vpop.f32.mrb[0].mxu0
        %v5141 = vadd.f32 0.0, %v5140
        %v5142 = vpop.f32.mrb[0].mxu0
        %5143 = vdwg.mxu0
        %v5144 = vmax.f32 %v5066, 1e-06
        %v5145 = vmax.f32 %v5071, 1e-06
        %v5146 = vmax.f32 %v5076, 1e-06
        %v5147 = vmax.f32 %v5081, 1e-06
        %v5148 = vmax.f32 %v5086, 1e-06
        %v5149 = vmax.f32 %v5091, 1e-06
        %v5150 = vmax.f32 %v5096, 1e-06
        %v5151 = vmax.f32 %v5101, 1e-06
        %v5152 = vmax.f32 %v5106, 1e-06
        %v5153 = vmax.f32 %v5111, 1e-06
        %v5154 = vmax.f32 %v5116, 1e-06
        %v5155 = vmax.f32 %v5121, 1e-06
        %v5156 = vmax.f32 %v5126, 1e-06
        %v5157 = vmax.f32 %v5131, 1e-06
        %v5158 = vmax.f32 %v5136, 1e-06
        %v5159 = vmax.f32 %v5141, 1e-06
        %v5160 = vld [vmem:[#allocation3] sm:$0xff]
        %v5161 = vld [vmem:[#allocation3 + $0x8] sm:$0xff]
        %v5162 = vld [vmem:[#allocation3 + $0x10] sm:$0xff]
        %v5163 = vld [vmem:[#allocation3 + $0x18] sm:$0xff]
        %v5164 = vld [vmem:[#allocation3 + $0x20] sm:$0xff]
        %v5165 = vld [vmem:[#allocation3 + $0x28] sm:$0xff]
        %v5166 = vld [vmem:[#allocation3 + $0x30] sm:$0xff]
        %v5167 = vld [vmem:[#allocation3 + $0x38] sm:$0xff]
        %v5168 = vld [vmem:[#allocation3 + $0x40] sm:$0xff]
        %v5169 = vld [vmem:[#allocation3 + $0x48] sm:$0xff]
        %v5170 = vld [vmem:[#allocation3 + $0x50] sm:$0xff]
        %v5171 = vld [vmem:[#allocation3 + $0x58] sm:$0xff]
        %v5172 = vld [vmem:[#allocation3 + $0x60] sm:$0xff]
        %v5173 = vld [vmem:[#allocation3 + $0x68] sm:$0xff]
        %v5174 = vld [vmem:[#allocation3 + $0x70] sm:$0xff]
        %v5175 = vld [vmem:[#allocation3 + $0x78] sm:$0xff]
        %v5176 = vmul.f32 %v5144, %v5144
        %v5177 = vmul.f32 %v5145, %v5145
        %v5178 = vmul.f32 %v5146, %v5146
        %v5179 = vmul.f32 %v5147, %v5147
        %v5180 = vmul.f32 %v5148, %v5148
        %v5181 = vmul.f32 %v5149, %v5149
        %v5182 = vmul.f32 %v5150, %v5150
        %v5183 = vmul.f32 %v5151, %v5151
        %v5184 = vmul.f32 %v5152, %v5152
        %v5185 = vmul.f32 %v5153, %v5153
        %v5186 = vmul.f32 %v5154, %v5154
        %v5187 = vmul.f32 %v5155, %v5155
        %v5188 = vmul.f32 %v5156, %v5156
        %v5189 = vmul.f32 %v5157, %v5157
        %v5190 = vmul.f32 %v5158, %v5158
        %v5191 = vmul.f32 %v5159, %v5159
        %v5192 = vmul.f32 %v5176, %v5144
        %v5193 = vmul.f32 %v5177, %v5145
        %v5194 = vmul.f32 %v5178, %v5146
        %v5195 = vmul.f32 %v5179, %v5147
        %v5196 = vmul.f32 %v5180, %v5148
        %v5197 = vmul.f32 %v5181, %v5149
        %v5198 = vmul.f32 %v5182, %v5150
        %v5199 = vmul.f32 %v5183, %v5151
        %v5200 = vmul.f32 %v5184, %v5152
        %v5201 = vmul.f32 %v5185, %v5153
        %v5202 = vmul.f32 %v5186, %v5154
        %v5203 = vmul.f32 %v5187, %v5155
        %v5204 = vmul.f32 %v5188, %v5156
        %v5205 = vmul.f32 %v5189, %v5157
        %v5206 = vmul.f32 %v5190, %v5158
        %v5207 = vmul.f32 %v5191, %v5159
        %5208 = vadd.xlane.f32.xlu0 %v5192
        %v5209 = vpop.xlane.xlu0 %5208
        %5210 = vadd.xlane.f32.xlu0 %v5193
        %v5211 = vpop.xlane.xlu0 %5210
        %5212 = vadd.xlane.f32.xlu0 %v5194
        %v5213 = vpop.xlane.xlu0 %5212
        %5214 = vadd.xlane.f32.xlu0 %v5195
        %v5215 = vpop.xlane.xlu0 %5214
        %5216 = vadd.xlane.f32.xlu0 %v5196
        %v5217 = vpop.xlane.xlu0 %5216
        %5218 = vadd.xlane.f32.xlu0 %v5197
        %v5219 = vpop.xlane.xlu0 %5218
        %5220 = vadd.xlane.f32.xlu0 %v5198
        %v5221 = vpop.xlane.xlu0 %5220
        %5222 = vadd.xlane.f32.xlu0 %v5199
        %v5223 = vpop.xlane.xlu0 %5222
        %5224 = vadd.xlane.f32.xlu0 %v5200
        %v5225 = vpop.xlane.xlu0 %5224
        %5226 = vadd.xlane.f32.xlu0 %v5201
        %v5227 = vpop.xlane.xlu0 %5226
        %5228 = vadd.xlane.f32.xlu0 %v5202
        %v5229 = vpop.xlane.xlu0 %5228
        %5230 = vadd.xlane.f32.xlu0 %v5203
        %v5231 = vpop.xlane.xlu0 %5230
        %5232 = vadd.xlane.f32.xlu0 %v5204
        %v5233 = vpop.xlane.xlu0 %5232
        %5234 = vadd.xlane.f32.xlu0 %v5205
        %v5235 = vpop.xlane.xlu0 %5234
        %5236 = vadd.xlane.f32.xlu0 %v5206
        %v5237 = vpop.xlane.xlu0 %5236
        %5238 = vadd.xlane.f32.xlu0 %v5207
        %v5239 = vpop.xlane.xlu0 %5238
        %v5240 = vadd.f32 %v5160, %v5209
        %v5241 = vadd.f32 %v5161, %v5211
        %v5242 = vadd.f32 %v5162, %v5213
        %v5243 = vadd.f32 %v5163, %v5215
        %v5244 = vadd.f32 %v5164, %v5217
        %v5245 = vadd.f32 %v5165, %v5219
        %v5246 = vadd.f32 %v5166, %v5221
        %v5247 = vadd.f32 %v5167, %v5223
        %v5248 = vadd.f32 %v5168, %v5225
        %v5249 = vadd.f32 %v5169, %v5227
        %v5250 = vadd.f32 %v5170, %v5229
        %v5251 = vadd.f32 %v5171, %v5231
        %v5252 = vadd.f32 %v5172, %v5233
        %v5253 = vadd.f32 %v5173, %v5235
        %v5254 = vadd.f32 %v5174, %v5237
        %v5255 = vadd.f32 %v5175, %v5239
        %5256 = vst.msk [vmem:[#allocation3] sm:$0xff] %vm4913, %v5240
        %5257 = vst.msk [vmem:[#allocation3 + $0x8] sm:$0xff] %vm4913, %v5241
        %5258 = vst.msk [vmem:[#allocation3 + $0x10] sm:$0xff] %vm4913, %v5242
        %5259 = vst.msk [vmem:[#allocation3 + $0x18] sm:$0xff] %vm4913, %v5243
        %5260 = vst.msk [vmem:[#allocation3 + $0x20] sm:$0xff] %vm4913, %v5244
        %5261 = vst.msk [vmem:[#allocation3 + $0x28] sm:$0xff] %vm4913, %v5245
        %5262 = vst.msk [vmem:[#allocation3 + $0x30] sm:$0xff] %vm4913, %v5246
        %5263 = vst.msk [vmem:[#allocation3 + $0x38] sm:$0xff] %vm4913, %v5247
        %5264 = vst.msk [vmem:[#allocation3 + $0x40] sm:$0xff] %vm4913, %v5248
        %5265 = vst.msk [vmem:[#allocation3 + $0x48] sm:$0xff] %vm4913, %v5249
        %5266 = vst.msk [vmem:[#allocation3 + $0x50] sm:$0xff] %vm4913, %v5250
        %5267 = vst.msk [vmem:[#allocation3 + $0x58] sm:$0xff] %vm4913, %v5251
        %5268 = vst.msk [vmem:[#allocation3 + $0x60] sm:$0xff] %vm4913, %v5252
        %5269 = vst.msk [vmem:[#allocation3 + $0x68] sm:$0xff] %vm4913, %v5253
        %5270 = vst.msk [vmem:[#allocation3 + $0x70] sm:$0xff] %vm4913, %v5254
        %5271 = vst.msk [vmem:[#allocation3 + $0x78] sm:$0xff] %vm4913, %v5255
        %v5272 = vld [vmem:[%s4] sm:$0xff]
        %v5273 = vld [vmem:[%s4 + $0x8] sm:$0xff]
        %v5274 = vld [vmem:[%s4 + $0x10] sm:$0xff]
        %v5275 = vld [vmem:[%s4 + $0x18] sm:$0xff]
        %v5276 = vld [vmem:[%s4 + $0x20] sm:$0xff]
        %v5277 = vld [vmem:[%s4 + $0x28] sm:$0xff]
        %v5278 = vld [vmem:[%s4 + $0x30] sm:$0xff]
        %v5279 = vld [vmem:[%s4 + $0x38] sm:$0xff]
        %v5280 = vld [vmem:[%s4 + $0x40] sm:$0xff]
        %v5281 = vld [vmem:[%s4 + $0x48] sm:$0xff]
        %v5282 = vld [vmem:[%s4 + $0x50] sm:$0xff]
        %v5283 = vld [vmem:[%s4 + $0x58] sm:$0xff]
        %v5284 = vld [vmem:[%s4 + $0x60] sm:$0xff]
        %v5285 = vld [vmem:[%s4 + $0x68] sm:$0xff]
        %v5286 = vld [vmem:[%s4 + $0x70] sm:$0xff]
        %v5287 = vld [vmem:[%s4 + $0x78] sm:$0xff]
        %s5288 = scalar_lea.vmem %s391, 28 [#allocation6]
        %v5289 = vld [vmem:[%s5288] sm:$0xf]
        %v5291 = vsel %vm492, %v5272, 0
        %v5294 = vsel %vm492, %v5273, 0
        %v5297 = vsel %vm492, %v5274, 0
        %v5300 = vsel %vm492, %v5275, 0
        %v5303 = vsel %vm492, %v5276, 0
        %v5306 = vsel %vm492, %v5277, 0
        %v5309 = vsel %vm492, %v5278, 0
        %v5312 = vsel %vm492, %v5279, 0
        %v5315 = vsel %vm492, %v5280, 0
        %v5318 = vsel %vm492, %v5281, 0
        %v5321 = vsel %vm492, %v5282, 0
        %v5324 = vsel %vm492, %v5283, 0
        %v5327 = vsel %vm492, %v5284, 0
        %v5330 = vsel %vm492, %v5285, 0
        %v5333 = vsel %vm492, %v5286, 0
        %v5336 = vsel %vm492, %v5287, 0
        %v5339 = vsel %vm541, %v5289, 0
        %5341 = vmatprep.subr.mxu0 0.0
        %5342 = vmatpush1.msra.mxu0 %v5339
        %5343 = vmatprep.subr.mxu0 0.0
        %5344 = vmatpush1.msra.mxu0 0.0
        %5345 = vmatprep.subr.mxu0 0.0
        %5346 = vmatpush1.msra.mxu0 0.0
        %5347 = vmatprep.subr.mxu0 0.0
        %5348 = vmatpush1.msra.mxu0 0.0
        %5349 = vmatprep.subr.mxu0 0.0
        %5350 = vmatpush1.msra.mxu0 0.0
        %5351 = vmatprep.subr.mxu0 0.0
        %5352 = vmatpush1.msra.mxu0 0.0
        %5353 = vmatprep.subr.mxu0 0.0
        %5354 = vmatpush1.msra.mxu0 0.0
        %5355 = vmatprep.subr.mxu0 0.0
        %5356 = vmatpush1.msra.mxu0 0.0
        %5357 = vmatprep.subr.mxu0 0.0
        %5358 = vmatpush1.msra.mxu0 0.0
        %5359 = vmatprep.subr.mxu0 0.0
        %5360 = vmatpush1.msra.mxu0 0.0
        %5361 = vmatprep.subr.mxu0 0.0
        %5362 = vmatpush1.msra.mxu0 0.0
        %5363 = vmatprep.subr.mxu0 0.0
        %5364 = vmatpush1.msra.mxu0 0.0
        %5365 = vmatprep.subr.mxu0 0.0
        %5366 = vmatpush1.msra.mxu0 0.0
        %5367 = vmatprep.subr.mxu0 0.0
        %5368 = vmatpush1.msra.mxu0 0.0
        %5369 = vmatprep.subr.mxu0 0.0
        %5370 = vmatpush1.msra.mxu0 0.0
        %5371 = vmatprep.subr.mxu0 0.0
        %5372 = vmatpush1.msra.mxu0 0.0
        %5373 = vmatprep.subr.mxu0 0.0
        %5374 = vmatpush1.msra.mxu0 0.0
        %5375 = vmatprep.subr.mxu0 0.0
        %5376 = vmatpush1.msra.mxu0 0.0
        %5377 = vmatprep.subr.mxu0 0.0
        %5378 = vmatpush1.msra.mxu0 0.0
        %5379 = vmatprep.subr.mxu0 0.0
        %5380 = vmatpush1.msra.mxu0 0.0
        %5381 = vmatprep.subr.mxu0 0.0
        %5382 = vmatpush1.msra.mxu0 0.0
        %5383 = vmatprep.subr.mxu0 0.0
        %5384 = vmatpush1.msra.mxu0 0.0
        %5385 = vmatprep.subr.mxu0 0.0
        %5386 = vmatpush1.msra.mxu0 0.0
        %5387 = vmatprep.subr.mxu0 0.0
        %5388 = vmatpush1.msra.mxu0 0.0
        %5389 = vmatprep.subr.mxu0 0.0
        %5390 = vmatpush1.msra.mxu0 0.0
        %5391 = vmatprep.subr.mxu0 0.0
        %5392 = vmatpush1.msra.mxu0 0.0
        %5393 = vmatprep.subr.mxu0 0.0
        %5394 = vmatpush1.msra.mxu0 0.0
        %5395 = vmatprep.subr.mxu0 0.0
        %5396 = vmatpush1.msra.mxu0 0.0
        %5397 = vmatprep.subr.mxu0 0.0
        %5398 = vmatpush1.msra.mxu0 0.0
        %5399 = vmatprep.subr.mxu0 0.0
        %5400 = vmatpush1.msra.mxu0 0.0
        %5401 = vmatprep.subr.mxu0 0.0
        %5402 = vmatpush1.msra.mxu0 0.0
        %5403 = vmatprep.subr.mxu0 0.0
        %5404 = vmatpush1.msra.mxu0 0.0
        %5405 = vmatprep.mubr.f32.mxu0 0.0
        %5406 = vmatmul.mubr.f32.gmra.mrb[0].mxu0 %v5291
        %v5407 = vpop.f32.mrb[0].mxu0
        %v5408 = vadd.f32 0.0, %v5407
        %v5409 = vpop.f32.mrb[0].mxu0
        %5410 = vmatprep.mubr.f32.mxu0 0.0
        %5411 = vmatmul.mubr.f32.gmra.mrb[0].mxu0 %v5294
        %v5412 = vpop.f32.mrb[0].mxu0
        %v5413 = vadd.f32 0.0, %v5412
        %v5414 = vpop.f32.mrb[0].mxu0
        %5415 = vmatprep.mubr.f32.mxu0 0.0
        %5416 = vmatmul.mubr.f32.gmra.mrb[0].mxu0 %v5297
        %v5417 = vpop.f32.mrb[0].mxu0
        %v5418 = vadd.f32 0.0, %v5417
        %v5419 = vpop.f32.mrb[0].mxu0
        %5420 = vmatprep.mubr.f32.mxu0 0.0
        %5421 = vmatmul.mubr.f32.gmra.mrb[0].mxu0 %v5300
        %v5422 = vpop.f32.mrb[0].mxu0
        %v5423 = vadd.f32 0.0, %v5422
        %v5424 = vpop.f32.mrb[0].mxu0
        %5425 = vmatprep.mubr.f32.mxu0 0.0
        %5426 = vmatmul.mubr.f32.gmra.mrb[0].mxu0 %v5303
        %v5427 = vpop.f32.mrb[0].mxu0
        %v5428 = vadd.f32 0.0, %v5427
        %v5429 = vpop.f32.mrb[0].mxu0
        %5430 = vmatprep.mubr.f32.mxu0 0.0
        %5431 = vmatmul.mubr.f32.gmra.mrb[0].mxu0 %v5306
        %v5432 = vpop.f32.mrb[0].mxu0
        %v5433 = vadd.f32 0.0, %v5432
        %v5434 = vpop.f32.mrb[0].mxu0
        %5435 = vmatprep.mubr.f32.mxu0 0.0
        %5436 = vmatmul.mubr.f32.gmra.mrb[0].mxu0 %v5309
        %v5437 = vpop.f32.mrb[0].mxu0
        %v5438 = vadd.f32 0.0, %v5437
        %v5439 = vpop.f32.mrb[0].mxu0
        %5440 = vmatprep.mubr.f32.mxu0 0.0
        %5441 = vmatmul.mubr.f32.gmra.mrb[0].mxu0 %v5312
        %v5442 = vpop.f32.mrb[0].mxu0
        %v5443 = vadd.f32 0.0, %v5442
        %v5444 = vpop.f32.mrb[0].mxu0
        %5445 = vmatprep.mubr.f32.mxu0 0.0
        %5446 = vmatmul.mubr.f32.gmra.mrb[0].mxu0 %v5315
        %v5447 = vpop.f32.mrb[0].mxu0
        %v5448 = vadd.f32 0.0, %v5447
        %v5449 = vpop.f32.mrb[0].mxu0
        %5450 = vmatprep.mubr.f32.mxu0 0.0
        %5451 = vmatmul.mubr.f32.gmra.mrb[0].mxu0 %v5318
        %v5452 = vpop.f32.mrb[0].mxu0
        %v5453 = vadd.f32 0.0, %v5452
        %v5454 = vpop.f32.mrb[0].mxu0
        %5455 = vmatprep.mubr.f32.mxu0 0.0
        %5456 = vmatmul.mubr.f32.gmra.mrb[0].mxu0 %v5321
        %v5457 = vpop.f32.mrb[0].mxu0
        %v5458 = vadd.f32 0.0, %v5457
        %v5459 = vpop.f32.mrb[0].mxu0
        %5460 = vmatprep.mubr.f32.mxu0 0.0
        %5461 = vmatmul.mubr.f32.gmra.mrb[0].mxu0 %v5324
        %v5462 = vpop.f32.mrb[0].mxu0
        %v5463 = vadd.f32 0.0, %v5462
        %v5464 = vpop.f32.mrb[0].mxu0
        %5465 = vmatprep.mubr.f32.mxu0 0.0
        %5466 = vmatmul.mubr.f32.gmra.mrb[0].mxu0 %v5327
        %v5467 = vpop.f32.mrb[0].mxu0
        %v5468 = vadd.f32 0.0, %v5467
        %v5469 = vpop.f32.mrb[0].mxu0
        %5470 = vmatprep.mubr.f32.mxu0 0.0
        %5471 = vmatmul.mubr.f32.gmra.mrb[0].mxu0 %v5330
        %v5472 = vpop.f32.mrb[0].mxu0
        %v5473 = vadd.f32 0.0, %v5472
        %v5474 = vpop.f32.mrb[0].mxu0
        %5475 = vmatprep.mubr.f32.mxu0 0.0
        %5476 = vmatmul.mubr.f32.gmra.mrb[0].mxu0 %v5333
        %v5477 = vpop.f32.mrb[0].mxu0
        %v5478 = vadd.f32 0.0, %v5477
        %v5479 = vpop.f32.mrb[0].mxu0
        %5480 = vmatprep.mubr.f32.mxu0 0.0
        %5481 = vmatmul.mubr.f32.gmra.mrb[0].mxu0 %v5336
        %v5482 = vpop.f32.mrb[0].mxu0
        %v5483 = vadd.f32 0.0, %v5482
        %v5484 = vpop.f32.mrb[0].mxu0
        %5485 = vdwg.mxu0
        %v5486 = vmax.f32 %v5408, 1e-06
        %v5487 = vmax.f32 %v5413, 1e-06
        %v5488 = vmax.f32 %v5418, 1e-06
        %v5489 = vmax.f32 %v5423, 1e-06
        %v5490 = vmax.f32 %v5428, 1e-06
        %v5491 = vmax.f32 %v5433, 1e-06
        %v5492 = vmax.f32 %v5438, 1e-06
        %v5493 = vmax.f32 %v5443, 1e-06
        %v5494 = vmax.f32 %v5448, 1e-06
        %v5495 = vmax.f32 %v5453, 1e-06
        %v5496 = vmax.f32 %v5458, 1e-06
        %v5497 = vmax.f32 %v5463, 1e-06
        %v5498 = vmax.f32 %v5468, 1e-06
        %v5499 = vmax.f32 %v5473, 1e-06
        %v5500 = vmax.f32 %v5478, 1e-06
        %v5501 = vmax.f32 %v5483, 1e-06
        %v5502 = vld [vmem:[#allocation2] sm:$0xff]
        %v5503 = vld [vmem:[#allocation2 + $0x8] sm:$0xff]
        %v5504 = vld [vmem:[#allocation2 + $0x10] sm:$0xff]
        %v5505 = vld [vmem:[#allocation2 + $0x18] sm:$0xff]
        %v5506 = vld [vmem:[#allocation2 + $0x20] sm:$0xff]
        %v5507 = vld [vmem:[#allocation2 + $0x28] sm:$0xff]
        %v5508 = vld [vmem:[#allocation2 + $0x30] sm:$0xff]
        %v5509 = vld [vmem:[#allocation2 + $0x38] sm:$0xff]
        %v5510 = vld [vmem:[#allocation2 + $0x40] sm:$0xff]
        %v5511 = vld [vmem:[#allocation2 + $0x48] sm:$0xff]
        %v5512 = vld [vmem:[#allocation2 + $0x50] sm:$0xff]
        %v5513 = vld [vmem:[#allocation2 + $0x58] sm:$0xff]
        %v5514 = vld [vmem:[#allocation2 + $0x60] sm:$0xff]
        %v5515 = vld [vmem:[#allocation2 + $0x68] sm:$0xff]
        %v5516 = vld [vmem:[#allocation2 + $0x70] sm:$0xff]
        %v5517 = vld [vmem:[#allocation2 + $0x78] sm:$0xff]
        %v5518 = vmul.f32 %v5486, %v5486
        %v5519 = vmul.f32 %v5487, %v5487
        %v5520 = vmul.f32 %v5488, %v5488
        %v5521 = vmul.f32 %v5489, %v5489
        %v5522 = vmul.f32 %v5490, %v5490
        %v5523 = vmul.f32 %v5491, %v5491
        %v5524 = vmul.f32 %v5492, %v5492
        %v5525 = vmul.f32 %v5493, %v5493
        %v5526 = vmul.f32 %v5494, %v5494
        %v5527 = vmul.f32 %v5495, %v5495
        %v5528 = vmul.f32 %v5496, %v5496
        %v5529 = vmul.f32 %v5497, %v5497
        %v5530 = vmul.f32 %v5498, %v5498
        %v5531 = vmul.f32 %v5499, %v5499
        %v5532 = vmul.f32 %v5500, %v5500
        %v5533 = vmul.f32 %v5501, %v5501
        %v5534 = vmul.f32 %v5518, %v5486
        %v5535 = vmul.f32 %v5519, %v5487
        %v5536 = vmul.f32 %v5520, %v5488
        %v5537 = vmul.f32 %v5521, %v5489
        %v5538 = vmul.f32 %v5522, %v5490
        %v5539 = vmul.f32 %v5523, %v5491
        %v5540 = vmul.f32 %v5524, %v5492
        %v5541 = vmul.f32 %v5525, %v5493
        %v5542 = vmul.f32 %v5526, %v5494
        %v5543 = vmul.f32 %v5527, %v5495
        %v5544 = vmul.f32 %v5528, %v5496
        %v5545 = vmul.f32 %v5529, %v5497
        %v5546 = vmul.f32 %v5530, %v5498
        %v5547 = vmul.f32 %v5531, %v5499
        %v5548 = vmul.f32 %v5532, %v5500
        %v5549 = vmul.f32 %v5533, %v5501
        %5550 = vadd.xlane.f32.xlu0 %v5534
        %v5551 = vpop.xlane.xlu0 %5550
        %5552 = vadd.xlane.f32.xlu0 %v5535
        %v5553 = vpop.xlane.xlu0 %5552
        %5554 = vadd.xlane.f32.xlu0 %v5536
        %v5555 = vpop.xlane.xlu0 %5554
        %5556 = vadd.xlane.f32.xlu0 %v5537
        %v5557 = vpop.xlane.xlu0 %5556
        %5558 = vadd.xlane.f32.xlu0 %v5538
        %v5559 = vpop.xlane.xlu0 %5558
        %5560 = vadd.xlane.f32.xlu0 %v5539
        %v5561 = vpop.xlane.xlu0 %5560
        %5562 = vadd.xlane.f32.xlu0 %v5540
        %v5563 = vpop.xlane.xlu0 %5562
        %5564 = vadd.xlane.f32.xlu0 %v5541
        %v5565 = vpop.xlane.xlu0 %5564
        %5566 = vadd.xlane.f32.xlu0 %v5542
        %v5567 = vpop.xlane.xlu0 %5566
        %5568 = vadd.xlane.f32.xlu0 %v5543
        %v5569 = vpop.xlane.xlu0 %5568
        %5570 = vadd.xlane.f32.xlu0 %v5544
        %v5571 = vpop.xlane.xlu0 %5570
        %5572 = vadd.xlane.f32.xlu0 %v5545
        %v5573 = vpop.xlane.xlu0 %5572
        %5574 = vadd.xlane.f32.xlu0 %v5546
        %v5575 = vpop.xlane.xlu0 %5574
        %5576 = vadd.xlane.f32.xlu0 %v5547
        %v5577 = vpop.xlane.xlu0 %5576
        %5578 = vadd.xlane.f32.xlu0 %v5548
        %v5579 = vpop.xlane.xlu0 %5578
        %5580 = vadd.xlane.f32.xlu0 %v5549
        %v5581 = vpop.xlane.xlu0 %5580
        %v5582 = vadd.f32 %v5502, %v5551
        %v5583 = vadd.f32 %v5503, %v5553
        %v5584 = vadd.f32 %v5504, %v5555
        %v5585 = vadd.f32 %v5505, %v5557
        %v5586 = vadd.f32 %v5506, %v5559
        %v5587 = vadd.f32 %v5507, %v5561
        %v5588 = vadd.f32 %v5508, %v5563
        %v5589 = vadd.f32 %v5509, %v5565
        %v5590 = vadd.f32 %v5510, %v5567
        %v5591 = vadd.f32 %v5511, %v5569
        %v5592 = vadd.f32 %v5512, %v5571
        %v5593 = vadd.f32 %v5513, %v5573
        %v5594 = vadd.f32 %v5514, %v5575
        %v5595 = vadd.f32 %v5515, %v5577
        %v5596 = vadd.f32 %v5516, %v5579
        %v5597 = vadd.f32 %v5517, %v5581
        %vm5598 = vcmask 64568
        %5599 = vst.msk [vmem:[#allocation2] sm:$0xff] %vm5598, %v5582
        %5600 = vst.msk [vmem:[#allocation2 + $0x8] sm:$0xff] %vm5598, %v5583
        %5601 = vst.msk [vmem:[#allocation2 + $0x10] sm:$0xff] %vm5598, %v5584
        %5602 = vst.msk [vmem:[#allocation2 + $0x18] sm:$0xff] %vm5598, %v5585
        %5603 = vst.msk [vmem:[#allocation2 + $0x20] sm:$0xff] %vm5598, %v5586
        %5604 = vst.msk [vmem:[#allocation2 + $0x28] sm:$0xff] %vm5598, %v5587
        %5605 = vst.msk [vmem:[#allocation2 + $0x30] sm:$0xff] %vm5598, %v5588
        %5606 = vst.msk [vmem:[#allocation2 + $0x38] sm:$0xff] %vm5598, %v5589
        %5607 = vst.msk [vmem:[#allocation2 + $0x40] sm:$0xff] %vm5598, %v5590
        %5608 = vst.msk [vmem:[#allocation2 + $0x48] sm:$0xff] %vm5598, %v5591
        %5609 = vst.msk [vmem:[#allocation2 + $0x50] sm:$0xff] %vm5598, %v5592
        %5610 = vst.msk [vmem:[#allocation2 + $0x58] sm:$0xff] %vm5598, %v5593
        %5611 = vst.msk [vmem:[#allocation2 + $0x60] sm:$0xff] %vm5598, %v5594
        %5612 = vst.msk [vmem:[#allocation2 + $0x68] sm:$0xff] %vm5598, %v5595
        %5613 = vst.msk [vmem:[#allocation2 + $0x70] sm:$0xff] %vm5598, %v5596
        %5614 = vst.msk [vmem:[#allocation2 + $0x78] sm:$0xff] %vm5598, %v5597
        %v5615 = vld [vmem:[%s5] sm:$0xff]
        %v5616 = vld [vmem:[%s5 + $0x8] sm:$0xff]
        %v5617 = vld [vmem:[%s5 + $0x10] sm:$0xff]
        %v5618 = vld [vmem:[%s5 + $0x18] sm:$0xff]
        %v5619 = vld [vmem:[%s5 + $0x20] sm:$0xff]
        %v5620 = vld [vmem:[%s5 + $0x28] sm:$0xff]
        %v5621 = vld [vmem:[%s5 + $0x30] sm:$0xff]
        %v5622 = vld [vmem:[%s5 + $0x38] sm:$0xff]
        %v5623 = vld [vmem:[%s5 + $0x40] sm:$0xff]
        %v5624 = vld [vmem:[%s5 + $0x48] sm:$0xff]
        %v5625 = vld [vmem:[%s5 + $0x50] sm:$0xff]
        %v5626 = vld [vmem:[%s5 + $0x58] sm:$0xff]
        %v5627 = vld [vmem:[%s5 + $0x60] sm:$0xff]
        %v5628 = vld [vmem:[%s5 + $0x68] sm:$0xff]
        %v5629 = vld [vmem:[%s5 + $0x70] sm:$0xff]
        %v5630 = vld [vmem:[%s5 + $0x78] sm:$0xff]
        %s5631 = scalar_lea.vmem %s398, 28 [#allocation7]
        %v5632 = vld [vmem:[%s5631] sm:$0x7]
        %v5634 = vsel %vm836, %v5615, 0
        %v5637 = vsel %vm836, %v5616, 0
        %v5640 = vsel %vm836, %v5617, 0
        %v5643 = vsel %vm836, %v5618, 0
        %v5646 = vsel %vm836, %v5619, 0
        %v5649 = vsel %vm836, %v5620, 0
        %v5652 = vsel %vm836, %v5621, 0
        %v5655 = vsel %vm836, %v5622, 0
        %v5658 = vsel %vm836, %v5623, 0
        %v5661 = vsel %vm836, %v5624, 0
        %v5664 = vsel %vm836, %v5625, 0
        %v5667 = vsel %vm836, %v5626, 0
        %v5670 = vsel %vm836, %v5627, 0
        %v5673 = vsel %vm836, %v5628, 0
        %v5676 = vsel %vm836, %v5629, 0
        %v5679 = vsel %vm836, %v5630, 0
        %v5682 = vsel %vm885, %v5632, 0
        %5684 = vmatprep.subr.mxu0 0.0
        %5685 = vmatpush1.msra.mxu0 %v5682
        %5686 = vmatprep.subr.mxu0 0.0
        %5687 = vmatpush1.msra.mxu0 0.0
        %5688 = vmatprep.subr.mxu0 0.0
        %5689 = vmatpush1.msra.mxu0 0.0
        %5690 = vmatprep.subr.mxu0 0.0
        %5691 = vmatpush1.msra.mxu0 0.0
        %5692 = vmatprep.subr.mxu0 0.0
        %5693 = vmatpush1.msra.mxu0 0.0
        %5694 = vmatprep.subr.mxu0 0.0
        %5695 = vmatpush1.msra.mxu0 0.0
        %5696 = vmatprep.subr.mxu0 0.0
        %5697 = vmatpush1.msra.mxu0 0.0
        %5698 = vmatprep.subr.mxu0 0.0
        %5699 = vmatpush1.msra.mxu0 0.0
        %5700 = vmatprep.subr.mxu0 0.0
        %5701 = vmatpush1.msra.mxu0 0.0
        %5702 = vmatprep.subr.mxu0 0.0
        %5703 = vmatpush1.msra.mxu0 0.0
        %5704 = vmatprep.subr.mxu0 0.0
        %5705 = vmatpush1.msra.mxu0 0.0
        %5706 = vmatprep.subr.mxu0 0.0
        %5707 = vmatpush1.msra.mxu0 0.0
        %5708 = vmatprep.subr.mxu0 0.0
        %5709 = vmatpush1.msra.mxu0 0.0
        %5710 = vmatprep.subr.mxu0 0.0
        %5711 = vmatpush1.msra.mxu0 0.0
        %5712 = vmatprep.subr.mxu0 0.0
        %5713 = vmatpush1.msra.mxu0 0.0
        %5714 = vmatprep.subr.mxu0 0.0
        %5715 = vmatpush1.msra.mxu0 0.0
        %5716 = vmatprep.subr.mxu0 0.0
        %5717 = vmatpush1.msra.mxu0 0.0
        %5718 = vmatprep.subr.mxu0 0.0
        %5719 = vmatpush1.msra.mxu0 0.0
        %5720 = vmatprep.subr.mxu0 0.0
        %5721 = vmatpush1.msra.mxu0 0.0
        %5722 = vmatprep.subr.mxu0 0.0
        %5723 = vmatpush1.msra.mxu0 0.0
        %5724 = vmatprep.subr.mxu0 0.0
        %5725 = vmatpush1.msra.mxu0 0.0
        %5726 = vmatprep.subr.mxu0 0.0
        %5727 = vmatpush1.msra.mxu0 0.0
        %5728 = vmatprep.subr.mxu0 0.0
        %5729 = vmatpush1.msra.mxu0 0.0
        %5730 = vmatprep.subr.mxu0 0.0
        %5731 = vmatpush1.msra.mxu0 0.0
        %5732 = vmatprep.subr.mxu0 0.0
        %5733 = vmatpush1.msra.mxu0 0.0
        %5734 = vmatprep.subr.mxu0 0.0
        %5735 = vmatpush1.msra.mxu0 0.0
        %5736 = vmatprep.subr.mxu0 0.0
        %5737 = vmatpush1.msra.mxu0 0.0
        %5738 = vmatprep.subr.mxu0 0.0
        %5739 = vmatpush1.msra.mxu0 0.0
        %5740 = vmatprep.subr.mxu0 0.0
        %5741 = vmatpush1.msra.mxu0 0.0
        %5742 = vmatprep.subr.mxu0 0.0
        %5743 = vmatpush1.msra.mxu0 0.0
        %5744 = vmatprep.subr.mxu0 0.0
        %5745 = vmatpush1.msra.mxu0 0.0
        %5746 = vmatprep.subr.mxu0 0.0
        %5747 = vmatpush1.msra.mxu0 0.0
        %5748 = vmatprep.mubr.f32.mxu0 0.0
        %5749 = vmatmul.mubr.f32.gmra.mrb[0].mxu0 %v5634
        %v5750 = vpop.f32.mrb[0].mxu0
        %v5751 = vadd.f32 0.0, %v5750
        %v5752 = vpop.f32.mrb[0].mxu0
        %5753 = vmatprep.mubr.f32.mxu0 0.0
        %5754 = vmatmul.mubr.f32.gmra.mrb[0].mxu0 %v5637
        %v5755 = vpop.f32.mrb[0].mxu0
        %v5756 = vadd.f32 0.0, %v5755
        %v5757 = vpop.f32.mrb[0].mxu0
        %5758 = vmatprep.mubr.f32.mxu0 0.0
        %5759 = vmatmul.mubr.f32.gmra.mrb[0].mxu0 %v5640
        %v5760 = vpop.f32.mrb[0].mxu0
        %v5761 = vadd.f32 0.0, %v5760
        %v5762 = vpop.f32.mrb[0].mxu0
        %5763 = vmatprep.mubr.f32.mxu0 0.0
        %5764 = vmatmul.mubr.f32.gmra.mrb[0].mxu0 %v5643
        %v5765 = vpop.f32.mrb[0].mxu0
        %v5766 = vadd.f32 0.0, %v5765
        %v5767 = vpop.f32.mrb[0].mxu0
        %5768 = vmatprep.mubr.f32.mxu0 0.0
        %5769 = vmatmul.mubr.f32.gmra.mrb[0].mxu0 %v5646
        %v5770 = vpop.f32.mrb[0].mxu0
        %v5771 = vadd.f32 0.0, %v5770
        %v5772 = vpop.f32.mrb[0].mxu0
        %5773 = vmatprep.mubr.f32.mxu0 0.0
        %5774 = vmatmul.mubr.f32.gmra.mrb[0].mxu0 %v5649
        %v5775 = vpop.f32.mrb[0].mxu0
        %v5776 = vadd.f32 0.0, %v5775
        %v5777 = vpop.f32.mrb[0].mxu0
        %5778 = vmatprep.mubr.f32.mxu0 0.0
        %5779 = vmatmul.mubr.f32.gmra.mrb[0].mxu0 %v5652
        %v5780 = vpop.f32.mrb[0].mxu0
        %v5781 = vadd.f32 0.0, %v5780
        %v5782 = vpop.f32.mrb[0].mxu0
        %5783 = vmatprep.mubr.f32.mxu0 0.0
        %5784 = vmatmul.mubr.f32.gmra.mrb[0].mxu0 %v5655
        %v5785 = vpop.f32.mrb[0].mxu0
        %v5786 = vadd.f32 0.0, %v5785
        %v5787 = vpop.f32.mrb[0].mxu0
        %5788 = vmatprep.mubr.f32.mxu0 0.0
        %5789 = vmatmul.mubr.f32.gmra.mrb[0].mxu0 %v5658
        %v5790 = vpop.f32.mrb[0].mxu0
        %v5791 = vadd.f32 0.0, %v5790
        %v5792 = vpop.f32.mrb[0].mxu0
        %5793 = vmatprep.mubr.f32.mxu0 0.0
        %5794 = vmatmul.mubr.f32.gmra.mrb[0].mxu0 %v5661
        %v5795 = vpop.f32.mrb[0].mxu0
        %v5796 = vadd.f32 0.0, %v5795
        %v5797 = vpop.f32.mrb[0].mxu0
        %5798 = vmatprep.mubr.f32.mxu0 0.0
        %5799 = vmatmul.mubr.f32.gmra.mrb[0].mxu0 %v5664
        %v5800 = vpop.f32.mrb[0].mxu0
        %v5801 = vadd.f32 0.0, %v5800
        %v5802 = vpop.f32.mrb[0].mxu0
        %5803 = vmatprep.mubr.f32.mxu0 0.0
        %5804 = vmatmul.mubr.f32.gmra.mrb[0].mxu0 %v5667
        %v5805 = vpop.f32.mrb[0].mxu0
        %v5806 = vadd.f32 0.0, %v5805
        %v5807 = vpop.f32.mrb[0].mxu0
        %5808 = vmatprep.mubr.f32.mxu0 0.0
        %5809 = vmatmul.mubr.f32.gmra.mrb[0].mxu0 %v5670
        %v5810 = vpop.f32.mrb[0].mxu0
        %v5811 = vadd.f32 0.0, %v5810
        %v5812 = vpop.f32.mrb[0].mxu0
        %5813 = vmatprep.mubr.f32.mxu0 0.0
        %5814 = vmatmul.mubr.f32.gmra.mrb[0].mxu0 %v5673
        %v5815 = vpop.f32.mrb[0].mxu0
        %v5816 = vadd.f32 0.0, %v5815
        %v5817 = vpop.f32.mrb[0].mxu0
        %5818 = vmatprep.mubr.f32.mxu0 0.0
        %5819 = vmatmul.mubr.f32.gmra.mrb[0].mxu0 %v5676
        %v5820 = vpop.f32.mrb[0].mxu0
        %v5821 = vadd.f32 0.0, %v5820
        %v5822 = vpop.f32.mrb[0].mxu0
        %5823 = vmatprep.mubr.f32.mxu0 0.0
        %5824 = vmatmul.mubr.f32.gmra.mrb[0].mxu0 %v5679
        %v5825 = vpop.f32.mrb[0].mxu0
        %v5826 = vadd.f32 0.0, %v5825
        %v5827 = vpop.f32.mrb[0].mxu0
        %5828 = vdwg.mxu0
        %v5829 = vmax.f32 %v5751, 1e-06
        %v5830 = vmax.f32 %v5756, 1e-06
        %v5831 = vmax.f32 %v5761, 1e-06
        %v5832 = vmax.f32 %v5766, 1e-06
        %v5833 = vmax.f32 %v5771, 1e-06
        %v5834 = vmax.f32 %v5776, 1e-06
        %v5835 = vmax.f32 %v5781, 1e-06
        %v5836 = vmax.f32 %v5786, 1e-06
        %v5837 = vmax.f32 %v5791, 1e-06
        %v5838 = vmax.f32 %v5796, 1e-06
        %v5839 = vmax.f32 %v5801, 1e-06
        %v5840 = vmax.f32 %v5806, 1e-06
        %v5841 = vmax.f32 %v5811, 1e-06
        %v5842 = vmax.f32 %v5816, 1e-06
        %v5843 = vmax.f32 %v5821, 1e-06
        %v5844 = vmax.f32 %v5826, 1e-06
        %v5845 = vld [vmem:[#allocation3] sm:$0xff]
        %v5846 = vld [vmem:[#allocation3 + $0x8] sm:$0xff]
        %v5847 = vld [vmem:[#allocation3 + $0x10] sm:$0xff]
        %v5848 = vld [vmem:[#allocation3 + $0x18] sm:$0xff]
        %v5849 = vld [vmem:[#allocation3 + $0x20] sm:$0xff]
        %v5850 = vld [vmem:[#allocation3 + $0x28] sm:$0xff]
        %v5851 = vld [vmem:[#allocation3 + $0x30] sm:$0xff]
        %v5852 = vld [vmem:[#allocation3 + $0x38] sm:$0xff]
        %v5853 = vld [vmem:[#allocation3 + $0x40] sm:$0xff]
        %v5854 = vld [vmem:[#allocation3 + $0x48] sm:$0xff]
        %v5855 = vld [vmem:[#allocation3 + $0x50] sm:$0xff]
        %v5856 = vld [vmem:[#allocation3 + $0x58] sm:$0xff]
        %v5857 = vld [vmem:[#allocation3 + $0x60] sm:$0xff]
        %v5858 = vld [vmem:[#allocation3 + $0x68] sm:$0xff]
        %v5859 = vld [vmem:[#allocation3 + $0x70] sm:$0xff]
        %v5860 = vld [vmem:[#allocation3 + $0x78] sm:$0xff]
        %v5861 = vmul.f32 %v5829, %v5829
        %v5862 = vmul.f32 %v5830, %v5830
        %v5863 = vmul.f32 %v5831, %v5831
        %v5864 = vmul.f32 %v5832, %v5832
        %v5865 = vmul.f32 %v5833, %v5833
        %v5866 = vmul.f32 %v5834, %v5834
        %v5867 = vmul.f32 %v5835, %v5835
        %v5868 = vmul.f32 %v5836, %v5836
        %v5869 = vmul.f32 %v5837, %v5837
        %v5870 = vmul.f32 %v5838, %v5838
        %v5871 = vmul.f32 %v5839, %v5839
        %v5872 = vmul.f32 %v5840, %v5840
        %v5873 = vmul.f32 %v5841, %v5841
        %v5874 = vmul.f32 %v5842, %v5842
        %v5875 = vmul.f32 %v5843, %v5843
        %v5876 = vmul.f32 %v5844, %v5844
        %v5877 = vmul.f32 %v5861, %v5829
        %v5878 = vmul.f32 %v5862, %v5830
        %v5879 = vmul.f32 %v5863, %v5831
        %v5880 = vmul.f32 %v5864, %v5832
        %v5881 = vmul.f32 %v5865, %v5833
        %v5882 = vmul.f32 %v5866, %v5834
        %v5883 = vmul.f32 %v5867, %v5835
        %v5884 = vmul.f32 %v5868, %v5836
        %v5885 = vmul.f32 %v5869, %v5837
        %v5886 = vmul.f32 %v5870, %v5838
        %v5887 = vmul.f32 %v5871, %v5839
        %v5888 = vmul.f32 %v5872, %v5840
        %v5889 = vmul.f32 %v5873, %v5841
        %v5890 = vmul.f32 %v5874, %v5842
        %v5891 = vmul.f32 %v5875, %v5843
        %v5892 = vmul.f32 %v5876, %v5844
        %5893 = vadd.xlane.f32.xlu0 %v5877
        %v5894 = vpop.xlane.xlu0 %5893
        %5895 = vadd.xlane.f32.xlu0 %v5878
        %v5896 = vpop.xlane.xlu0 %5895
        %5897 = vadd.xlane.f32.xlu0 %v5879
        %v5898 = vpop.xlane.xlu0 %5897
        %5899 = vadd.xlane.f32.xlu0 %v5880
        %v5900 = vpop.xlane.xlu0 %5899
        %5901 = vadd.xlane.f32.xlu0 %v5881
        %v5902 = vpop.xlane.xlu0 %5901
        %5903 = vadd.xlane.f32.xlu0 %v5882
        %v5904 = vpop.xlane.xlu0 %5903
        %5905 = vadd.xlane.f32.xlu0 %v5883
        %v5906 = vpop.xlane.xlu0 %5905
        %5907 = vadd.xlane.f32.xlu0 %v5884
        %v5908 = vpop.xlane.xlu0 %5907
        %5909 = vadd.xlane.f32.xlu0 %v5885
        %v5910 = vpop.xlane.xlu0 %5909
        %5911 = vadd.xlane.f32.xlu0 %v5886
        %v5912 = vpop.xlane.xlu0 %5911
        %5913 = vadd.xlane.f32.xlu0 %v5887
        %v5914 = vpop.xlane.xlu0 %5913
        %5915 = vadd.xlane.f32.xlu0 %v5888
        %v5916 = vpop.xlane.xlu0 %5915
        %5917 = vadd.xlane.f32.xlu0 %v5889
        %v5918 = vpop.xlane.xlu0 %5917
        %5919 = vadd.xlane.f32.xlu0 %v5890
        %v5920 = vpop.xlane.xlu0 %5919
        %5921 = vadd.xlane.f32.xlu0 %v5891
        %v5922 = vpop.xlane.xlu0 %5921
        %5923 = vadd.xlane.f32.xlu0 %v5892
        %v5924 = vpop.xlane.xlu0 %5923
        %v5925 = vadd.f32 %v5845, %v5894
        %v5926 = vadd.f32 %v5846, %v5896
        %v5927 = vadd.f32 %v5847, %v5898
        %v5928 = vadd.f32 %v5848, %v5900
        %v5929 = vadd.f32 %v5849, %v5902
        %v5930 = vadd.f32 %v5850, %v5904
        %v5931 = vadd.f32 %v5851, %v5906
        %v5932 = vadd.f32 %v5852, %v5908
        %v5933 = vadd.f32 %v5853, %v5910
        %v5934 = vadd.f32 %v5854, %v5912
        %v5935 = vadd.f32 %v5855, %v5914
        %v5936 = vadd.f32 %v5856, %v5916
        %v5937 = vadd.f32 %v5857, %v5918
        %v5938 = vadd.f32 %v5858, %v5920
        %v5939 = vadd.f32 %v5859, %v5922
        %v5940 = vadd.f32 %v5860, %v5924
        %5941 = vst.msk [vmem:[#allocation3] sm:$0xff] %vm5598, %v5925
        %5942 = vst.msk [vmem:[#allocation3 + $0x8] sm:$0xff] %vm5598, %v5926
        %5943 = vst.msk [vmem:[#allocation3 + $0x10] sm:$0xff] %vm5598, %v5927
        %5944 = vst.msk [vmem:[#allocation3 + $0x18] sm:$0xff] %vm5598, %v5928
        %5945 = vst.msk [vmem:[#allocation3 + $0x20] sm:$0xff] %vm5598, %v5929
        %5946 = vst.msk [vmem:[#allocation3 + $0x28] sm:$0xff] %vm5598, %v5930
        %5947 = vst.msk [vmem:[#allocation3 + $0x30] sm:$0xff] %vm5598, %v5931
        %5948 = vst.msk [vmem:[#allocation3 + $0x38] sm:$0xff] %vm5598, %v5932
        %5949 = vst.msk [vmem:[#allocation3 + $0x40] sm:$0xff] %vm5598, %v5933
        %5950 = vst.msk [vmem:[#allocation3 + $0x48] sm:$0xff] %vm5598, %v5934
        %5951 = vst.msk [vmem:[#allocation3 + $0x50] sm:$0xff] %vm5598, %v5935
        %5952 = vst.msk [vmem:[#allocation3 + $0x58] sm:$0xff] %vm5598, %v5936
        %5953 = vst.msk [vmem:[#allocation3 + $0x60] sm:$0xff] %vm5598, %v5937
        %5954 = vst.msk [vmem:[#allocation3 + $0x68] sm:$0xff] %vm5598, %v5938
        %5955 = vst.msk [vmem:[#allocation3 + $0x70] sm:$0xff] %vm5598, %v5939
        %5956 = vst.msk [vmem:[#allocation3 + $0x78] sm:$0xff] %vm5598, %v5940
        %p5957 = scmp.eq.s32.totalorder %s24, 1
        // Predicated region
        $region131: #{tpu_custom_call.1} parent=117 // pred_check
          %p5958 = pneg %p5957
        $region132: #{tpu_custom_call.1} parent=117 // pred_check_branch
          %5960 = sbr.rel (%p5958) target = $region134
        $region133: #{tpu_custom_call.1} parent=117 // pred_region
          %v5961 = vld [vmem:[#allocation2] sm:$0xff]
          %v5962 = vld [vmem:[#allocation2 + $0x8] sm:$0xff]
          %v5963 = vld [vmem:[#allocation2 + $0x10] sm:$0xff]
          %v5964 = vld [vmem:[#allocation2 + $0x18] sm:$0xff]
          %v5965 = vld [vmem:[#allocation2 + $0x20] sm:$0xff]
          %v5966 = vld [vmem:[#allocation2 + $0x28] sm:$0xff]
          %v5967 = vld [vmem:[#allocation2 + $0x30] sm:$0xff]
          %v5968 = vld [vmem:[#allocation2 + $0x38] sm:$0xff]
          %v5969 = vld [vmem:[#allocation2 + $0x40] sm:$0xff]
          %v5970 = vld [vmem:[#allocation2 + $0x48] sm:$0xff]
          %v5971 = vld [vmem:[#allocation2 + $0x50] sm:$0xff]
          %v5972 = vld [vmem:[#allocation2 + $0x58] sm:$0xff]
          %v5973 = vld [vmem:[#allocation2 + $0x60] sm:$0xff]
          %v5974 = vld [vmem:[#allocation2 + $0x68] sm:$0xff]
          %v5975 = vld [vmem:[#allocation2 + $0x70] sm:$0xff]
          %v5976 = vld [vmem:[#allocation2 + $0x78] sm:$0xff]
          %v5977 = vmul.f32 %v5961, 0.00390625
          %v5978 = vmul.f32 %v5962, 0.00390625
          %v5979 = vmul.f32 %v5963, 0.00390625
          %v5980 = vmul.f32 %v5964, 0.00390625
          %v5981 = vmul.f32 %v5965, 0.00390625
          %v5982 = vmul.f32 %v5966, 0.00390625
          %v5983 = vmul.f32 %v5967, 0.00390625
          %v5984 = vmul.f32 %v5968, 0.00390625
          %v5985 = vmul.f32 %v5969, 0.00390625
          %v5986 = vmul.f32 %v5970, 0.00390625
          %v5987 = vmul.f32 %v5971, 0.00390625
          %v5988 = vmul.f32 %v5972, 0.00390625
          %v5989 = vmul.f32 %v5973, 0.00390625
          %v5990 = vmul.f32 %v5974, 0.00390625
          %v5991 = vmul.f32 %v5975, 0.00390625
          %v5992 = vmul.f32 %v5976, 0.00390625
          %v5993 = vstv %s473
          %v5994 = vrcp.pop %v5993
          %s5995 = vtos %v5994
          %v5996 = vstv %s5995
          %v5997 = vpow.f32 %v5977, %v5996
          %v5998 = vpow.f32 %v5978, %v5996
          %v5999 = vpow.f32 %v5979, %v5996
          %v6000 = vpow.f32 %v5980, %v5996
          %v6001 = vpow.f32 %v5981, %v5996
          %v6002 = vpow.f32 %v5982, %v5996
          %v6003 = vpow.f32 %v5983, %v5996
          %v6004 = vpow.f32 %v5984, %v5996
          %v6005 = vpow.f32 %v5985, %v5996
          %v6006 = vpow.f32 %v5986, %v5996
          %v6007 = vpow.f32 %v5987, %v5996
          %v6008 = vpow.f32 %v5988, %v5996
          %v6009 = vpow.f32 %v5989, %v5996
          %v6010 = vpow.f32 %v5990, %v5996
          %v6011 = vpow.f32 %v5991, %v5996
          %v6012 = vpow.f32 %v5992, %v5996
          %v6013 = vld [vmem:[#allocation3] sm:$0xff]
          %v6014 = vld [vmem:[#allocation3 + $0x8] sm:$0xff]
          %v6015 = vld [vmem:[#allocation3 + $0x10] sm:$0xff]
          %v6016 = vld [vmem:[#allocation3 + $0x18] sm:$0xff]
          %v6017 = vld [vmem:[#allocation3 + $0x20] sm:$0xff]
          %v6018 = vld [vmem:[#allocation3 + $0x28] sm:$0xff]
          %v6019 = vld [vmem:[#allocation3 + $0x30] sm:$0xff]
          %v6020 = vld [vmem:[#allocation3 + $0x38] sm:$0xff]
          %v6021 = vld [vmem:[#allocation3 + $0x40] sm:$0xff]
          %v6022 = vld [vmem:[#allocation3 + $0x48] sm:$0xff]
          %v6023 = vld [vmem:[#allocation3 + $0x50] sm:$0xff]
          %v6024 = vld [vmem:[#allocation3 + $0x58] sm:$0xff]
          %v6025 = vld [vmem:[#allocation3 + $0x60] sm:$0xff]
          %v6026 = vld [vmem:[#allocation3 + $0x68] sm:$0xff]
          %v6027 = vld [vmem:[#allocation3 + $0x70] sm:$0xff]
          %v6028 = vld [vmem:[#allocation3 + $0x78] sm:$0xff]
          %v6029 = vmul.f32 %v6013, 0.00390625
          %v6030 = vmul.f32 %v6014, 0.00390625
          %v6031 = vmul.f32 %v6015, 0.00390625
          %v6032 = vmul.f32 %v6016, 0.00390625
          %v6033 = vmul.f32 %v6017, 0.00390625
          %v6034 = vmul.f32 %v6018, 0.00390625
          %v6035 = vmul.f32 %v6019, 0.00390625
          %v6036 = vmul.f32 %v6020, 0.00390625
          %v6037 = vmul.f32 %v6021, 0.00390625
          %v6038 = vmul.f32 %v6022, 0.00390625
          %v6039 = vmul.f32 %v6023, 0.00390625
          %v6040 = vmul.f32 %v6024, 0.00390625
          %v6041 = vmul.f32 %v6025, 0.00390625
          %v6042 = vmul.f32 %v6026, 0.00390625
          %v6043 = vmul.f32 %v6027, 0.00390625
          %v6044 = vmul.f32 %v6028, 0.00390625
          %v6045 = vstv %s474
          %v6046 = vrcp.pop %v6045
          %s6047 = vtos %v6046
          %v6048 = vstv %s6047
          %v6049 = vpow.f32 %v6029, %v6048
          %v6050 = vpow.f32 %v6030, %v6048
          %v6051 = vpow.f32 %v6031, %v6048
          %v6052 = vpow.f32 %v6032, %v6048
          %v6053 = vpow.f32 %v6033, %v6048
          %v6054 = vpow.f32 %v6034, %v6048
          %v6055 = vpow.f32 %v6035, %v6048
          %v6056 = vpow.f32 %v6036, %v6048
          %v6057 = vpow.f32 %v6037, %v6048
          %v6058 = vpow.f32 %v6038, %v6048
          %v6059 = vpow.f32 %v6039, %v6048
          %v6060 = vpow.f32 %v6040, %v6048
          %v6061 = vpow.f32 %v6041, %v6048
          %v6062 = vpow.f32 %v6042, %v6048
          %v6063 = vpow.f32 %v6043, %v6048
          %v6064 = vpow.f32 %v6044, %v6048
          %v6065 = vadd.f32 %v5997, %v6049
          %v6066 = vadd.f32 %v5998, %v6050
          %v6067 = vadd.f32 %v5999, %v6051
          %v6068 = vadd.f32 %v6000, %v6052
          %v6069 = vadd.f32 %v6001, %v6053
          %v6070 = vadd.f32 %v6002, %v6054
          %v6071 = vadd.f32 %v6003, %v6055
          %v6072 = vadd.f32 %v6004, %v6056
          %v6073 = vadd.f32 %v6005, %v6057
          %v6074 = vadd.f32 %v6006, %v6058
          %v6075 = vadd.f32 %v6007, %v6059
          %v6076 = vadd.f32 %v6008, %v6060
          %v6077 = vadd.f32 %v6009, %v6061
          %v6078 = vadd.f32 %v6010, %v6062
          %v6079 = vadd.f32 %v6011, %v6063
          %v6080 = vadd.f32 %v6012, %v6064
          %vm6081 = vcmask 64512
          %6082 = vst.msk [vmem:[%s435] sm:$0xff] %vm6081, %v6065
          %6083 = vst.msk [vmem:[%s435 + $0x8] sm:$0xff] %vm6081, %v6066
          %6084 = vst.msk [vmem:[%s435 + $0x10] sm:$0xff] %vm6081, %v6067
          %6085 = vst.msk [vmem:[%s435 + $0x18] sm:$0xff] %vm6081, %v6068
          %6086 = vst.msk [vmem:[%s435 + $0x20] sm:$0xff] %vm6081, %v6069
          %6087 = vst.msk [vmem:[%s435 + $0x28] sm:$0xff] %vm6081, %v6070
          %6088 = vst.msk [vmem:[%s435 + $0x30] sm:$0xff] %vm6081, %v6071
          %6089 = vst.msk [vmem:[%s435 + $0x38] sm:$0xff] %vm6081, %v6072
          %6090 = vst.msk [vmem:[%s435 + $0x40] sm:$0xff] %vm6081, %v6073
          %6091 = vst.msk [vmem:[%s435 + $0x48] sm:$0xff] %vm6081, %v6074
          %6092 = vst.msk [vmem:[%s435 + $0x50] sm:$0xff] %vm6081, %v6075
          %6093 = vst.msk [vmem:[%s435 + $0x58] sm:$0xff] %vm6081, %v6076
          %6094 = vst.msk [vmem:[%s435 + $0x60] sm:$0xff] %vm6081, %v6077
          %6095 = vst.msk [vmem:[%s435 + $0x68] sm:$0xff] %vm6081, %v6078
          %6096 = vst.msk [vmem:[%s435 + $0x70] sm:$0xff] %vm6081, %v6079
          %6097 = vst.msk [vmem:[%s435 + $0x78] sm:$0xff] %vm6081, %v6080
        $region134: #{tpu_custom_call.1} parent=117 // pred_fallthru
          _
        %p6098 = scmp.lt.s32.totalorder %s23, 1
        %s6099 = scalar_select %p6098, %s23, 1
        %s6100 = smul.addr %s6099, 16
        %s6101 = smul.addr %s6100, 8
        %s6102 = scalar_lea.vmem %s6, %s6101
        // Predicated region
        $region135: #{tpu_custom_call.1} parent=117 // pred_check
          %p6103 = pneg %p189
        $region136: #{tpu_custom_call.1} parent=117 // pred_check_branch
          %6105 = sbr.rel (%p6103) target = $region138
        $region137: #{tpu_custom_call.1} parent=117 // pred_region
          _
        $region138: #{tpu_custom_call.1} parent=117 // pred_fallthru
          _
      $region118: #{tpu_custom_call.1} parent=5 // pred_fallthru
        _
      %p6106 = scmp.le.s32.totalorder 2, %s14
      // Predicated region
      $region139: #{tpu_custom_call.1} parent=5 // pred_check
        %p6107 = pneg %p6106
      $region140: #{tpu_custom_call.1} parent=5 // pred_check_branch
        %6109 = sbr.rel (%p6107) target = $region142
      $region141: #{tpu_custom_call.1} parent=5 // pred_region
        %s6110 = ssub.s32 %s14, 2
        // Predicated region
        $region143: #{tpu_custom_call.1} parent=141 // pred_check
          %p6111 = pneg %p195
        $region144: #{tpu_custom_call.1} parent=141 // pred_check_branch
          %6113 = sbr.rel (%p6111) target = $region146
        $region145: #{tpu_custom_call.1} parent=141 // pred_region
          %p6114 = scmp.lt.s32.totalorder %s25, 1
          %s6115 = scalar_select %p6114, %s25, 1
          %s6116 = smul.addr %s6115, 16
          %s6117 = smul.addr %s6116, 8
          %s6118 = scalar_lea.vmem %s6, %s6117
        $region146: #{tpu_custom_call.1} parent=141 // pred_fallthru
          _
      $region142: #{tpu_custom_call.1} parent=5 // pred_fallthru
        _
    $region6: #{tpu_custom_call.1} parent=1 // loop_footer
      %s18 = sadd.s32 1, %s14
    $region7: #{tpu_custom_call.1} parent=1 // loop_footer_branch
      %13 = sbr.rel target = $region3
    $region8: #{tpu_custom_call.1} parent=1 // loop_exit
      _

</llo_original>
